<compile_context>
chip_gen: v7x
topology: tpu7x:2x2x1
jax: 0.10.0
libtpu: 0.0.40
codegen_flags: <defaults>
</compile_context>

<pallas_src>
import numpy as np
import jax
import jax.numpy as jnp
from jax import lax
from jax.experimental import pallas as pl
from jax.experimental.pallas import tpu as pltpu

# ---- model dimensions (small, BERT-like) -----------------------------------
B = 2      # number of entities (batch)
S = 8      # sequence length
H = 32     # hidden size
NH = 4     # attention heads
DH = H // NH
F = 64     # FFN intermediate size
V = 128    # vocab size
L = 2      # encoder layers
N = B * S  # rows per pass; both passes are stacked to 2N rows in-kernel
CLS_ID = 101
SEP_ID = 102
LANES = 128

# ---- packed weight slab layout: ONE (rows, 128) f32 operand -----------------
OFF_DEC = 0                    # (H, V)  tied decoder (word_emb.T), full 128 lanes
OFF_WEMB = OFF_DEC + H         # (V, H)  word embeddings
OFF_POS = OFF_WEMB + V         # (N, H)  position embeddings pre-tiled over batch
OFF_WT = OFF_POS + N           # (H, H)  MLM head transform
OFF_L0 = OFF_WT + H            # per-layer weight blocks start here
LAYER_WQKV = 0                 # (H, 3H)
LAYER_WO = H                   # (H, H)
LAYER_W1 = 2 * H               # (H, F)
LAYER_W2 = 3 * H               # (F, H)
LAYER_ROWS = 3 * H + F
OFF_VEC = OFF_L0 + L * LAYER_ROWS   # bias / LayerNorm vector rows start here

ROW_EMB_G = 0                  # embedding LN gamma (H)
ROW_EMB_B = 1                  # embedding LN beta  (H)


def _vec_layer_base(l):
    # per layer: bqkv(3H), bo(H), ln1_g(H), ln1_b(H), b1(F), b2(H), ln2_g(H), ln2_b(H)
    return 2 + 8 * l


ROW_HEAD = 2 + 8 * L           # head: bt(H), ln_g(H), ln_b(H), dec_b(V)
N_VEC_ROWS = ROW_HEAD + 4
SLAB_ROWS = OFF_VEC + N_VEC_ROWS
SLAB_ROWS_PAD = ((SLAB_ROWS + 7) // 8) * 8


# ---- in-kernel helpers ------------------------------------------------------
def _ln(x, g, b, eps=1e-12):
    mu = jnp.mean(x, axis=-1, keepdims=True)
    var = jnp.mean((x - mu) ** 2, axis=-1, keepdims=True)
    return (x - mu) * lax.rsqrt(var + eps) * g + b


def _gelu(x):
    return 0.5 * x * (1.0 + jnp.tanh(0.7978845608028654 * (x + 0.044715 * x * x * x)))


# ---- single fused kernel: both passes, embeddings + L layers + head + loss ---
def fused_bert_kernel(ids_ref, amask_ref, slab_ref, logits_ref, loss_ref):
    def wmat(row, nrows, ncols):                 # weight block from the slab
        return slab_ref[row:row + nrows, :ncols]

    def vrow(r, d):                              # one bias / LN vector -> (1, d)
        return slab_ref[OFF_VEC + r:OFF_VEC + r + 1, :d]

    ids = ids_ref[...]                                            # (N, 1) int32
    onehot = (lax.broadcasted_iota(jnp.int32, (N, V), 1) == ids).astype(jnp.float32)

    # embeddings (pass-invariant): one-hot gather + positions + LayerNorm,
    # then stack the two passes along rows -> (2N, H)
    x_emb = jnp.dot(onehot, wmat(OFF_WEMB, V, H), preferred_element_type=jnp.float32)
    x_emb = x_emb + wmat(OFF_POS, N, H)           # positions pre-tiled over batch
    x_emb = _ln(x_emb, vrow(ROW_EMB_G, H), vrow(ROW_EMB_B, H))
    x = jnp.concatenate([x_emb, x_emb], axis=0)   # rows [0:N)=pass0, [N:2N)=pass1

    # additive attention masks for the 2B (pass, entity) groups, broadcast once
    am = jnp.broadcast_to(amask_ref[...].reshape(2 * B, 1, S), (2 * B, S, S))

    inv_sqrt_dh = 1.0 / np.sqrt(DH)

    for l in range(L):
        wbase = OFF_L0 + l * LAYER_ROWS
        vbase = _vec_layer_base(l)
        qkv = (jnp.dot(x, wmat(wbase + LAYER_WQKV, H, 3 * H),
                       preferred_element_type=jnp.float32)
               + vrow(vbase + 0, 3 * H))                          # (2N, 3H)

        heads = []
        for h in range(NH):
            qh = qkv[:, h * DH:(h + 1) * DH].reshape(2 * B, S, DH)
            kh = qkv[:, H + h * DH:H + (h + 1) * DH].reshape(2 * B, S, DH)
            vh = qkv[:, 2 * H + h * DH:2 * H + (h + 1) * DH].reshape(2 * B, S, DH)
            sc = jnp.einsum('bqd,bkd->bqk', qh, kh,
                            preferred_element_type=jnp.float32) * inv_sqrt_dh + am
            sc = sc - jnp.max(sc, axis=-1, keepdims=True)
            e = jnp.exp(sc)
            probs = e * pl.reciprocal(jnp.sum(e, axis=-1, keepdims=True), approx=True)
            heads.append(jnp.einsum('bqk,bkd->bqd', probs, vh,
                                    preferred_element_type=jnp.float32))
        ctx = jnp.concatenate(heads, axis=-1).reshape(2 * N, H)   # (2N, H)

        attn = (jnp.dot(ctx, wmat(wbase + LAYER_WO, H, H),
                        preferred_element_type=jnp.float32)
                + vrow(vbase + 1, H))
        x = _ln(x + attn, vrow(vbase + 2, H), vrow(vbase + 3, H))
        mid = _gelu(jnp.dot(x, wmat(wbase + LAYER_W1, H, F),
                            preferred_element_type=jnp.float32)
                    + vrow(vbase + 4, F))
        ffn = (jnp.dot(mid, wmat(wbase + LAYER_W2, F, H),
                       preferred_element_type=jnp.float32)
               + vrow(vbase + 5, H))
        x = _ln(x + ffn, vrow(vbase + 6, H), vrow(vbase + 7, H))

    # MLM head for both passes at once: transform + GELU + LN + tied decoder
    t = _gelu(jnp.dot(x, wmat(OFF_WT, H, H), preferred_element_type=jnp.float32)
              + vrow(ROW_HEAD + 0, H))
    t = _ln(t, vrow(ROW_HEAD + 1, H), vrow(ROW_HEAD + 2, H))
    logits2 = (jnp.dot(t, wmat(OFF_DEC, H, V), preferred_element_type=jnp.float32)
               + vrow(ROW_HEAD + 3, V))                           # (2N, V) lane-dense

    # pass 1 (tokenizer mask) logits are the module's return value
    logits_ref[...] = logits2[N:2 * N, :]

    # pass 0 ("training" forward, MLM mask as attention mask): masked-LM
    # cross-entropy with labels == input_ids over all positions
    lg0 = logits2[:N, :]
    m = jnp.max(lg0, axis=-1, keepdims=True)
    lse = jnp.log(jnp.sum(jnp.exp(lg0 - m), axis=-1, keepdims=True)) + m
    picked = jnp.sum(lg0 * onehot, axis=-1, keepdims=True)
    total = jnp.sum(lse - picked, axis=0, keepdims=True)          # (1, 1)
    loss_ref[0, 0] = total[0, 0] * (1.0 / N)                      # scalar via SMEM


# ---- wrapper: one pallas_call, 3 inputs, everything VMEM-resident ------------
def fused_forward(ids_2d, amask_all, slab):
    logits_flat, loss = pl.pallas_call(
        fused_bert_kernel,
        out_shape=(jax.ShapeDtypeStruct((N, V), jnp.float32),
                   jax.ShapeDtypeStruct((1, 1), jnp.float32)),
        grid=(1,),
        in_specs=[pl.BlockSpec((N, 1), lambda i: (0, 0)),
                  pl.BlockSpec((2 * B, S), lambda i: (0, 0)),
                  pl.BlockSpec((SLAB_ROWS_PAD, LANES), lambda i: (0, 0))],
        out_specs=(pl.BlockSpec((N, V), lambda i: (0, 0)),
                   pl.BlockSpec(memory_space=pltpu.MemorySpace.SMEM)),
    )(ids_2d, amask_all, slab)
    return logits_flat.reshape(B, S, V), loss


# ---- deterministic parameter init: one packed f32 slab ------------------------
def init_packed_slab(key):
    def nrm(k, shape, scale=0.02):
        return np.asarray(scale * jax.random.normal(k, shape), np.float32)

    ks = iter(jax.random.split(key, 64))
    word_emb = nrm(next(ks), (V, H))
    pos_emb = nrm(next(ks), (S, H))

    slab = np.zeros((SLAB_ROWS_PAD, LANES), np.float32)
    slab[OFF_DEC:OFF_DEC + H, :V] = word_emb.T                    # tied decoder
    slab[OFF_WEMB:OFF_WEMB + V, :H] = word_emb
    slab[OFF_POS:OFF_POS + N, :H] = np.tile(pos_emb, (B, 1))      # pre-tiled positions

    for l in range(L):
        base = OFF_L0 + l * LAYER_ROWS
        wq, wk, wv = nrm(next(ks), (H, H)), nrm(next(ks), (H, H)), nrm(next(ks), (H, H))
        slab[base + LAYER_WQKV:base + LAYER_WQKV + H, :3 * H] = np.concatenate(
            [wq, wk, wv], axis=1)
        slab[base + LAYER_WO:base + LAYER_WO + H, :H] = nrm(next(ks), (H, H))
        slab[base + LAYER_W1:base + LAYER_W1 + H, :F] = nrm(next(ks), (H, F))
        slab[base + LAYER_W2:base + LAYER_W2 + F, :H] = nrm(next(ks), (F, H))
    slab[OFF_WT:OFF_WT + H, :H] = nrm(next(ks), (H, H))

    # bias / LayerNorm vectors (biases & LN betas stay 0, LN gammas = 1)
    vb = OFF_VEC
    slab[vb + ROW_EMB_G, :H] = 1.0
    for l in range(L):
        lb = vb + _vec_layer_base(l)
        slab[lb + 2, :H] = 1.0       # ln1 gamma
        slab[lb + 6, :H] = 1.0       # ln2 gamma
    slab[vb + ROW_HEAD + 1, :H] = 1.0  # head LN gamma

    return jnp.asarray(slab)


if __name__ == "__main__":
    key = jax.random.PRNGKey(0)
    k_param, k_tok, k_rand = jax.random.split(key, 3)

    slab = init_packed_slab(k_param)

    # synthetic "tokenized entities": [CLS] body tokens [SEP]
    body = jax.random.randint(k_tok, (B, S - 2), 103, V, dtype=jnp.int32)
    input_ids = jnp.concatenate(
        [jnp.full((B, 1), CLS_ID, jnp.int32), body, jnp.full((B, 1), SEP_ID, jnp.int32)],
        axis=1)                                         # (B, S)
    attention_mask = jnp.ones((B, S), jnp.int32)        # tokenizer mask (no padding)

    # mask = (rand < 0.2) * (ids != 101) * (ids != 102)
    rand = jax.random.uniform(k_rand, input_ids.shape)
    mlm_mask = ((rand < 0.2) & (input_ids != CLS_ID) & (input_ids != SEP_ID)).astype(jnp.int32)

    # additive attention masks for both passes, packed into one (2B, S) operand:
    # pass 0 uses the (buggy) MLM selection mask, pass 1 the tokenizer mask.
    train_add = (1.0 - mlm_mask.astype(jnp.float32)) * -10000.0
    final_add = (1.0 - attention_mask.astype(jnp.float32)) * -10000.0
    amask_all = jnp.concatenate([train_add, final_add], axis=0)

    ids_2d = input_ids.reshape(N, 1)                    # labels == input_ids (reused in-kernel)

    out_logits, loss = fused_forward(ids_2d, amask_all, slab)
    # TODO(synk): loss.backward(); AdamW.step() — no clean Pallas equivalent,
    #             so the weights are left unchanged before the final forward.

    jax.block_until_ready((loss, out_logits))
    assert out_logits.shape == (B, S, V)
    assert bool(jnp.isfinite(loss).all()) and bool(jnp.isfinite(out_logits).all())
    print("KERNEL_OK")
</pallas_src>

<mosaic_0001>
module attributes {stable_mosaic.version = 11 : i64} {
  func.func @fused_bert_kernel(%arg0: i32, %arg1: memref<16x1xi32, #tpu.memory_space<vmem>>, %arg2: memref<4x8xf32, #tpu.memory_space<vmem>>, %arg3: memref<552x128xf32, #tpu.memory_space<vmem>>, %arg4: memref<16x128xf32, #tpu.memory_space<vmem>>, %arg5: memref<1x1xf32, #tpu.memory_space<smem>>) attributes {dimension_semantics = [#tpu.dimension_semantics<arbitrary>], iteration_bounds = array<i64: 1>, scalar_prefetch = 0 : i64, scratch_operands = 0 : i64, tpu.core_type = #tpu.core_type<tc>, window_params = [{pipeline_mode = #tpu.pipeline_mode<synchronous>, transform_indices = @transform_0, window_bounds = array<i64: 16, 1>}, {pipeline_mode = #tpu.pipeline_mode<synchronous>, transform_indices = @transform_1, window_bounds = array<i64: 4, 8>}, {pipeline_mode = #tpu.pipeline_mode<synchronous>, transform_indices = @transform_2, window_bounds = array<i64: 552, 128>}, {pipeline_mode = #tpu.pipeline_mode<synchronous>, transform_indices = @transform_3, window_bounds = array<i64: 16, 128>}, {transform_indices = @transform_4, window_bounds = array<i64: 1, 1>}]} {
    %c0 = arith.constant 0 : index
    %c0_0 = arith.constant 0 : index
    %0 = vector.load %arg1[%c0, %c0_0] : memref<16x1xi32, #tpu.memory_space<vmem>>, vector<16x1xi32>
    %1 = tpu.iota {dimensions = array<i32: 1>} : vector<16x128xi32>
    %2 = vector.broadcast %0 : vector<16x1xi32> to vector<16x128xi32>
    %3 = arith.cmpi eq, %1, %2 : vector<16x128xi32>
    %4 = arith.extui %3 : vector<16x128xi1> to vector<16x128xi32>
    %5 = arith.sitofp %4 : vector<16x128xi32> to vector<16x128xf32>
    %c32 = arith.constant 32 : index
    %c0_1 = arith.constant 0 : index
    %6 = vector.load %arg3[%c32, %c0_1] : memref<552x128xf32, #tpu.memory_space<vmem>>, vector<128x32xf32>
    %cst = arith.constant dense<0.000000e+00> : vector<16x32xf32>
    %7 = tpu.matmul %5, %6, %cst {dimension_numbers = #tpu.dot_dimension_numbers<[1], [0], [0], [1], [0, 0, 1, 1], [], []>} : vector<16x128xf32>, vector<128x32xf32>, vector<16x32xf32> -> vector<16x32xf32>
    %c160 = arith.constant 160 : index
    %c0_2 = arith.constant 0 : index
    %8 = vector.load %arg3[%c160, %c0_2] : memref<552x128xf32, #tpu.memory_space<vmem>>, vector<16x32xf32>
    %9 = arith.addf %7, %8 : vector<16x32xf32>
    %c528 = arith.constant 528 : index
    %c0_3 = arith.constant 0 : index
    %10 = vector.load %arg3[%c528, %c0_3] : memref<552x128xf32, #tpu.memory_space<vmem>>, vector<1x32xf32>
    %c529 = arith.constant 529 : index
    %c0_4 = arith.constant 0 : index
    %11 = vector.load %arg3[%c529, %c0_4] : memref<552x128xf32, #tpu.memory_space<vmem>>, vector<1x32xf32>
    %cst_5 = arith.constant dense<0.000000e+00> : vector<16xf32>
    %12 = vector.multi_reduction <add>, %9, %cst_5 [1] : vector<16x32xf32> to vector<16xf32>
    %13 = vector.shape_cast %12 : vector<16xf32> to vector<16x1xf32>
    %cst_6 = arith.constant 3.200000e+01 : f32
    %14 = vector.broadcast %cst_6 : f32 to vector<16x1xf32>
    %15 = arith.divf %13, %14 : vector<16x1xf32>
    %16 = vector.broadcast %15 : vector<16x1xf32> to vector<16x32xf32>
    %17 = arith.subf %9, %16 : vector<16x32xf32>
    %18 = arith.mulf %17, %17 : vector<16x32xf32>
    %cst_7 = arith.constant dense<0.000000e+00> : vector<16xf32>
    %19 = vector.multi_reduction <add>, %18, %cst_7 [1] : vector<16x32xf32> to vector<16xf32>
    %20 = vector.shape_cast %19 : vector<16xf32> to vector<16x1xf32>
    %cst_8 = arith.constant 3.200000e+01 : f32
    %21 = vector.broadcast %cst_8 : f32 to vector<16x1xf32>
    %22 = arith.divf %20, %21 : vector<16x1xf32>
    %23 = vector.broadcast %15 : vector<16x1xf32> to vector<16x32xf32>
    %24 = arith.subf %9, %23 : vector<16x32xf32>
    %cst_9 = arith.constant 9.99999996E-13 : f32
    %25 = vector.broadcast %cst_9 : f32 to vector<16x1xf32>
    %26 = arith.addf %22, %25 : vector<16x1xf32>
    %27 = math.rsqrt %26 : vector<16x1xf32>
    %28 = vector.broadcast %27 : vector<16x1xf32> to vector<16x32xf32>
    %29 = arith.mulf %24, %28 : vector<16x32xf32>
    %30 = vector.broadcast %10 : vector<1x32xf32> to vector<16x32xf32>
    %31 = arith.mulf %29, %30 : vector<16x32xf32>
    %32 = vector.broadcast %11 : vector<1x32xf32> to vector<16x32xf32>
    %33 = arith.addf %31, %32 : vector<16x32xf32>
    %34 = tpu.concatenate %33, %33 in 0 : vector<16x32xf32>, vector<16x32xf32> -> vector<32x32xf32>
    %c0_10 = arith.constant 0 : index
    %c0_11 = arith.constant 0 : index
    %35 = vector.load %arg2[%c0_10, %c0_11] : memref<4x8xf32, #tpu.memory_space<vmem>>, vector<4x8xf32>
    %36 = vector.shape_cast %35 : vector<4x8xf32> to vector<4x1x8xf32>
    %37 = vector.shape_cast %36 : vector<4x1x8xf32> to vector<4x1x8xf32>
    %38 = vector.broadcast %37 : vector<4x1x8xf32> to vector<4x8x8xf32>
    %c208 = arith.constant 208 : index
    %c0_12 = arith.constant 0 : index
    %39 = vector.load %arg3[%c208, %c0_12] : memref<552x128xf32, #tpu.memory_space<vmem>>, vector<32x96xf32>
    %cst_13 = arith.constant dense<0.000000e+00> : vector<32x96xf32>
    %40 = tpu.matmul %34, %39, %cst_13 {dimension_numbers = #tpu.dot_dimension_numbers<[1], [0], [0], [1], [0, 0, 1, 1], [], []>} : vector<32x32xf32>, vector<32x96xf32>, vector<32x96xf32> -> vector<32x96xf32>
    %c530 = arith.constant 530 : index
    %c0_14 = arith.constant 0 : index
    %41 = vector.load %arg3[%c530, %c0_14] : memref<552x128xf32, #tpu.memory_space<vmem>>, vector<1x96xf32>
    %42 = vector.broadcast %41 : vector<1x96xf32> to vector<32x96xf32>
    %43 = arith.addf %40, %42 : vector<32x96xf32>
    %44 = vector.extract_strided_slice %43 {offsets = [0, 0], sizes = [32, 8], strides = [1, 1]} : vector<32x96xf32> to vector<32x8xf32>
    %45 = vector.shape_cast %44 : vector<32x8xf32> to vector<4x8x8xf32>
    %46 = vector.extract_strided_slice %43 {offsets = [0, 32], sizes = [32, 8], strides = [1, 1]} : vector<32x96xf32> to vector<32x8xf32>
    %47 = vector.shape_cast %46 : vector<32x8xf32> to vector<4x8x8xf32>
    %48 = vector.extract_strided_slice %43 {offsets = [0, 64], sizes = [32, 8], strides = [1, 1]} : vector<32x96xf32> to vector<32x8xf32>
    %49 = vector.shape_cast %48 : vector<32x8xf32> to vector<4x8x8xf32>
    "tpu.trace_start"() <{level = 10 : i32, message = "bqd,bkd->bqk"}> : () -> ()
    %cst_15 = arith.constant dense<0.000000e+00> : vector<4x8x8xf32>
    %50 = tpu.matmul %45, %47, %cst_15 {dimension_numbers = #tpu.dot_dimension_numbers<[2], [2], [1], [1], [0, 0, 0, 1, 1, 1], [0], [0]>} : vector<4x8x8xf32>, vector<4x8x8xf32>, vector<4x8x8xf32> -> vector<4x8x8xf32>
    "tpu.trace_stop"() : () -> ()
    %cst_16 = arith.constant 0.353553385 : f32
    %51 = vector.broadcast %cst_16 : f32 to vector<4x8x8xf32>
    %52 = arith.mulf %50, %51 : vector<4x8x8xf32>
    %53 = arith.addf %52, %38 : vector<4x8x8xf32>
    %cst_17 = arith.constant dense<0xFF800000> : vector<4x8xf32>
    %54 = vector.multi_reduction <maximumf>, %53, %cst_17 [2] : vector<4x8x8xf32> to vector<4x8xf32>
    %55 = vector.shape_cast %54 : vector<4x8xf32> to vector<4x8x1xf32>
    %56 = vector.broadcast %55 : vector<4x8x1xf32> to vector<4x8x8xf32>
    %57 = arith.subf %53, %56 : vector<4x8x8xf32>
    %58 = math.exp %57 : vector<4x8x8xf32>
    %cst_18 = arith.constant dense<0.000000e+00> : vector<4x8xf32>
    %59 = vector.multi_reduction <add>, %58, %cst_18 [2] : vector<4x8x8xf32> to vector<4x8xf32>
    %60 = vector.shape_cast %59 : vector<4x8xf32> to vector<4x8x1xf32>
    %61 = tpu.reciprocal %60 {approx = true} : vector<4x8x1xf32> -> vector<4x8x1xf32>
    %62 = vector.broadcast %61 : vector<4x8x1xf32> to vector<4x8x8xf32>
    %63 = arith.mulf %58, %62 : vector<4x8x8xf32>
    "tpu.trace_start"() <{level = 10 : i32, message = "bqk,bkd->bqd"}> : () -> ()
    %cst_19 = arith.constant dense<0.000000e+00> : vector<4x8x8xf32>
    %64 = tpu.matmul %63, %49, %cst_19 {dimension_numbers = #tpu.dot_dimension_numbers<[2], [1], [1], [2], [0, 0, 0, 1, 1, 2], [0], [0]>} : vector<4x8x8xf32>, vector<4x8x8xf32>, vector<4x8x8xf32> -> vector<4x8x8xf32>
    "tpu.trace_stop"() : () -> ()
    %65 = vector.extract_strided_slice %43 {offsets = [0, 8], sizes = [32, 8], strides = [1, 1]} : vector<32x96xf32> to vector<32x8xf32>
    %66 = vector.shape_cast %65 : vector<32x8xf32> to vector<4x8x8xf32>
    %67 = vector.extract_strided_slice %43 {offsets = [0, 40], sizes = [32, 8], strides = [1, 1]} : vector<32x96xf32> to vector<32x8xf32>
    %68 = vector.shape_cast %67 : vector<32x8xf32> to vector<4x8x8xf32>
    %69 = vector.extract_strided_slice %43 {offsets = [0, 72], sizes = [32, 8], strides = [1, 1]} : vector<32x96xf32> to vector<32x8xf32>
    %70 = vector.shape_cast %69 : vector<32x8xf32> to vector<4x8x8xf32>
    "tpu.trace_start"() <{level = 10 : i32, message = "bqd,bkd->bqk"}> : () -> ()
    %cst_20 = arith.constant dense<0.000000e+00> : vector<4x8x8xf32>
    %71 = tpu.matmul %66, %68, %cst_20 {dimension_numbers = #tpu.dot_dimension_numbers<[2], [2], [1], [1], [0, 0, 0, 1, 1, 1], [0], [0]>} : vector<4x8x8xf32>, vector<4x8x8xf32>, vector<4x8x8xf32> -> vector<4x8x8xf32>
    "tpu.trace_stop"() : () -> ()
    %cst_21 = arith.constant 0.353553385 : f32
    %72 = vector.broadcast %cst_21 : f32 to vector<4x8x8xf32>
    %73 = arith.mulf %71, %72 : vector<4x8x8xf32>
    %74 = arith.addf %73, %38 : vector<4x8x8xf32>
    %cst_22 = arith.constant dense<0xFF800000> : vector<4x8xf32>
    %75 = vector.multi_reduction <maximumf>, %74, %cst_22 [2] : vector<4x8x8xf32> to vector<4x8xf32>
    %76 = vector.shape_cast %75 : vector<4x8xf32> to vector<4x8x1xf32>
    %77 = vector.broadcast %76 : vector<4x8x1xf32> to vector<4x8x8xf32>
    %78 = arith.subf %74, %77 : vector<4x8x8xf32>
    %79 = math.exp %78 : vector<4x8x8xf32>
    %cst_23 = arith.constant dense<0.000000e+00> : vector<4x8xf32>
    %80 = vector.multi_reduction <add>, %79, %cst_23 [2] : vector<4x8x8xf32> to vector<4x8xf32>
    %81 = vector.shape_cast %80 : vector<4x8xf32> to vector<4x8x1xf32>
    %82 = tpu.reciprocal %81 {approx = true} : vector<4x8x1xf32> -> vector<4x8x1xf32>
    %83 = vector.broadcast %82 : vector<4x8x1xf32> to vector<4x8x8xf32>
    %84 = arith.mulf %79, %83 : vector<4x8x8xf32>
    "tpu.trace_start"() <{level = 10 : i32, message = "bqk,bkd->bqd"}> : () -> ()
    %cst_24 = arith.constant dense<0.000000e+00> : vector<4x8x8xf32>
    %85 = tpu.matmul %84, %70, %cst_24 {dimension_numbers = #tpu.dot_dimension_numbers<[2], [1], [1], [2], [0, 0, 0, 1, 1, 2], [0], [0]>} : vector<4x8x8xf32>, vector<4x8x8xf32>, vector<4x8x8xf32> -> vector<4x8x8xf32>
    "tpu.trace_stop"() : () -> ()
    %86 = vector.extract_strided_slice %43 {offsets = [0, 16], sizes = [32, 8], strides = [1, 1]} : vector<32x96xf32> to vector<32x8xf32>
    %87 = vector.shape_cast %86 : vector<32x8xf32> to vector<4x8x8xf32>
    %88 = vector.extract_strided_slice %43 {offsets = [0, 48], sizes = [32, 8], strides = [1, 1]} : vector<32x96xf32> to vector<32x8xf32>
    %89 = vector.shape_cast %88 : vector<32x8xf32> to vector<4x8x8xf32>
    %90 = vector.extract_strided_slice %43 {offsets = [0, 80], sizes = [32, 8], strides = [1, 1]} : vector<32x96xf32> to vector<32x8xf32>
    %91 = vector.shape_cast %90 : vector<32x8xf32> to vector<4x8x8xf32>
    "tpu.trace_start"() <{level = 10 : i32, message = "bqd,bkd->bqk"}> : () -> ()
    %cst_25 = arith.constant dense<0.000000e+00> : vector<4x8x8xf32>
    %92 = tpu.matmul %87, %89, %cst_25 {dimension_numbers = #tpu.dot_dimension_numbers<[2], [2], [1], [1], [0, 0, 0, 1, 1, 1], [0], [0]>} : vector<4x8x8xf32>, vector<4x8x8xf32>, vector<4x8x8xf32> -> vector<4x8x8xf32>
    "tpu.trace_stop"() : () -> ()
    %cst_26 = arith.constant 0.353553385 : f32
    %93 = vector.broadcast %cst_26 : f32 to vector<4x8x8xf32>
    %94 = arith.mulf %92, %93 : vector<4x8x8xf32>
    %95 = arith.addf %94, %38 : vector<4x8x8xf32>
    %cst_27 = arith.constant dense<0xFF800000> : vector<4x8xf32>
    %96 = vector.multi_reduction <maximumf>, %95, %cst_27 [2] : vector<4x8x8xf32> to vector<4x8xf32>
    %97 = vector.shape_cast %96 : vector<4x8xf32> to vector<4x8x1xf32>
    %98 = vector.broadcast %97 : vector<4x8x1xf32> to vector<4x8x8xf32>
    %99 = arith.subf %95, %98 : vector<4x8x8xf32>
    %100 = math.exp %99 : vector<4x8x8xf32>
    %cst_28 = arith.constant dense<0.000000e+00> : vector<4x8xf32>
    %101 = vector.multi_reduction <add>, %100, %cst_28 [2] : vector<4x8x8xf32> to vector<4x8xf32>
    %102 = vector.shape_cast %101 : vector<4x8xf32> to vector<4x8x1xf32>
    %103 = tpu.reciprocal %102 {approx = true} : vector<4x8x1xf32> -> vector<4x8x1xf32>
    %104 = vector.broadcast %103 : vector<4x8x1xf32> to vector<4x8x8xf32>
    %105 = arith.mulf %100, %104 : vector<4x8x8xf32>
    "tpu.trace_start"() <{level = 10 : i32, message = "bqk,bkd->bqd"}> : () -> ()
    %cst_29 = arith.constant dense<0.000000e+00> : vector<4x8x8xf32>
    %106 = tpu.matmul %105, %91, %cst_29 {dimension_numbers = #tpu.dot_dimension_numbers<[2], [1], [1], [2], [0, 0, 0, 1, 1, 2], [0], [0]>} : vector<4x8x8xf32>, vector<4x8x8xf32>, vector<4x8x8xf32> -> vector<4x8x8xf32>
    "tpu.trace_stop"() : () -> ()
    %107 = vector.extract_strided_slice %43 {offsets = [0, 24], sizes = [32, 8], strides = [1, 1]} : vector<32x96xf32> to vector<32x8xf32>
    %108 = vector.shape_cast %107 : vector<32x8xf32> to vector<4x8x8xf32>
    %109 = vector.extract_strided_slice %43 {offsets = [0, 56], sizes = [32, 8], strides = [1, 1]} : vector<32x96xf32> to vector<32x8xf32>
    %110 = vector.shape_cast %109 : vector<32x8xf32> to vector<4x8x8xf32>
    %111 = vector.extract_strided_slice %43 {offsets = [0, 88], sizes = [32, 8], strides = [1, 1]} : vector<32x96xf32> to vector<32x8xf32>
    %112 = vector.shape_cast %111 : vector<32x8xf32> to vector<4x8x8xf32>
    "tpu.trace_start"() <{level = 10 : i32, message = "bqd,bkd->bqk"}> : () -> ()
    %cst_30 = arith.constant dense<0.000000e+00> : vector<4x8x8xf32>
    %113 = tpu.matmul %108, %110, %cst_30 {dimension_numbers = #tpu.dot_dimension_numbers<[2], [2], [1], [1], [0, 0, 0, 1, 1, 1], [0], [0]>} : vector<4x8x8xf32>, vector<4x8x8xf32>, vector<4x8x8xf32> -> vector<4x8x8xf32>
    "tpu.trace_stop"() : () -> ()
    %cst_31 = arith.constant 0.353553385 : f32
    %114 = vector.broadcast %cst_31 : f32 to vector<4x8x8xf32>
    %115 = arith.mulf %113, %114 : vector<4x8x8xf32>
    %116 = arith.addf %115, %38 : vector<4x8x8xf32>
    %cst_32 = arith.constant dense<0xFF800000> : vector<4x8xf32>
    %117 = vector.multi_reduction <maximumf>, %116, %cst_32 [2] : vector<4x8x8xf32> to vector<4x8xf32>
    %118 = vector.shape_cast %117 : vector<4x8xf32> to vector<4x8x1xf32>
    %119 = vector.broadcast %118 : vector<4x8x1xf32> to vector<4x8x8xf32>
    %120 = arith.subf %116, %119 : vector<4x8x8xf32>
    %121 = math.exp %120 : vector<4x8x8xf32>
    %cst_33 = arith.constant dense<0.000000e+00> : vector<4x8xf32>
    %122 = vector.multi_reduction <add>, %121, %cst_33 [2] : vector<4x8x8xf32> to vector<4x8xf32>
    %123 = vector.shape_cast %122 : vector<4x8xf32> to vector<4x8x1xf32>
    %124 = tpu.reciprocal %123 {approx = true} : vector<4x8x1xf32> -> vector<4x8x1xf32>
    %125 = vector.broadcast %124 : vector<4x8x1xf32> to vector<4x8x8xf32>
    %126 = arith.mulf %121, %125 : vector<4x8x8xf32>
    "tpu.trace_start"() <{level = 10 : i32, message = "bqk,bkd->bqd"}> : () -> ()
    %cst_34 = arith.constant dense<0.000000e+00> : vector<4x8x8xf32>
    %127 = tpu.matmul %126, %112, %cst_34 {dimension_numbers = #tpu.dot_dimension_numbers<[2], [1], [1], [2], [0, 0, 0, 1, 1, 2], [0], [0]>} : vector<4x8x8xf32>, vector<4x8x8xf32>, vector<4x8x8xf32> -> vector<4x8x8xf32>
    "tpu.trace_stop"() : () -> ()
    %128 = tpu.concatenate %64, %85, %106, %127 in 2 : vector<4x8x8xf32>, vector<4x8x8xf32>, vector<4x8x8xf32>, vector<4x8x8xf32> -> vector<4x8x32xf32>
    %129 = vector.shape_cast %128 : vector<4x8x32xf32> to vector<32x32xf32>
    %c240 = arith.constant 240 : index
    %c0_35 = arith.constant 0 : index
    %130 = vector.load %arg3[%c240, %c0_35] : memref<552x128xf32, #tpu.memory_space<vmem>>, vector<32x32xf32>
    %cst_36 = arith.constant dense<0.000000e+00> : vector<32x32xf32>
    %131 = tpu.matmul %129, %130, %cst_36 {dimension_numbers = #tpu.dot_dimension_numbers<[1], [0], [0], [1], [0, 0, 1, 1], [], []>} : vector<32x32xf32>, vector<32x32xf32>, vector<32x32xf32> -> vector<32x32xf32>
    %c531 = arith.constant 531 : index
    %c0_37 = arith.constant 0 : index
    %132 = vector.load %arg3[%c531, %c0_37] : memref<552x128xf32, #tpu.memory_space<vmem>>, vector<1x32xf32>
    %133 = vector.broadcast %132 : vector<1x32xf32> to vector<32x32xf32>
    %134 = arith.addf %131, %133 : vector<32x32xf32>
    %135 = arith.addf %34, %134 : vector<32x32xf32>
    %c532 = arith.constant 532 : index
    %c0_38 = arith.constant 0 : index
    %136 = vector.load %arg3[%c532, %c0_38] : memref<552x128xf32, #tpu.memory_space<vmem>>, vector<1x32xf32>
    %c533 = arith.constant 533 : index
    %c0_39 = arith.constant 0 : index
    %137 = vector.load %arg3[%c533, %c0_39] : memref<552x128xf32, #tpu.memory_space<vmem>>, vector<1x32xf32>
    %cst_40 = arith.constant dense<0.000000e+00> : vector<32xf32>
    %138 = vector.multi_reduction <add>, %135, %cst_40 [1] : vector<32x32xf32> to vector<32xf32>
    %139 = vector.shape_cast %138 : vector<32xf32> to vector<32x1xf32>
    %cst_41 = arith.constant 3.200000e+01 : f32
    %140 = vector.broadcast %cst_41 : f32 to vector<32x1xf32>
    %141 = arith.divf %139, %140 : vector<32x1xf32>
    %142 = vector.broadcast %141 : vector<32x1xf32> to vector<32x32xf32>
    %143 = arith.subf %135, %142 : vector<32x32xf32>
    %144 = arith.mulf %143, %143 : vector<32x32xf32>
    %cst_42 = arith.constant dense<0.000000e+00> : vector<32xf32>
    %145 = vector.multi_reduction <add>, %144, %cst_42 [1] : vector<32x32xf32> to vector<32xf32>
    %146 = vector.shape_cast %145 : vector<32xf32> to vector<32x1xf32>
    %cst_43 = arith.constant 3.200000e+01 : f32
    %147 = vector.broadcast %cst_43 : f32 to vector<32x1xf32>
    %148 = arith.divf %146, %147 : vector<32x1xf32>
    %149 = vector.broadcast %141 : vector<32x1xf32> to vector<32x32xf32>
    %150 = arith.subf %135, %149 : vector<32x32xf32>
    %cst_44 = arith.constant 9.99999996E-13 : f32
    %151 = vector.broadcast %cst_44 : f32 to vector<32x1xf32>
    %152 = arith.addf %148, %151 : vector<32x1xf32>
    %153 = math.rsqrt %152 : vector<32x1xf32>
    %154 = vector.broadcast %153 : vector<32x1xf32> to vector<32x32xf32>
    %155 = arith.mulf %150, %154 : vector<32x32xf32>
    %156 = vector.broadcast %136 : vector<1x32xf32> to vector<32x32xf32>
    %157 = arith.mulf %155, %156 : vector<32x32xf32>
    %158 = vector.broadcast %137 : vector<1x32xf32> to vector<32x32xf32>
    %159 = arith.addf %157, %158 : vector<32x32xf32>
    %c272 = arith.constant 272 : index
    %c0_45 = arith.constant 0 : index
    %160 = vector.load %arg3[%c272, %c0_45] : memref<552x128xf32, #tpu.memory_space<vmem>>, vector<32x64xf32>
    %cst_46 = arith.constant dense<0.000000e+00> : vector<32x64xf32>
    %161 = tpu.matmul %159, %160, %cst_46 {dimension_numbers = #tpu.dot_dimension_numbers<[1], [0], [0], [1], [0, 0, 1, 1], [], []>} : vector<32x32xf32>, vector<32x64xf32>, vector<32x64xf32> -> vector<32x64xf32>
    %c534 = arith.constant 534 : index
    %c0_47 = arith.constant 0 : index
    %162 = vector.load %arg3[%c534, %c0_47] : memref<552x128xf32, #tpu.memory_space<vmem>>, vector<1x64xf32>
    %163 = vector.broadcast %162 : vector<1x64xf32> to vector<32x64xf32>
    %164 = arith.addf %161, %163 : vector<32x64xf32>
    %cst_48 = arith.constant 5.000000e-01 : f32
    %165 = vector.broadcast %cst_48 : f32 to vector<32x64xf32>
    %166 = arith.mulf %165, %164 : vector<32x64xf32>
    %cst_49 = arith.constant 4.471500e-02 : f32
    %167 = vector.broadcast %cst_49 : f32 to vector<32x64xf32>
    %168 = arith.mulf %167, %164 : vector<32x64xf32>
    %169 = arith.mulf %168, %164 : vector<32x64xf32>
    %170 = arith.mulf %169, %164 : vector<32x64xf32>
    %171 = arith.addf %164, %170 : vector<32x64xf32>
    %cst_50 = arith.constant 0.797884583 : f32
    %172 = vector.broadcast %cst_50 : f32 to vector<32x64xf32>
    %173 = arith.mulf %172, %171 : vector<32x64xf32>
    %174 = math.tanh %173 : vector<32x64xf32>
    %cst_51 = arith.constant 1.000000e+00 : f32
    %175 = vector.broadcast %cst_51 : f32 to vector<32x64xf32>
    %176 = arith.addf %175, %174 : vector<32x64xf32>
    %177 = arith.mulf %166, %176 : vector<32x64xf32>
    %c304 = arith.constant 304 : index
    %c0_52 = arith.constant 0 : index
    %178 = vector.load %arg3[%c304, %c0_52] : memref<552x128xf32, #tpu.memory_space<vmem>>, vector<64x32xf32>
    %cst_53 = arith.constant dense<0.000000e+00> : vector<32x32xf32>
    %179 = tpu.matmul %177, %178, %cst_53 {dimension_numbers = #tpu.dot_dimension_numbers<[1], [0], [0], [1], [0, 0, 1, 1], [], []>} : vector<32x64xf32>, vector<64x32xf32>, vector<32x32xf32> -> vector<32x32xf32>
    %c535 = arith.constant 535 : index
    %c0_54 = arith.constant 0 : index
    %180 = vector.load %arg3[%c535, %c0_54] : memref<552x128xf32, #tpu.memory_space<vmem>>, vector<1x32xf32>
    %181 = vector.broadcast %180 : vector<1x32xf32> to vector<32x32xf32>
    %182 = arith.addf %179, %181 : vector<32x32xf32>
    %183 = arith.addf %159, %182 : vector<32x32xf32>
    %c536 = arith.constant 536 : index
    %c0_55 = arith.constant 0 : index
    %184 = vector.load %arg3[%c536, %c0_55] : memref<552x128xf32, #tpu.memory_space<vmem>>, vector<1x32xf32>
    %c537 = arith.constant 537 : index
    %c0_56 = arith.constant 0 : index
    %185 = vector.load %arg3[%c537, %c0_56] : memref<552x128xf32, #tpu.memory_space<vmem>>, vector<1x32xf32>
    %cst_57 = arith.constant dense<0.000000e+00> : vector<32xf32>
    %186 = vector.multi_reduction <add>, %183, %cst_57 [1] : vector<32x32xf32> to vector<32xf32>
    %187 = vector.shape_cast %186 : vector<32xf32> to vector<32x1xf32>
    %cst_58 = arith.constant 3.200000e+01 : f32
    %188 = vector.broadcast %cst_58 : f32 to vector<32x1xf32>
    %189 = arith.divf %187, %188 : vector<32x1xf32>
    %190 = vector.broadcast %189 : vector<32x1xf32> to vector<32x32xf32>
    %191 = arith.subf %183, %190 : vector<32x32xf32>
    %192 = arith.mulf %191, %191 : vector<32x32xf32>
    %cst_59 = arith.constant dense<0.000000e+00> : vector<32xf32>
    %193 = vector.multi_reduction <add>, %192, %cst_59 [1] : vector<32x32xf32> to vector<32xf32>
    %194 = vector.shape_cast %193 : vector<32xf32> to vector<32x1xf32>
    %cst_60 = arith.constant 3.200000e+01 : f32
    %195 = vector.broadcast %cst_60 : f32 to vector<32x1xf32>
    %196 = arith.divf %194, %195 : vector<32x1xf32>
    %197 = vector.broadcast %189 : vector<32x1xf32> to vector<32x32xf32>
    %198 = arith.subf %183, %197 : vector<32x32xf32>
    %cst_61 = arith.constant 9.99999996E-13 : f32
    %199 = vector.broadcast %cst_61 : f32 to vector<32x1xf32>
    %200 = arith.addf %196, %199 : vector<32x1xf32>
    %201 = math.rsqrt %200 : vector<32x1xf32>
    %202 = vector.broadcast %201 : vector<32x1xf32> to vector<32x32xf32>
    %203 = arith.mulf %198, %202 : vector<32x32xf32>
    %204 = vector.broadcast %184 : vector<1x32xf32> to vector<32x32xf32>
    %205 = arith.mulf %203, %204 : vector<32x32xf32>
    %206 = vector.broadcast %185 : vector<1x32xf32> to vector<32x32xf32>
    %207 = arith.addf %205, %206 : vector<32x32xf32>
    %c368 = arith.constant 368 : index
    %c0_62 = arith.constant 0 : index
    %208 = vector.load %arg3[%c368, %c0_62] : memref<552x128xf32, #tpu.memory_space<vmem>>, vector<32x96xf32>
    %cst_63 = arith.constant dense<0.000000e+00> : vector<32x96xf32>
    %209 = tpu.matmul %207, %208, %cst_63 {dimension_numbers = #tpu.dot_dimension_numbers<[1], [0], [0], [1], [0, 0, 1, 1], [], []>} : vector<32x32xf32>, vector<32x96xf32>, vector<32x96xf32> -> vector<32x96xf32>
    %c538 = arith.constant 538 : index
    %c0_64 = arith.constant 0 : index
    %210 = vector.load %arg3[%c538, %c0_64] : memref<552x128xf32, #tpu.memory_space<vmem>>, vector<1x96xf32>
    %211 = vector.broadcast %210 : vector<1x96xf32> to vector<32x96xf32>
    %212 = arith.addf %209, %211 : vector<32x96xf32>
    %213 = vector.extract_strided_slice %212 {offsets = [0, 0], sizes = [32, 8], strides = [1, 1]} : vector<32x96xf32> to vector<32x8xf32>
    %214 = vector.shape_cast %213 : vector<32x8xf32> to vector<4x8x8xf32>
    %215 = vector.extract_strided_slice %212 {offsets = [0, 32], sizes = [32, 8], strides = [1, 1]} : vector<32x96xf32> to vector<32x8xf32>
    %216 = vector.shape_cast %215 : vector<32x8xf32> to vector<4x8x8xf32>
    %217 = vector.extract_strided_slice %212 {offsets = [0, 64], sizes = [32, 8], strides = [1, 1]} : vector<32x96xf32> to vector<32x8xf32>
    %218 = vector.shape_cast %217 : vector<32x8xf32> to vector<4x8x8xf32>
    "tpu.trace_start"() <{level = 10 : i32, message = "bqd,bkd->bqk"}> : () -> ()
    %cst_65 = arith.constant dense<0.000000e+00> : vector<4x8x8xf32>
    %219 = tpu.matmul %214, %216, %cst_65 {dimension_numbers = #tpu.dot_dimension_numbers<[2], [2], [1], [1], [0, 0, 0, 1, 1, 1], [0], [0]>} : vector<4x8x8xf32>, vector<4x8x8xf32>, vector<4x8x8xf32> -> vector<4x8x8xf32>
    "tpu.trace_stop"() : () -> ()
    %cst_66 = arith.constant 0.353553385 : f32
    %220 = vector.broadcast %cst_66 : f32 to vector<4x8x8xf32>
    %221 = arith.mulf %219, %220 : vector<4x8x8xf32>
    %222 = arith.addf %221, %38 : vector<4x8x8xf32>
    %cst_67 = arith.constant dense<0xFF800000> : vector<4x8xf32>
    %223 = vector.multi_reduction <maximumf>, %222, %cst_67 [2] : vector<4x8x8xf32> to vector<4x8xf32>
    %224 = vector.shape_cast %223 : vector<4x8xf32> to vector<4x8x1xf32>
    %225 = vector.broadcast %224 : vector<4x8x1xf32> to vector<4x8x8xf32>
    %226 = arith.subf %222, %225 : vector<4x8x8xf32>
    %227 = math.exp %226 : vector<4x8x8xf32>
    %cst_68 = arith.constant dense<0.000000e+00> : vector<4x8xf32>
    %228 = vector.multi_reduction <add>, %227, %cst_68 [2] : vector<4x8x8xf32> to vector<4x8xf32>
    %229 = vector.shape_cast %228 : vector<4x8xf32> to vector<4x8x1xf32>
    %230 = tpu.reciprocal %229 {approx = true} : vector<4x8x1xf32> -> vector<4x8x1xf32>
    %231 = vector.broadcast %230 : vector<4x8x1xf32> to vector<4x8x8xf32>
    %232 = arith.mulf %227, %231 : vector<4x8x8xf32>
    "tpu.trace_start"() <{level = 10 : i32, message = "bqk,bkd->bqd"}> : () -> ()
    %cst_69 = arith.constant dense<0.000000e+00> : vector<4x8x8xf32>
    %233 = tpu.matmul %232, %218, %cst_69 {dimension_numbers = #tpu.dot_dimension_numbers<[2], [1], [1], [2], [0, 0, 0, 1, 1, 2], [0], [0]>} : vector<4x8x8xf32>, vector<4x8x8xf32>, vector<4x8x8xf32> -> vector<4x8x8xf32>
    "tpu.trace_stop"() : () -> ()
    %234 = vector.extract_strided_slice %212 {offsets = [0, 8], sizes = [32, 8], strides = [1, 1]} : vector<32x96xf32> to vector<32x8xf32>
    %235 = vector.shape_cast %234 : vector<32x8xf32> to vector<4x8x8xf32>
    %236 = vector.extract_strided_slice %212 {offsets = [0, 40], sizes = [32, 8], strides = [1, 1]} : vector<32x96xf32> to vector<32x8xf32>
    %237 = vector.shape_cast %236 : vector<32x8xf32> to vector<4x8x8xf32>
    %238 = vector.extract_strided_slice %212 {offsets = [0, 72], sizes = [32, 8], strides = [1, 1]} : vector<32x96xf32> to vector<32x8xf32>
    %239 = vector.shape_cast %238 : vector<32x8xf32> to vector<4x8x8xf32>
    "tpu.trace_start"() <{level = 10 : i32, message = "bqd,bkd->bqk"}> : () -> ()
    %cst_70 = arith.constant dense<0.000000e+00> : vector<4x8x8xf32>
    %240 = tpu.matmul %235, %237, %cst_70 {dimension_numbers = #tpu.dot_dimension_numbers<[2], [2], [1], [1], [0, 0, 0, 1, 1, 1], [0], [0]>} : vector<4x8x8xf32>, vector<4x8x8xf32>, vector<4x8x8xf32> -> vector<4x8x8xf32>
    "tpu.trace_stop"() : () -> ()
    %cst_71 = arith.constant 0.353553385 : f32
    %241 = vector.broadcast %cst_71 : f32 to vector<4x8x8xf32>
    %242 = arith.mulf %240, %241 : vector<4x8x8xf32>
    %243 = arith.addf %242, %38 : vector<4x8x8xf32>
    %cst_72 = arith.constant dense<0xFF800000> : vector<4x8xf32>
    %244 = vector.multi_reduction <maximumf>, %243, %cst_72 [2] : vector<4x8x8xf32> to vector<4x8xf32>
    %245 = vector.shape_cast %244 : vector<4x8xf32> to vector<4x8x1xf32>
    %246 = vector.broadcast %245 : vector<4x8x1xf32> to vector<4x8x8xf32>
    %247 = arith.subf %243, %246 : vector<4x8x8xf32>
    %248 = math.exp %247 : vector<4x8x8xf32>
    %cst_73 = arith.constant dense<0.000000e+00> : vector<4x8xf32>
    %249 = vector.multi_reduction <add>, %248, %cst_73 [2] : vector<4x8x8xf32> to vector<4x8xf32>
    %250 = vector.shape_cast %249 : vector<4x8xf32> to vector<4x8x1xf32>
    %251 = tpu.reciprocal %250 {approx = true} : vector<4x8x1xf32> -> vector<4x8x1xf32>
    %252 = vector.broadcast %251 : vector<4x8x1xf32> to vector<4x8x8xf32>
    %253 = arith.mulf %248, %252 : vector<4x8x8xf32>
    "tpu.trace_start"() <{level = 10 : i32, message = "bqk,bkd->bqd"}> : () -> ()
    %cst_74 = arith.constant dense<0.000000e+00> : vector<4x8x8xf32>
    %254 = tpu.matmul %253, %239, %cst_74 {dimension_numbers = #tpu.dot_dimension_numbers<[2], [1], [1], [2], [0, 0, 0, 1, 1, 2], [0], [0]>} : vector<4x8x8xf32>, vector<4x8x8xf32>, vector<4x8x8xf32> -> vector<4x8x8xf32>
    "tpu.trace_stop"() : () -> ()
    %255 = vector.extract_strided_slice %212 {offsets = [0, 16], sizes = [32, 8], strides = [1, 1]} : vector<32x96xf32> to vector<32x8xf32>
    %256 = vector.shape_cast %255 : vector<32x8xf32> to vector<4x8x8xf32>
    %257 = vector.extract_strided_slice %212 {offsets = [0, 48], sizes = [32, 8], strides = [1, 1]} : vector<32x96xf32> to vector<32x8xf32>
    %258 = vector.shape_cast %257 : vector<32x8xf32> to vector<4x8x8xf32>
    %259 = vector.extract_strided_slice %212 {offsets = [0, 80], sizes = [32, 8], strides = [1, 1]} : vector<32x96xf32> to vector<32x8xf32>
    %260 = vector.shape_cast %259 : vector<32x8xf32> to vector<4x8x8xf32>
    "tpu.trace_start"() <{level = 10 : i32, message = "bqd,bkd->bqk"}> : () -> ()
    %cst_75 = arith.constant dense<0.000000e+00> : vector<4x8x8xf32>
    %261 = tpu.matmul %256, %258, %cst_75 {dimension_numbers = #tpu.dot_dimension_numbers<[2], [2], [1], [1], [0, 0, 0, 1, 1, 1], [0], [0]>} : vector<4x8x8xf32>, vector<4x8x8xf32>, vector<4x8x8xf32> -> vector<4x8x8xf32>
    "tpu.trace_stop"() : () -> ()
    %cst_76 = arith.constant 0.353553385 : f32
    %262 = vector.broadcast %cst_76 : f32 to vector<4x8x8xf32>
    %263 = arith.mulf %261, %262 : vector<4x8x8xf32>
    %264 = arith.addf %263, %38 : vector<4x8x8xf32>
    %cst_77 = arith.constant dense<0xFF800000> : vector<4x8xf32>
    %265 = vector.multi_reduction <maximumf>, %264, %cst_77 [2] : vector<4x8x8xf32> to vector<4x8xf32>
    %266 = vector.shape_cast %265 : vector<4x8xf32> to vector<4x8x1xf32>
    %267 = vector.broadcast %266 : vector<4x8x1xf32> to vector<4x8x8xf32>
    %268 = arith.subf %264, %267 : vector<4x8x8xf32>
    %269 = math.exp %268 : vector<4x8x8xf32>
    %cst_78 = arith.constant dense<0.000000e+00> : vector<4x8xf32>
    %270 = vector.multi_reduction <add>, %269, %cst_78 [2] : vector<4x8x8xf32> to vector<4x8xf32>
    %271 = vector.shape_cast %270 : vector<4x8xf32> to vector<4x8x1xf32>
    %272 = tpu.reciprocal %271 {approx = true} : vector<4x8x1xf32> -> vector<4x8x1xf32>
    %273 = vector.broadcast %272 : vector<4x8x1xf32> to vector<4x8x8xf32>
    %274 = arith.mulf %269, %273 : vector<4x8x8xf32>
    "tpu.trace_start"() <{level = 10 : i32, message = "bqk,bkd->bqd"}> : () -> ()
    %cst_79 = arith.constant dense<0.000000e+00> : vector<4x8x8xf32>
    %275 = tpu.matmul %274, %260, %cst_79 {dimension_numbers = #tpu.dot_dimension_numbers<[2], [1], [1], [2], [0, 0, 0, 1, 1, 2], [0], [0]>} : vector<4x8x8xf32>, vector<4x8x8xf32>, vector<4x8x8xf32> -> vector<4x8x8xf32>
    "tpu.trace_stop"() : () -> ()
    %276 = vector.extract_strided_slice %212 {offsets = [0, 24], sizes = [32, 8], strides = [1, 1]} : vector<32x96xf32> to vector<32x8xf32>
    %277 = vector.shape_cast %276 : vector<32x8xf32> to vector<4x8x8xf32>
    %278 = vector.extract_strided_slice %212 {offsets = [0, 56], sizes = [32, 8], strides = [1, 1]} : vector<32x96xf32> to vector<32x8xf32>
    %279 = vector.shape_cast %278 : vector<32x8xf32> to vector<4x8x8xf32>
    %280 = vector.extract_strided_slice %212 {offsets = [0, 88], sizes = [32, 8], strides = [1, 1]} : vector<32x96xf32> to vector<32x8xf32>
    %281 = vector.shape_cast %280 : vector<32x8xf32> to vector<4x8x8xf32>
    "tpu.trace_start"() <{level = 10 : i32, message = "bqd,bkd->bqk"}> : () -> ()
    %cst_80 = arith.constant dense<0.000000e+00> : vector<4x8x8xf32>
    %282 = tpu.matmul %277, %279, %cst_80 {dimension_numbers = #tpu.dot_dimension_numbers<[2], [2], [1], [1], [0, 0, 0, 1, 1, 1], [0], [0]>} : vector<4x8x8xf32>, vector<4x8x8xf32>, vector<4x8x8xf32> -> vector<4x8x8xf32>
    "tpu.trace_stop"() : () -> ()
    %cst_81 = arith.constant 0.353553385 : f32
    %283 = vector.broadcast %cst_81 : f32 to vector<4x8x8xf32>
    %284 = arith.mulf %282, %283 : vector<4x8x8xf32>
    %285 = arith.addf %284, %38 : vector<4x8x8xf32>
    %cst_82 = arith.constant dense<0xFF800000> : vector<4x8xf32>
    %286 = vector.multi_reduction <maximumf>, %285, %cst_82 [2] : vector<4x8x8xf32> to vector<4x8xf32>
    %287 = vector.shape_cast %286 : vector<4x8xf32> to vector<4x8x1xf32>
    %288 = vector.broadcast %287 : vector<4x8x1xf32> to vector<4x8x8xf32>
    %289 = arith.subf %285, %288 : vector<4x8x8xf32>
    %290 = math.exp %289 : vector<4x8x8xf32>
    %cst_83 = arith.constant dense<0.000000e+00> : vector<4x8xf32>
    %291 = vector.multi_reduction <add>, %290, %cst_83 [2] : vector<4x8x8xf32> to vector<4x8xf32>
    %292 = vector.shape_cast %291 : vector<4x8xf32> to vector<4x8x1xf32>
    %293 = tpu.reciprocal %292 {approx = true} : vector<4x8x1xf32> -> vector<4x8x1xf32>
    %294 = vector.broadcast %293 : vector<4x8x1xf32> to vector<4x8x8xf32>
    %295 = arith.mulf %290, %294 : vector<4x8x8xf32>
    "tpu.trace_start"() <{level = 10 : i32, message = "bqk,bkd->bqd"}> : () -> ()
    %cst_84 = arith.constant dense<0.000000e+00> : vector<4x8x8xf32>
    %296 = tpu.matmul %295, %281, %cst_84 {dimension_numbers = #tpu.dot_dimension_numbers<[2], [1], [1], [2], [0, 0, 0, 1, 1, 2], [0], [0]>} : vector<4x8x8xf32>, vector<4x8x8xf32>, vector<4x8x8xf32> -> vector<4x8x8xf32>
    "tpu.trace_stop"() : () -> ()
    %297 = tpu.concatenate %233, %254, %275, %296 in 2 : vector<4x8x8xf32>, vector<4x8x8xf32>, vector<4x8x8xf32>, vector<4x8x8xf32> -> vector<4x8x32xf32>
    %298 = vector.shape_cast %297 : vector<4x8x32xf32> to vector<32x32xf32>
    %c400 = arith.constant 400 : index
    %c0_85 = arith.constant 0 : index
    %299 = vector.load %arg3[%c400, %c0_85] : memref<552x128xf32, #tpu.memory_space<vmem>>, vector<32x32xf32>
    %cst_86 = arith.constant dense<0.000000e+00> : vector<32x32xf32>
    %300 = tpu.matmul %298, %299, %cst_86 {dimension_numbers = #tpu.dot_dimension_numbers<[1], [0], [0], [1], [0, 0, 1, 1], [], []>} : vector<32x32xf32>, vector<32x32xf32>, vector<32x32xf32> -> vector<32x32xf32>
    %c539 = arith.constant 539 : index
    %c0_87 = arith.constant 0 : index
    %301 = vector.load %arg3[%c539, %c0_87] : memref<552x128xf32, #tpu.memory_space<vmem>>, vector<1x32xf32>
    %302 = vector.broadcast %301 : vector<1x32xf32> to vector<32x32xf32>
    %303 = arith.addf %300, %302 : vector<32x32xf32>
    %304 = arith.addf %207, %303 : vector<32x32xf32>
    %c540 = arith.constant 540 : index
    %c0_88 = arith.constant 0 : index
    %305 = vector.load %arg3[%c540, %c0_88] : memref<552x128xf32, #tpu.memory_space<vmem>>, vector<1x32xf32>
    %c541 = arith.constant 541 : index
    %c0_89 = arith.constant 0 : index
    %306 = vector.load %arg3[%c541, %c0_89] : memref<552x128xf32, #tpu.memory_space<vmem>>, vector<1x32xf32>
    %cst_90 = arith.constant dense<0.000000e+00> : vector<32xf32>
    %307 = vector.multi_reduction <add>, %304, %cst_90 [1] : vector<32x32xf32> to vector<32xf32>
    %308 = vector.shape_cast %307 : vector<32xf32> to vector<32x1xf32>
    %cst_91 = arith.constant 3.200000e+01 : f32
    %309 = vector.broadcast %cst_91 : f32 to vector<32x1xf32>
    %310 = arith.divf %308, %309 : vector<32x1xf32>
    %311 = vector.broadcast %310 : vector<32x1xf32> to vector<32x32xf32>
    %312 = arith.subf %304, %311 : vector<32x32xf32>
    %313 = arith.mulf %312, %312 : vector<32x32xf32>
    %cst_92 = arith.constant dense<0.000000e+00> : vector<32xf32>
    %314 = vector.multi_reduction <add>, %313, %cst_92 [1] : vector<32x32xf32> to vector<32xf32>
    %315 = vector.shape_cast %314 : vector<32xf32> to vector<32x1xf32>
    %cst_93 = arith.constant 3.200000e+01 : f32
    %316 = vector.broadcast %cst_93 : f32 to vector<32x1xf32>
    %317 = arith.divf %315, %316 : vector<32x1xf32>
    %318 = vector.broadcast %310 : vector<32x1xf32> to vector<32x32xf32>
    %319 = arith.subf %304, %318 : vector<32x32xf32>
    %cst_94 = arith.constant 9.99999996E-13 : f32
    %320 = vector.broadcast %cst_94 : f32 to vector<32x1xf32>
    %321 = arith.addf %317, %320 : vector<32x1xf32>
    %322 = math.rsqrt %321 : vector<32x1xf32>
    %323 = vector.broadcast %322 : vector<32x1xf32> to vector<32x32xf32>
    %324 = arith.mulf %319, %323 : vector<32x32xf32>
    %325 = vector.broadcast %305 : vector<1x32xf32> to vector<32x32xf32>
    %326 = arith.mulf %324, %325 : vector<32x32xf32>
    %327 = vector.broadcast %306 : vector<1x32xf32> to vector<32x32xf32>
    %328 = arith.addf %326, %327 : vector<32x32xf32>
    %c432 = arith.constant 432 : index
    %c0_95 = arith.constant 0 : index
    %329 = vector.load %arg3[%c432, %c0_95] : memref<552x128xf32, #tpu.memory_space<vmem>>, vector<32x64xf32>
    %cst_96 = arith.constant dense<0.000000e+00> : vector<32x64xf32>
    %330 = tpu.matmul %328, %329, %cst_96 {dimension_numbers = #tpu.dot_dimension_numbers<[1], [0], [0], [1], [0, 0, 1, 1], [], []>} : vector<32x32xf32>, vector<32x64xf32>, vector<32x64xf32> -> vector<32x64xf32>
    %c542 = arith.constant 542 : index
    %c0_97 = arith.constant 0 : index
    %331 = vector.load %arg3[%c542, %c0_97] : memref<552x128xf32, #tpu.memory_space<vmem>>, vector<1x64xf32>
    %332 = vector.broadcast %331 : vector<1x64xf32> to vector<32x64xf32>
    %333 = arith.addf %330, %332 : vector<32x64xf32>
    %cst_98 = arith.constant 5.000000e-01 : f32
    %334 = vector.broadcast %cst_98 : f32 to vector<32x64xf32>
    %335 = arith.mulf %334, %333 : vector<32x64xf32>
    %cst_99 = arith.constant 4.471500e-02 : f32
    %336 = vector.broadcast %cst_99 : f32 to vector<32x64xf32>
    %337 = arith.mulf %336, %333 : vector<32x64xf32>
    %338 = arith.mulf %337, %333 : vector<32x64xf32>
    %339 = arith.mulf %338, %333 : vector<32x64xf32>
    %340 = arith.addf %333, %339 : vector<32x64xf32>
    %cst_100 = arith.constant 0.797884583 : f32
    %341 = vector.broadcast %cst_100 : f32 to vector<32x64xf32>
    %342 = arith.mulf %341, %340 : vector<32x64xf32>
    %343 = math.tanh %342 : vector<32x64xf32>
    %cst_101 = arith.constant 1.000000e+00 : f32
    %344 = vector.broadcast %cst_101 : f32 to vector<32x64xf32>
    %345 = arith.addf %344, %343 : vector<32x64xf32>
    %346 = arith.mulf %335, %345 : vector<32x64xf32>
    %c464 = arith.constant 464 : index
    %c0_102 = arith.constant 0 : index
    %347 = vector.load %arg3[%c464, %c0_102] : memref<552x128xf32, #tpu.memory_space<vmem>>, vector<64x32xf32>
    %cst_103 = arith.constant dense<0.000000e+00> : vector<32x32xf32>
    %348 = tpu.matmul %346, %347, %cst_103 {dimension_numbers = #tpu.dot_dimension_numbers<[1], [0], [0], [1], [0, 0, 1, 1], [], []>} : vector<32x64xf32>, vector<64x32xf32>, vector<32x32xf32> -> vector<32x32xf32>
    %c543 = arith.constant 543 : index
    %c0_104 = arith.constant 0 : index
    %349 = vector.load %arg3[%c543, %c0_104] : memref<552x128xf32, #tpu.memory_space<vmem>>, vector<1x32xf32>
    %350 = vector.broadcast %349 : vector<1x32xf32> to vector<32x32xf32>
    %351 = arith.addf %348, %350 : vector<32x32xf32>
    %352 = arith.addf %328, %351 : vector<32x32xf32>
    %c544 = arith.constant 544 : index
    %c0_105 = arith.constant 0 : index
    %353 = vector.load %arg3[%c544, %c0_105] : memref<552x128xf32, #tpu.memory_space<vmem>>, vector<1x32xf32>
    %c545 = arith.constant 545 : index
    %c0_106 = arith.constant 0 : index
    %354 = vector.load %arg3[%c545, %c0_106] : memref<552x128xf32, #tpu.memory_space<vmem>>, vector<1x32xf32>
    %cst_107 = arith.constant dense<0.000000e+00> : vector<32xf32>
    %355 = vector.multi_reduction <add>, %352, %cst_107 [1] : vector<32x32xf32> to vector<32xf32>
    %356 = vector.shape_cast %355 : vector<32xf32> to vector<32x1xf32>
    %cst_108 = arith.constant 3.200000e+01 : f32
    %357 = vector.broadcast %cst_108 : f32 to vector<32x1xf32>
    %358 = arith.divf %356, %357 : vector<32x1xf32>
    %359 = vector.broadcast %358 : vector<32x1xf32> to vector<32x32xf32>
    %360 = arith.subf %352, %359 : vector<32x32xf32>
    %361 = arith.mulf %360, %360 : vector<32x32xf32>
    %cst_109 = arith.constant dense<0.000000e+00> : vector<32xf32>
    %362 = vector.multi_reduction <add>, %361, %cst_109 [1] : vector<32x32xf32> to vector<32xf32>
    %363 = vector.shape_cast %362 : vector<32xf32> to vector<32x1xf32>
    %cst_110 = arith.constant 3.200000e+01 : f32
    %364 = vector.broadcast %cst_110 : f32 to vector<32x1xf32>
    %365 = arith.divf %363, %364 : vector<32x1xf32>
    %366 = vector.broadcast %358 : vector<32x1xf32> to vector<32x32xf32>
    %367 = arith.subf %352, %366 : vector<32x32xf32>
    %cst_111 = arith.constant 9.99999996E-13 : f32
    %368 = vector.broadcast %cst_111 : f32 to vector<32x1xf32>
    %369 = arith.addf %365, %368 : vector<32x1xf32>
    %370 = math.rsqrt %369 : vector<32x1xf32>
    %371 = vector.broadcast %370 : vector<32x1xf32> to vector<32x32xf32>
    %372 = arith.mulf %367, %371 : vector<32x32xf32>
    %373 = vector.broadcast %353 : vector<1x32xf32> to vector<32x32xf32>
    %374 = arith.mulf %372, %373 : vector<32x32xf32>
    %375 = vector.broadcast %354 : vector<1x32xf32> to vector<32x32xf32>
    %376 = arith.addf %374, %375 : vector<32x32xf32>
    %c176 = arith.constant 176 : index
    %c0_112 = arith.constant 0 : index
    %377 = vector.load %arg3[%c176, %c0_112] : memref<552x128xf32, #tpu.memory_space<vmem>>, vector<32x32xf32>
    %cst_113 = arith.constant dense<0.000000e+00> : vector<32x32xf32>
    %378 = tpu.matmul %376, %377, %cst_113 {dimension_numbers = #tpu.dot_dimension_numbers<[1], [0], [0], [1], [0, 0, 1, 1], [], []>} : vector<32x32xf32>, vector<32x32xf32>, vector<32x32xf32> -> vector<32x32xf32>
    %c546 = arith.constant 546 : index
    %c0_114 = arith.constant 0 : index
    %379 = vector.load %arg3[%c546, %c0_114] : memref<552x128xf32, #tpu.memory_space<vmem>>, vector<1x32xf32>
    %380 = vector.broadcast %379 : vector<1x32xf32> to vector<32x32xf32>
    %381 = arith.addf %378, %380 : vector<32x32xf32>
    %cst_115 = arith.constant 5.000000e-01 : f32
    %382 = vector.broadcast %cst_115 : f32 to vector<32x32xf32>
    %383 = arith.mulf %382, %381 : vector<32x32xf32>
    %cst_116 = arith.constant 4.471500e-02 : f32
    %384 = vector.broadcast %cst_116 : f32 to vector<32x32xf32>
    %385 = arith.mulf %384, %381 : vector<32x32xf32>
    %386 = arith.mulf %385, %381 : vector<32x32xf32>
    %387 = arith.mulf %386, %381 : vector<32x32xf32>
    %388 = arith.addf %381, %387 : vector<32x32xf32>
    %cst_117 = arith.constant 0.797884583 : f32
    %389 = vector.broadcast %cst_117 : f32 to vector<32x32xf32>
    %390 = arith.mulf %389, %388 : vector<32x32xf32>
    %391 = math.tanh %390 : vector<32x32xf32>
    %cst_118 = arith.constant 1.000000e+00 : f32
    %392 = vector.broadcast %cst_118 : f32 to vector<32x32xf32>
    %393 = arith.addf %392, %391 : vector<32x32xf32>
    %394 = arith.mulf %383, %393 : vector<32x32xf32>
    %c547 = arith.constant 547 : index
    %c0_119 = arith.constant 0 : index
    %395 = vector.load %arg3[%c547, %c0_119] : memref<552x128xf32, #tpu.memory_space<vmem>>, vector<1x32xf32>
    %c548 = arith.constant 548 : index
    %c0_120 = arith.constant 0 : index
    %396 = vector.load %arg3[%c548, %c0_120] : memref<552x128xf32, #tpu.memory_space<vmem>>, vector<1x32xf32>
    %cst_121 = arith.constant dense<0.000000e+00> : vector<32xf32>
    %397 = vector.multi_reduction <add>, %394, %cst_121 [1] : vector<32x32xf32> to vector<32xf32>
    %398 = vector.shape_cast %397 : vector<32xf32> to vector<32x1xf32>
    %cst_122 = arith.constant 3.200000e+01 : f32
    %399 = vector.broadcast %cst_122 : f32 to vector<32x1xf32>
    %400 = arith.divf %398, %399 : vector<32x1xf32>
    %401 = vector.broadcast %400 : vector<32x1xf32> to vector<32x32xf32>
    %402 = arith.subf %394, %401 : vector<32x32xf32>
    %403 = arith.mulf %402, %402 : vector<32x32xf32>
    %cst_123 = arith.constant dense<0.000000e+00> : vector<32xf32>
    %404 = vector.multi_reduction <add>, %403, %cst_123 [1] : vector<32x32xf32> to vector<32xf32>
    %405 = vector.shape_cast %404 : vector<32xf32> to vector<32x1xf32>
    %cst_124 = arith.constant 3.200000e+01 : f32
    %406 = vector.broadcast %cst_124 : f32 to vector<32x1xf32>
    %407 = arith.divf %405, %406 : vector<32x1xf32>
    %408 = vector.broadcast %400 : vector<32x1xf32> to vector<32x32xf32>
    %409 = arith.subf %394, %408 : vector<32x32xf32>
    %cst_125 = arith.constant 9.99999996E-13 : f32
    %410 = vector.broadcast %cst_125 : f32 to vector<32x1xf32>
    %411 = arith.addf %407, %410 : vector<32x1xf32>
    %412 = math.rsqrt %411 : vector<32x1xf32>
    %413 = vector.broadcast %412 : vector<32x1xf32> to vector<32x32xf32>
    %414 = arith.mulf %409, %413 : vector<32x32xf32>
    %415 = vector.broadcast %395 : vector<1x32xf32> to vector<32x32xf32>
    %416 = arith.mulf %414, %415 : vector<32x32xf32>
    %417 = vector.broadcast %396 : vector<1x32xf32> to vector<32x32xf32>
    %418 = arith.addf %416, %417 : vector<32x32xf32>
    %c0_126 = arith.constant 0 : index
    %c0_127 = arith.constant 0 : index
    %419 = vector.load %arg3[%c0_126, %c0_127] : memref<552x128xf32, #tpu.memory_space<vmem>>, vector<32x128xf32>
    %cst_128 = arith.constant dense<0.000000e+00> : vector<32x128xf32>
    %420 = tpu.matmul %418, %419, %cst_128 {dimension_numbers = #tpu.dot_dimension_numbers<[1], [0], [0], [1], [0, 0, 1, 1], [], []>} : vector<32x32xf32>, vector<32x128xf32>, vector<32x128xf32> -> vector<32x128xf32>
    %c549 = arith.constant 549 : index
    %c0_129 = arith.constant 0 : index
    %421 = vector.load %arg3[%c549, %c0_129] : memref<552x128xf32, #tpu.memory_space<vmem>>, vector<1x128xf32>
    %422 = vector.broadcast %421 : vector<1x128xf32> to vector<32x128xf32>
    %423 = arith.addf %420, %422 : vector<32x128xf32>
    %424 = vector.extract_strided_slice %423 {offsets = [16, 0], sizes = [16, 128], strides = [1, 1]} : vector<32x128xf32> to vector<16x128xf32>
    %c0_130 = arith.constant 0 : index
    %c0_131 = arith.constant 0 : index
    %425 = vector.load %arg4[%c0_130, %c0_131] : memref<16x128xf32, #tpu.memory_space<vmem>>, vector<16x128xf32>
    tpu.vector_store %arg4[%c0_130, %c0_131], %424 {strides = array<i32>} : memref<16x128xf32, #tpu.memory_space<vmem>>, vector<16x128xf32>,
    %426 = vector.extract_strided_slice %423 {offsets = [0, 0], sizes = [16, 128], strides = [1, 1]} : vector<32x128xf32> to vector<16x128xf32>
    %cst_132 = arith.constant dense<0xFF800000> : vector<16xf32>
    %427 = vector.multi_reduction <maximumf>, %426, %cst_132 [1] : vector<16x128xf32> to vector<16xf32>
    %428 = vector.shape_cast %427 : vector<16xf32> to vector<16x1xf32>
    %429 = vector.broadcast %428 : vector<16x1xf32> to vector<16x128xf32>
    %430 = arith.subf %426, %429 : vector<16x128xf32>
    %431 = math.exp %430 : vector<16x128xf32>
    %cst_133 = arith.constant dense<0.000000e+00> : vector<16xf32>
    %432 = vector.multi_reduction <add>, %431, %cst_133 [1] : vector<16x128xf32> to vector<16xf32>
    %433 = vector.shape_cast %432 : vector<16xf32> to vector<16x1xf32>
    %434 = math.log %433 : vector<16x1xf32>
    %435 = arith.addf %434, %428 : vector<16x1xf32>
    %436 = arith.mulf %426, %5 : vector<16x128xf32>
    %cst_134 = arith.constant dense<0.000000e+00> : vector<16xf32>
    %437 = vector.multi_reduction <add>, %436, %cst_134 [1] : vector<16x128xf32> to vector<16xf32>
    %438 = vector.shape_cast %437 : vector<16xf32> to vector<16x1xf32>
    %439 = arith.subf %435, %438 : vector<16x1xf32>
    %cst_135 = arith.constant dense<0.000000e+00> : vector<1xf32>
    %440 = vector.multi_reduction <add>, %439, %cst_135 [0] : vector<16x1xf32> to vector<1xf32>
    %441 = vector.shape_cast %440 : vector<1xf32> to vector<1x1xf32>
    %442 = vector.extract %441[0, 0] : f32 from vector<1x1xf32>
    %cst_136 = arith.constant 6.250000e-02 : f32
    %443 = arith.mulf %442, %cst_136 : f32
    %c0_137 = arith.constant 0 : index
    %c0_138 = arith.constant 0 : index
    %444 = memref.load %arg5[%c0_137, %c0_138] : memref<1x1xf32, #tpu.memory_space<smem>>
    memref.store %443, %arg5[%c0_137, %c0_138] : memref<1x1xf32, #tpu.memory_space<smem>>
    return
  }
  func.func @transform_0(%arg0: i32) -> (i32, i32) {
    %c0_i32 = arith.constant 0 : i32
    %c0_i32_0 = arith.constant 0 : i32
    %c0_i32_1 = arith.constant 0 : i32
    return %c0_i32, %c0_i32_0 : i32, i32
  }
  func.func @transform_1(%arg0: i32) -> (i32, i32) {
    %c0_i32 = arith.constant 0 : i32
    %c0_i32_0 = arith.constant 0 : i32
    %c0_i32_1 = arith.constant 0 : i32
    return %c0_i32, %c0_i32_0 : i32, i32
  }
  func.func @transform_2(%arg0: i32) -> (i32, i32) {
    %c0_i32 = arith.constant 0 : i32
    %c0_i32_0 = arith.constant 0 : i32
    %c0_i32_1 = arith.constant 0 : i32
    return %c0_i32, %c0_i32_0 : i32, i32
  }
  func.func @transform_3(%arg0: i32) -> (i32, i32) {
    %c0_i32 = arith.constant 0 : i32
    %c0_i32_0 = arith.constant 0 : i32
    %c0_i32_1 = arith.constant 0 : i32
    return %c0_i32, %c0_i32_0 : i32, i32
  }
  func.func @transform_4(%arg0: i32) -> (i32, i32) {
    %c0_i32 = arith.constant 0 : i32
    %c0_i32_0 = arith.constant 0 : i32
    %c0_i32_1 = arith.constant 0 : i32
    return %c0_i32, %c0_i32_0 : i32, i32
  }
}

</mosaic_0001>

<llo_original>
// kernel: tpu_custom_call.1
$region0: #{tpu_custom_call.1}
  #allocation0 [shape = 'u32[]', space=smem, size = 0x4, offset = 0x4, fixed_abs, tag = 'smem constant byte address 0x4 - core index']
  #allocation1 [shape = 'u32[144,128]{1,0:T(1,128)}', space=vmem, size = 0x12000, scoped, tag = 'internal scratch']
  %s0 = inlined_call_operand.vmem [shape: s32[16,1], index: 0, kind: input, shape index: {}]
  %s1 = inlined_call_operand.vmem [shape: f32[4,8], index: 1, kind: input, shape index: {}]
  %s2 = inlined_call_operand.hbm [shape: f32[552,128], index: 2, kind: input, shape index: {}]
  %s3 = inlined_call_operand.hbm [shape: f32[16,128], index: 3, kind: output, shape index: {0}]
  %s4 = inlined_call_operand.hbm [shape: f32[1,1], index: 4, kind: output, shape index: {1}]
  %5 = xla_tuple %s3, %s4
  %s6 = sld [smem:[#allocation0]]
  $region34: #{tpu_custom_call.1} parent=0
    _
  %s8 = ssub.s32 1, %s6
  %s9 = scalar_select 0, %s8, %s6
  $region1: #{tpu_custom_call.1} parent=0
    #allocation2 [shape = 'u8[282624]{0}', space=vmem, size = 0x45000, scoped, tag = 'input window, operand 2, single buffered']
    #allocation3 [shape = 's32[1]{0}', space=sflag, size = 0x4, scoped, tag = 'scoped memory for tpu_custom_call.1']
    #allocation4 [shape = 's32[1]{0}', space=sflag, size = 0x4, scoped, tag = 'scoped memory for tpu_custom_call.1']
    #allocation5 [shape = 's32[1]{0}', space=sflag, size = 0x4, scoped, tag = 'scoped memory for tpu_custom_call.1']
    #allocation6 [shape = 'u8[8192]{0}', space=vmem, size = 0x2000, scoped, tag = 'output window, operand 0, single buffered']
    #allocation7 [shape = 'u8[512]{0}', space=smem, size = 0x200, scoped, tag = 'output window, operand 1, single buffered']
    %10 = vsyncpa [#allocation3], 0
    %11 = vsyncpa [#allocation4], 0
    %12 = vsyncpa [#allocation5], 0
    // Predicated region
    $region2: #{tpu_custom_call.1} parent=1 // pred_check
      _
    $region3: #{tpu_custom_call.1} parent=1 // pred_check_branch
      %14 = sbr.rel (0) target = $region5
    $region4: #{tpu_custom_call.1} parent=1 // pred_region
      _
    $region5: #{tpu_custom_call.1} parent=1 // pred_fallthru
      _
    // Predicated region
    $region6: #{tpu_custom_call.1} parent=1 // pred_check
      _
    $region7: #{tpu_custom_call.1} parent=1 // pred_check_branch
      %16 = sbr.rel (0) target = $region9
    $region8: #{tpu_custom_call.1} parent=1 // pred_region
      _
    $region9: #{tpu_custom_call.1} parent=1 // pred_fallthru
      _
    // Predicated region
    $region10: #{tpu_custom_call.1} parent=1 // pred_check
      _
    $region11: #{tpu_custom_call.1} parent=1 // pred_check_branch
      %18 = sbr.rel (0) target = $region13
    $region12: #{tpu_custom_call.1} parent=1 // pred_region
      %s20 = ssub.s32 8832, 8832
      %21 = vsyncadd [#allocation3], %s20
      %s22 = sshll.u32 [#allocation2], 4
      %s23 = int_to_ptr.vmem [resolvable:$true] %s22
      %28 = dma.hbm_to_vmem [thread:$0]  %s2, 8832, %s23, [#allocation3], 128, 128, 8
    $region13: #{tpu_custom_call.1} parent=1 // pred_fallthru
      _
    // Predicated region
    $region14: #{tpu_custom_call.1} parent=1 // pred_check
      _
    $region15: #{tpu_custom_call.1} parent=1 // pred_check_branch
      %30 = sbr.rel (0) target = $region17
    $region16: #{tpu_custom_call.1} parent=1 // pred_region
      %31 = dma.done [#allocation3], 8832
    $region17: #{tpu_custom_call.1} parent=1 // pred_fallthru
      _
    %v32 = vld [vmem:[%s0] sm:$0xff]
    %v33 = vld [vmem:[%s0 + $0x8] sm:$0xff]
    %v34 = vlaneseq
    %v35 = vand.u32 %v34, 127
    %36 = vset.pattern.permute.xlu0 0
    %37 = vperm.xlu0 %36, %v32
    %v38 = vpop.permute.xlu0 %37
    %39 = vset.pattern.permute.xlu0 0
    %40 = vperm.xlu0 %39, %v33
    %v41 = vpop.permute.xlu0 %40
    %vm42 = vcmp.eq.s32.totalorder %v35, %v38
    %vm43 = vcmp.eq.s32.totalorder %v35, %v41
    %v44 = vsel %vm42, 1, 0
    %v45 = vsel %vm43, 1, 0
    %v46 = vcvt.s32.f32 %v44
    %v47 = vcvt.s32.f32 %v45
    %v48 = vld [vmem:[#allocation2 + $0x20] sm:$0xff]
    %v49 = vld [vmem:[#allocation2 + $0x28] sm:$0xff]
    %v50 = vld [vmem:[#allocation2 + $0x30] sm:$0xff]
    %v51 = vld [vmem:[#allocation2 + $0x38] sm:$0xff]
    %v52 = vld [vmem:[#allocation2 + $0x40] sm:$0xff]
    %v53 = vld [vmem:[#allocation2 + $0x48] sm:$0xff]
    %v54 = vld [vmem:[#allocation2 + $0x50] sm:$0xff]
    %v55 = vld [vmem:[#allocation2 + $0x58] sm:$0xff]
    %v56 = vld [vmem:[#allocation2 + $0x60] sm:$0xff]
    %v57 = vld [vmem:[#allocation2 + $0x68] sm:$0xff]
    %v58 = vld [vmem:[#allocation2 + $0x70] sm:$0xff]
    %v59 = vld [vmem:[#allocation2 + $0x78] sm:$0xff]
    %v60 = vld [vmem:[#allocation2 + $0x80] sm:$0xff]
    %v61 = vld [vmem:[#allocation2 + $0x88] sm:$0xff]
    %v62 = vld [vmem:[#allocation2 + $0x90] sm:$0xff]
    %v63 = vld [vmem:[#allocation2 + $0x98] sm:$0xff]
    %v64 = vld [vmem:[#allocation2 + $0xa0] sm:$0xff]
    %v65 = vld [vmem:[#allocation2 + $0xa8] sm:$0xff]
    %66 = vmatprep.subr.mxu0 0.0
    %67 = vmatpush1.msra.mxu0 %v48
    %68 = vmatprep.subr.mxu0 0.0
    %69 = vmatpush1.msra.mxu0 %v49
    %70 = vmatprep.subr.mxu0 0.0
    %71 = vmatpush1.msra.mxu0 %v50
    %72 = vmatprep.subr.mxu0 0.0
    %73 = vmatpush1.msra.mxu0 %v51
    %74 = vmatprep.subr.mxu0 0.0
    %75 = vmatpush1.msra.mxu0 %v52
    %76 = vmatprep.subr.mxu0 0.0
    %77 = vmatpush1.msra.mxu0 %v53
    %78 = vmatprep.subr.mxu0 0.0
    %79 = vmatpush1.msra.mxu0 %v54
    %80 = vmatprep.subr.mxu0 0.0
    %81 = vmatpush1.msra.mxu0 %v55
    %82 = vmatprep.subr.mxu0 0.0
    %83 = vmatpush1.msra.mxu0 %v56
    %84 = vmatprep.subr.mxu0 0.0
    %85 = vmatpush1.msra.mxu0 %v57
    %86 = vmatprep.subr.mxu0 0.0
    %87 = vmatpush1.msra.mxu0 %v58
    %88 = vmatprep.subr.mxu0 0.0
    %89 = vmatpush1.msra.mxu0 %v59
    %90 = vmatprep.subr.mxu0 0.0
    %91 = vmatpush1.msra.mxu0 %v60
    %92 = vmatprep.subr.mxu0 0.0
    %93 = vmatpush1.msra.mxu0 %v61
    %94 = vmatprep.subr.mxu0 0.0
    %95 = vmatpush1.msra.mxu0 %v62
    %96 = vmatprep.subr.mxu0 0.0
    %97 = vmatpush1.msra.mxu0 %v63
    %98 = vmatprep.subr.mxu0 0.0
    %99 = vmatpush1.msra.mxu0 0.0
    %100 = vmatprep.subr.mxu0 0.0
    %101 = vmatpush1.msra.mxu0 0.0
    %102 = vmatprep.subr.mxu0 0.0
    %103 = vmatpush1.msra.mxu0 0.0
    %104 = vmatprep.subr.mxu0 0.0
    %105 = vmatpush1.msra.mxu0 0.0
    %106 = vmatprep.subr.mxu0 0.0
    %107 = vmatpush1.msra.mxu0 0.0
    %108 = vmatprep.subr.mxu0 0.0
    %109 = vmatpush1.msra.mxu0 0.0
    %110 = vmatprep.subr.mxu0 0.0
    %111 = vmatpush1.msra.mxu0 0.0
    %112 = vmatprep.subr.mxu0 0.0
    %113 = vmatpush1.msra.mxu0 0.0
    %114 = vmatprep.subr.mxu0 0.0
    %115 = vmatpush1.msra.mxu0 0.0
    %116 = vmatprep.subr.mxu0 0.0
    %117 = vmatpush1.msra.mxu0 0.0
    %118 = vmatprep.subr.mxu0 0.0
    %119 = vmatpush1.msra.mxu0 0.0
    %120 = vmatprep.subr.mxu0 0.0
    %121 = vmatpush1.msra.mxu0 0.0
    %122 = vmatprep.subr.mxu0 0.0
    %123 = vmatpush1.msra.mxu0 0.0
    %124 = vmatprep.subr.mxu0 0.0
    %125 = vmatpush1.msra.mxu0 0.0
    %126 = vmatprep.subr.mxu0 0.0
    %127 = vmatpush1.msra.mxu0 0.0
    %128 = vmatprep.subr.mxu0 0.0
    %129 = vmatpush1.msra.mxu0 0.0
    %130 = vmatprep.mubr.f32.mxu0 0.0
    %131 = vmatmul.mubr.f32.gmra.mrb[0].mxu0 %v46
    %v132 = vpop.f32.mrb[0].mxu0
    %v133 = vadd.f32 %v64, %v132
    %v134 = vpop.f32.mrb[0].mxu0
    %135 = vmatprep.mubr.f32.mxu0 0.0
    %136 = vmatmul.mubr.f32.gmra.mrb[0].mxu0 %v47
    %v137 = vpop.f32.mrb[0].mxu0
    %v138 = vadd.f32 %v65, %v137
    %v139 = vpop.f32.mrb[0].mxu0
    %140 = vdwg.mxu0
    %v141 = vld [vmem:[#allocation2 + $0x210] sm:$0x1]
    %v142 = vld [vmem:[#allocation2 + $0x211] sm:$0x1]
    %vm143 = vcmask 261120
    %v144 = vsel %vm143, %v133, 0.0
    %145 = vadd.xlane.f32.xlu0 %v144
    %v146 = vpop.xlane.xlu0 %145
    %v147 = vsel %vm143, %v138, 0.0
    %148 = vadd.xlane.f32.xlu0 %v147
    %v149 = vpop.xlane.xlu0 %148
    %v150 = vrcp.pop 32.0
    %v151 = vmul.f32 %v146, %v150
    %v152 = vmul.f32 %v149, %v150
    %v153 = vsub.f32 %v133, %v151
    %v154 = vsub.f32 %v138, %v152
    %v155 = vmul.f32 %v153, %v153
    %v156 = vmul.f32 %v154, %v154
    %v157 = vsel %vm143, %v155, 0.0
    %158 = vadd.xlane.f32.xlu0 %v157
    %v159 = vpop.xlane.xlu0 %158
    %v160 = vsel %vm143, %v156, 0.0
    %161 = vadd.xlane.f32.xlu0 %v160
    %v162 = vpop.xlane.xlu0 %161
    %v163 = vmul.f32 %v159, %v150
    %v164 = vmul.f32 %v162, %v150
    %v165 = vadd.f32 %v163, 1e-12
    %v166 = vadd.f32 %v164, 1e-12
    %v167 = vrsqrt.pop %v165
    %v168 = vrsqrt.pop %v166
    %v169 = vmul.f32 %v153, %v167
    %v170 = vmul.f32 %v154, %v168
    %v171 = vlaneseq
    %v172 = vshrl.u32 %v171, 7
    %v173 = vsub.s32 0, %v172
    %v174 = vrot.slane %v141, %v173
    %v175 = vmul.f32 %v169, %v174
    %v176 = vmul.f32 %v170, %v174
    %v177 = vlaneseq
    %v178 = vshrl.u32 %v177, 7
    %v179 = vsub.s32 0, %v178
    %v180 = vrot.slane %v142, %v179
    %v181 = vadd.f32 %v175, %v180
    %v182 = vadd.f32 %v176, %v180
    %v183 = vld [vmem:[%s1] sm:$0xf]
    %v186 = vunpack.c.l.s4 1966171168
    %v187 = vunpack.c.0.s8 %v186
    %v188 = vlaneseq
    %v189 = vshrl.u32 %v188, 7
    %v190 = vsub.s32 %v187, %v189
    %v191 = vrot.slane %v183, %v190
    %v192 = vcombine.high %v191, %v191
    %v194 = vunpack.c.l.s4 1966171168
    %v195 = vunpack.c.0.s8 %v194
    %v196 = vlaneseq
    %v197 = vshrl.u32 %v196, 7
    %v198 = vsub.s32 %v195, %v197
    %v199 = vrot.slane %v191, %v198
    %v201 = vunpack.c.l.s4 1966171168
    %v202 = vunpack.c.0.s8 %v201
    %v203 = vlaneseq
    %v204 = vshrl.u32 %v203, 7
    %v205 = vsub.s32 %v202, %v204
    %v206 = vrot.slane %v192, %v205
    %v207 = vcombine.high %v199, %v199
    %v208 = vcombine.high %v206, %v206
    %v209 = vlaneseq
    %v210 = vshrl.u32 %v209, 7
    %v211 = vsub.s32 0, %v210
    %v212 = vrot.slane %v199, %v211
    %v213 = vlaneseq
    %v214 = vshrl.u32 %v213, 7
    %v215 = vsub.s32 0, %v214
    %v216 = vrot.slane %v206, %v215
    %v217 = vlaneseq
    %v218 = vshrl.u32 %v217, 7
    %v219 = vsub.s32 0, %v218
    %v220 = vrot.slane %v207, %v219
    %v221 = vlaneseq
    %v222 = vshrl.u32 %v221, 7
    %v223 = vsub.s32 0, %v222
    %v224 = vrot.slane %v208, %v223
    %v229 = vld [vmem:[#allocation2 + $0xd0] sm:$0xff]
    %v230 = vld [vmem:[#allocation2 + $0xd8] sm:$0xff]
    %v231 = vld [vmem:[#allocation2 + $0xe0] sm:$0xff]
    %v232 = vld [vmem:[#allocation2 + $0xe8] sm:$0xff]
    %v233 = vld [vmem:[#allocation2 + $0x212] sm:$0x1]
    %v234 = vlaneseq
    %v235 = vshrl.u32 %v234, 7
    %v236 = vsub.s32 0, %v235
    %v237 = vrot.slane %v233, %v236
    %v239 = vsel %vm143, %v181, 0
    %v242 = vsel %vm143, %v182, 0
    %244 = vmatprep.subr.mxu0 0.0
    %245 = vmatpush1.msra.mxu0 %v229
    %246 = vmatprep.subr.mxu0 0.0
    %247 = vmatpush1.msra.mxu0 %v230
    %248 = vmatprep.subr.mxu0 0.0
    %249 = vmatpush1.msra.mxu0 %v231
    %250 = vmatprep.subr.mxu0 0.0
    %251 = vmatpush1.msra.mxu0 %v232
    %252 = vmatprep.subr.mxu0 0.0
    %253 = vmatpush1.msra.mxu0 0.0
    %254 = vmatprep.subr.mxu0 0.0
    %255 = vmatpush1.msra.mxu0 0.0
    %256 = vmatprep.subr.mxu0 0.0
    %257 = vmatpush1.msra.mxu0 0.0
    %258 = vmatprep.subr.mxu0 0.0
    %259 = vmatpush1.msra.mxu0 0.0
    %260 = vmatprep.subr.mxu0 0.0
    %261 = vmatpush1.msra.mxu0 0.0
    %262 = vmatprep.subr.mxu0 0.0
    %263 = vmatpush1.msra.mxu0 0.0
    %264 = vmatprep.subr.mxu0 0.0
    %265 = vmatpush1.msra.mxu0 0.0
    %266 = vmatprep.subr.mxu0 0.0
    %267 = vmatpush1.msra.mxu0 0.0
    %268 = vmatprep.subr.mxu0 0.0
    %269 = vmatpush1.msra.mxu0 0.0
    %270 = vmatprep.subr.mxu0 0.0
    %271 = vmatpush1.msra.mxu0 0.0
    %272 = vmatprep.subr.mxu0 0.0
    %273 = vmatpush1.msra.mxu0 0.0
    %274 = vmatprep.subr.mxu0 0.0
    %275 = vmatpush1.msra.mxu0 0.0
    %276 = vmatprep.subr.mxu0 0.0
    %277 = vmatpush1.msra.mxu0 0.0
    %278 = vmatprep.subr.mxu0 0.0
    %279 = vmatpush1.msra.mxu0 0.0
    %280 = vmatprep.subr.mxu0 0.0
    %281 = vmatpush1.msra.mxu0 0.0
    %282 = vmatprep.subr.mxu0 0.0
    %283 = vmatpush1.msra.mxu0 0.0
    %284 = vmatprep.subr.mxu0 0.0
    %285 = vmatpush1.msra.mxu0 0.0
    %286 = vmatprep.subr.mxu0 0.0
    %287 = vmatpush1.msra.mxu0 0.0
    %288 = vmatprep.subr.mxu0 0.0
    %289 = vmatpush1.msra.mxu0 0.0
    %290 = vmatprep.subr.mxu0 0.0
    %291 = vmatpush1.msra.mxu0 0.0
    %292 = vmatprep.subr.mxu0 0.0
    %293 = vmatpush1.msra.mxu0 0.0
    %294 = vmatprep.subr.mxu0 0.0
    %295 = vmatpush1.msra.mxu0 0.0
    %296 = vmatprep.subr.mxu0 0.0
    %297 = vmatpush1.msra.mxu0 0.0
    %298 = vmatprep.subr.mxu0 0.0
    %299 = vmatpush1.msra.mxu0 0.0
    %300 = vmatprep.subr.mxu0 0.0
    %301 = vmatpush1.msra.mxu0 0.0
    %302 = vmatprep.subr.mxu0 0.0
    %303 = vmatpush1.msra.mxu0 0.0
    %304 = vmatprep.subr.mxu0 0.0
    %305 = vmatpush1.msra.mxu0 0.0
    %306 = vmatprep.subr.mxu0 0.0
    %307 = vmatpush1.msra.mxu0 0.0
    %308 = vmatprep.mubr.f32.mxu0 0.0
    %309 = vmatmul.mubr.f32.gmra.mrb[0].mxu0 %v239
    %v310 = vpop.f32.mrb[0].mxu0
    %v311 = vadd.f32 %v237, %v310
    %v312 = vpop.f32.mrb[0].mxu0
    %313 = vmatprep.mubr.f32.mxu0 0.0
    %314 = vmatmul.mubr.f32.gmra.mrb[0].mxu0 %v242
    %v315 = vpop.f32.mrb[0].mxu0
    %v316 = vadd.f32 %v237, %v315
    %v317 = vpop.f32.mrb[0].mxu0
    %318 = vmatprep.mubr.f32.mxu0 0.0
    %319 = vmatmul.mubr.f32.gmra.mrb[0].mxu0 %v239
    %v320 = vpop.f32.mrb[0].mxu0
    %v321 = vadd.f32 %v237, %v320
    %v322 = vpop.f32.mrb[0].mxu0
    %323 = vmatprep.mubr.f32.mxu0 0.0
    %324 = vmatmul.mubr.f32.gmra.mrb[0].mxu0 %v242
    %v325 = vpop.f32.mrb[0].mxu0
    %v326 = vadd.f32 %v237, %v325
    %v327 = vpop.f32.mrb[0].mxu0
    %328 = vdwg.mxu0
    %330 = vrot.lane.b32.xlu0 %v311, 96
    %v331 = vpop.permute.xlu0 %330
    %vm332 = vcmask 64512
    %v333 = vsel %vm332, %v311, 0
    %v335 = vsel %vm332, %v331, 0
    %337 = vmatprep.subr.mxu0 0.0
    %338 = vmatpush1.xpose.msra.mxu0 %v335
    %339 = vmatprep.subr.mxu0 0.0
    %340 = vmatpush1.xpose.msra.mxu0 0.0
    %341 = vmatprep.subr.mxu0 0.0
    %342 = vmatpush1.xpose.msra.mxu0 0.0
    %343 = vmatprep.subr.mxu0 0.0
    %344 = vmatpush1.xpose.msra.mxu0 0.0
    %345 = vmatprep.subr.mxu0 0.0
    %346 = vmatpush1.xpose.msra.mxu0 0.0
    %347 = vmatprep.subr.mxu0 0.0
    %348 = vmatpush1.xpose.msra.mxu0 0.0
    %349 = vmatprep.subr.mxu0 0.0
    %350 = vmatpush1.xpose.msra.mxu0 0.0
    %351 = vmatprep.subr.mxu0 0.0
    %352 = vmatpush1.xpose.msra.mxu0 0.0
    %353 = vmatprep.subr.mxu0 0.0
    %354 = vmatpush1.xpose.msra.mxu0 0.0
    %355 = vmatprep.subr.mxu0 0.0
    %356 = vmatpush1.xpose.msra.mxu0 0.0
    %357 = vmatprep.subr.mxu0 0.0
    %358 = vmatpush1.xpose.msra.mxu0 0.0
    %359 = vmatprep.subr.mxu0 0.0
    %360 = vmatpush1.xpose.msra.mxu0 0.0
    %361 = vmatprep.subr.mxu0 0.0
    %362 = vmatpush1.xpose.msra.mxu0 0.0
    %363 = vmatprep.subr.mxu0 0.0
    %364 = vmatpush1.xpose.msra.mxu0 0.0
    %365 = vmatprep.subr.mxu0 0.0
    %366 = vmatpush1.xpose.msra.mxu0 0.0
    %367 = vmatprep.subr.mxu0 0.0
    %368 = vmatpush1.xpose.msra.mxu0 0.0
    %369 = vmatprep.subr.mxu0 0.0
    %370 = vmatpush1.xpose.msra.mxu0 0.0
    %371 = vmatprep.subr.mxu0 0.0
    %372 = vmatpush1.xpose.msra.mxu0 0.0
    %373 = vmatprep.subr.mxu0 0.0
    %374 = vmatpush1.xpose.msra.mxu0 0.0
    %375 = vmatprep.subr.mxu0 0.0
    %376 = vmatpush1.xpose.msra.mxu0 0.0
    %377 = vmatprep.subr.mxu0 0.0
    %378 = vmatpush1.xpose.msra.mxu0 0.0
    %379 = vmatprep.subr.mxu0 0.0
    %380 = vmatpush1.xpose.msra.mxu0 0.0
    %381 = vmatprep.subr.mxu0 0.0
    %382 = vmatpush1.xpose.msra.mxu0 0.0
    %383 = vmatprep.subr.mxu0 0.0
    %384 = vmatpush1.xpose.msra.mxu0 0.0
    %385 = vmatprep.subr.mxu0 0.0
    %386 = vmatpush1.xpose.msra.mxu0 0.0
    %387 = vmatprep.subr.mxu0 0.0
    %388 = vmatpush1.xpose.msra.mxu0 0.0
    %389 = vmatprep.subr.mxu0 0.0
    %390 = vmatpush1.xpose.msra.mxu0 0.0
    %391 = vmatprep.subr.mxu0 0.0
    %392 = vmatpush1.xpose.msra.mxu0 0.0
    %393 = vmatprep.subr.mxu0 0.0
    %394 = vmatpush1.xpose.msra.mxu0 0.0
    %395 = vmatprep.subr.mxu0 0.0
    %396 = vmatpush1.xpose.msra.mxu0 0.0
    %397 = vmatprep.subr.mxu0 0.0
    %398 = vmatpush1.xpose.msra.mxu0 0.0
    %399 = vmatprep.subr.mxu0 0.0
    %400 = vmatpush1.xpose.msra.mxu0 0.0
    %401 = vmatprep.mubr.f32.mxu0 0.0
    %402 = vmatmul.mubr.f32.gmra.mrb[0].mxu0 %v333
    %v403 = vpop.f32.mrb[0].mxu0
    %v404 = vadd.f32 0.0, %v403
    %v405 = vpop.f32.mrb[0].mxu0
    %406 = vdwg.mxu0
    %408 = vrot.lane.b32.xlu0 %v316, 96
    %v409 = vpop.permute.xlu0 %408
    %v410 = vsel %vm332, %v316, 0
    %v412 = vsel %vm332, %v409, 0
    %414 = vmatprep.subr.mxu0 0.0
    %415 = vmatpush1.xpose.msra.mxu0 %v412
    %416 = vmatprep.subr.mxu0 0.0
    %417 = vmatpush1.xpose.msra.mxu0 0.0
    %418 = vmatprep.subr.mxu0 0.0
    %419 = vmatpush1.xpose.msra.mxu0 0.0
    %420 = vmatprep.subr.mxu0 0.0
    %421 = vmatpush1.xpose.msra.mxu0 0.0
    %422 = vmatprep.subr.mxu0 0.0
    %423 = vmatpush1.xpose.msra.mxu0 0.0
    %424 = vmatprep.subr.mxu0 0.0
    %425 = vmatpush1.xpose.msra.mxu0 0.0
    %426 = vmatprep.subr.mxu0 0.0
    %427 = vmatpush1.xpose.msra.mxu0 0.0
    %428 = vmatprep.subr.mxu0 0.0
    %429 = vmatpush1.xpose.msra.mxu0 0.0
    %430 = vmatprep.subr.mxu0 0.0
    %431 = vmatpush1.xpose.msra.mxu0 0.0
    %432 = vmatprep.subr.mxu0 0.0
    %433 = vmatpush1.xpose.msra.mxu0 0.0
    %434 = vmatprep.subr.mxu0 0.0
    %435 = vmatpush1.xpose.msra.mxu0 0.0
    %436 = vmatprep.subr.mxu0 0.0
    %437 = vmatpush1.xpose.msra.mxu0 0.0
    %438 = vmatprep.subr.mxu0 0.0
    %439 = vmatpush1.xpose.msra.mxu0 0.0
    %440 = vmatprep.subr.mxu0 0.0
    %441 = vmatpush1.xpose.msra.mxu0 0.0
    %442 = vmatprep.subr.mxu0 0.0
    %443 = vmatpush1.xpose.msra.mxu0 0.0
    %444 = vmatprep.subr.mxu0 0.0
    %445 = vmatpush1.xpose.msra.mxu0 0.0
    %446 = vmatprep.subr.mxu0 0.0
    %447 = vmatpush1.xpose.msra.mxu0 0.0
    %448 = vmatprep.subr.mxu0 0.0
    %449 = vmatpush1.xpose.msra.mxu0 0.0
    %450 = vmatprep.subr.mxu0 0.0
    %451 = vmatpush1.xpose.msra.mxu0 0.0
    %452 = vmatprep.subr.mxu0 0.0
    %453 = vmatpush1.xpose.msra.mxu0 0.0
    %454 = vmatprep.subr.mxu0 0.0
    %455 = vmatpush1.xpose.msra.mxu0 0.0
    %456 = vmatprep.subr.mxu0 0.0
    %457 = vmatpush1.xpose.msra.mxu0 0.0
    %458 = vmatprep.subr.mxu0 0.0
    %459 = vmatpush1.xpose.msra.mxu0 0.0
    %460 = vmatprep.subr.mxu0 0.0
    %461 = vmatpush1.xpose.msra.mxu0 0.0
    %462 = vmatprep.subr.mxu0 0.0
    %463 = vmatpush1.xpose.msra.mxu0 0.0
    %464 = vmatprep.subr.mxu0 0.0
    %465 = vmatpush1.xpose.msra.mxu0 0.0
    %466 = vmatprep.subr.mxu0 0.0
    %467 = vmatpush1.xpose.msra.mxu0 0.0
    %468 = vmatprep.subr.mxu0 0.0
    %469 = vmatpush1.xpose.msra.mxu0 0.0
    %470 = vmatprep.subr.mxu0 0.0
    %471 = vmatpush1.xpose.msra.mxu0 0.0
    %472 = vmatprep.subr.mxu0 0.0
    %473 = vmatpush1.xpose.msra.mxu0 0.0
    %474 = vmatprep.subr.mxu0 0.0
    %475 = vmatpush1.xpose.msra.mxu0 0.0
    %476 = vmatprep.subr.mxu0 0.0
    %477 = vmatpush1.xpose.msra.mxu0 0.0
    %478 = vmatprep.mubr.f32.mxu0 0.0
    %479 = vmatmul.mubr.f32.gmra.mrb[0].mxu0 %v410
    %v480 = vpop.f32.mrb[0].mxu0
    %v481 = vadd.f32 0.0, %v480
    %v482 = vpop.f32.mrb[0].mxu0
    %483 = vdwg.mxu0
    %485 = vrot.lane.b32.xlu0 %v321, 96
    %v486 = vpop.permute.xlu0 %485
    %v487 = vsel %vm332, %v321, 0
    %v489 = vsel %vm332, %v486, 0
    %491 = vmatprep.subr.mxu0 0.0
    %492 = vmatpush1.xpose.msra.mxu0 %v489
    %493 = vmatprep.subr.mxu0 0.0
    %494 = vmatpush1.xpose.msra.mxu0 0.0
    %495 = vmatprep.subr.mxu0 0.0
    %496 = vmatpush1.xpose.msra.mxu0 0.0
    %497 = vmatprep.subr.mxu0 0.0
    %498 = vmatpush1.xpose.msra.mxu0 0.0
    %499 = vmatprep.subr.mxu0 0.0
    %500 = vmatpush1.xpose.msra.mxu0 0.0
    %501 = vmatprep.subr.mxu0 0.0
    %502 = vmatpush1.xpose.msra.mxu0 0.0
    %503 = vmatprep.subr.mxu0 0.0
    %504 = vmatpush1.xpose.msra.mxu0 0.0
    %505 = vmatprep.subr.mxu0 0.0
    %506 = vmatpush1.xpose.msra.mxu0 0.0
    %507 = vmatprep.subr.mxu0 0.0
    %508 = vmatpush1.xpose.msra.mxu0 0.0
    %509 = vmatprep.subr.mxu0 0.0
    %510 = vmatpush1.xpose.msra.mxu0 0.0
    %511 = vmatprep.subr.mxu0 0.0
    %512 = vmatpush1.xpose.msra.mxu0 0.0
    %513 = vmatprep.subr.mxu0 0.0
    %514 = vmatpush1.xpose.msra.mxu0 0.0
    %515 = vmatprep.subr.mxu0 0.0
    %516 = vmatpush1.xpose.msra.mxu0 0.0
    %517 = vmatprep.subr.mxu0 0.0
    %518 = vmatpush1.xpose.msra.mxu0 0.0
    %519 = vmatprep.subr.mxu0 0.0
    %520 = vmatpush1.xpose.msra.mxu0 0.0
    %521 = vmatprep.subr.mxu0 0.0
    %522 = vmatpush1.xpose.msra.mxu0 0.0
    %523 = vmatprep.subr.mxu0 0.0
    %524 = vmatpush1.xpose.msra.mxu0 0.0
    %525 = vmatprep.subr.mxu0 0.0
    %526 = vmatpush1.xpose.msra.mxu0 0.0
    %527 = vmatprep.subr.mxu0 0.0
    %528 = vmatpush1.xpose.msra.mxu0 0.0
    %529 = vmatprep.subr.mxu0 0.0
    %530 = vmatpush1.xpose.msra.mxu0 0.0
    %531 = vmatprep.subr.mxu0 0.0
    %532 = vmatpush1.xpose.msra.mxu0 0.0
    %533 = vmatprep.subr.mxu0 0.0
    %534 = vmatpush1.xpose.msra.mxu0 0.0
    %535 = vmatprep.subr.mxu0 0.0
    %536 = vmatpush1.xpose.msra.mxu0 0.0
    %537 = vmatprep.subr.mxu0 0.0
    %538 = vmatpush1.xpose.msra.mxu0 0.0
    %539 = vmatprep.subr.mxu0 0.0
    %540 = vmatpush1.xpose.msra.mxu0 0.0
    %541 = vmatprep.subr.mxu0 0.0
    %542 = vmatpush1.xpose.msra.mxu0 0.0
    %543 = vmatprep.subr.mxu0 0.0
    %544 = vmatpush1.xpose.msra.mxu0 0.0
    %545 = vmatprep.subr.mxu0 0.0
    %546 = vmatpush1.xpose.msra.mxu0 0.0
    %547 = vmatprep.subr.mxu0 0.0
    %548 = vmatpush1.xpose.msra.mxu0 0.0
    %549 = vmatprep.subr.mxu0 0.0
    %550 = vmatpush1.xpose.msra.mxu0 0.0
    %551 = vmatprep.subr.mxu0 0.0
    %552 = vmatpush1.xpose.msra.mxu0 0.0
    %553 = vmatprep.subr.mxu0 0.0
    %554 = vmatpush1.xpose.msra.mxu0 0.0
    %555 = vmatprep.mubr.f32.mxu0 0.0
    %556 = vmatmul.mubr.f32.gmra.mrb[0].mxu0 %v487
    %v557 = vpop.f32.mrb[0].mxu0
    %v558 = vadd.f32 0.0, %v557
    %v559 = vpop.f32.mrb[0].mxu0
    %560 = vdwg.mxu0
    %562 = vrot.lane.b32.xlu0 %v326, 96
    %v563 = vpop.permute.xlu0 %562
    %v564 = vsel %vm332, %v326, 0
    %v566 = vsel %vm332, %v563, 0
    %568 = vmatprep.subr.mxu0 0.0
    %569 = vmatpush1.xpose.msra.mxu0 %v566
    %570 = vmatprep.subr.mxu0 0.0
    %571 = vmatpush1.xpose.msra.mxu0 0.0
    %572 = vmatprep.subr.mxu0 0.0
    %573 = vmatpush1.xpose.msra.mxu0 0.0
    %574 = vmatprep.subr.mxu0 0.0
    %575 = vmatpush1.xpose.msra.mxu0 0.0
    %576 = vmatprep.subr.mxu0 0.0
    %577 = vmatpush1.xpose.msra.mxu0 0.0
    %578 = vmatprep.subr.mxu0 0.0
    %579 = vmatpush1.xpose.msra.mxu0 0.0
    %580 = vmatprep.subr.mxu0 0.0
    %581 = vmatpush1.xpose.msra.mxu0 0.0
    %582 = vmatprep.subr.mxu0 0.0
    %583 = vmatpush1.xpose.msra.mxu0 0.0
    %584 = vmatprep.subr.mxu0 0.0
    %585 = vmatpush1.xpose.msra.mxu0 0.0
    %586 = vmatprep.subr.mxu0 0.0
    %587 = vmatpush1.xpose.msra.mxu0 0.0
    %588 = vmatprep.subr.mxu0 0.0
    %589 = vmatpush1.xpose.msra.mxu0 0.0
    %590 = vmatprep.subr.mxu0 0.0
    %591 = vmatpush1.xpose.msra.mxu0 0.0
    %592 = vmatprep.subr.mxu0 0.0
    %593 = vmatpush1.xpose.msra.mxu0 0.0
    %594 = vmatprep.subr.mxu0 0.0
    %595 = vmatpush1.xpose.msra.mxu0 0.0
    %596 = vmatprep.subr.mxu0 0.0
    %597 = vmatpush1.xpose.msra.mxu0 0.0
    %598 = vmatprep.subr.mxu0 0.0
    %599 = vmatpush1.xpose.msra.mxu0 0.0
    %600 = vmatprep.subr.mxu0 0.0
    %601 = vmatpush1.xpose.msra.mxu0 0.0
    %602 = vmatprep.subr.mxu0 0.0
    %603 = vmatpush1.xpose.msra.mxu0 0.0
    %604 = vmatprep.subr.mxu0 0.0
    %605 = vmatpush1.xpose.msra.mxu0 0.0
    %606 = vmatprep.subr.mxu0 0.0
    %607 = vmatpush1.xpose.msra.mxu0 0.0
    %608 = vmatprep.subr.mxu0 0.0
    %609 = vmatpush1.xpose.msra.mxu0 0.0
    %610 = vmatprep.subr.mxu0 0.0
    %611 = vmatpush1.xpose.msra.mxu0 0.0
    %612 = vmatprep.subr.mxu0 0.0
    %613 = vmatpush1.xpose.msra.mxu0 0.0
    %614 = vmatprep.subr.mxu0 0.0
    %615 = vmatpush1.xpose.msra.mxu0 0.0
    %616 = vmatprep.subr.mxu0 0.0
    %617 = vmatpush1.xpose.msra.mxu0 0.0
    %618 = vmatprep.subr.mxu0 0.0
    %619 = vmatpush1.xpose.msra.mxu0 0.0
    %620 = vmatprep.subr.mxu0 0.0
    %621 = vmatpush1.xpose.msra.mxu0 0.0
    %622 = vmatprep.subr.mxu0 0.0
    %623 = vmatpush1.xpose.msra.mxu0 0.0
    %624 = vmatprep.subr.mxu0 0.0
    %625 = vmatpush1.xpose.msra.mxu0 0.0
    %626 = vmatprep.subr.mxu0 0.0
    %627 = vmatpush1.xpose.msra.mxu0 0.0
    %628 = vmatprep.subr.mxu0 0.0
    %629 = vmatpush1.xpose.msra.mxu0 0.0
    %630 = vmatprep.subr.mxu0 0.0
    %631 = vmatpush1.xpose.msra.mxu0 0.0
    %632 = vmatprep.mubr.f32.mxu0 0.0
    %633 = vmatmul.mubr.f32.gmra.mrb[0].mxu0 %v564
    %v634 = vpop.f32.mrb[0].mxu0
    %v635 = vadd.f32 0.0, %v634
    %v636 = vpop.f32.mrb[0].mxu0
    %637 = vdwg.mxu0
    %v638 = vmul.f32 %v404, 0.35355338
    %v639 = vmul.f32 %v481, 0.35355338
    %v640 = vmul.f32 %v558, 0.35355338
    %v641 = vmul.f32 %v635, 0.35355338
    %v642 = vadd.f32 %v638, %v212
    %v643 = vadd.f32 %v639, %v216
    %v644 = vadd.f32 %v640, %v220
    %v645 = vadd.f32 %v641, %v224
    %v646 = vsel %vm332, %v642, -inf
    %647 = vmax.xlane.f32.xlu0 %v646
    %v648 = vpop.xlane.xlu0 %647
    %v649 = vsel %vm332, %v643, -inf
    %650 = vmax.xlane.f32.xlu0 %v649
    %v651 = vpop.xlane.xlu0 %650
    %v652 = vsel %vm332, %v644, -inf
    %653 = vmax.xlane.f32.xlu0 %v652
    %v654 = vpop.xlane.xlu0 %653
    %v655 = vsel %vm332, %v645, -inf
    %656 = vmax.xlane.f32.xlu0 %v655
    %v657 = vpop.xlane.xlu0 %656
    %v658 = vsub.f32 %v642, %v648
    %v659 = vsub.f32 %v643, %v651
    %v660 = vsub.f32 %v644, %v654
    %v661 = vsub.f32 %v645, %v657
    %v662 = vmul.f32 %v658, 1.442695
    %v663 = vpow.pop %v662
    %v664 = vmul.f32 %v659, 1.442695
    %v665 = vpow.pop %v664
    %v666 = vmul.f32 %v660, 1.442695
    %v667 = vpow.pop %v666
    %v668 = vmul.f32 %v661, 1.442695
    %v669 = vpow.pop %v668
    %v670 = vsel %vm332, %v663, 0.0
    %671 = vadd.xlane.f32.xlu0 %v670
    %v672 = vpop.xlane.xlu0 %671
    %v673 = vsel %vm332, %v665, 0.0
    %674 = vadd.xlane.f32.xlu0 %v673
    %v675 = vpop.xlane.xlu0 %674
    %v676 = vsel %vm332, %v667, 0.0
    %677 = vadd.xlane.f32.xlu0 %v676
    %v678 = vpop.xlane.xlu0 %677
    %v679 = vsel %vm332, %v669, 0.0
    %680 = vadd.xlane.f32.xlu0 %v679
    %v681 = vpop.xlane.xlu0 %680
    %v682 = vrcp.pop %v672
    %v683 = vrcp.pop %v675
    %v684 = vrcp.pop %v678
    %v685 = vrcp.pop %v681
    %v686 = vmul.f32 %v663, %v682
    %v687 = vmul.f32 %v665, %v683
    %v688 = vmul.f32 %v667, %v684
    %v689 = vmul.f32 %v669, %v685
    %690 = vrot.lane.b32.xlu0 %v311, 64
    %v691 = vpop.permute.xlu0 %690
    %v694 = vsel %vm332, %v686, 0
    %696 = vmatprep.subr.mxu0 0.0
    %697 = vmatpush1.msra.mxu0 %v691
    %698 = vmatprep.subr.mxu0 0.0
    %699 = vmatpush1.msra.mxu0 0.0
    %700 = vmatprep.subr.mxu0 0.0
    %701 = vmatpush1.msra.mxu0 0.0
    %702 = vmatprep.subr.mxu0 0.0
    %703 = vmatpush1.msra.mxu0 0.0
    %704 = vmatprep.subr.mxu0 0.0
    %705 = vmatpush1.msra.mxu0 0.0
    %706 = vmatprep.subr.mxu0 0.0
    %707 = vmatpush1.msra.mxu0 0.0
    %708 = vmatprep.subr.mxu0 0.0
    %709 = vmatpush1.msra.mxu0 0.0
    %710 = vmatprep.subr.mxu0 0.0
    %711 = vmatpush1.msra.mxu0 0.0
    %712 = vmatprep.subr.mxu0 0.0
    %713 = vmatpush1.msra.mxu0 0.0
    %714 = vmatprep.subr.mxu0 0.0
    %715 = vmatpush1.msra.mxu0 0.0
    %716 = vmatprep.subr.mxu0 0.0
    %717 = vmatpush1.msra.mxu0 0.0
    %718 = vmatprep.subr.mxu0 0.0
    %719 = vmatpush1.msra.mxu0 0.0
    %720 = vmatprep.subr.mxu0 0.0
    %721 = vmatpush1.msra.mxu0 0.0
    %722 = vmatprep.subr.mxu0 0.0
    %723 = vmatpush1.msra.mxu0 0.0
    %724 = vmatprep.subr.mxu0 0.0
    %725 = vmatpush1.msra.mxu0 0.0
    %726 = vmatprep.subr.mxu0 0.0
    %727 = vmatpush1.msra.mxu0 0.0
    %728 = vmatprep.subr.mxu0 0.0
    %729 = vmatpush1.msra.mxu0 0.0
    %730 = vmatprep.subr.mxu0 0.0
    %731 = vmatpush1.msra.mxu0 0.0
    %732 = vmatprep.subr.mxu0 0.0
    %733 = vmatpush1.msra.mxu0 0.0
    %734 = vmatprep.subr.mxu0 0.0
    %735 = vmatpush1.msra.mxu0 0.0
    %736 = vmatprep.subr.mxu0 0.0
    %737 = vmatpush1.msra.mxu0 0.0
    %738 = vmatprep.subr.mxu0 0.0
    %739 = vmatpush1.msra.mxu0 0.0
    %740 = vmatprep.subr.mxu0 0.0
    %741 = vmatpush1.msra.mxu0 0.0
    %742 = vmatprep.subr.mxu0 0.0
    %743 = vmatpush1.msra.mxu0 0.0
    %744 = vmatprep.subr.mxu0 0.0
    %745 = vmatpush1.msra.mxu0 0.0
    %746 = vmatprep.subr.mxu0 0.0
    %747 = vmatpush1.msra.mxu0 0.0
    %748 = vmatprep.subr.mxu0 0.0
    %749 = vmatpush1.msra.mxu0 0.0
    %750 = vmatprep.subr.mxu0 0.0
    %751 = vmatpush1.msra.mxu0 0.0
    %752 = vmatprep.subr.mxu0 0.0
    %753 = vmatpush1.msra.mxu0 0.0
    %754 = vmatprep.subr.mxu0 0.0
    %755 = vmatpush1.msra.mxu0 0.0
    %756 = vmatprep.subr.mxu0 0.0
    %757 = vmatpush1.msra.mxu0 0.0
    %758 = vmatprep.subr.mxu0 0.0
    %759 = vmatpush1.msra.mxu0 0.0
    %760 = vmatprep.mubr.f32.mxu0 0.0
    %761 = vmatmul.mubr.f32.gmra.mrb[0].mxu0 %v694
    %v762 = vpop.f32.mrb[0].mxu0
    %v763 = vadd.f32 0.0, %v762
    %v764 = vpop.f32.mrb[0].mxu0
    %765 = vdwg.mxu0
    %766 = vrot.lane.b32.xlu0 %v316, 64
    %v767 = vpop.permute.xlu0 %766
    %v770 = vsel %vm332, %v687, 0
    %772 = vmatprep.subr.mxu0 0.0
    %773 = vmatpush1.msra.mxu0 %v767
    %774 = vmatprep.subr.mxu0 0.0
    %775 = vmatpush1.msra.mxu0 0.0
    %776 = vmatprep.subr.mxu0 0.0
    %777 = vmatpush1.msra.mxu0 0.0
    %778 = vmatprep.subr.mxu0 0.0
    %779 = vmatpush1.msra.mxu0 0.0
    %780 = vmatprep.subr.mxu0 0.0
    %781 = vmatpush1.msra.mxu0 0.0
    %782 = vmatprep.subr.mxu0 0.0
    %783 = vmatpush1.msra.mxu0 0.0
    %784 = vmatprep.subr.mxu0 0.0
    %785 = vmatpush1.msra.mxu0 0.0
    %786 = vmatprep.subr.mxu0 0.0
    %787 = vmatpush1.msra.mxu0 0.0
    %788 = vmatprep.subr.mxu0 0.0
    %789 = vmatpush1.msra.mxu0 0.0
    %790 = vmatprep.subr.mxu0 0.0
    %791 = vmatpush1.msra.mxu0 0.0
    %792 = vmatprep.subr.mxu0 0.0
    %793 = vmatpush1.msra.mxu0 0.0
    %794 = vmatprep.subr.mxu0 0.0
    %795 = vmatpush1.msra.mxu0 0.0
    %796 = vmatprep.subr.mxu0 0.0
    %797 = vmatpush1.msra.mxu0 0.0
    %798 = vmatprep.subr.mxu0 0.0
    %799 = vmatpush1.msra.mxu0 0.0
    %800 = vmatprep.subr.mxu0 0.0
    %801 = vmatpush1.msra.mxu0 0.0
    %802 = vmatprep.subr.mxu0 0.0
    %803 = vmatpush1.msra.mxu0 0.0
    %804 = vmatprep.subr.mxu0 0.0
    %805 = vmatpush1.msra.mxu0 0.0
    %806 = vmatprep.subr.mxu0 0.0
    %807 = vmatpush1.msra.mxu0 0.0
    %808 = vmatprep.subr.mxu0 0.0
    %809 = vmatpush1.msra.mxu0 0.0
    %810 = vmatprep.subr.mxu0 0.0
    %811 = vmatpush1.msra.mxu0 0.0
    %812 = vmatprep.subr.mxu0 0.0
    %813 = vmatpush1.msra.mxu0 0.0
    %814 = vmatprep.subr.mxu0 0.0
    %815 = vmatpush1.msra.mxu0 0.0
    %816 = vmatprep.subr.mxu0 0.0
    %817 = vmatpush1.msra.mxu0 0.0
    %818 = vmatprep.subr.mxu0 0.0
    %819 = vmatpush1.msra.mxu0 0.0
    %820 = vmatprep.subr.mxu0 0.0
    %821 = vmatpush1.msra.mxu0 0.0
    %822 = vmatprep.subr.mxu0 0.0
    %823 = vmatpush1.msra.mxu0 0.0
    %824 = vmatprep.subr.mxu0 0.0
    %825 = vmatpush1.msra.mxu0 0.0
    %826 = vmatprep.subr.mxu0 0.0
    %827 = vmatpush1.msra.mxu0 0.0
    %828 = vmatprep.subr.mxu0 0.0
    %829 = vmatpush1.msra.mxu0 0.0
    %830 = vmatprep.subr.mxu0 0.0
    %831 = vmatpush1.msra.mxu0 0.0
    %832 = vmatprep.subr.mxu0 0.0
    %833 = vmatpush1.msra.mxu0 0.0
    %834 = vmatprep.subr.mxu0 0.0
    %835 = vmatpush1.msra.mxu0 0.0
    %836 = vmatprep.mubr.f32.mxu0 0.0
    %837 = vmatmul.mubr.f32.gmra.mrb[0].mxu0 %v770
    %v838 = vpop.f32.mrb[0].mxu0
    %v839 = vadd.f32 0.0, %v838
    %v840 = vpop.f32.mrb[0].mxu0
    %841 = vdwg.mxu0
    %842 = vrot.lane.b32.xlu0 %v321, 64
    %v843 = vpop.permute.xlu0 %842
    %v846 = vsel %vm332, %v688, 0
    %848 = vmatprep.subr.mxu0 0.0
    %849 = vmatpush1.msra.mxu0 %v843
    %850 = vmatprep.subr.mxu0 0.0
    %851 = vmatpush1.msra.mxu0 0.0
    %852 = vmatprep.subr.mxu0 0.0
    %853 = vmatpush1.msra.mxu0 0.0
    %854 = vmatprep.subr.mxu0 0.0
    %855 = vmatpush1.msra.mxu0 0.0
    %856 = vmatprep.subr.mxu0 0.0
    %857 = vmatpush1.msra.mxu0 0.0
    %858 = vmatprep.subr.mxu0 0.0
    %859 = vmatpush1.msra.mxu0 0.0
    %860 = vmatprep.subr.mxu0 0.0
    %861 = vmatpush1.msra.mxu0 0.0
    %862 = vmatprep.subr.mxu0 0.0
    %863 = vmatpush1.msra.mxu0 0.0
    %864 = vmatprep.subr.mxu0 0.0
    %865 = vmatpush1.msra.mxu0 0.0
    %866 = vmatprep.subr.mxu0 0.0
    %867 = vmatpush1.msra.mxu0 0.0
    %868 = vmatprep.subr.mxu0 0.0
    %869 = vmatpush1.msra.mxu0 0.0
    %870 = vmatprep.subr.mxu0 0.0
    %871 = vmatpush1.msra.mxu0 0.0
    %872 = vmatprep.subr.mxu0 0.0
    %873 = vmatpush1.msra.mxu0 0.0
    %874 = vmatprep.subr.mxu0 0.0
    %875 = vmatpush1.msra.mxu0 0.0
    %876 = vmatprep.subr.mxu0 0.0
    %877 = vmatpush1.msra.mxu0 0.0
    %878 = vmatprep.subr.mxu0 0.0
    %879 = vmatpush1.msra.mxu0 0.0
    %880 = vmatprep.subr.mxu0 0.0
    %881 = vmatpush1.msra.mxu0 0.0
    %882 = vmatprep.subr.mxu0 0.0
    %883 = vmatpush1.msra.mxu0 0.0
    %884 = vmatprep.subr.mxu0 0.0
    %885 = vmatpush1.msra.mxu0 0.0
    %886 = vmatprep.subr.mxu0 0.0
    %887 = vmatpush1.msra.mxu0 0.0
    %888 = vmatprep.subr.mxu0 0.0
    %889 = vmatpush1.msra.mxu0 0.0
    %890 = vmatprep.subr.mxu0 0.0
    %891 = vmatpush1.msra.mxu0 0.0
    %892 = vmatprep.subr.mxu0 0.0
    %893 = vmatpush1.msra.mxu0 0.0
    %894 = vmatprep.subr.mxu0 0.0
    %895 = vmatpush1.msra.mxu0 0.0
    %896 = vmatprep.subr.mxu0 0.0
    %897 = vmatpush1.msra.mxu0 0.0
    %898 = vmatprep.subr.mxu0 0.0
    %899 = vmatpush1.msra.mxu0 0.0
    %900 = vmatprep.subr.mxu0 0.0
    %901 = vmatpush1.msra.mxu0 0.0
    %902 = vmatprep.subr.mxu0 0.0
    %903 = vmatpush1.msra.mxu0 0.0
    %904 = vmatprep.subr.mxu0 0.0
    %905 = vmatpush1.msra.mxu0 0.0
    %906 = vmatprep.subr.mxu0 0.0
    %907 = vmatpush1.msra.mxu0 0.0
    %908 = vmatprep.subr.mxu0 0.0
    %909 = vmatpush1.msra.mxu0 0.0
    %910 = vmatprep.subr.mxu0 0.0
    %911 = vmatpush1.msra.mxu0 0.0
    %912 = vmatprep.mubr.f32.mxu0 0.0
    %913 = vmatmul.mubr.f32.gmra.mrb[0].mxu0 %v846
    %v914 = vpop.f32.mrb[0].mxu0
    %v915 = vadd.f32 0.0, %v914
    %v916 = vpop.f32.mrb[0].mxu0
    %917 = vdwg.mxu0
    %918 = vrot.lane.b32.xlu0 %v326, 64
    %v919 = vpop.permute.xlu0 %918
    %v922 = vsel %vm332, %v689, 0
    %924 = vmatprep.subr.mxu0 0.0
    %925 = vmatpush1.msra.mxu0 %v919
    %926 = vmatprep.subr.mxu0 0.0
    %927 = vmatpush1.msra.mxu0 0.0
    %928 = vmatprep.subr.mxu0 0.0
    %929 = vmatpush1.msra.mxu0 0.0
    %930 = vmatprep.subr.mxu0 0.0
    %931 = vmatpush1.msra.mxu0 0.0
    %932 = vmatprep.subr.mxu0 0.0
    %933 = vmatpush1.msra.mxu0 0.0
    %934 = vmatprep.subr.mxu0 0.0
    %935 = vmatpush1.msra.mxu0 0.0
    %936 = vmatprep.subr.mxu0 0.0
    %937 = vmatpush1.msra.mxu0 0.0
    %938 = vmatprep.subr.mxu0 0.0
    %939 = vmatpush1.msra.mxu0 0.0
    %940 = vmatprep.subr.mxu0 0.0
    %941 = vmatpush1.msra.mxu0 0.0
    %942 = vmatprep.subr.mxu0 0.0
    %943 = vmatpush1.msra.mxu0 0.0
    %944 = vmatprep.subr.mxu0 0.0
    %945 = vmatpush1.msra.mxu0 0.0
    %946 = vmatprep.subr.mxu0 0.0
    %947 = vmatpush1.msra.mxu0 0.0
    %948 = vmatprep.subr.mxu0 0.0
    %949 = vmatpush1.msra.mxu0 0.0
    %950 = vmatprep.subr.mxu0 0.0
    %951 = vmatpush1.msra.mxu0 0.0
    %952 = vmatprep.subr.mxu0 0.0
    %953 = vmatpush1.msra.mxu0 0.0
    %954 = vmatprep.subr.mxu0 0.0
    %955 = vmatpush1.msra.mxu0 0.0
    %956 = vmatprep.subr.mxu0 0.0
    %957 = vmatpush1.msra.mxu0 0.0
    %958 = vmatprep.subr.mxu0 0.0
    %959 = vmatpush1.msra.mxu0 0.0
    %960 = vmatprep.subr.mxu0 0.0
    %961 = vmatpush1.msra.mxu0 0.0
    %962 = vmatprep.subr.mxu0 0.0
    %963 = vmatpush1.msra.mxu0 0.0
    %964 = vmatprep.subr.mxu0 0.0
    %965 = vmatpush1.msra.mxu0 0.0
    %966 = vmatprep.subr.mxu0 0.0
    %967 = vmatpush1.msra.mxu0 0.0
    %968 = vmatprep.subr.mxu0 0.0
    %969 = vmatpush1.msra.mxu0 0.0
    %970 = vmatprep.subr.mxu0 0.0
    %971 = vmatpush1.msra.mxu0 0.0
    %972 = vmatprep.subr.mxu0 0.0
    %973 = vmatpush1.msra.mxu0 0.0
    %974 = vmatprep.subr.mxu0 0.0
    %975 = vmatpush1.msra.mxu0 0.0
    %976 = vmatprep.subr.mxu0 0.0
    %977 = vmatpush1.msra.mxu0 0.0
    %978 = vmatprep.subr.mxu0 0.0
    %979 = vmatpush1.msra.mxu0 0.0
    %980 = vmatprep.subr.mxu0 0.0
    %981 = vmatpush1.msra.mxu0 0.0
    %982 = vmatprep.subr.mxu0 0.0
    %983 = vmatpush1.msra.mxu0 0.0
    %984 = vmatprep.subr.mxu0 0.0
    %985 = vmatpush1.msra.mxu0 0.0
    %986 = vmatprep.subr.mxu0 0.0
    %987 = vmatpush1.msra.mxu0 0.0
    %988 = vmatprep.mubr.f32.mxu0 0.0
    %989 = vmatmul.mubr.f32.gmra.mrb[0].mxu0 %v922
    %v990 = vpop.f32.mrb[0].mxu0
    %v991 = vadd.f32 0.0, %v990
    %v992 = vpop.f32.mrb[0].mxu0
    %993 = vdwg.mxu0
    %994 = vrot.lane.b32.xlu0 %v311, 120
    %v995 = vpop.permute.xlu0 %994
    %996 = vrot.lane.b32.xlu0 %v311, 88
    %v997 = vpop.permute.xlu0 %996
    %v998 = vsel %vm332, %v995, 0
    %v1000 = vsel %vm332, %v997, 0
    %1002 = vmatprep.subr.mxu0 0.0
    %1003 = vmatpush1.xpose.msra.mxu0 %v1000
    %1004 = vmatprep.subr.mxu0 0.0
    %1005 = vmatpush1.xpose.msra.mxu0 0.0
    %1006 = vmatprep.subr.mxu0 0.0
    %1007 = vmatpush1.xpose.msra.mxu0 0.0
    %1008 = vmatprep.subr.mxu0 0.0
    %1009 = vmatpush1.xpose.msra.mxu0 0.0
    %1010 = vmatprep.subr.mxu0 0.0
    %1011 = vmatpush1.xpose.msra.mxu0 0.0
    %1012 = vmatprep.subr.mxu0 0.0
    %1013 = vmatpush1.xpose.msra.mxu0 0.0
    %1014 = vmatprep.subr.mxu0 0.0
    %1015 = vmatpush1.xpose.msra.mxu0 0.0
    %1016 = vmatprep.subr.mxu0 0.0
    %1017 = vmatpush1.xpose.msra.mxu0 0.0
    %1018 = vmatprep.subr.mxu0 0.0
    %1019 = vmatpush1.xpose.msra.mxu0 0.0
    %1020 = vmatprep.subr.mxu0 0.0
    %1021 = vmatpush1.xpose.msra.mxu0 0.0
    %1022 = vmatprep.subr.mxu0 0.0
    %1023 = vmatpush1.xpose.msra.mxu0 0.0
    %1024 = vmatprep.subr.mxu0 0.0
    %1025 = vmatpush1.xpose.msra.mxu0 0.0
    %1026 = vmatprep.subr.mxu0 0.0
    %1027 = vmatpush1.xpose.msra.mxu0 0.0
    %1028 = vmatprep.subr.mxu0 0.0
    %1029 = vmatpush1.xpose.msra.mxu0 0.0
    %1030 = vmatprep.subr.mxu0 0.0
    %1031 = vmatpush1.xpose.msra.mxu0 0.0
    %1032 = vmatprep.subr.mxu0 0.0
    %1033 = vmatpush1.xpose.msra.mxu0 0.0
    %1034 = vmatprep.subr.mxu0 0.0
    %1035 = vmatpush1.xpose.msra.mxu0 0.0
    %1036 = vmatprep.subr.mxu0 0.0
    %1037 = vmatpush1.xpose.msra.mxu0 0.0
    %1038 = vmatprep.subr.mxu0 0.0
    %1039 = vmatpush1.xpose.msra.mxu0 0.0
    %1040 = vmatprep.subr.mxu0 0.0
    %1041 = vmatpush1.xpose.msra.mxu0 0.0
    %1042 = vmatprep.subr.mxu0 0.0
    %1043 = vmatpush1.xpose.msra.mxu0 0.0
    %1044 = vmatprep.subr.mxu0 0.0
    %1045 = vmatpush1.xpose.msra.mxu0 0.0
    %1046 = vmatprep.subr.mxu0 0.0
    %1047 = vmatpush1.xpose.msra.mxu0 0.0
    %1048 = vmatprep.subr.mxu0 0.0
    %1049 = vmatpush1.xpose.msra.mxu0 0.0
    %1050 = vmatprep.subr.mxu0 0.0
    %1051 = vmatpush1.xpose.msra.mxu0 0.0
    %1052 = vmatprep.subr.mxu0 0.0
    %1053 = vmatpush1.xpose.msra.mxu0 0.0
    %1054 = vmatprep.subr.mxu0 0.0
    %1055 = vmatpush1.xpose.msra.mxu0 0.0
    %1056 = vmatprep.subr.mxu0 0.0
    %1057 = vmatpush1.xpose.msra.mxu0 0.0
    %1058 = vmatprep.subr.mxu0 0.0
    %1059 = vmatpush1.xpose.msra.mxu0 0.0
    %1060 = vmatprep.subr.mxu0 0.0
    %1061 = vmatpush1.xpose.msra.mxu0 0.0
    %1062 = vmatprep.subr.mxu0 0.0
    %1063 = vmatpush1.xpose.msra.mxu0 0.0
    %1064 = vmatprep.subr.mxu0 0.0
    %1065 = vmatpush1.xpose.msra.mxu0 0.0
    %1066 = vmatprep.mubr.f32.mxu0 0.0
    %1067 = vmatmul.mubr.f32.gmra.mrb[0].mxu0 %v998
    %v1068 = vpop.f32.mrb[0].mxu0
    %v1069 = vadd.f32 0.0, %v1068
    %v1070 = vpop.f32.mrb[0].mxu0
    %1071 = vdwg.mxu0
    %1072 = vrot.lane.b32.xlu0 %v316, 120
    %v1073 = vpop.permute.xlu0 %1072
    %1074 = vrot.lane.b32.xlu0 %v316, 88
    %v1075 = vpop.permute.xlu0 %1074
    %v1076 = vsel %vm332, %v1073, 0
    %v1078 = vsel %vm332, %v1075, 0
    %1080 = vmatprep.subr.mxu0 0.0
    %1081 = vmatpush1.xpose.msra.mxu0 %v1078
    %1082 = vmatprep.subr.mxu0 0.0
    %1083 = vmatpush1.xpose.msra.mxu0 0.0
    %1084 = vmatprep.subr.mxu0 0.0
    %1085 = vmatpush1.xpose.msra.mxu0 0.0
    %1086 = vmatprep.subr.mxu0 0.0
    %1087 = vmatpush1.xpose.msra.mxu0 0.0
    %1088 = vmatprep.subr.mxu0 0.0
    %1089 = vmatpush1.xpose.msra.mxu0 0.0
    %1090 = vmatprep.subr.mxu0 0.0
    %1091 = vmatpush1.xpose.msra.mxu0 0.0
    %1092 = vmatprep.subr.mxu0 0.0
    %1093 = vmatpush1.xpose.msra.mxu0 0.0
    %1094 = vmatprep.subr.mxu0 0.0
    %1095 = vmatpush1.xpose.msra.mxu0 0.0
    %1096 = vmatprep.subr.mxu0 0.0
    %1097 = vmatpush1.xpose.msra.mxu0 0.0
    %1098 = vmatprep.subr.mxu0 0.0
    %1099 = vmatpush1.xpose.msra.mxu0 0.0
    %1100 = vmatprep.subr.mxu0 0.0
    %1101 = vmatpush1.xpose.msra.mxu0 0.0
    %1102 = vmatprep.subr.mxu0 0.0
    %1103 = vmatpush1.xpose.msra.mxu0 0.0
    %1104 = vmatprep.subr.mxu0 0.0
    %1105 = vmatpush1.xpose.msra.mxu0 0.0
    %1106 = vmatprep.subr.mxu0 0.0
    %1107 = vmatpush1.xpose.msra.mxu0 0.0
    %1108 = vmatprep.subr.mxu0 0.0
    %1109 = vmatpush1.xpose.msra.mxu0 0.0
    %1110 = vmatprep.subr.mxu0 0.0
    %1111 = vmatpush1.xpose.msra.mxu0 0.0
    %1112 = vmatprep.subr.mxu0 0.0
    %1113 = vmatpush1.xpose.msra.mxu0 0.0
    %1114 = vmatprep.subr.mxu0 0.0
    %1115 = vmatpush1.xpose.msra.mxu0 0.0
    %1116 = vmatprep.subr.mxu0 0.0
    %1117 = vmatpush1.xpose.msra.mxu0 0.0
    %1118 = vmatprep.subr.mxu0 0.0
    %1119 = vmatpush1.xpose.msra.mxu0 0.0
    %1120 = vmatprep.subr.mxu0 0.0
    %1121 = vmatpush1.xpose.msra.mxu0 0.0
    %1122 = vmatprep.subr.mxu0 0.0
    %1123 = vmatpush1.xpose.msra.mxu0 0.0
    %1124 = vmatprep.subr.mxu0 0.0
    %1125 = vmatpush1.xpose.msra.mxu0 0.0
    %1126 = vmatprep.subr.mxu0 0.0
    %1127 = vmatpush1.xpose.msra.mxu0 0.0
    %1128 = vmatprep.subr.mxu0 0.0
    %1129 = vmatpush1.xpose.msra.mxu0 0.0
    %1130 = vmatprep.subr.mxu0 0.0
    %1131 = vmatpush1.xpose.msra.mxu0 0.0
    %1132 = vmatprep.subr.mxu0 0.0
    %1133 = vmatpush1.xpose.msra.mxu0 0.0
    %1134 = vmatprep.subr.mxu0 0.0
    %1135 = vmatpush1.xpose.msra.mxu0 0.0
    %1136 = vmatprep.subr.mxu0 0.0
    %1137 = vmatpush1.xpose.msra.mxu0 0.0
    %1138 = vmatprep.subr.mxu0 0.0
    %1139 = vmatpush1.xpose.msra.mxu0 0.0
    %1140 = vmatprep.subr.mxu0 0.0
    %1141 = vmatpush1.xpose.msra.mxu0 0.0
    %1142 = vmatprep.subr.mxu0 0.0
    %1143 = vmatpush1.xpose.msra.mxu0 0.0
    %1144 = vmatprep.mubr.f32.mxu0 0.0
    %1145 = vmatmul.mubr.f32.gmra.mrb[0].mxu0 %v1076
    %v1146 = vpop.f32.mrb[0].mxu0
    %v1147 = vadd.f32 0.0, %v1146
    %v1148 = vpop.f32.mrb[0].mxu0
    %1149 = vdwg.mxu0
    %1150 = vrot.lane.b32.xlu0 %v321, 120
    %v1151 = vpop.permute.xlu0 %1150
    %1152 = vrot.lane.b32.xlu0 %v321, 88
    %v1153 = vpop.permute.xlu0 %1152
    %v1154 = vsel %vm332, %v1151, 0
    %v1156 = vsel %vm332, %v1153, 0
    %1158 = vmatprep.subr.mxu0 0.0
    %1159 = vmatpush1.xpose.msra.mxu0 %v1156
    %1160 = vmatprep.subr.mxu0 0.0
    %1161 = vmatpush1.xpose.msra.mxu0 0.0
    %1162 = vmatprep.subr.mxu0 0.0
    %1163 = vmatpush1.xpose.msra.mxu0 0.0
    %1164 = vmatprep.subr.mxu0 0.0
    %1165 = vmatpush1.xpose.msra.mxu0 0.0
    %1166 = vmatprep.subr.mxu0 0.0
    %1167 = vmatpush1.xpose.msra.mxu0 0.0
    %1168 = vmatprep.subr.mxu0 0.0
    %1169 = vmatpush1.xpose.msra.mxu0 0.0
    %1170 = vmatprep.subr.mxu0 0.0
    %1171 = vmatpush1.xpose.msra.mxu0 0.0
    %1172 = vmatprep.subr.mxu0 0.0
    %1173 = vmatpush1.xpose.msra.mxu0 0.0
    %1174 = vmatprep.subr.mxu0 0.0
    %1175 = vmatpush1.xpose.msra.mxu0 0.0
    %1176 = vmatprep.subr.mxu0 0.0
    %1177 = vmatpush1.xpose.msra.mxu0 0.0
    %1178 = vmatprep.subr.mxu0 0.0
    %1179 = vmatpush1.xpose.msra.mxu0 0.0
    %1180 = vmatprep.subr.mxu0 0.0
    %1181 = vmatpush1.xpose.msra.mxu0 0.0
    %1182 = vmatprep.subr.mxu0 0.0
    %1183 = vmatpush1.xpose.msra.mxu0 0.0
    %1184 = vmatprep.subr.mxu0 0.0
    %1185 = vmatpush1.xpose.msra.mxu0 0.0
    %1186 = vmatprep.subr.mxu0 0.0
    %1187 = vmatpush1.xpose.msra.mxu0 0.0
    %1188 = vmatprep.subr.mxu0 0.0
    %1189 = vmatpush1.xpose.msra.mxu0 0.0
    %1190 = vmatprep.subr.mxu0 0.0
    %1191 = vmatpush1.xpose.msra.mxu0 0.0
    %1192 = vmatprep.subr.mxu0 0.0
    %1193 = vmatpush1.xpose.msra.mxu0 0.0
    %1194 = vmatprep.subr.mxu0 0.0
    %1195 = vmatpush1.xpose.msra.mxu0 0.0
    %1196 = vmatprep.subr.mxu0 0.0
    %1197 = vmatpush1.xpose.msra.mxu0 0.0
    %1198 = vmatprep.subr.mxu0 0.0
    %1199 = vmatpush1.xpose.msra.mxu0 0.0
    %1200 = vmatprep.subr.mxu0 0.0
    %1201 = vmatpush1.xpose.msra.mxu0 0.0
    %1202 = vmatprep.subr.mxu0 0.0
    %1203 = vmatpush1.xpose.msra.mxu0 0.0
    %1204 = vmatprep.subr.mxu0 0.0
    %1205 = vmatpush1.xpose.msra.mxu0 0.0
    %1206 = vmatprep.subr.mxu0 0.0
    %1207 = vmatpush1.xpose.msra.mxu0 0.0
    %1208 = vmatprep.subr.mxu0 0.0
    %1209 = vmatpush1.xpose.msra.mxu0 0.0
    %1210 = vmatprep.subr.mxu0 0.0
    %1211 = vmatpush1.xpose.msra.mxu0 0.0
    %1212 = vmatprep.subr.mxu0 0.0
    %1213 = vmatpush1.xpose.msra.mxu0 0.0
    %1214 = vmatprep.subr.mxu0 0.0
    %1215 = vmatpush1.xpose.msra.mxu0 0.0
    %1216 = vmatprep.subr.mxu0 0.0
    %1217 = vmatpush1.xpose.msra.mxu0 0.0
    %1218 = vmatprep.subr.mxu0 0.0
    %1219 = vmatpush1.xpose.msra.mxu0 0.0
    %1220 = vmatprep.subr.mxu0 0.0
    %1221 = vmatpush1.xpose.msra.mxu0 0.0
    %1222 = vmatprep.mubr.f32.mxu0 0.0
    %1223 = vmatmul.mubr.f32.gmra.mrb[0].mxu0 %v1154
    %v1224 = vpop.f32.mrb[0].mxu0
    %v1225 = vadd.f32 0.0, %v1224
    %v1226 = vpop.f32.mrb[0].mxu0
    %1227 = vdwg.mxu0
    %1228 = vrot.lane.b32.xlu0 %v326, 120
    %v1229 = vpop.permute.xlu0 %1228
    %1230 = vrot.lane.b32.xlu0 %v326, 88
    %v1231 = vpop.permute.xlu0 %1230
    %v1232 = vsel %vm332, %v1229, 0
    %v1234 = vsel %vm332, %v1231, 0
    %1236 = vmatprep.subr.mxu0 0.0
    %1237 = vmatpush1.xpose.msra.mxu0 %v1234
    %1238 = vmatprep.subr.mxu0 0.0
    %1239 = vmatpush1.xpose.msra.mxu0 0.0
    %1240 = vmatprep.subr.mxu0 0.0
    %1241 = vmatpush1.xpose.msra.mxu0 0.0
    %1242 = vmatprep.subr.mxu0 0.0
    %1243 = vmatpush1.xpose.msra.mxu0 0.0
    %1244 = vmatprep.subr.mxu0 0.0
    %1245 = vmatpush1.xpose.msra.mxu0 0.0
    %1246 = vmatprep.subr.mxu0 0.0
    %1247 = vmatpush1.xpose.msra.mxu0 0.0
    %1248 = vmatprep.subr.mxu0 0.0
    %1249 = vmatpush1.xpose.msra.mxu0 0.0
    %1250 = vmatprep.subr.mxu0 0.0
    %1251 = vmatpush1.xpose.msra.mxu0 0.0
    %1252 = vmatprep.subr.mxu0 0.0
    %1253 = vmatpush1.xpose.msra.mxu0 0.0
    %1254 = vmatprep.subr.mxu0 0.0
    %1255 = vmatpush1.xpose.msra.mxu0 0.0
    %1256 = vmatprep.subr.mxu0 0.0
    %1257 = vmatpush1.xpose.msra.mxu0 0.0
    %1258 = vmatprep.subr.mxu0 0.0
    %1259 = vmatpush1.xpose.msra.mxu0 0.0
    %1260 = vmatprep.subr.mxu0 0.0
    %1261 = vmatpush1.xpose.msra.mxu0 0.0
    %1262 = vmatprep.subr.mxu0 0.0
    %1263 = vmatpush1.xpose.msra.mxu0 0.0
    %1264 = vmatprep.subr.mxu0 0.0
    %1265 = vmatpush1.xpose.msra.mxu0 0.0
    %1266 = vmatprep.subr.mxu0 0.0
    %1267 = vmatpush1.xpose.msra.mxu0 0.0
    %1268 = vmatprep.subr.mxu0 0.0
    %1269 = vmatpush1.xpose.msra.mxu0 0.0
    %1270 = vmatprep.subr.mxu0 0.0
    %1271 = vmatpush1.xpose.msra.mxu0 0.0
    %1272 = vmatprep.subr.mxu0 0.0
    %1273 = vmatpush1.xpose.msra.mxu0 0.0
    %1274 = vmatprep.subr.mxu0 0.0
    %1275 = vmatpush1.xpose.msra.mxu0 0.0
    %1276 = vmatprep.subr.mxu0 0.0
    %1277 = vmatpush1.xpose.msra.mxu0 0.0
    %1278 = vmatprep.subr.mxu0 0.0
    %1279 = vmatpush1.xpose.msra.mxu0 0.0
    %1280 = vmatprep.subr.mxu0 0.0
    %1281 = vmatpush1.xpose.msra.mxu0 0.0
    %1282 = vmatprep.subr.mxu0 0.0
    %1283 = vmatpush1.xpose.msra.mxu0 0.0
    %1284 = vmatprep.subr.mxu0 0.0
    %1285 = vmatpush1.xpose.msra.mxu0 0.0
    %1286 = vmatprep.subr.mxu0 0.0
    %1287 = vmatpush1.xpose.msra.mxu0 0.0
    %1288 = vmatprep.subr.mxu0 0.0
    %1289 = vmatpush1.xpose.msra.mxu0 0.0
    %1290 = vmatprep.subr.mxu0 0.0
    %1291 = vmatpush1.xpose.msra.mxu0 0.0
    %1292 = vmatprep.subr.mxu0 0.0
    %1293 = vmatpush1.xpose.msra.mxu0 0.0
    %1294 = vmatprep.subr.mxu0 0.0
    %1295 = vmatpush1.xpose.msra.mxu0 0.0
    %1296 = vmatprep.subr.mxu0 0.0
    %1297 = vmatpush1.xpose.msra.mxu0 0.0
    %1298 = vmatprep.subr.mxu0 0.0
    %1299 = vmatpush1.xpose.msra.mxu0 0.0
    %1300 = vmatprep.mubr.f32.mxu0 0.0
    %1301 = vmatmul.mubr.f32.gmra.mrb[0].mxu0 %v1232
    %v1302 = vpop.f32.mrb[0].mxu0
    %v1303 = vadd.f32 0.0, %v1302
    %v1304 = vpop.f32.mrb[0].mxu0
    %1305 = vdwg.mxu0
    %v1306 = vmul.f32 %v1069, 0.35355338
    %v1307 = vmul.f32 %v1147, 0.35355338
    %v1308 = vmul.f32 %v1225, 0.35355338
    %v1309 = vmul.f32 %v1303, 0.35355338
    %v1310 = vadd.f32 %v1306, %v212
    %v1311 = vadd.f32 %v1307, %v216
    %v1312 = vadd.f32 %v1308, %v220
    %v1313 = vadd.f32 %v1309, %v224
    %v1314 = vsel %vm332, %v1310, -inf
    %1315 = vmax.xlane.f32.xlu0 %v1314
    %v1316 = vpop.xlane.xlu0 %1315
    %v1317 = vsel %vm332, %v1311, -inf
    %1318 = vmax.xlane.f32.xlu0 %v1317
    %v1319 = vpop.xlane.xlu0 %1318
    %v1320 = vsel %vm332, %v1312, -inf
    %1321 = vmax.xlane.f32.xlu0 %v1320
    %v1322 = vpop.xlane.xlu0 %1321
    %v1323 = vsel %vm332, %v1313, -inf
    %1324 = vmax.xlane.f32.xlu0 %v1323
    %v1325 = vpop.xlane.xlu0 %1324
    %v1326 = vsub.f32 %v1310, %v1316
    %v1327 = vsub.f32 %v1311, %v1319
    %v1328 = vsub.f32 %v1312, %v1322
    %v1329 = vsub.f32 %v1313, %v1325
    %v1330 = vmul.f32 %v1326, 1.442695
    %v1331 = vpow.pop %v1330
    %v1332 = vmul.f32 %v1327, 1.442695
    %v1333 = vpow.pop %v1332
    %v1334 = vmul.f32 %v1328, 1.442695
    %v1335 = vpow.pop %v1334
    %v1336 = vmul.f32 %v1329, 1.442695
    %v1337 = vpow.pop %v1336
    %v1338 = vsel %vm332, %v1331, 0.0
    %1339 = vadd.xlane.f32.xlu0 %v1338
    %v1340 = vpop.xlane.xlu0 %1339
    %v1341 = vsel %vm332, %v1333, 0.0
    %1342 = vadd.xlane.f32.xlu0 %v1341
    %v1343 = vpop.xlane.xlu0 %1342
    %v1344 = vsel %vm332, %v1335, 0.0
    %1345 = vadd.xlane.f32.xlu0 %v1344
    %v1346 = vpop.xlane.xlu0 %1345
    %v1347 = vsel %vm332, %v1337, 0.0
    %1348 = vadd.xlane.f32.xlu0 %v1347
    %v1349 = vpop.xlane.xlu0 %1348
    %v1350 = vrcp.pop %v1340
    %v1351 = vrcp.pop %v1343
    %v1352 = vrcp.pop %v1346
    %v1353 = vrcp.pop %v1349
    %v1354 = vmul.f32 %v1331, %v1350
    %v1355 = vmul.f32 %v1333, %v1351
    %v1356 = vmul.f32 %v1335, %v1352
    %v1357 = vmul.f32 %v1337, %v1353
    %1358 = vrot.lane.b32.xlu0 %v311, 56
    %v1359 = vpop.permute.xlu0 %1358
    %v1362 = vsel %vm332, %v1354, 0
    %1364 = vmatprep.subr.mxu0 0.0
    %1365 = vmatpush1.msra.mxu0 %v1359
    %1366 = vmatprep.subr.mxu0 0.0
    %1367 = vmatpush1.msra.mxu0 0.0
    %1368 = vmatprep.subr.mxu0 0.0
    %1369 = vmatpush1.msra.mxu0 0.0
    %1370 = vmatprep.subr.mxu0 0.0
    %1371 = vmatpush1.msra.mxu0 0.0
    %1372 = vmatprep.subr.mxu0 0.0
    %1373 = vmatpush1.msra.mxu0 0.0
    %1374 = vmatprep.subr.mxu0 0.0
    %1375 = vmatpush1.msra.mxu0 0.0
    %1376 = vmatprep.subr.mxu0 0.0
    %1377 = vmatpush1.msra.mxu0 0.0
    %1378 = vmatprep.subr.mxu0 0.0
    %1379 = vmatpush1.msra.mxu0 0.0
    %1380 = vmatprep.subr.mxu0 0.0
    %1381 = vmatpush1.msra.mxu0 0.0
    %1382 = vmatprep.subr.mxu0 0.0
    %1383 = vmatpush1.msra.mxu0 0.0
    %1384 = vmatprep.subr.mxu0 0.0
    %1385 = vmatpush1.msra.mxu0 0.0
    %1386 = vmatprep.subr.mxu0 0.0
    %1387 = vmatpush1.msra.mxu0 0.0
    %1388 = vmatprep.subr.mxu0 0.0
    %1389 = vmatpush1.msra.mxu0 0.0
    %1390 = vmatprep.subr.mxu0 0.0
    %1391 = vmatpush1.msra.mxu0 0.0
    %1392 = vmatprep.subr.mxu0 0.0
    %1393 = vmatpush1.msra.mxu0 0.0
    %1394 = vmatprep.subr.mxu0 0.0
    %1395 = vmatpush1.msra.mxu0 0.0
    %1396 = vmatprep.subr.mxu0 0.0
    %1397 = vmatpush1.msra.mxu0 0.0
    %1398 = vmatprep.subr.mxu0 0.0
    %1399 = vmatpush1.msra.mxu0 0.0
    %1400 = vmatprep.subr.mxu0 0.0
    %1401 = vmatpush1.msra.mxu0 0.0
    %1402 = vmatprep.subr.mxu0 0.0
    %1403 = vmatpush1.msra.mxu0 0.0
    %1404 = vmatprep.subr.mxu0 0.0
    %1405 = vmatpush1.msra.mxu0 0.0
    %1406 = vmatprep.subr.mxu0 0.0
    %1407 = vmatpush1.msra.mxu0 0.0
    %1408 = vmatprep.subr.mxu0 0.0
    %1409 = vmatpush1.msra.mxu0 0.0
    %1410 = vmatprep.subr.mxu0 0.0
    %1411 = vmatpush1.msra.mxu0 0.0
    %1412 = vmatprep.subr.mxu0 0.0
    %1413 = vmatpush1.msra.mxu0 0.0
    %1414 = vmatprep.subr.mxu0 0.0
    %1415 = vmatpush1.msra.mxu0 0.0
    %1416 = vmatprep.subr.mxu0 0.0
    %1417 = vmatpush1.msra.mxu0 0.0
    %1418 = vmatprep.subr.mxu0 0.0
    %1419 = vmatpush1.msra.mxu0 0.0
    %1420 = vmatprep.subr.mxu0 0.0
    %1421 = vmatpush1.msra.mxu0 0.0
    %1422 = vmatprep.subr.mxu0 0.0
    %1423 = vmatpush1.msra.mxu0 0.0
    %1424 = vmatprep.subr.mxu0 0.0
    %1425 = vmatpush1.msra.mxu0 0.0
    %1426 = vmatprep.subr.mxu0 0.0
    %1427 = vmatpush1.msra.mxu0 0.0
    %1428 = vmatprep.mubr.f32.mxu0 0.0
    %1429 = vmatmul.mubr.f32.gmra.mrb[0].mxu0 %v1362
    %v1430 = vpop.f32.mrb[0].mxu0
    %v1431 = vadd.f32 0.0, %v1430
    %v1432 = vpop.f32.mrb[0].mxu0
    %1433 = vdwg.mxu0
    %1434 = vrot.lane.b32.xlu0 %v316, 56
    %v1435 = vpop.permute.xlu0 %1434
    %v1438 = vsel %vm332, %v1355, 0
    %1440 = vmatprep.subr.mxu0 0.0
    %1441 = vmatpush1.msra.mxu0 %v1435
    %1442 = vmatprep.subr.mxu0 0.0
    %1443 = vmatpush1.msra.mxu0 0.0
    %1444 = vmatprep.subr.mxu0 0.0
    %1445 = vmatpush1.msra.mxu0 0.0
    %1446 = vmatprep.subr.mxu0 0.0
    %1447 = vmatpush1.msra.mxu0 0.0
    %1448 = vmatprep.subr.mxu0 0.0
    %1449 = vmatpush1.msra.mxu0 0.0
    %1450 = vmatprep.subr.mxu0 0.0
    %1451 = vmatpush1.msra.mxu0 0.0
    %1452 = vmatprep.subr.mxu0 0.0
    %1453 = vmatpush1.msra.mxu0 0.0
    %1454 = vmatprep.subr.mxu0 0.0
    %1455 = vmatpush1.msra.mxu0 0.0
    %1456 = vmatprep.subr.mxu0 0.0
    %1457 = vmatpush1.msra.mxu0 0.0
    %1458 = vmatprep.subr.mxu0 0.0
    %1459 = vmatpush1.msra.mxu0 0.0
    %1460 = vmatprep.subr.mxu0 0.0
    %1461 = vmatpush1.msra.mxu0 0.0
    %1462 = vmatprep.subr.mxu0 0.0
    %1463 = vmatpush1.msra.mxu0 0.0
    %1464 = vmatprep.subr.mxu0 0.0
    %1465 = vmatpush1.msra.mxu0 0.0
    %1466 = vmatprep.subr.mxu0 0.0
    %1467 = vmatpush1.msra.mxu0 0.0
    %1468 = vmatprep.subr.mxu0 0.0
    %1469 = vmatpush1.msra.mxu0 0.0
    %1470 = vmatprep.subr.mxu0 0.0
    %1471 = vmatpush1.msra.mxu0 0.0
    %1472 = vmatprep.subr.mxu0 0.0
    %1473 = vmatpush1.msra.mxu0 0.0
    %1474 = vmatprep.subr.mxu0 0.0
    %1475 = vmatpush1.msra.mxu0 0.0
    %1476 = vmatprep.subr.mxu0 0.0
    %1477 = vmatpush1.msra.mxu0 0.0
    %1478 = vmatprep.subr.mxu0 0.0
    %1479 = vmatpush1.msra.mxu0 0.0
    %1480 = vmatprep.subr.mxu0 0.0
    %1481 = vmatpush1.msra.mxu0 0.0
    %1482 = vmatprep.subr.mxu0 0.0
    %1483 = vmatpush1.msra.mxu0 0.0
    %1484 = vmatprep.subr.mxu0 0.0
    %1485 = vmatpush1.msra.mxu0 0.0
    %1486 = vmatprep.subr.mxu0 0.0
    %1487 = vmatpush1.msra.mxu0 0.0
    %1488 = vmatprep.subr.mxu0 0.0
    %1489 = vmatpush1.msra.mxu0 0.0
    %1490 = vmatprep.subr.mxu0 0.0
    %1491 = vmatpush1.msra.mxu0 0.0
    %1492 = vmatprep.subr.mxu0 0.0
    %1493 = vmatpush1.msra.mxu0 0.0
    %1494 = vmatprep.subr.mxu0 0.0
    %1495 = vmatpush1.msra.mxu0 0.0
    %1496 = vmatprep.subr.mxu0 0.0
    %1497 = vmatpush1.msra.mxu0 0.0
    %1498 = vmatprep.subr.mxu0 0.0
    %1499 = vmatpush1.msra.mxu0 0.0
    %1500 = vmatprep.subr.mxu0 0.0
    %1501 = vmatpush1.msra.mxu0 0.0
    %1502 = vmatprep.subr.mxu0 0.0
    %1503 = vmatpush1.msra.mxu0 0.0
    %1504 = vmatprep.mubr.f32.mxu0 0.0
    %1505 = vmatmul.mubr.f32.gmra.mrb[0].mxu0 %v1438
    %v1506 = vpop.f32.mrb[0].mxu0
    %v1507 = vadd.f32 0.0, %v1506
    %v1508 = vpop.f32.mrb[0].mxu0
    %1509 = vdwg.mxu0
    %1510 = vrot.lane.b32.xlu0 %v321, 56
    %v1511 = vpop.permute.xlu0 %1510
    %v1514 = vsel %vm332, %v1356, 0
    %1516 = vmatprep.subr.mxu0 0.0
    %1517 = vmatpush1.msra.mxu0 %v1511
    %1518 = vmatprep.subr.mxu0 0.0
    %1519 = vmatpush1.msra.mxu0 0.0
    %1520 = vmatprep.subr.mxu0 0.0
    %1521 = vmatpush1.msra.mxu0 0.0
    %1522 = vmatprep.subr.mxu0 0.0
    %1523 = vmatpush1.msra.mxu0 0.0
    %1524 = vmatprep.subr.mxu0 0.0
    %1525 = vmatpush1.msra.mxu0 0.0
    %1526 = vmatprep.subr.mxu0 0.0
    %1527 = vmatpush1.msra.mxu0 0.0
    %1528 = vmatprep.subr.mxu0 0.0
    %1529 = vmatpush1.msra.mxu0 0.0
    %1530 = vmatprep.subr.mxu0 0.0
    %1531 = vmatpush1.msra.mxu0 0.0
    %1532 = vmatprep.subr.mxu0 0.0
    %1533 = vmatpush1.msra.mxu0 0.0
    %1534 = vmatprep.subr.mxu0 0.0
    %1535 = vmatpush1.msra.mxu0 0.0
    %1536 = vmatprep.subr.mxu0 0.0
    %1537 = vmatpush1.msra.mxu0 0.0
    %1538 = vmatprep.subr.mxu0 0.0
    %1539 = vmatpush1.msra.mxu0 0.0
    %1540 = vmatprep.subr.mxu0 0.0
    %1541 = vmatpush1.msra.mxu0 0.0
    %1542 = vmatprep.subr.mxu0 0.0
    %1543 = vmatpush1.msra.mxu0 0.0
    %1544 = vmatprep.subr.mxu0 0.0
    %1545 = vmatpush1.msra.mxu0 0.0
    %1546 = vmatprep.subr.mxu0 0.0
    %1547 = vmatpush1.msra.mxu0 0.0
    %1548 = vmatprep.subr.mxu0 0.0
    %1549 = vmatpush1.msra.mxu0 0.0
    %1550 = vmatprep.subr.mxu0 0.0
    %1551 = vmatpush1.msra.mxu0 0.0
    %1552 = vmatprep.subr.mxu0 0.0
    %1553 = vmatpush1.msra.mxu0 0.0
    %1554 = vmatprep.subr.mxu0 0.0
    %1555 = vmatpush1.msra.mxu0 0.0
    %1556 = vmatprep.subr.mxu0 0.0
    %1557 = vmatpush1.msra.mxu0 0.0
    %1558 = vmatprep.subr.mxu0 0.0
    %1559 = vmatpush1.msra.mxu0 0.0
    %1560 = vmatprep.subr.mxu0 0.0
    %1561 = vmatpush1.msra.mxu0 0.0
    %1562 = vmatprep.subr.mxu0 0.0
    %1563 = vmatpush1.msra.mxu0 0.0
    %1564 = vmatprep.subr.mxu0 0.0
    %1565 = vmatpush1.msra.mxu0 0.0
    %1566 = vmatprep.subr.mxu0 0.0
    %1567 = vmatpush1.msra.mxu0 0.0
    %1568 = vmatprep.subr.mxu0 0.0
    %1569 = vmatpush1.msra.mxu0 0.0
    %1570 = vmatprep.subr.mxu0 0.0
    %1571 = vmatpush1.msra.mxu0 0.0
    %1572 = vmatprep.subr.mxu0 0.0
    %1573 = vmatpush1.msra.mxu0 0.0
    %1574 = vmatprep.subr.mxu0 0.0
    %1575 = vmatpush1.msra.mxu0 0.0
    %1576 = vmatprep.subr.mxu0 0.0
    %1577 = vmatpush1.msra.mxu0 0.0
    %1578 = vmatprep.subr.mxu0 0.0
    %1579 = vmatpush1.msra.mxu0 0.0
    %1580 = vmatprep.mubr.f32.mxu0 0.0
    %1581 = vmatmul.mubr.f32.gmra.mrb[0].mxu0 %v1514
    %v1582 = vpop.f32.mrb[0].mxu0
    %v1583 = vadd.f32 0.0, %v1582
    %v1584 = vpop.f32.mrb[0].mxu0
    %1585 = vdwg.mxu0
    %1586 = vrot.lane.b32.xlu0 %v326, 56
    %v1587 = vpop.permute.xlu0 %1586
    %v1590 = vsel %vm332, %v1357, 0
    %1592 = vmatprep.subr.mxu0 0.0
    %1593 = vmatpush1.msra.mxu0 %v1587
    %1594 = vmatprep.subr.mxu0 0.0
    %1595 = vmatpush1.msra.mxu0 0.0
    %1596 = vmatprep.subr.mxu0 0.0
    %1597 = vmatpush1.msra.mxu0 0.0
    %1598 = vmatprep.subr.mxu0 0.0
    %1599 = vmatpush1.msra.mxu0 0.0
    %1600 = vmatprep.subr.mxu0 0.0
    %1601 = vmatpush1.msra.mxu0 0.0
    %1602 = vmatprep.subr.mxu0 0.0
    %1603 = vmatpush1.msra.mxu0 0.0
    %1604 = vmatprep.subr.mxu0 0.0
    %1605 = vmatpush1.msra.mxu0 0.0
    %1606 = vmatprep.subr.mxu0 0.0
    %1607 = vmatpush1.msra.mxu0 0.0
    %1608 = vmatprep.subr.mxu0 0.0
    %1609 = vmatpush1.msra.mxu0 0.0
    %1610 = vmatprep.subr.mxu0 0.0
    %1611 = vmatpush1.msra.mxu0 0.0
    %1612 = vmatprep.subr.mxu0 0.0
    %1613 = vmatpush1.msra.mxu0 0.0
    %1614 = vmatprep.subr.mxu0 0.0
    %1615 = vmatpush1.msra.mxu0 0.0
    %1616 = vmatprep.subr.mxu0 0.0
    %1617 = vmatpush1.msra.mxu0 0.0
    %1618 = vmatprep.subr.mxu0 0.0
    %1619 = vmatpush1.msra.mxu0 0.0
    %1620 = vmatprep.subr.mxu0 0.0
    %1621 = vmatpush1.msra.mxu0 0.0
    %1622 = vmatprep.subr.mxu0 0.0
    %1623 = vmatpush1.msra.mxu0 0.0
    %1624 = vmatprep.subr.mxu0 0.0
    %1625 = vmatpush1.msra.mxu0 0.0
    %1626 = vmatprep.subr.mxu0 0.0
    %1627 = vmatpush1.msra.mxu0 0.0
    %1628 = vmatprep.subr.mxu0 0.0
    %1629 = vmatpush1.msra.mxu0 0.0
    %1630 = vmatprep.subr.mxu0 0.0
    %1631 = vmatpush1.msra.mxu0 0.0
    %1632 = vmatprep.subr.mxu0 0.0
    %1633 = vmatpush1.msra.mxu0 0.0
    %1634 = vmatprep.subr.mxu0 0.0
    %1635 = vmatpush1.msra.mxu0 0.0
    %1636 = vmatprep.subr.mxu0 0.0
    %1637 = vmatpush1.msra.mxu0 0.0
    %1638 = vmatprep.subr.mxu0 0.0
    %1639 = vmatpush1.msra.mxu0 0.0
    %1640 = vmatprep.subr.mxu0 0.0
    %1641 = vmatpush1.msra.mxu0 0.0
    %1642 = vmatprep.subr.mxu0 0.0
    %1643 = vmatpush1.msra.mxu0 0.0
    %1644 = vmatprep.subr.mxu0 0.0
    %1645 = vmatpush1.msra.mxu0 0.0
    %1646 = vmatprep.subr.mxu0 0.0
    %1647 = vmatpush1.msra.mxu0 0.0
    %1648 = vmatprep.subr.mxu0 0.0
    %1649 = vmatpush1.msra.mxu0 0.0
    %1650 = vmatprep.subr.mxu0 0.0
    %1651 = vmatpush1.msra.mxu0 0.0
    %1652 = vmatprep.subr.mxu0 0.0
    %1653 = vmatpush1.msra.mxu0 0.0
    %1654 = vmatprep.subr.mxu0 0.0
    %1655 = vmatpush1.msra.mxu0 0.0
    %1656 = vmatprep.mubr.f32.mxu0 0.0
    %1657 = vmatmul.mubr.f32.gmra.mrb[0].mxu0 %v1590
    %v1658 = vpop.f32.mrb[0].mxu0
    %v1659 = vadd.f32 0.0, %v1658
    %v1660 = vpop.f32.mrb[0].mxu0
    %1661 = vdwg.mxu0
    %1662 = vrot.lane.b32.xlu0 %v311, 112
    %v1663 = vpop.permute.xlu0 %1662
    %1664 = vrot.lane.b32.xlu0 %v311, 80
    %v1665 = vpop.permute.xlu0 %1664
    %v1666 = vsel %vm332, %v1663, 0
    %v1668 = vsel %vm332, %v1665, 0
    %1670 = vmatprep.subr.mxu0 0.0
    %1671 = vmatpush1.xpose.msra.mxu0 %v1668
    %1672 = vmatprep.subr.mxu0 0.0
    %1673 = vmatpush1.xpose.msra.mxu0 0.0
    %1674 = vmatprep.subr.mxu0 0.0
    %1675 = vmatpush1.xpose.msra.mxu0 0.0
    %1676 = vmatprep.subr.mxu0 0.0
    %1677 = vmatpush1.xpose.msra.mxu0 0.0
    %1678 = vmatprep.subr.mxu0 0.0
    %1679 = vmatpush1.xpose.msra.mxu0 0.0
    %1680 = vmatprep.subr.mxu0 0.0
    %1681 = vmatpush1.xpose.msra.mxu0 0.0
    %1682 = vmatprep.subr.mxu0 0.0
    %1683 = vmatpush1.xpose.msra.mxu0 0.0
    %1684 = vmatprep.subr.mxu0 0.0
    %1685 = vmatpush1.xpose.msra.mxu0 0.0
    %1686 = vmatprep.subr.mxu0 0.0
    %1687 = vmatpush1.xpose.msra.mxu0 0.0
    %1688 = vmatprep.subr.mxu0 0.0
    %1689 = vmatpush1.xpose.msra.mxu0 0.0
    %1690 = vmatprep.subr.mxu0 0.0
    %1691 = vmatpush1.xpose.msra.mxu0 0.0
    %1692 = vmatprep.subr.mxu0 0.0
    %1693 = vmatpush1.xpose.msra.mxu0 0.0
    %1694 = vmatprep.subr.mxu0 0.0
    %1695 = vmatpush1.xpose.msra.mxu0 0.0
    %1696 = vmatprep.subr.mxu0 0.0
    %1697 = vmatpush1.xpose.msra.mxu0 0.0
    %1698 = vmatprep.subr.mxu0 0.0
    %1699 = vmatpush1.xpose.msra.mxu0 0.0
    %1700 = vmatprep.subr.mxu0 0.0
    %1701 = vmatpush1.xpose.msra.mxu0 0.0
    %1702 = vmatprep.subr.mxu0 0.0
    %1703 = vmatpush1.xpose.msra.mxu0 0.0
    %1704 = vmatprep.subr.mxu0 0.0
    %1705 = vmatpush1.xpose.msra.mxu0 0.0
    %1706 = vmatprep.subr.mxu0 0.0
    %1707 = vmatpush1.xpose.msra.mxu0 0.0
    %1708 = vmatprep.subr.mxu0 0.0
    %1709 = vmatpush1.xpose.msra.mxu0 0.0
    %1710 = vmatprep.subr.mxu0 0.0
    %1711 = vmatpush1.xpose.msra.mxu0 0.0
    %1712 = vmatprep.subr.mxu0 0.0
    %1713 = vmatpush1.xpose.msra.mxu0 0.0
    %1714 = vmatprep.subr.mxu0 0.0
    %1715 = vmatpush1.xpose.msra.mxu0 0.0
    %1716 = vmatprep.subr.mxu0 0.0
    %1717 = vmatpush1.xpose.msra.mxu0 0.0
    %1718 = vmatprep.subr.mxu0 0.0
    %1719 = vmatpush1.xpose.msra.mxu0 0.0
    %1720 = vmatprep.subr.mxu0 0.0
    %1721 = vmatpush1.xpose.msra.mxu0 0.0
    %1722 = vmatprep.subr.mxu0 0.0
    %1723 = vmatpush1.xpose.msra.mxu0 0.0
    %1724 = vmatprep.subr.mxu0 0.0
    %1725 = vmatpush1.xpose.msra.mxu0 0.0
    %1726 = vmatprep.subr.mxu0 0.0
    %1727 = vmatpush1.xpose.msra.mxu0 0.0
    %1728 = vmatprep.subr.mxu0 0.0
    %1729 = vmatpush1.xpose.msra.mxu0 0.0
    %1730 = vmatprep.subr.mxu0 0.0
    %1731 = vmatpush1.xpose.msra.mxu0 0.0
    %1732 = vmatprep.subr.mxu0 0.0
    %1733 = vmatpush1.xpose.msra.mxu0 0.0
    %1734 = vmatprep.mubr.f32.mxu0 0.0
    %1735 = vmatmul.mubr.f32.gmra.mrb[0].mxu0 %v1666
    %v1736 = vpop.f32.mrb[0].mxu0
    %v1737 = vadd.f32 0.0, %v1736
    %v1738 = vpop.f32.mrb[0].mxu0
    %1739 = vdwg.mxu0
    %1740 = vrot.lane.b32.xlu0 %v316, 112
    %v1741 = vpop.permute.xlu0 %1740
    %1742 = vrot.lane.b32.xlu0 %v316, 80
    %v1743 = vpop.permute.xlu0 %1742
    %v1744 = vsel %vm332, %v1741, 0
    %v1746 = vsel %vm332, %v1743, 0
    %1748 = vmatprep.subr.mxu0 0.0
    %1749 = vmatpush1.xpose.msra.mxu0 %v1746
    %1750 = vmatprep.subr.mxu0 0.0
    %1751 = vmatpush1.xpose.msra.mxu0 0.0
    %1752 = vmatprep.subr.mxu0 0.0
    %1753 = vmatpush1.xpose.msra.mxu0 0.0
    %1754 = vmatprep.subr.mxu0 0.0
    %1755 = vmatpush1.xpose.msra.mxu0 0.0
    %1756 = vmatprep.subr.mxu0 0.0
    %1757 = vmatpush1.xpose.msra.mxu0 0.0
    %1758 = vmatprep.subr.mxu0 0.0
    %1759 = vmatpush1.xpose.msra.mxu0 0.0
    %1760 = vmatprep.subr.mxu0 0.0
    %1761 = vmatpush1.xpose.msra.mxu0 0.0
    %1762 = vmatprep.subr.mxu0 0.0
    %1763 = vmatpush1.xpose.msra.mxu0 0.0
    %1764 = vmatprep.subr.mxu0 0.0
    %1765 = vmatpush1.xpose.msra.mxu0 0.0
    %1766 = vmatprep.subr.mxu0 0.0
    %1767 = vmatpush1.xpose.msra.mxu0 0.0
    %1768 = vmatprep.subr.mxu0 0.0
    %1769 = vmatpush1.xpose.msra.mxu0 0.0
    %1770 = vmatprep.subr.mxu0 0.0
    %1771 = vmatpush1.xpose.msra.mxu0 0.0
    %1772 = vmatprep.subr.mxu0 0.0
    %1773 = vmatpush1.xpose.msra.mxu0 0.0
    %1774 = vmatprep.subr.mxu0 0.0
    %1775 = vmatpush1.xpose.msra.mxu0 0.0
    %1776 = vmatprep.subr.mxu0 0.0
    %1777 = vmatpush1.xpose.msra.mxu0 0.0
    %1778 = vmatprep.subr.mxu0 0.0
    %1779 = vmatpush1.xpose.msra.mxu0 0.0
    %1780 = vmatprep.subr.mxu0 0.0
    %1781 = vmatpush1.xpose.msra.mxu0 0.0
    %1782 = vmatprep.subr.mxu0 0.0
    %1783 = vmatpush1.xpose.msra.mxu0 0.0
    %1784 = vmatprep.subr.mxu0 0.0
    %1785 = vmatpush1.xpose.msra.mxu0 0.0
    %1786 = vmatprep.subr.mxu0 0.0
    %1787 = vmatpush1.xpose.msra.mxu0 0.0
    %1788 = vmatprep.subr.mxu0 0.0
    %1789 = vmatpush1.xpose.msra.mxu0 0.0
    %1790 = vmatprep.subr.mxu0 0.0
    %1791 = vmatpush1.xpose.msra.mxu0 0.0
    %1792 = vmatprep.subr.mxu0 0.0
    %1793 = vmatpush1.xpose.msra.mxu0 0.0
    %1794 = vmatprep.subr.mxu0 0.0
    %1795 = vmatpush1.xpose.msra.mxu0 0.0
    %1796 = vmatprep.subr.mxu0 0.0
    %1797 = vmatpush1.xpose.msra.mxu0 0.0
    %1798 = vmatprep.subr.mxu0 0.0
    %1799 = vmatpush1.xpose.msra.mxu0 0.0
    %1800 = vmatprep.subr.mxu0 0.0
    %1801 = vmatpush1.xpose.msra.mxu0 0.0
    %1802 = vmatprep.subr.mxu0 0.0
    %1803 = vmatpush1.xpose.msra.mxu0 0.0
    %1804 = vmatprep.subr.mxu0 0.0
    %1805 = vmatpush1.xpose.msra.mxu0 0.0
    %1806 = vmatprep.subr.mxu0 0.0
    %1807 = vmatpush1.xpose.msra.mxu0 0.0
    %1808 = vmatprep.subr.mxu0 0.0
    %1809 = vmatpush1.xpose.msra.mxu0 0.0
    %1810 = vmatprep.subr.mxu0 0.0
    %1811 = vmatpush1.xpose.msra.mxu0 0.0
    %1812 = vmatprep.mubr.f32.mxu0 0.0
    %1813 = vmatmul.mubr.f32.gmra.mrb[0].mxu0 %v1744
    %v1814 = vpop.f32.mrb[0].mxu0
    %v1815 = vadd.f32 0.0, %v1814
    %v1816 = vpop.f32.mrb[0].mxu0
    %1817 = vdwg.mxu0
    %1818 = vrot.lane.b32.xlu0 %v321, 112
    %v1819 = vpop.permute.xlu0 %1818
    %1820 = vrot.lane.b32.xlu0 %v321, 80
    %v1821 = vpop.permute.xlu0 %1820
    %v1822 = vsel %vm332, %v1819, 0
    %v1824 = vsel %vm332, %v1821, 0
    %1826 = vmatprep.subr.mxu0 0.0
    %1827 = vmatpush1.xpose.msra.mxu0 %v1824
    %1828 = vmatprep.subr.mxu0 0.0
    %1829 = vmatpush1.xpose.msra.mxu0 0.0
    %1830 = vmatprep.subr.mxu0 0.0
    %1831 = vmatpush1.xpose.msra.mxu0 0.0
    %1832 = vmatprep.subr.mxu0 0.0
    %1833 = vmatpush1.xpose.msra.mxu0 0.0
    %1834 = vmatprep.subr.mxu0 0.0
    %1835 = vmatpush1.xpose.msra.mxu0 0.0
    %1836 = vmatprep.subr.mxu0 0.0
    %1837 = vmatpush1.xpose.msra.mxu0 0.0
    %1838 = vmatprep.subr.mxu0 0.0
    %1839 = vmatpush1.xpose.msra.mxu0 0.0
    %1840 = vmatprep.subr.mxu0 0.0
    %1841 = vmatpush1.xpose.msra.mxu0 0.0
    %1842 = vmatprep.subr.mxu0 0.0
    %1843 = vmatpush1.xpose.msra.mxu0 0.0
    %1844 = vmatprep.subr.mxu0 0.0
    %1845 = vmatpush1.xpose.msra.mxu0 0.0
    %1846 = vmatprep.subr.mxu0 0.0
    %1847 = vmatpush1.xpose.msra.mxu0 0.0
    %1848 = vmatprep.subr.mxu0 0.0
    %1849 = vmatpush1.xpose.msra.mxu0 0.0
    %1850 = vmatprep.subr.mxu0 0.0
    %1851 = vmatpush1.xpose.msra.mxu0 0.0
    %1852 = vmatprep.subr.mxu0 0.0
    %1853 = vmatpush1.xpose.msra.mxu0 0.0
    %1854 = vmatprep.subr.mxu0 0.0
    %1855 = vmatpush1.xpose.msra.mxu0 0.0
    %1856 = vmatprep.subr.mxu0 0.0
    %1857 = vmatpush1.xpose.msra.mxu0 0.0
    %1858 = vmatprep.subr.mxu0 0.0
    %1859 = vmatpush1.xpose.msra.mxu0 0.0
    %1860 = vmatprep.subr.mxu0 0.0
    %1861 = vmatpush1.xpose.msra.mxu0 0.0
    %1862 = vmatprep.subr.mxu0 0.0
    %1863 = vmatpush1.xpose.msra.mxu0 0.0
    %1864 = vmatprep.subr.mxu0 0.0
    %1865 = vmatpush1.xpose.msra.mxu0 0.0
    %1866 = vmatprep.subr.mxu0 0.0
    %1867 = vmatpush1.xpose.msra.mxu0 0.0
    %1868 = vmatprep.subr.mxu0 0.0
    %1869 = vmatpush1.xpose.msra.mxu0 0.0
    %1870 = vmatprep.subr.mxu0 0.0
    %1871 = vmatpush1.xpose.msra.mxu0 0.0
    %1872 = vmatprep.subr.mxu0 0.0
    %1873 = vmatpush1.xpose.msra.mxu0 0.0
    %1874 = vmatprep.subr.mxu0 0.0
    %1875 = vmatpush1.xpose.msra.mxu0 0.0
    %1876 = vmatprep.subr.mxu0 0.0
    %1877 = vmatpush1.xpose.msra.mxu0 0.0
    %1878 = vmatprep.subr.mxu0 0.0
    %1879 = vmatpush1.xpose.msra.mxu0 0.0
    %1880 = vmatprep.subr.mxu0 0.0
    %1881 = vmatpush1.xpose.msra.mxu0 0.0
    %1882 = vmatprep.subr.mxu0 0.0
    %1883 = vmatpush1.xpose.msra.mxu0 0.0
    %1884 = vmatprep.subr.mxu0 0.0
    %1885 = vmatpush1.xpose.msra.mxu0 0.0
    %1886 = vmatprep.subr.mxu0 0.0
    %1887 = vmatpush1.xpose.msra.mxu0 0.0
    %1888 = vmatprep.subr.mxu0 0.0
    %1889 = vmatpush1.xpose.msra.mxu0 0.0
    %1890 = vmatprep.mubr.f32.mxu0 0.0
    %1891 = vmatmul.mubr.f32.gmra.mrb[0].mxu0 %v1822
    %v1892 = vpop.f32.mrb[0].mxu0
    %v1893 = vadd.f32 0.0, %v1892
    %v1894 = vpop.f32.mrb[0].mxu0
    %1895 = vdwg.mxu0
    %1896 = vrot.lane.b32.xlu0 %v326, 112
    %v1897 = vpop.permute.xlu0 %1896
    %1898 = vrot.lane.b32.xlu0 %v326, 80
    %v1899 = vpop.permute.xlu0 %1898
    %v1900 = vsel %vm332, %v1897, 0
    %v1902 = vsel %vm332, %v1899, 0
    %1904 = vmatprep.subr.mxu0 0.0
    %1905 = vmatpush1.xpose.msra.mxu0 %v1902
    %1906 = vmatprep.subr.mxu0 0.0
    %1907 = vmatpush1.xpose.msra.mxu0 0.0
    %1908 = vmatprep.subr.mxu0 0.0
    %1909 = vmatpush1.xpose.msra.mxu0 0.0
    %1910 = vmatprep.subr.mxu0 0.0
    %1911 = vmatpush1.xpose.msra.mxu0 0.0
    %1912 = vmatprep.subr.mxu0 0.0
    %1913 = vmatpush1.xpose.msra.mxu0 0.0
    %1914 = vmatprep.subr.mxu0 0.0
    %1915 = vmatpush1.xpose.msra.mxu0 0.0
    %1916 = vmatprep.subr.mxu0 0.0
    %1917 = vmatpush1.xpose.msra.mxu0 0.0
    %1918 = vmatprep.subr.mxu0 0.0
    %1919 = vmatpush1.xpose.msra.mxu0 0.0
    %1920 = vmatprep.subr.mxu0 0.0
    %1921 = vmatpush1.xpose.msra.mxu0 0.0
    %1922 = vmatprep.subr.mxu0 0.0
    %1923 = vmatpush1.xpose.msra.mxu0 0.0
    %1924 = vmatprep.subr.mxu0 0.0
    %1925 = vmatpush1.xpose.msra.mxu0 0.0
    %1926 = vmatprep.subr.mxu0 0.0
    %1927 = vmatpush1.xpose.msra.mxu0 0.0
    %1928 = vmatprep.subr.mxu0 0.0
    %1929 = vmatpush1.xpose.msra.mxu0 0.0
    %1930 = vmatprep.subr.mxu0 0.0
    %1931 = vmatpush1.xpose.msra.mxu0 0.0
    %1932 = vmatprep.subr.mxu0 0.0
    %1933 = vmatpush1.xpose.msra.mxu0 0.0
    %1934 = vmatprep.subr.mxu0 0.0
    %1935 = vmatpush1.xpose.msra.mxu0 0.0
    %1936 = vmatprep.subr.mxu0 0.0
    %1937 = vmatpush1.xpose.msra.mxu0 0.0
    %1938 = vmatprep.subr.mxu0 0.0
    %1939 = vmatpush1.xpose.msra.mxu0 0.0
    %1940 = vmatprep.subr.mxu0 0.0
    %1941 = vmatpush1.xpose.msra.mxu0 0.0
    %1942 = vmatprep.subr.mxu0 0.0
    %1943 = vmatpush1.xpose.msra.mxu0 0.0
    %1944 = vmatprep.subr.mxu0 0.0
    %1945 = vmatpush1.xpose.msra.mxu0 0.0
    %1946 = vmatprep.subr.mxu0 0.0
    %1947 = vmatpush1.xpose.msra.mxu0 0.0
    %1948 = vmatprep.subr.mxu0 0.0
    %1949 = vmatpush1.xpose.msra.mxu0 0.0
    %1950 = vmatprep.subr.mxu0 0.0
    %1951 = vmatpush1.xpose.msra.mxu0 0.0
    %1952 = vmatprep.subr.mxu0 0.0
    %1953 = vmatpush1.xpose.msra.mxu0 0.0
    %1954 = vmatprep.subr.mxu0 0.0
    %1955 = vmatpush1.xpose.msra.mxu0 0.0
    %1956 = vmatprep.subr.mxu0 0.0
    %1957 = vmatpush1.xpose.msra.mxu0 0.0
    %1958 = vmatprep.subr.mxu0 0.0
    %1959 = vmatpush1.xpose.msra.mxu0 0.0
    %1960 = vmatprep.subr.mxu0 0.0
    %1961 = vmatpush1.xpose.msra.mxu0 0.0
    %1962 = vmatprep.subr.mxu0 0.0
    %1963 = vmatpush1.xpose.msra.mxu0 0.0
    %1964 = vmatprep.subr.mxu0 0.0
    %1965 = vmatpush1.xpose.msra.mxu0 0.0
    %1966 = vmatprep.subr.mxu0 0.0
    %1967 = vmatpush1.xpose.msra.mxu0 0.0
    %1968 = vmatprep.mubr.f32.mxu0 0.0
    %1969 = vmatmul.mubr.f32.gmra.mrb[0].mxu0 %v1900
    %v1970 = vpop.f32.mrb[0].mxu0
    %v1971 = vadd.f32 0.0, %v1970
    %v1972 = vpop.f32.mrb[0].mxu0
    %1973 = vdwg.mxu0
    %v1974 = vmul.f32 %v1737, 0.35355338
    %v1975 = vmul.f32 %v1815, 0.35355338
    %v1976 = vmul.f32 %v1893, 0.35355338
    %v1977 = vmul.f32 %v1971, 0.35355338
    %v1978 = vadd.f32 %v1974, %v212
    %v1979 = vadd.f32 %v1975, %v216
    %v1980 = vadd.f32 %v1976, %v220
    %v1981 = vadd.f32 %v1977, %v224
    %v1982 = vsel %vm332, %v1978, -inf
    %1983 = vmax.xlane.f32.xlu0 %v1982
    %v1984 = vpop.xlane.xlu0 %1983
    %v1985 = vsel %vm332, %v1979, -inf
    %1986 = vmax.xlane.f32.xlu0 %v1985
    %v1987 = vpop.xlane.xlu0 %1986
    %v1988 = vsel %vm332, %v1980, -inf
    %1989 = vmax.xlane.f32.xlu0 %v1988
    %v1990 = vpop.xlane.xlu0 %1989
    %v1991 = vsel %vm332, %v1981, -inf
    %1992 = vmax.xlane.f32.xlu0 %v1991
    %v1993 = vpop.xlane.xlu0 %1992
    %v1994 = vsub.f32 %v1978, %v1984
    %v1995 = vsub.f32 %v1979, %v1987
    %v1996 = vsub.f32 %v1980, %v1990
    %v1997 = vsub.f32 %v1981, %v1993
    %v1998 = vmul.f32 %v1994, 1.442695
    %v1999 = vpow.pop %v1998
    %v2000 = vmul.f32 %v1995, 1.442695
    %v2001 = vpow.pop %v2000
    %v2002 = vmul.f32 %v1996, 1.442695
    %v2003 = vpow.pop %v2002
    %v2004 = vmul.f32 %v1997, 1.442695
    %v2005 = vpow.pop %v2004
    %v2006 = vsel %vm332, %v1999, 0.0
    %2007 = vadd.xlane.f32.xlu0 %v2006
    %v2008 = vpop.xlane.xlu0 %2007
    %v2009 = vsel %vm332, %v2001, 0.0
    %2010 = vadd.xlane.f32.xlu0 %v2009
    %v2011 = vpop.xlane.xlu0 %2010
    %v2012 = vsel %vm332, %v2003, 0.0
    %2013 = vadd.xlane.f32.xlu0 %v2012
    %v2014 = vpop.xlane.xlu0 %2013
    %v2015 = vsel %vm332, %v2005, 0.0
    %2016 = vadd.xlane.f32.xlu0 %v2015
    %v2017 = vpop.xlane.xlu0 %2016
    %v2018 = vrcp.pop %v2008
    %v2019 = vrcp.pop %v2011
    %v2020 = vrcp.pop %v2014
    %v2021 = vrcp.pop %v2017
    %v2022 = vmul.f32 %v1999, %v2018
    %v2023 = vmul.f32 %v2001, %v2019
    %v2024 = vmul.f32 %v2003, %v2020
    %v2025 = vmul.f32 %v2005, %v2021
    %2026 = vrot.lane.b32.xlu0 %v311, 48
    %v2027 = vpop.permute.xlu0 %2026
    %v2030 = vsel %vm332, %v2022, 0
    %2032 = vmatprep.subr.mxu0 0.0
    %2033 = vmatpush1.msra.mxu0 %v2027
    %2034 = vmatprep.subr.mxu0 0.0
    %2035 = vmatpush1.msra.mxu0 0.0
    %2036 = vmatprep.subr.mxu0 0.0
    %2037 = vmatpush1.msra.mxu0 0.0
    %2038 = vmatprep.subr.mxu0 0.0
    %2039 = vmatpush1.msra.mxu0 0.0
    %2040 = vmatprep.subr.mxu0 0.0
    %2041 = vmatpush1.msra.mxu0 0.0
    %2042 = vmatprep.subr.mxu0 0.0
    %2043 = vmatpush1.msra.mxu0 0.0
    %2044 = vmatprep.subr.mxu0 0.0
    %2045 = vmatpush1.msra.mxu0 0.0
    %2046 = vmatprep.subr.mxu0 0.0
    %2047 = vmatpush1.msra.mxu0 0.0
    %2048 = vmatprep.subr.mxu0 0.0
    %2049 = vmatpush1.msra.mxu0 0.0
    %2050 = vmatprep.subr.mxu0 0.0
    %2051 = vmatpush1.msra.mxu0 0.0
    %2052 = vmatprep.subr.mxu0 0.0
    %2053 = vmatpush1.msra.mxu0 0.0
    %2054 = vmatprep.subr.mxu0 0.0
    %2055 = vmatpush1.msra.mxu0 0.0
    %2056 = vmatprep.subr.mxu0 0.0
    %2057 = vmatpush1.msra.mxu0 0.0
    %2058 = vmatprep.subr.mxu0 0.0
    %2059 = vmatpush1.msra.mxu0 0.0
    %2060 = vmatprep.subr.mxu0 0.0
    %2061 = vmatpush1.msra.mxu0 0.0
    %2062 = vmatprep.subr.mxu0 0.0
    %2063 = vmatpush1.msra.mxu0 0.0
    %2064 = vmatprep.subr.mxu0 0.0
    %2065 = vmatpush1.msra.mxu0 0.0
    %2066 = vmatprep.subr.mxu0 0.0
    %2067 = vmatpush1.msra.mxu0 0.0
    %2068 = vmatprep.subr.mxu0 0.0
    %2069 = vmatpush1.msra.mxu0 0.0
    %2070 = vmatprep.subr.mxu0 0.0
    %2071 = vmatpush1.msra.mxu0 0.0
    %2072 = vmatprep.subr.mxu0 0.0
    %2073 = vmatpush1.msra.mxu0 0.0
    %2074 = vmatprep.subr.mxu0 0.0
    %2075 = vmatpush1.msra.mxu0 0.0
    %2076 = vmatprep.subr.mxu0 0.0
    %2077 = vmatpush1.msra.mxu0 0.0
    %2078 = vmatprep.subr.mxu0 0.0
    %2079 = vmatpush1.msra.mxu0 0.0
    %2080 = vmatprep.subr.mxu0 0.0
    %2081 = vmatpush1.msra.mxu0 0.0
    %2082 = vmatprep.subr.mxu0 0.0
    %2083 = vmatpush1.msra.mxu0 0.0
    %2084 = vmatprep.subr.mxu0 0.0
    %2085 = vmatpush1.msra.mxu0 0.0
    %2086 = vmatprep.subr.mxu0 0.0
    %2087 = vmatpush1.msra.mxu0 0.0
    %2088 = vmatprep.subr.mxu0 0.0
    %2089 = vmatpush1.msra.mxu0 0.0
    %2090 = vmatprep.subr.mxu0 0.0
    %2091 = vmatpush1.msra.mxu0 0.0
    %2092 = vmatprep.subr.mxu0 0.0
    %2093 = vmatpush1.msra.mxu0 0.0
    %2094 = vmatprep.subr.mxu0 0.0
    %2095 = vmatpush1.msra.mxu0 0.0
    %2096 = vmatprep.mubr.f32.mxu0 0.0
    %2097 = vmatmul.mubr.f32.gmra.mrb[0].mxu0 %v2030
    %v2098 = vpop.f32.mrb[0].mxu0
    %v2099 = vadd.f32 0.0, %v2098
    %v2100 = vpop.f32.mrb[0].mxu0
    %2101 = vdwg.mxu0
    %2102 = vrot.lane.b32.xlu0 %v316, 48
    %v2103 = vpop.permute.xlu0 %2102
    %v2106 = vsel %vm332, %v2023, 0
    %2108 = vmatprep.subr.mxu0 0.0
    %2109 = vmatpush1.msra.mxu0 %v2103
    %2110 = vmatprep.subr.mxu0 0.0
    %2111 = vmatpush1.msra.mxu0 0.0
    %2112 = vmatprep.subr.mxu0 0.0
    %2113 = vmatpush1.msra.mxu0 0.0
    %2114 = vmatprep.subr.mxu0 0.0
    %2115 = vmatpush1.msra.mxu0 0.0
    %2116 = vmatprep.subr.mxu0 0.0
    %2117 = vmatpush1.msra.mxu0 0.0
    %2118 = vmatprep.subr.mxu0 0.0
    %2119 = vmatpush1.msra.mxu0 0.0
    %2120 = vmatprep.subr.mxu0 0.0
    %2121 = vmatpush1.msra.mxu0 0.0
    %2122 = vmatprep.subr.mxu0 0.0
    %2123 = vmatpush1.msra.mxu0 0.0
    %2124 = vmatprep.subr.mxu0 0.0
    %2125 = vmatpush1.msra.mxu0 0.0
    %2126 = vmatprep.subr.mxu0 0.0
    %2127 = vmatpush1.msra.mxu0 0.0
    %2128 = vmatprep.subr.mxu0 0.0
    %2129 = vmatpush1.msra.mxu0 0.0
    %2130 = vmatprep.subr.mxu0 0.0
    %2131 = vmatpush1.msra.mxu0 0.0
    %2132 = vmatprep.subr.mxu0 0.0
    %2133 = vmatpush1.msra.mxu0 0.0
    %2134 = vmatprep.subr.mxu0 0.0
    %2135 = vmatpush1.msra.mxu0 0.0
    %2136 = vmatprep.subr.mxu0 0.0
    %2137 = vmatpush1.msra.mxu0 0.0
    %2138 = vmatprep.subr.mxu0 0.0
    %2139 = vmatpush1.msra.mxu0 0.0
    %2140 = vmatprep.subr.mxu0 0.0
    %2141 = vmatpush1.msra.mxu0 0.0
    %2142 = vmatprep.subr.mxu0 0.0
    %2143 = vmatpush1.msra.mxu0 0.0
    %2144 = vmatprep.subr.mxu0 0.0
    %2145 = vmatpush1.msra.mxu0 0.0
    %2146 = vmatprep.subr.mxu0 0.0
    %2147 = vmatpush1.msra.mxu0 0.0
    %2148 = vmatprep.subr.mxu0 0.0
    %2149 = vmatpush1.msra.mxu0 0.0
    %2150 = vmatprep.subr.mxu0 0.0
    %2151 = vmatpush1.msra.mxu0 0.0
    %2152 = vmatprep.subr.mxu0 0.0
    %2153 = vmatpush1.msra.mxu0 0.0
    %2154 = vmatprep.subr.mxu0 0.0
    %2155 = vmatpush1.msra.mxu0 0.0
    %2156 = vmatprep.subr.mxu0 0.0
    %2157 = vmatpush1.msra.mxu0 0.0
    %2158 = vmatprep.subr.mxu0 0.0
    %2159 = vmatpush1.msra.mxu0 0.0
    %2160 = vmatprep.subr.mxu0 0.0
    %2161 = vmatpush1.msra.mxu0 0.0
    %2162 = vmatprep.subr.mxu0 0.0
    %2163 = vmatpush1.msra.mxu0 0.0
    %2164 = vmatprep.subr.mxu0 0.0
    %2165 = vmatpush1.msra.mxu0 0.0
    %2166 = vmatprep.subr.mxu0 0.0
    %2167 = vmatpush1.msra.mxu0 0.0
    %2168 = vmatprep.subr.mxu0 0.0
    %2169 = vmatpush1.msra.mxu0 0.0
    %2170 = vmatprep.subr.mxu0 0.0
    %2171 = vmatpush1.msra.mxu0 0.0
    %2172 = vmatprep.mubr.f32.mxu0 0.0
    %2173 = vmatmul.mubr.f32.gmra.mrb[0].mxu0 %v2106
    %v2174 = vpop.f32.mrb[0].mxu0
    %v2175 = vadd.f32 0.0, %v2174
    %v2176 = vpop.f32.mrb[0].mxu0
    %2177 = vdwg.mxu0
    %2178 = vrot.lane.b32.xlu0 %v321, 48
    %v2179 = vpop.permute.xlu0 %2178
    %v2182 = vsel %vm332, %v2024, 0
    %2184 = vmatprep.subr.mxu0 0.0
    %2185 = vmatpush1.msra.mxu0 %v2179
    %2186 = vmatprep.subr.mxu0 0.0
    %2187 = vmatpush1.msra.mxu0 0.0
    %2188 = vmatprep.subr.mxu0 0.0
    %2189 = vmatpush1.msra.mxu0 0.0
    %2190 = vmatprep.subr.mxu0 0.0
    %2191 = vmatpush1.msra.mxu0 0.0
    %2192 = vmatprep.subr.mxu0 0.0
    %2193 = vmatpush1.msra.mxu0 0.0
    %2194 = vmatprep.subr.mxu0 0.0
    %2195 = vmatpush1.msra.mxu0 0.0
    %2196 = vmatprep.subr.mxu0 0.0
    %2197 = vmatpush1.msra.mxu0 0.0
    %2198 = vmatprep.subr.mxu0 0.0
    %2199 = vmatpush1.msra.mxu0 0.0
    %2200 = vmatprep.subr.mxu0 0.0
    %2201 = vmatpush1.msra.mxu0 0.0
    %2202 = vmatprep.subr.mxu0 0.0
    %2203 = vmatpush1.msra.mxu0 0.0
    %2204 = vmatprep.subr.mxu0 0.0
    %2205 = vmatpush1.msra.mxu0 0.0
    %2206 = vmatprep.subr.mxu0 0.0
    %2207 = vmatpush1.msra.mxu0 0.0
    %2208 = vmatprep.subr.mxu0 0.0
    %2209 = vmatpush1.msra.mxu0 0.0
    %2210 = vmatprep.subr.mxu0 0.0
    %2211 = vmatpush1.msra.mxu0 0.0
    %2212 = vmatprep.subr.mxu0 0.0
    %2213 = vmatpush1.msra.mxu0 0.0
    %2214 = vmatprep.subr.mxu0 0.0
    %2215 = vmatpush1.msra.mxu0 0.0
    %2216 = vmatprep.subr.mxu0 0.0
    %2217 = vmatpush1.msra.mxu0 0.0
    %2218 = vmatprep.subr.mxu0 0.0
    %2219 = vmatpush1.msra.mxu0 0.0
    %2220 = vmatprep.subr.mxu0 0.0
    %2221 = vmatpush1.msra.mxu0 0.0
    %2222 = vmatprep.subr.mxu0 0.0
    %2223 = vmatpush1.msra.mxu0 0.0
    %2224 = vmatprep.subr.mxu0 0.0
    %2225 = vmatpush1.msra.mxu0 0.0
    %2226 = vmatprep.subr.mxu0 0.0
    %2227 = vmatpush1.msra.mxu0 0.0
    %2228 = vmatprep.subr.mxu0 0.0
    %2229 = vmatpush1.msra.mxu0 0.0
    %2230 = vmatprep.subr.mxu0 0.0
    %2231 = vmatpush1.msra.mxu0 0.0
    %2232 = vmatprep.subr.mxu0 0.0
    %2233 = vmatpush1.msra.mxu0 0.0
    %2234 = vmatprep.subr.mxu0 0.0
    %2235 = vmatpush1.msra.mxu0 0.0
    %2236 = vmatprep.subr.mxu0 0.0
    %2237 = vmatpush1.msra.mxu0 0.0
    %2238 = vmatprep.subr.mxu0 0.0
    %2239 = vmatpush1.msra.mxu0 0.0
    %2240 = vmatprep.subr.mxu0 0.0
    %2241 = vmatpush1.msra.mxu0 0.0
    %2242 = vmatprep.subr.mxu0 0.0
    %2243 = vmatpush1.msra.mxu0 0.0
    %2244 = vmatprep.subr.mxu0 0.0
    %2245 = vmatpush1.msra.mxu0 0.0
    %2246 = vmatprep.subr.mxu0 0.0
    %2247 = vmatpush1.msra.mxu0 0.0
    %2248 = vmatprep.mubr.f32.mxu0 0.0
    %2249 = vmatmul.mubr.f32.gmra.mrb[0].mxu0 %v2182
    %v2250 = vpop.f32.mrb[0].mxu0
    %v2251 = vadd.f32 0.0, %v2250
    %v2252 = vpop.f32.mrb[0].mxu0
    %2253 = vdwg.mxu0
    %2254 = vrot.lane.b32.xlu0 %v326, 48
    %v2255 = vpop.permute.xlu0 %2254
    %v2258 = vsel %vm332, %v2025, 0
    %2260 = vmatprep.subr.mxu0 0.0
    %2261 = vmatpush1.msra.mxu0 %v2255
    %2262 = vmatprep.subr.mxu0 0.0
    %2263 = vmatpush1.msra.mxu0 0.0
    %2264 = vmatprep.subr.mxu0 0.0
    %2265 = vmatpush1.msra.mxu0 0.0
    %2266 = vmatprep.subr.mxu0 0.0
    %2267 = vmatpush1.msra.mxu0 0.0
    %2268 = vmatprep.subr.mxu0 0.0
    %2269 = vmatpush1.msra.mxu0 0.0
    %2270 = vmatprep.subr.mxu0 0.0
    %2271 = vmatpush1.msra.mxu0 0.0
    %2272 = vmatprep.subr.mxu0 0.0
    %2273 = vmatpush1.msra.mxu0 0.0
    %2274 = vmatprep.subr.mxu0 0.0
    %2275 = vmatpush1.msra.mxu0 0.0
    %2276 = vmatprep.subr.mxu0 0.0
    %2277 = vmatpush1.msra.mxu0 0.0
    %2278 = vmatprep.subr.mxu0 0.0
    %2279 = vmatpush1.msra.mxu0 0.0
    %2280 = vmatprep.subr.mxu0 0.0
    %2281 = vmatpush1.msra.mxu0 0.0
    %2282 = vmatprep.subr.mxu0 0.0
    %2283 = vmatpush1.msra.mxu0 0.0
    %2284 = vmatprep.subr.mxu0 0.0
    %2285 = vmatpush1.msra.mxu0 0.0
    %2286 = vmatprep.subr.mxu0 0.0
    %2287 = vmatpush1.msra.mxu0 0.0
    %2288 = vmatprep.subr.mxu0 0.0
    %2289 = vmatpush1.msra.mxu0 0.0
    %2290 = vmatprep.subr.mxu0 0.0
    %2291 = vmatpush1.msra.mxu0 0.0
    %2292 = vmatprep.subr.mxu0 0.0
    %2293 = vmatpush1.msra.mxu0 0.0
    %2294 = vmatprep.subr.mxu0 0.0
    %2295 = vmatpush1.msra.mxu0 0.0
    %2296 = vmatprep.subr.mxu0 0.0
    %2297 = vmatpush1.msra.mxu0 0.0
    %2298 = vmatprep.subr.mxu0 0.0
    %2299 = vmatpush1.msra.mxu0 0.0
    %2300 = vmatprep.subr.mxu0 0.0
    %2301 = vmatpush1.msra.mxu0 0.0
    %2302 = vmatprep.subr.mxu0 0.0
    %2303 = vmatpush1.msra.mxu0 0.0
    %2304 = vmatprep.subr.mxu0 0.0
    %2305 = vmatpush1.msra.mxu0 0.0
    %2306 = vmatprep.subr.mxu0 0.0
    %2307 = vmatpush1.msra.mxu0 0.0
    %2308 = vmatprep.subr.mxu0 0.0
    %2309 = vmatpush1.msra.mxu0 0.0
    %2310 = vmatprep.subr.mxu0 0.0
    %2311 = vmatpush1.msra.mxu0 0.0
    %2312 = vmatprep.subr.mxu0 0.0
    %2313 = vmatpush1.msra.mxu0 0.0
    %2314 = vmatprep.subr.mxu0 0.0
    %2315 = vmatpush1.msra.mxu0 0.0
    %2316 = vmatprep.subr.mxu0 0.0
    %2317 = vmatpush1.msra.mxu0 0.0
    %2318 = vmatprep.subr.mxu0 0.0
    %2319 = vmatpush1.msra.mxu0 0.0
    %2320 = vmatprep.subr.mxu0 0.0
    %2321 = vmatpush1.msra.mxu0 0.0
    %2322 = vmatprep.subr.mxu0 0.0
    %2323 = vmatpush1.msra.mxu0 0.0
    %2324 = vmatprep.mubr.f32.mxu0 0.0
    %2325 = vmatmul.mubr.f32.gmra.mrb[0].mxu0 %v2258
    %v2326 = vpop.f32.mrb[0].mxu0
    %v2327 = vadd.f32 0.0, %v2326
    %v2328 = vpop.f32.mrb[0].mxu0
    %2329 = vdwg.mxu0
    %2330 = vrot.lane.b32.xlu0 %v311, 104
    %v2331 = vpop.permute.xlu0 %2330
    %2332 = vrot.lane.b32.xlu0 %v311, 72
    %v2333 = vpop.permute.xlu0 %2332
    %v2334 = vsel %vm332, %v2331, 0
    %v2336 = vsel %vm332, %v2333, 0
    %2338 = vmatprep.subr.mxu0 0.0
    %2339 = vmatpush1.xpose.msra.mxu0 %v2336
    %2340 = vmatprep.subr.mxu0 0.0
    %2341 = vmatpush1.xpose.msra.mxu0 0.0
    %2342 = vmatprep.subr.mxu0 0.0
    %2343 = vmatpush1.xpose.msra.mxu0 0.0
    %2344 = vmatprep.subr.mxu0 0.0
    %2345 = vmatpush1.xpose.msra.mxu0 0.0
    %2346 = vmatprep.subr.mxu0 0.0
    %2347 = vmatpush1.xpose.msra.mxu0 0.0
    %2348 = vmatprep.subr.mxu0 0.0
    %2349 = vmatpush1.xpose.msra.mxu0 0.0
    %2350 = vmatprep.subr.mxu0 0.0
    %2351 = vmatpush1.xpose.msra.mxu0 0.0
    %2352 = vmatprep.subr.mxu0 0.0
    %2353 = vmatpush1.xpose.msra.mxu0 0.0
    %2354 = vmatprep.subr.mxu0 0.0
    %2355 = vmatpush1.xpose.msra.mxu0 0.0
    %2356 = vmatprep.subr.mxu0 0.0
    %2357 = vmatpush1.xpose.msra.mxu0 0.0
    %2358 = vmatprep.subr.mxu0 0.0
    %2359 = vmatpush1.xpose.msra.mxu0 0.0
    %2360 = vmatprep.subr.mxu0 0.0
    %2361 = vmatpush1.xpose.msra.mxu0 0.0
    %2362 = vmatprep.subr.mxu0 0.0
    %2363 = vmatpush1.xpose.msra.mxu0 0.0
    %2364 = vmatprep.subr.mxu0 0.0
    %2365 = vmatpush1.xpose.msra.mxu0 0.0
    %2366 = vmatprep.subr.mxu0 0.0
    %2367 = vmatpush1.xpose.msra.mxu0 0.0
    %2368 = vmatprep.subr.mxu0 0.0
    %2369 = vmatpush1.xpose.msra.mxu0 0.0
    %2370 = vmatprep.subr.mxu0 0.0
    %2371 = vmatpush1.xpose.msra.mxu0 0.0
    %2372 = vmatprep.subr.mxu0 0.0
    %2373 = vmatpush1.xpose.msra.mxu0 0.0
    %2374 = vmatprep.subr.mxu0 0.0
    %2375 = vmatpush1.xpose.msra.mxu0 0.0
    %2376 = vmatprep.subr.mxu0 0.0
    %2377 = vmatpush1.xpose.msra.mxu0 0.0
    %2378 = vmatprep.subr.mxu0 0.0
    %2379 = vmatpush1.xpose.msra.mxu0 0.0
    %2380 = vmatprep.subr.mxu0 0.0
    %2381 = vmatpush1.xpose.msra.mxu0 0.0
    %2382 = vmatprep.subr.mxu0 0.0
    %2383 = vmatpush1.xpose.msra.mxu0 0.0
    %2384 = vmatprep.subr.mxu0 0.0
    %2385 = vmatpush1.xpose.msra.mxu0 0.0
    %2386 = vmatprep.subr.mxu0 0.0
    %2387 = vmatpush1.xpose.msra.mxu0 0.0
    %2388 = vmatprep.subr.mxu0 0.0
    %2389 = vmatpush1.xpose.msra.mxu0 0.0
    %2390 = vmatprep.subr.mxu0 0.0
    %2391 = vmatpush1.xpose.msra.mxu0 0.0
    %2392 = vmatprep.subr.mxu0 0.0
    %2393 = vmatpush1.xpose.msra.mxu0 0.0
    %2394 = vmatprep.subr.mxu0 0.0
    %2395 = vmatpush1.xpose.msra.mxu0 0.0
    %2396 = vmatprep.subr.mxu0 0.0
    %2397 = vmatpush1.xpose.msra.mxu0 0.0
    %2398 = vmatprep.subr.mxu0 0.0
    %2399 = vmatpush1.xpose.msra.mxu0 0.0
    %2400 = vmatprep.subr.mxu0 0.0
    %2401 = vmatpush1.xpose.msra.mxu0 0.0
    %2402 = vmatprep.mubr.f32.mxu0 0.0
    %2403 = vmatmul.mubr.f32.gmra.mrb[0].mxu0 %v2334
    %v2404 = vpop.f32.mrb[0].mxu0
    %v2405 = vadd.f32 0.0, %v2404
    %v2406 = vpop.f32.mrb[0].mxu0
    %2407 = vdwg.mxu0
    %2408 = vrot.lane.b32.xlu0 %v316, 104
    %v2409 = vpop.permute.xlu0 %2408
    %2410 = vrot.lane.b32.xlu0 %v316, 72
    %v2411 = vpop.permute.xlu0 %2410
    %v2412 = vsel %vm332, %v2409, 0
    %v2414 = vsel %vm332, %v2411, 0
    %2416 = vmatprep.subr.mxu0 0.0
    %2417 = vmatpush1.xpose.msra.mxu0 %v2414
    %2418 = vmatprep.subr.mxu0 0.0
    %2419 = vmatpush1.xpose.msra.mxu0 0.0
    %2420 = vmatprep.subr.mxu0 0.0
    %2421 = vmatpush1.xpose.msra.mxu0 0.0
    %2422 = vmatprep.subr.mxu0 0.0
    %2423 = vmatpush1.xpose.msra.mxu0 0.0
    %2424 = vmatprep.subr.mxu0 0.0
    %2425 = vmatpush1.xpose.msra.mxu0 0.0
    %2426 = vmatprep.subr.mxu0 0.0
    %2427 = vmatpush1.xpose.msra.mxu0 0.0
    %2428 = vmatprep.subr.mxu0 0.0
    %2429 = vmatpush1.xpose.msra.mxu0 0.0
    %2430 = vmatprep.subr.mxu0 0.0
    %2431 = vmatpush1.xpose.msra.mxu0 0.0
    %2432 = vmatprep.subr.mxu0 0.0
    %2433 = vmatpush1.xpose.msra.mxu0 0.0
    %2434 = vmatprep.subr.mxu0 0.0
    %2435 = vmatpush1.xpose.msra.mxu0 0.0
    %2436 = vmatprep.subr.mxu0 0.0
    %2437 = vmatpush1.xpose.msra.mxu0 0.0
    %2438 = vmatprep.subr.mxu0 0.0
    %2439 = vmatpush1.xpose.msra.mxu0 0.0
    %2440 = vmatprep.subr.mxu0 0.0
    %2441 = vmatpush1.xpose.msra.mxu0 0.0
    %2442 = vmatprep.subr.mxu0 0.0
    %2443 = vmatpush1.xpose.msra.mxu0 0.0
    %2444 = vmatprep.subr.mxu0 0.0
    %2445 = vmatpush1.xpose.msra.mxu0 0.0
    %2446 = vmatprep.subr.mxu0 0.0
    %2447 = vmatpush1.xpose.msra.mxu0 0.0
    %2448 = vmatprep.subr.mxu0 0.0
    %2449 = vmatpush1.xpose.msra.mxu0 0.0
    %2450 = vmatprep.subr.mxu0 0.0
    %2451 = vmatpush1.xpose.msra.mxu0 0.0
    %2452 = vmatprep.subr.mxu0 0.0
    %2453 = vmatpush1.xpose.msra.mxu0 0.0
    %2454 = vmatprep.subr.mxu0 0.0
    %2455 = vmatpush1.xpose.msra.mxu0 0.0
    %2456 = vmatprep.subr.mxu0 0.0
    %2457 = vmatpush1.xpose.msra.mxu0 0.0
    %2458 = vmatprep.subr.mxu0 0.0
    %2459 = vmatpush1.xpose.msra.mxu0 0.0
    %2460 = vmatprep.subr.mxu0 0.0
    %2461 = vmatpush1.xpose.msra.mxu0 0.0
    %2462 = vmatprep.subr.mxu0 0.0
    %2463 = vmatpush1.xpose.msra.mxu0 0.0
    %2464 = vmatprep.subr.mxu0 0.0
    %2465 = vmatpush1.xpose.msra.mxu0 0.0
    %2466 = vmatprep.subr.mxu0 0.0
    %2467 = vmatpush1.xpose.msra.mxu0 0.0
    %2468 = vmatprep.subr.mxu0 0.0
    %2469 = vmatpush1.xpose.msra.mxu0 0.0
    %2470 = vmatprep.subr.mxu0 0.0
    %2471 = vmatpush1.xpose.msra.mxu0 0.0
    %2472 = vmatprep.subr.mxu0 0.0
    %2473 = vmatpush1.xpose.msra.mxu0 0.0
    %2474 = vmatprep.subr.mxu0 0.0
    %2475 = vmatpush1.xpose.msra.mxu0 0.0
    %2476 = vmatprep.subr.mxu0 0.0
    %2477 = vmatpush1.xpose.msra.mxu0 0.0
    %2478 = vmatprep.subr.mxu0 0.0
    %2479 = vmatpush1.xpose.msra.mxu0 0.0
    %2480 = vmatprep.mubr.f32.mxu0 0.0
    %2481 = vmatmul.mubr.f32.gmra.mrb[0].mxu0 %v2412
    %v2482 = vpop.f32.mrb[0].mxu0
    %v2483 = vadd.f32 0.0, %v2482
    %v2484 = vpop.f32.mrb[0].mxu0
    %2485 = vdwg.mxu0
    %2486 = vrot.lane.b32.xlu0 %v321, 104
    %v2487 = vpop.permute.xlu0 %2486
    %2488 = vrot.lane.b32.xlu0 %v321, 72
    %v2489 = vpop.permute.xlu0 %2488
    %v2490 = vsel %vm332, %v2487, 0
    %v2492 = vsel %vm332, %v2489, 0
    %2494 = vmatprep.subr.mxu0 0.0
    %2495 = vmatpush1.xpose.msra.mxu0 %v2492
    %2496 = vmatprep.subr.mxu0 0.0
    %2497 = vmatpush1.xpose.msra.mxu0 0.0
    %2498 = vmatprep.subr.mxu0 0.0
    %2499 = vmatpush1.xpose.msra.mxu0 0.0
    %2500 = vmatprep.subr.mxu0 0.0
    %2501 = vmatpush1.xpose.msra.mxu0 0.0
    %2502 = vmatprep.subr.mxu0 0.0
    %2503 = vmatpush1.xpose.msra.mxu0 0.0
    %2504 = vmatprep.subr.mxu0 0.0
    %2505 = vmatpush1.xpose.msra.mxu0 0.0
    %2506 = vmatprep.subr.mxu0 0.0
    %2507 = vmatpush1.xpose.msra.mxu0 0.0
    %2508 = vmatprep.subr.mxu0 0.0
    %2509 = vmatpush1.xpose.msra.mxu0 0.0
    %2510 = vmatprep.subr.mxu0 0.0
    %2511 = vmatpush1.xpose.msra.mxu0 0.0
    %2512 = vmatprep.subr.mxu0 0.0
    %2513 = vmatpush1.xpose.msra.mxu0 0.0
    %2514 = vmatprep.subr.mxu0 0.0
    %2515 = vmatpush1.xpose.msra.mxu0 0.0
    %2516 = vmatprep.subr.mxu0 0.0
    %2517 = vmatpush1.xpose.msra.mxu0 0.0
    %2518 = vmatprep.subr.mxu0 0.0
    %2519 = vmatpush1.xpose.msra.mxu0 0.0
    %2520 = vmatprep.subr.mxu0 0.0
    %2521 = vmatpush1.xpose.msra.mxu0 0.0
    %2522 = vmatprep.subr.mxu0 0.0
    %2523 = vmatpush1.xpose.msra.mxu0 0.0
    %2524 = vmatprep.subr.mxu0 0.0
    %2525 = vmatpush1.xpose.msra.mxu0 0.0
    %2526 = vmatprep.subr.mxu0 0.0
    %2527 = vmatpush1.xpose.msra.mxu0 0.0
    %2528 = vmatprep.subr.mxu0 0.0
    %2529 = vmatpush1.xpose.msra.mxu0 0.0
    %2530 = vmatprep.subr.mxu0 0.0
    %2531 = vmatpush1.xpose.msra.mxu0 0.0
    %2532 = vmatprep.subr.mxu0 0.0
    %2533 = vmatpush1.xpose.msra.mxu0 0.0
    %2534 = vmatprep.subr.mxu0 0.0
    %2535 = vmatpush1.xpose.msra.mxu0 0.0
    %2536 = vmatprep.subr.mxu0 0.0
    %2537 = vmatpush1.xpose.msra.mxu0 0.0
    %2538 = vmatprep.subr.mxu0 0.0
    %2539 = vmatpush1.xpose.msra.mxu0 0.0
    %2540 = vmatprep.subr.mxu0 0.0
    %2541 = vmatpush1.xpose.msra.mxu0 0.0
    %2542 = vmatprep.subr.mxu0 0.0
    %2543 = vmatpush1.xpose.msra.mxu0 0.0
    %2544 = vmatprep.subr.mxu0 0.0
    %2545 = vmatpush1.xpose.msra.mxu0 0.0
    %2546 = vmatprep.subr.mxu0 0.0
    %2547 = vmatpush1.xpose.msra.mxu0 0.0
    %2548 = vmatprep.subr.mxu0 0.0
    %2549 = vmatpush1.xpose.msra.mxu0 0.0
    %2550 = vmatprep.subr.mxu0 0.0
    %2551 = vmatpush1.xpose.msra.mxu0 0.0
    %2552 = vmatprep.subr.mxu0 0.0
    %2553 = vmatpush1.xpose.msra.mxu0 0.0
    %2554 = vmatprep.subr.mxu0 0.0
    %2555 = vmatpush1.xpose.msra.mxu0 0.0
    %2556 = vmatprep.subr.mxu0 0.0
    %2557 = vmatpush1.xpose.msra.mxu0 0.0
    %2558 = vmatprep.mubr.f32.mxu0 0.0
    %2559 = vmatmul.mubr.f32.gmra.mrb[0].mxu0 %v2490
    %v2560 = vpop.f32.mrb[0].mxu0
    %v2561 = vadd.f32 0.0, %v2560
    %v2562 = vpop.f32.mrb[0].mxu0
    %2563 = vdwg.mxu0
    %2564 = vrot.lane.b32.xlu0 %v326, 104
    %v2565 = vpop.permute.xlu0 %2564
    %2566 = vrot.lane.b32.xlu0 %v326, 72
    %v2567 = vpop.permute.xlu0 %2566
    %v2568 = vsel %vm332, %v2565, 0
    %v2570 = vsel %vm332, %v2567, 0
    %2572 = vmatprep.subr.mxu0 0.0
    %2573 = vmatpush1.xpose.msra.mxu0 %v2570
    %2574 = vmatprep.subr.mxu0 0.0
    %2575 = vmatpush1.xpose.msra.mxu0 0.0
    %2576 = vmatprep.subr.mxu0 0.0
    %2577 = vmatpush1.xpose.msra.mxu0 0.0
    %2578 = vmatprep.subr.mxu0 0.0
    %2579 = vmatpush1.xpose.msra.mxu0 0.0
    %2580 = vmatprep.subr.mxu0 0.0
    %2581 = vmatpush1.xpose.msra.mxu0 0.0
    %2582 = vmatprep.subr.mxu0 0.0
    %2583 = vmatpush1.xpose.msra.mxu0 0.0
    %2584 = vmatprep.subr.mxu0 0.0
    %2585 = vmatpush1.xpose.msra.mxu0 0.0
    %2586 = vmatprep.subr.mxu0 0.0
    %2587 = vmatpush1.xpose.msra.mxu0 0.0
    %2588 = vmatprep.subr.mxu0 0.0
    %2589 = vmatpush1.xpose.msra.mxu0 0.0
    %2590 = vmatprep.subr.mxu0 0.0
    %2591 = vmatpush1.xpose.msra.mxu0 0.0
    %2592 = vmatprep.subr.mxu0 0.0
    %2593 = vmatpush1.xpose.msra.mxu0 0.0
    %2594 = vmatprep.subr.mxu0 0.0
    %2595 = vmatpush1.xpose.msra.mxu0 0.0
    %2596 = vmatprep.subr.mxu0 0.0
    %2597 = vmatpush1.xpose.msra.mxu0 0.0
    %2598 = vmatprep.subr.mxu0 0.0
    %2599 = vmatpush1.xpose.msra.mxu0 0.0
    %2600 = vmatprep.subr.mxu0 0.0
    %2601 = vmatpush1.xpose.msra.mxu0 0.0
    %2602 = vmatprep.subr.mxu0 0.0
    %2603 = vmatpush1.xpose.msra.mxu0 0.0
    %2604 = vmatprep.subr.mxu0 0.0
    %2605 = vmatpush1.xpose.msra.mxu0 0.0
    %2606 = vmatprep.subr.mxu0 0.0
    %2607 = vmatpush1.xpose.msra.mxu0 0.0
    %2608 = vmatprep.subr.mxu0 0.0
    %2609 = vmatpush1.xpose.msra.mxu0 0.0
    %2610 = vmatprep.subr.mxu0 0.0
    %2611 = vmatpush1.xpose.msra.mxu0 0.0
    %2612 = vmatprep.subr.mxu0 0.0
    %2613 = vmatpush1.xpose.msra.mxu0 0.0
    %2614 = vmatprep.subr.mxu0 0.0
    %2615 = vmatpush1.xpose.msra.mxu0 0.0
    %2616 = vmatprep.subr.mxu0 0.0
    %2617 = vmatpush1.xpose.msra.mxu0 0.0
    %2618 = vmatprep.subr.mxu0 0.0
    %2619 = vmatpush1.xpose.msra.mxu0 0.0
    %2620 = vmatprep.subr.mxu0 0.0
    %2621 = vmatpush1.xpose.msra.mxu0 0.0
    %2622 = vmatprep.subr.mxu0 0.0
    %2623 = vmatpush1.xpose.msra.mxu0 0.0
    %2624 = vmatprep.subr.mxu0 0.0
    %2625 = vmatpush1.xpose.msra.mxu0 0.0
    %2626 = vmatprep.subr.mxu0 0.0
    %2627 = vmatpush1.xpose.msra.mxu0 0.0
    %2628 = vmatprep.subr.mxu0 0.0
    %2629 = vmatpush1.xpose.msra.mxu0 0.0
    %2630 = vmatprep.subr.mxu0 0.0
    %2631 = vmatpush1.xpose.msra.mxu0 0.0
    %2632 = vmatprep.subr.mxu0 0.0
    %2633 = vmatpush1.xpose.msra.mxu0 0.0
    %2634 = vmatprep.subr.mxu0 0.0
    %2635 = vmatpush1.xpose.msra.mxu0 0.0
    %2636 = vmatprep.mubr.f32.mxu0 0.0
    %2637 = vmatmul.mubr.f32.gmra.mrb[0].mxu0 %v2568
    %v2638 = vpop.f32.mrb[0].mxu0
    %v2639 = vadd.f32 0.0, %v2638
    %v2640 = vpop.f32.mrb[0].mxu0
    %2641 = vdwg.mxu0
    %v2642 = vmul.f32 %v2405, 0.35355338
    %v2643 = vmul.f32 %v2483, 0.35355338
    %v2644 = vmul.f32 %v2561, 0.35355338
    %v2645 = vmul.f32 %v2639, 0.35355338
    %v2646 = vadd.f32 %v2642, %v212
    %v2647 = vadd.f32 %v2643, %v216
    %v2648 = vadd.f32 %v2644, %v220
    %v2649 = vadd.f32 %v2645, %v224
    %v2650 = vsel %vm332, %v2646, -inf
    %2651 = vmax.xlane.f32.xlu0 %v2650
    %v2652 = vpop.xlane.xlu0 %2651
    %v2653 = vsel %vm332, %v2647, -inf
    %2654 = vmax.xlane.f32.xlu0 %v2653
    %v2655 = vpop.xlane.xlu0 %2654
    %v2656 = vsel %vm332, %v2648, -inf
    %2657 = vmax.xlane.f32.xlu0 %v2656
    %v2658 = vpop.xlane.xlu0 %2657
    %v2659 = vsel %vm332, %v2649, -inf
    %2660 = vmax.xlane.f32.xlu0 %v2659
    %v2661 = vpop.xlane.xlu0 %2660
    %v2662 = vsub.f32 %v2646, %v2652
    %v2663 = vsub.f32 %v2647, %v2655
    %v2664 = vsub.f32 %v2648, %v2658
    %v2665 = vsub.f32 %v2649, %v2661
    %v2666 = vmul.f32 %v2662, 1.442695
    %v2667 = vpow.pop %v2666
    %v2668 = vmul.f32 %v2663, 1.442695
    %v2669 = vpow.pop %v2668
    %v2670 = vmul.f32 %v2664, 1.442695
    %v2671 = vpow.pop %v2670
    %v2672 = vmul.f32 %v2665, 1.442695
    %v2673 = vpow.pop %v2672
    %v2674 = vsel %vm332, %v2667, 0.0
    %2675 = vadd.xlane.f32.xlu0 %v2674
    %v2676 = vpop.xlane.xlu0 %2675
    %v2677 = vsel %vm332, %v2669, 0.0
    %2678 = vadd.xlane.f32.xlu0 %v2677
    %v2679 = vpop.xlane.xlu0 %2678
    %v2680 = vsel %vm332, %v2671, 0.0
    %2681 = vadd.xlane.f32.xlu0 %v2680
    %v2682 = vpop.xlane.xlu0 %2681
    %v2683 = vsel %vm332, %v2673, 0.0
    %2684 = vadd.xlane.f32.xlu0 %v2683
    %v2685 = vpop.xlane.xlu0 %2684
    %v2686 = vrcp.pop %v2676
    %v2687 = vrcp.pop %v2679
    %v2688 = vrcp.pop %v2682
    %v2689 = vrcp.pop %v2685
    %v2690 = vmul.f32 %v2667, %v2686
    %v2691 = vmul.f32 %v2669, %v2687
    %v2692 = vmul.f32 %v2671, %v2688
    %v2693 = vmul.f32 %v2673, %v2689
    %2694 = vrot.lane.b32.xlu0 %v311, 40
    %v2695 = vpop.permute.xlu0 %2694
    %v2698 = vsel %vm332, %v2690, 0
    %2700 = vmatprep.subr.mxu0 0.0
    %2701 = vmatpush1.msra.mxu0 %v2695
    %2702 = vmatprep.subr.mxu0 0.0
    %2703 = vmatpush1.msra.mxu0 0.0
    %2704 = vmatprep.subr.mxu0 0.0
    %2705 = vmatpush1.msra.mxu0 0.0
    %2706 = vmatprep.subr.mxu0 0.0
    %2707 = vmatpush1.msra.mxu0 0.0
    %2708 = vmatprep.subr.mxu0 0.0
    %2709 = vmatpush1.msra.mxu0 0.0
    %2710 = vmatprep.subr.mxu0 0.0
    %2711 = vmatpush1.msra.mxu0 0.0
    %2712 = vmatprep.subr.mxu0 0.0
    %2713 = vmatpush1.msra.mxu0 0.0
    %2714 = vmatprep.subr.mxu0 0.0
    %2715 = vmatpush1.msra.mxu0 0.0
    %2716 = vmatprep.subr.mxu0 0.0
    %2717 = vmatpush1.msra.mxu0 0.0
    %2718 = vmatprep.subr.mxu0 0.0
    %2719 = vmatpush1.msra.mxu0 0.0
    %2720 = vmatprep.subr.mxu0 0.0
    %2721 = vmatpush1.msra.mxu0 0.0
    %2722 = vmatprep.subr.mxu0 0.0
    %2723 = vmatpush1.msra.mxu0 0.0
    %2724 = vmatprep.subr.mxu0 0.0
    %2725 = vmatpush1.msra.mxu0 0.0
    %2726 = vmatprep.subr.mxu0 0.0
    %2727 = vmatpush1.msra.mxu0 0.0
    %2728 = vmatprep.subr.mxu0 0.0
    %2729 = vmatpush1.msra.mxu0 0.0
    %2730 = vmatprep.subr.mxu0 0.0
    %2731 = vmatpush1.msra.mxu0 0.0
    %2732 = vmatprep.subr.mxu0 0.0
    %2733 = vmatpush1.msra.mxu0 0.0
    %2734 = vmatprep.subr.mxu0 0.0
    %2735 = vmatpush1.msra.mxu0 0.0
    %2736 = vmatprep.subr.mxu0 0.0
    %2737 = vmatpush1.msra.mxu0 0.0
    %2738 = vmatprep.subr.mxu0 0.0
    %2739 = vmatpush1.msra.mxu0 0.0
    %2740 = vmatprep.subr.mxu0 0.0
    %2741 = vmatpush1.msra.mxu0 0.0
    %2742 = vmatprep.subr.mxu0 0.0
    %2743 = vmatpush1.msra.mxu0 0.0
    %2744 = vmatprep.subr.mxu0 0.0
    %2745 = vmatpush1.msra.mxu0 0.0
    %2746 = vmatprep.subr.mxu0 0.0
    %2747 = vmatpush1.msra.mxu0 0.0
    %2748 = vmatprep.subr.mxu0 0.0
    %2749 = vmatpush1.msra.mxu0 0.0
    %2750 = vmatprep.subr.mxu0 0.0
    %2751 = vmatpush1.msra.mxu0 0.0
    %2752 = vmatprep.subr.mxu0 0.0
    %2753 = vmatpush1.msra.mxu0 0.0
    %2754 = vmatprep.subr.mxu0 0.0
    %2755 = vmatpush1.msra.mxu0 0.0
    %2756 = vmatprep.subr.mxu0 0.0
    %2757 = vmatpush1.msra.mxu0 0.0
    %2758 = vmatprep.subr.mxu0 0.0
    %2759 = vmatpush1.msra.mxu0 0.0
    %2760 = vmatprep.subr.mxu0 0.0
    %2761 = vmatpush1.msra.mxu0 0.0
    %2762 = vmatprep.subr.mxu0 0.0
    %2763 = vmatpush1.msra.mxu0 0.0
    %2764 = vmatprep.mubr.f32.mxu0 0.0
    %2765 = vmatmul.mubr.f32.gmra.mrb[0].mxu0 %v2698
    %v2766 = vpop.f32.mrb[0].mxu0
    %v2767 = vadd.f32 0.0, %v2766
    %v2768 = vpop.f32.mrb[0].mxu0
    %2769 = vdwg.mxu0
    %2770 = vrot.lane.b32.xlu0 %v316, 40
    %v2771 = vpop.permute.xlu0 %2770
    %v2774 = vsel %vm332, %v2691, 0
    %2776 = vmatprep.subr.mxu0 0.0
    %2777 = vmatpush1.msra.mxu0 %v2771
    %2778 = vmatprep.subr.mxu0 0.0
    %2779 = vmatpush1.msra.mxu0 0.0
    %2780 = vmatprep.subr.mxu0 0.0
    %2781 = vmatpush1.msra.mxu0 0.0
    %2782 = vmatprep.subr.mxu0 0.0
    %2783 = vmatpush1.msra.mxu0 0.0
    %2784 = vmatprep.subr.mxu0 0.0
    %2785 = vmatpush1.msra.mxu0 0.0
    %2786 = vmatprep.subr.mxu0 0.0
    %2787 = vmatpush1.msra.mxu0 0.0
    %2788 = vmatprep.subr.mxu0 0.0
    %2789 = vmatpush1.msra.mxu0 0.0
    %2790 = vmatprep.subr.mxu0 0.0
    %2791 = vmatpush1.msra.mxu0 0.0
    %2792 = vmatprep.subr.mxu0 0.0
    %2793 = vmatpush1.msra.mxu0 0.0
    %2794 = vmatprep.subr.mxu0 0.0
    %2795 = vmatpush1.msra.mxu0 0.0
    %2796 = vmatprep.subr.mxu0 0.0
    %2797 = vmatpush1.msra.mxu0 0.0
    %2798 = vmatprep.subr.mxu0 0.0
    %2799 = vmatpush1.msra.mxu0 0.0
    %2800 = vmatprep.subr.mxu0 0.0
    %2801 = vmatpush1.msra.mxu0 0.0
    %2802 = vmatprep.subr.mxu0 0.0
    %2803 = vmatpush1.msra.mxu0 0.0
    %2804 = vmatprep.subr.mxu0 0.0
    %2805 = vmatpush1.msra.mxu0 0.0
    %2806 = vmatprep.subr.mxu0 0.0
    %2807 = vmatpush1.msra.mxu0 0.0
    %2808 = vmatprep.subr.mxu0 0.0
    %2809 = vmatpush1.msra.mxu0 0.0
    %2810 = vmatprep.subr.mxu0 0.0
    %2811 = vmatpush1.msra.mxu0 0.0
    %2812 = vmatprep.subr.mxu0 0.0
    %2813 = vmatpush1.msra.mxu0 0.0
    %2814 = vmatprep.subr.mxu0 0.0
    %2815 = vmatpush1.msra.mxu0 0.0
    %2816 = vmatprep.subr.mxu0 0.0
    %2817 = vmatpush1.msra.mxu0 0.0
    %2818 = vmatprep.subr.mxu0 0.0
    %2819 = vmatpush1.msra.mxu0 0.0
    %2820 = vmatprep.subr.mxu0 0.0
    %2821 = vmatpush1.msra.mxu0 0.0
    %2822 = vmatprep.subr.mxu0 0.0
    %2823 = vmatpush1.msra.mxu0 0.0
    %2824 = vmatprep.subr.mxu0 0.0
    %2825 = vmatpush1.msra.mxu0 0.0
    %2826 = vmatprep.subr.mxu0 0.0
    %2827 = vmatpush1.msra.mxu0 0.0
    %2828 = vmatprep.subr.mxu0 0.0
    %2829 = vmatpush1.msra.mxu0 0.0
    %2830 = vmatprep.subr.mxu0 0.0
    %2831 = vmatpush1.msra.mxu0 0.0
    %2832 = vmatprep.subr.mxu0 0.0
    %2833 = vmatpush1.msra.mxu0 0.0
    %2834 = vmatprep.subr.mxu0 0.0
    %2835 = vmatpush1.msra.mxu0 0.0
    %2836 = vmatprep.subr.mxu0 0.0
    %2837 = vmatpush1.msra.mxu0 0.0
    %2838 = vmatprep.subr.mxu0 0.0
    %2839 = vmatpush1.msra.mxu0 0.0
    %2840 = vmatprep.mubr.f32.mxu0 0.0
    %2841 = vmatmul.mubr.f32.gmra.mrb[0].mxu0 %v2774
    %v2842 = vpop.f32.mrb[0].mxu0
    %v2843 = vadd.f32 0.0, %v2842
    %v2844 = vpop.f32.mrb[0].mxu0
    %2845 = vdwg.mxu0
    %2846 = vrot.lane.b32.xlu0 %v321, 40
    %v2847 = vpop.permute.xlu0 %2846
    %v2850 = vsel %vm332, %v2692, 0
    %2852 = vmatprep.subr.mxu0 0.0
    %2853 = vmatpush1.msra.mxu0 %v2847
    %2854 = vmatprep.subr.mxu0 0.0
    %2855 = vmatpush1.msra.mxu0 0.0
    %2856 = vmatprep.subr.mxu0 0.0
    %2857 = vmatpush1.msra.mxu0 0.0
    %2858 = vmatprep.subr.mxu0 0.0
    %2859 = vmatpush1.msra.mxu0 0.0
    %2860 = vmatprep.subr.mxu0 0.0
    %2861 = vmatpush1.msra.mxu0 0.0
    %2862 = vmatprep.subr.mxu0 0.0
    %2863 = vmatpush1.msra.mxu0 0.0
    %2864 = vmatprep.subr.mxu0 0.0
    %2865 = vmatpush1.msra.mxu0 0.0
    %2866 = vmatprep.subr.mxu0 0.0
    %2867 = vmatpush1.msra.mxu0 0.0
    %2868 = vmatprep.subr.mxu0 0.0
    %2869 = vmatpush1.msra.mxu0 0.0
    %2870 = vmatprep.subr.mxu0 0.0
    %2871 = vmatpush1.msra.mxu0 0.0
    %2872 = vmatprep.subr.mxu0 0.0
    %2873 = vmatpush1.msra.mxu0 0.0
    %2874 = vmatprep.subr.mxu0 0.0
    %2875 = vmatpush1.msra.mxu0 0.0
    %2876 = vmatprep.subr.mxu0 0.0
    %2877 = vmatpush1.msra.mxu0 0.0
    %2878 = vmatprep.subr.mxu0 0.0
    %2879 = vmatpush1.msra.mxu0 0.0
    %2880 = vmatprep.subr.mxu0 0.0
    %2881 = vmatpush1.msra.mxu0 0.0
    %2882 = vmatprep.subr.mxu0 0.0
    %2883 = vmatpush1.msra.mxu0 0.0
    %2884 = vmatprep.subr.mxu0 0.0
    %2885 = vmatpush1.msra.mxu0 0.0
    %2886 = vmatprep.subr.mxu0 0.0
    %2887 = vmatpush1.msra.mxu0 0.0
    %2888 = vmatprep.subr.mxu0 0.0
    %2889 = vmatpush1.msra.mxu0 0.0
    %2890 = vmatprep.subr.mxu0 0.0
    %2891 = vmatpush1.msra.mxu0 0.0
    %2892 = vmatprep.subr.mxu0 0.0
    %2893 = vmatpush1.msra.mxu0 0.0
    %2894 = vmatprep.subr.mxu0 0.0
    %2895 = vmatpush1.msra.mxu0 0.0
    %2896 = vmatprep.subr.mxu0 0.0
    %2897 = vmatpush1.msra.mxu0 0.0
    %2898 = vmatprep.subr.mxu0 0.0
    %2899 = vmatpush1.msra.mxu0 0.0
    %2900 = vmatprep.subr.mxu0 0.0
    %2901 = vmatpush1.msra.mxu0 0.0
    %2902 = vmatprep.subr.mxu0 0.0
    %2903 = vmatpush1.msra.mxu0 0.0
    %2904 = vmatprep.subr.mxu0 0.0
    %2905 = vmatpush1.msra.mxu0 0.0
    %2906 = vmatprep.subr.mxu0 0.0
    %2907 = vmatpush1.msra.mxu0 0.0
    %2908 = vmatprep.subr.mxu0 0.0
    %2909 = vmatpush1.msra.mxu0 0.0
    %2910 = vmatprep.subr.mxu0 0.0
    %2911 = vmatpush1.msra.mxu0 0.0
    %2912 = vmatprep.subr.mxu0 0.0
    %2913 = vmatpush1.msra.mxu0 0.0
    %2914 = vmatprep.subr.mxu0 0.0
    %2915 = vmatpush1.msra.mxu0 0.0
    %2916 = vmatprep.mubr.f32.mxu0 0.0
    %2917 = vmatmul.mubr.f32.gmra.mrb[0].mxu0 %v2850
    %v2918 = vpop.f32.mrb[0].mxu0
    %v2919 = vadd.f32 0.0, %v2918
    %v2920 = vpop.f32.mrb[0].mxu0
    %2921 = vdwg.mxu0
    %2922 = vrot.lane.b32.xlu0 %v326, 40
    %v2923 = vpop.permute.xlu0 %2922
    %v2926 = vsel %vm332, %v2693, 0
    %2928 = vmatprep.subr.mxu0 0.0
    %2929 = vmatpush1.msra.mxu0 %v2923
    %2930 = vmatprep.subr.mxu0 0.0
    %2931 = vmatpush1.msra.mxu0 0.0
    %2932 = vmatprep.subr.mxu0 0.0
    %2933 = vmatpush1.msra.mxu0 0.0
    %2934 = vmatprep.subr.mxu0 0.0
    %2935 = vmatpush1.msra.mxu0 0.0
    %2936 = vmatprep.subr.mxu0 0.0
    %2937 = vmatpush1.msra.mxu0 0.0
    %2938 = vmatprep.subr.mxu0 0.0
    %2939 = vmatpush1.msra.mxu0 0.0
    %2940 = vmatprep.subr.mxu0 0.0
    %2941 = vmatpush1.msra.mxu0 0.0
    %2942 = vmatprep.subr.mxu0 0.0
    %2943 = vmatpush1.msra.mxu0 0.0
    %2944 = vmatprep.subr.mxu0 0.0
    %2945 = vmatpush1.msra.mxu0 0.0
    %2946 = vmatprep.subr.mxu0 0.0
    %2947 = vmatpush1.msra.mxu0 0.0
    %2948 = vmatprep.subr.mxu0 0.0
    %2949 = vmatpush1.msra.mxu0 0.0
    %2950 = vmatprep.subr.mxu0 0.0
    %2951 = vmatpush1.msra.mxu0 0.0
    %2952 = vmatprep.subr.mxu0 0.0
    %2953 = vmatpush1.msra.mxu0 0.0
    %2954 = vmatprep.subr.mxu0 0.0
    %2955 = vmatpush1.msra.mxu0 0.0
    %2956 = vmatprep.subr.mxu0 0.0
    %2957 = vmatpush1.msra.mxu0 0.0
    %2958 = vmatprep.subr.mxu0 0.0
    %2959 = vmatpush1.msra.mxu0 0.0
    %2960 = vmatprep.subr.mxu0 0.0
    %2961 = vmatpush1.msra.mxu0 0.0
    %2962 = vmatprep.subr.mxu0 0.0
    %2963 = vmatpush1.msra.mxu0 0.0
    %2964 = vmatprep.subr.mxu0 0.0
    %2965 = vmatpush1.msra.mxu0 0.0
    %2966 = vmatprep.subr.mxu0 0.0
    %2967 = vmatpush1.msra.mxu0 0.0
    %2968 = vmatprep.subr.mxu0 0.0
    %2969 = vmatpush1.msra.mxu0 0.0
    %2970 = vmatprep.subr.mxu0 0.0
    %2971 = vmatpush1.msra.mxu0 0.0
    %2972 = vmatprep.subr.mxu0 0.0
    %2973 = vmatpush1.msra.mxu0 0.0
    %2974 = vmatprep.subr.mxu0 0.0
    %2975 = vmatpush1.msra.mxu0 0.0
    %2976 = vmatprep.subr.mxu0 0.0
    %2977 = vmatpush1.msra.mxu0 0.0
    %2978 = vmatprep.subr.mxu0 0.0
    %2979 = vmatpush1.msra.mxu0 0.0
    %2980 = vmatprep.subr.mxu0 0.0
    %2981 = vmatpush1.msra.mxu0 0.0
    %2982 = vmatprep.subr.mxu0 0.0
    %2983 = vmatpush1.msra.mxu0 0.0
    %2984 = vmatprep.subr.mxu0 0.0
    %2985 = vmatpush1.msra.mxu0 0.0
    %2986 = vmatprep.subr.mxu0 0.0
    %2987 = vmatpush1.msra.mxu0 0.0
    %2988 = vmatprep.subr.mxu0 0.0
    %2989 = vmatpush1.msra.mxu0 0.0
    %2990 = vmatprep.subr.mxu0 0.0
    %2991 = vmatpush1.msra.mxu0 0.0
    %2992 = vmatprep.mubr.f32.mxu0 0.0
    %2993 = vmatmul.mubr.f32.gmra.mrb[0].mxu0 %v2926
    %v2994 = vpop.f32.mrb[0].mxu0
    %v2995 = vadd.f32 0.0, %v2994
    %v2996 = vpop.f32.mrb[0].mxu0
    %2997 = vdwg.mxu0
    %3002 = vrot.lane.b32.xlu0 %v1431, 8
    %v3003 = vpop.permute.xlu0 %3002
    %3004 = vrot.lane.b32.xlu0 %v1507, 8
    %v3005 = vpop.permute.xlu0 %3004
    %3006 = vrot.lane.b32.xlu0 %v1583, 8
    %v3007 = vpop.permute.xlu0 %3006
    %3008 = vrot.lane.b32.xlu0 %v1659, 8
    %v3009 = vpop.permute.xlu0 %3008
    %3018 = vrot.lane.b32.xlu0 %v2099, 16
    %v3019 = vpop.permute.xlu0 %3018
    %3020 = vrot.lane.b32.xlu0 %v2175, 16
    %v3021 = vpop.permute.xlu0 %3020
    %3022 = vrot.lane.b32.xlu0 %v2251, 16
    %v3023 = vpop.permute.xlu0 %3022
    %3024 = vrot.lane.b32.xlu0 %v2327, 16
    %v3025 = vpop.permute.xlu0 %3024
    %3034 = vrot.lane.b32.xlu0 %v2767, 24
    %v3035 = vpop.permute.xlu0 %3034
    %3036 = vrot.lane.b32.xlu0 %v2843, 24
    %v3037 = vpop.permute.xlu0 %3036
    %3038 = vrot.lane.b32.xlu0 %v2919, 24
    %v3039 = vpop.permute.xlu0 %3038
    %3040 = vrot.lane.b32.xlu0 %v2995, 24
    %v3041 = vpop.permute.xlu0 %3040
    %v3046 = vsel %vm332, %v763, %v3003
    %v3047 = vsel %vm332, %v839, %v3005
    %v3048 = vsel %vm332, %v915, %v3007
    %v3049 = vsel %vm332, %v991, %v3009
    %vm3050 = vcmask 130048
    %v3051 = vsel %vm3050, %v3046, %v3019
    %v3052 = vsel %vm3050, %v3047, %v3021
    %v3053 = vsel %vm3050, %v3048, %v3023
    %v3054 = vsel %vm3050, %v3049, %v3025
    %vm3055 = vcmask 195584
    %v3056 = vsel %vm3055, %v3051, %v3035
    %v3057 = vsel %vm3055, %v3052, %v3037
    %v3058 = vsel %vm3055, %v3053, %v3039
    %v3059 = vsel %vm3055, %v3054, %v3041
    %v3060 = vld [vmem:[#allocation2 + $0xf0] sm:$0xff]
    %v3061 = vld [vmem:[#allocation2 + $0xf8] sm:$0xff]
    %v3062 = vld [vmem:[#allocation2 + $0x100] sm:$0xff]
    %v3063 = vld [vmem:[#allocation2 + $0x108] sm:$0xff]
    %v3064 = vld [vmem:[#allocation2 + $0x213] sm:$0x1]
    %v3065 = vlaneseq
    %v3066 = vshrl.u32 %v3065, 7
    %v3067 = vsub.s32 0, %v3066
    %v3068 = vrot.slane %v3064, %v3067
    %v3070 = vsel %vm143, %v3056, 0
    %v3073 = vsel %vm143, %v3057, 0
    %v3076 = vsel %vm143, %v3058, 0
    %v3079 = vsel %vm143, %v3059, 0
    %3081 = vmatprep.subr.mxu0 0.0
    %3082 = vmatpush1.msra.mxu0 %v3060
    %3083 = vmatprep.subr.mxu0 0.0
    %3084 = vmatpush1.msra.mxu0 %v3061
    %3085 = vmatprep.subr.mxu0 0.0
    %3086 = vmatpush1.msra.mxu0 %v3062
    %3087 = vmatprep.subr.mxu0 0.0
    %3088 = vmatpush1.msra.mxu0 %v3063
    %3089 = vmatprep.subr.mxu0 0.0
    %3090 = vmatpush1.msra.mxu0 0.0
    %3091 = vmatprep.subr.mxu0 0.0
    %3092 = vmatpush1.msra.mxu0 0.0
    %3093 = vmatprep.subr.mxu0 0.0
    %3094 = vmatpush1.msra.mxu0 0.0
    %3095 = vmatprep.subr.mxu0 0.0
    %3096 = vmatpush1.msra.mxu0 0.0
    %3097 = vmatprep.subr.mxu0 0.0
    %3098 = vmatpush1.msra.mxu0 0.0
    %3099 = vmatprep.subr.mxu0 0.0
    %3100 = vmatpush1.msra.mxu0 0.0
    %3101 = vmatprep.subr.mxu0 0.0
    %3102 = vmatpush1.msra.mxu0 0.0
    %3103 = vmatprep.subr.mxu0 0.0
    %3104 = vmatpush1.msra.mxu0 0.0
    %3105 = vmatprep.subr.mxu0 0.0
    %3106 = vmatpush1.msra.mxu0 0.0
    %3107 = vmatprep.subr.mxu0 0.0
    %3108 = vmatpush1.msra.mxu0 0.0
    %3109 = vmatprep.subr.mxu0 0.0
    %3110 = vmatpush1.msra.mxu0 0.0
    %3111 = vmatprep.subr.mxu0 0.0
    %3112 = vmatpush1.msra.mxu0 0.0
    %3113 = vmatprep.subr.mxu0 0.0
    %3114 = vmatpush1.msra.mxu0 0.0
    %3115 = vmatprep.subr.mxu0 0.0
    %3116 = vmatpush1.msra.mxu0 0.0
    %3117 = vmatprep.subr.mxu0 0.0
    %3118 = vmatpush1.msra.mxu0 0.0
    %3119 = vmatprep.subr.mxu0 0.0
    %3120 = vmatpush1.msra.mxu0 0.0
    %3121 = vmatprep.subr.mxu0 0.0
    %3122 = vmatpush1.msra.mxu0 0.0
    %3123 = vmatprep.subr.mxu0 0.0
    %3124 = vmatpush1.msra.mxu0 0.0
    %3125 = vmatprep.subr.mxu0 0.0
    %3126 = vmatpush1.msra.mxu0 0.0
    %3127 = vmatprep.subr.mxu0 0.0
    %3128 = vmatpush1.msra.mxu0 0.0
    %3129 = vmatprep.subr.mxu0 0.0
    %3130 = vmatpush1.msra.mxu0 0.0
    %3131 = vmatprep.subr.mxu0 0.0
    %3132 = vmatpush1.msra.mxu0 0.0
    %3133 = vmatprep.subr.mxu0 0.0
    %3134 = vmatpush1.msra.mxu0 0.0
    %3135 = vmatprep.subr.mxu0 0.0
    %3136 = vmatpush1.msra.mxu0 0.0
    %3137 = vmatprep.subr.mxu0 0.0
    %3138 = vmatpush1.msra.mxu0 0.0
    %3139 = vmatprep.subr.mxu0 0.0
    %3140 = vmatpush1.msra.mxu0 0.0
    %3141 = vmatprep.subr.mxu0 0.0
    %3142 = vmatpush1.msra.mxu0 0.0
    %3143 = vmatprep.subr.mxu0 0.0
    %3144 = vmatpush1.msra.mxu0 0.0
    %3145 = vmatprep.mubr.f32.mxu0 0.0
    %3146 = vmatmul.mubr.f32.gmra.mrb[0].mxu0 %v3070
    %v3147 = vpop.f32.mrb[0].mxu0
    %v3148 = vadd.f32 %v3068, %v3147
    %v3149 = vpop.f32.mrb[0].mxu0
    %3150 = vmatprep.mubr.f32.mxu0 0.0
    %3151 = vmatmul.mubr.f32.gmra.mrb[0].mxu0 %v3073
    %v3152 = vpop.f32.mrb[0].mxu0
    %v3153 = vadd.f32 %v3068, %v3152
    %v3154 = vpop.f32.mrb[0].mxu0
    %3155 = vmatprep.mubr.f32.mxu0 0.0
    %3156 = vmatmul.mubr.f32.gmra.mrb[0].mxu0 %v3076
    %v3157 = vpop.f32.mrb[0].mxu0
    %v3158 = vadd.f32 %v3068, %v3157
    %v3159 = vpop.f32.mrb[0].mxu0
    %3160 = vmatprep.mubr.f32.mxu0 0.0
    %3161 = vmatmul.mubr.f32.gmra.mrb[0].mxu0 %v3079
    %v3162 = vpop.f32.mrb[0].mxu0
    %v3163 = vadd.f32 %v3068, %v3162
    %v3164 = vpop.f32.mrb[0].mxu0
    %3165 = vdwg.mxu0
    %v3166 = vadd.f32 %v181, %v3148
    %v3167 = vadd.f32 %v182, %v3153
    %v3168 = vadd.f32 %v181, %v3158
    %v3169 = vadd.f32 %v182, %v3163
    %v3170 = vld [vmem:[#allocation2 + $0x214] sm:$0x1]
    %v3171 = vld [vmem:[#allocation2 + $0x215] sm:$0x1]
    %v3172 = vsel %vm143, %v3166, 0.0
    %3173 = vadd.xlane.f32.xlu0 %v3172
    %v3174 = vpop.xlane.xlu0 %3173
    %v3175 = vsel %vm143, %v3167, 0.0
    %3176 = vadd.xlane.f32.xlu0 %v3175
    %v3177 = vpop.xlane.xlu0 %3176
    %v3178 = vsel %vm143, %v3168, 0.0
    %3179 = vadd.xlane.f32.xlu0 %v3178
    %v3180 = vpop.xlane.xlu0 %3179
    %v3181 = vsel %vm143, %v3169, 0.0
    %3182 = vadd.xlane.f32.xlu0 %v3181
    %v3183 = vpop.xlane.xlu0 %3182
    %v3184 = vmul.f32 %v3174, %v150
    %v3185 = vmul.f32 %v3177, %v150
    %v3186 = vmul.f32 %v3180, %v150
    %v3187 = vmul.f32 %v3183, %v150
    %v3188 = vsub.f32 %v3166, %v3184
    %v3189 = vsub.f32 %v3167, %v3185
    %v3190 = vsub.f32 %v3168, %v3186
    %v3191 = vsub.f32 %v3169, %v3187
    %v3192 = vmul.f32 %v3188, %v3188
    %v3193 = vmul.f32 %v3189, %v3189
    %v3194 = vmul.f32 %v3190, %v3190
    %v3195 = vmul.f32 %v3191, %v3191
    %v3196 = vsel %vm143, %v3192, 0.0
    %3197 = vadd.xlane.f32.xlu0 %v3196
    %v3198 = vpop.xlane.xlu0 %3197
    %v3199 = vsel %vm143, %v3193, 0.0
    %3200 = vadd.xlane.f32.xlu0 %v3199
    %v3201 = vpop.xlane.xlu0 %3200
    %v3202 = vsel %vm143, %v3194, 0.0
    %3203 = vadd.xlane.f32.xlu0 %v3202
    %v3204 = vpop.xlane.xlu0 %3203
    %v3205 = vsel %vm143, %v3195, 0.0
    %3206 = vadd.xlane.f32.xlu0 %v3205
    %v3207 = vpop.xlane.xlu0 %3206
    %v3208 = vmul.f32 %v3198, %v150
    %v3209 = vmul.f32 %v3201, %v150
    %v3210 = vmul.f32 %v3204, %v150
    %v3211 = vmul.f32 %v3207, %v150
    %v3212 = vadd.f32 %v3208, 1e-12
    %v3213 = vadd.f32 %v3209, 1e-12
    %v3214 = vadd.f32 %v3210, 1e-12
    %v3215 = vadd.f32 %v3211, 1e-12
    %v3216 = vrsqrt.pop %v3212
    %v3217 = vrsqrt.pop %v3213
    %v3218 = vrsqrt.pop %v3214
    %v3219 = vrsqrt.pop %v3215
    %v3220 = vmul.f32 %v3188, %v3216
    %v3221 = vmul.f32 %v3189, %v3217
    %v3222 = vmul.f32 %v3190, %v3218
    %v3223 = vmul.f32 %v3191, %v3219
    %v3224 = vlaneseq
    %v3225 = vshrl.u32 %v3224, 7
    %v3226 = vsub.s32 0, %v3225
    %v3227 = vrot.slane %v3170, %v3226
    %v3228 = vmul.f32 %v3220, %v3227
    %v3229 = vmul.f32 %v3221, %v3227
    %v3230 = vmul.f32 %v3222, %v3227
    %v3231 = vmul.f32 %v3223, %v3227
    %v3232 = vlaneseq
    %v3233 = vshrl.u32 %v3232, 7
    %v3234 = vsub.s32 0, %v3233
    %v3235 = vrot.slane %v3171, %v3234
    %v3236 = vadd.f32 %v3228, %v3235
    %v3237 = vadd.f32 %v3229, %v3235
    %v3238 = vadd.f32 %v3230, %v3235
    %v3239 = vadd.f32 %v3231, %v3235
    %v3240 = vld [vmem:[#allocation2 + $0x110] sm:$0xff]
    %v3241 = vld [vmem:[#allocation2 + $0x118] sm:$0xff]
    %v3242 = vld [vmem:[#allocation2 + $0x120] sm:$0xff]
    %v3243 = vld [vmem:[#allocation2 + $0x128] sm:$0xff]
    %v3244 = vld [vmem:[#allocation2 + $0x216] sm:$0x1]
    %v3245 = vlaneseq
    %v3246 = vshrl.u32 %v3245, 7
    %v3247 = vsub.s32 0, %v3246
    %v3248 = vrot.slane %v3244, %v3247
    %v3250 = vsel %vm143, %v3236, 0
    %v3253 = vsel %vm143, %v3237, 0
    %v3256 = vsel %vm143, %v3238, 0
    %v3259 = vsel %vm143, %v3239, 0
    %3261 = vmatprep.subr.mxu0 0.0
    %3262 = vmatpush1.msra.mxu0 %v3240
    %3263 = vmatprep.subr.mxu0 0.0
    %3264 = vmatpush1.msra.mxu0 %v3241
    %3265 = vmatprep.subr.mxu0 0.0
    %3266 = vmatpush1.msra.mxu0 %v3242
    %3267 = vmatprep.subr.mxu0 0.0
    %3268 = vmatpush1.msra.mxu0 %v3243
    %3269 = vmatprep.subr.mxu0 0.0
    %3270 = vmatpush1.msra.mxu0 0.0
    %3271 = vmatprep.subr.mxu0 0.0
    %3272 = vmatpush1.msra.mxu0 0.0
    %3273 = vmatprep.subr.mxu0 0.0
    %3274 = vmatpush1.msra.mxu0 0.0
    %3275 = vmatprep.subr.mxu0 0.0
    %3276 = vmatpush1.msra.mxu0 0.0
    %3277 = vmatprep.subr.mxu0 0.0
    %3278 = vmatpush1.msra.mxu0 0.0
    %3279 = vmatprep.subr.mxu0 0.0
    %3280 = vmatpush1.msra.mxu0 0.0
    %3281 = vmatprep.subr.mxu0 0.0
    %3282 = vmatpush1.msra.mxu0 0.0
    %3283 = vmatprep.subr.mxu0 0.0
    %3284 = vmatpush1.msra.mxu0 0.0
    %3285 = vmatprep.subr.mxu0 0.0
    %3286 = vmatpush1.msra.mxu0 0.0
    %3287 = vmatprep.subr.mxu0 0.0
    %3288 = vmatpush1.msra.mxu0 0.0
    %3289 = vmatprep.subr.mxu0 0.0
    %3290 = vmatpush1.msra.mxu0 0.0
    %3291 = vmatprep.subr.mxu0 0.0
    %3292 = vmatpush1.msra.mxu0 0.0
    %3293 = vmatprep.subr.mxu0 0.0
    %3294 = vmatpush1.msra.mxu0 0.0
    %3295 = vmatprep.subr.mxu0 0.0
    %3296 = vmatpush1.msra.mxu0 0.0
    %3297 = vmatprep.subr.mxu0 0.0
    %3298 = vmatpush1.msra.mxu0 0.0
    %3299 = vmatprep.subr.mxu0 0.0
    %3300 = vmatpush1.msra.mxu0 0.0
    %3301 = vmatprep.subr.mxu0 0.0
    %3302 = vmatpush1.msra.mxu0 0.0
    %3303 = vmatprep.subr.mxu0 0.0
    %3304 = vmatpush1.msra.mxu0 0.0
    %3305 = vmatprep.subr.mxu0 0.0
    %3306 = vmatpush1.msra.mxu0 0.0
    %3307 = vmatprep.subr.mxu0 0.0
    %3308 = vmatpush1.msra.mxu0 0.0
    %3309 = vmatprep.subr.mxu0 0.0
    %3310 = vmatpush1.msra.mxu0 0.0
    %3311 = vmatprep.subr.mxu0 0.0
    %3312 = vmatpush1.msra.mxu0 0.0
    %3313 = vmatprep.subr.mxu0 0.0
    %3314 = vmatpush1.msra.mxu0 0.0
    %3315 = vmatprep.subr.mxu0 0.0
    %3316 = vmatpush1.msra.mxu0 0.0
    %3317 = vmatprep.subr.mxu0 0.0
    %3318 = vmatpush1.msra.mxu0 0.0
    %3319 = vmatprep.subr.mxu0 0.0
    %3320 = vmatpush1.msra.mxu0 0.0
    %3321 = vmatprep.subr.mxu0 0.0
    %3322 = vmatpush1.msra.mxu0 0.0
    %3323 = vmatprep.subr.mxu0 0.0
    %3324 = vmatpush1.msra.mxu0 0.0
    %3325 = vmatprep.mubr.f32.mxu0 0.0
    %3326 = vmatmul.mubr.f32.gmra.mrb[0].mxu0 %v3250
    %v3327 = vpop.f32.mrb[0].mxu0
    %v3328 = vadd.f32 %v3248, %v3327
    %v3329 = vpop.f32.mrb[0].mxu0
    %3330 = vmatprep.mubr.f32.mxu0 0.0
    %3331 = vmatmul.mubr.f32.gmra.mrb[0].mxu0 %v3253
    %v3332 = vpop.f32.mrb[0].mxu0
    %v3333 = vadd.f32 %v3248, %v3332
    %v3334 = vpop.f32.mrb[0].mxu0
    %3335 = vmatprep.mubr.f32.mxu0 0.0
    %3336 = vmatmul.mubr.f32.gmra.mrb[0].mxu0 %v3256
    %v3337 = vpop.f32.mrb[0].mxu0
    %v3338 = vadd.f32 %v3248, %v3337
    %v3339 = vpop.f32.mrb[0].mxu0
    %3340 = vmatprep.mubr.f32.mxu0 0.0
    %3341 = vmatmul.mubr.f32.gmra.mrb[0].mxu0 %v3259
    %v3342 = vpop.f32.mrb[0].mxu0
    %v3343 = vadd.f32 %v3248, %v3342
    %v3344 = vpop.f32.mrb[0].mxu0
    %3345 = vdwg.mxu0
    %v3346 = vmul.f32 %v3328, 0.5
    %v3347 = vmul.f32 %v3333, 0.5
    %v3348 = vmul.f32 %v3338, 0.5
    %v3349 = vmul.f32 %v3343, 0.5
    %v3350 = vmul.f32 %v3328, 0.044715
    %v3351 = vmul.f32 %v3333, 0.044715
    %v3352 = vmul.f32 %v3338, 0.044715
    %v3353 = vmul.f32 %v3343, 0.044715
    %v3354 = vmul.f32 %v3350, %v3328
    %v3355 = vmul.f32 %v3351, %v3333
    %v3356 = vmul.f32 %v3352, %v3338
    %v3357 = vmul.f32 %v3353, %v3343
    %v3358 = vmul.f32 %v3354, %v3328
    %v3359 = vmul.f32 %v3355, %v3333
    %v3360 = vmul.f32 %v3356, %v3338
    %v3361 = vmul.f32 %v3357, %v3343
    %v3362 = vadd.f32 %v3328, %v3358
    %v3363 = vadd.f32 %v3333, %v3359
    %v3364 = vadd.f32 %v3338, %v3360
    %v3365 = vadd.f32 %v3343, %v3361
    %v3366 = vmul.f32 %v3362, 0.7978846
    %v3367 = vmul.f32 %v3363, 0.7978846
    %v3368 = vmul.f32 %v3364, 0.7978846
    %v3369 = vmul.f32 %v3365, 0.7978846
    %v3370 = vtanh.pop %v3366
    %v3371 = vtanh.pop %v3367
    %v3372 = vtanh.pop %v3368
    %v3373 = vtanh.pop %v3369
    %v3374 = vadd.f32 %v3370, 1.0
    %v3375 = vadd.f32 %v3371, 1.0
    %v3376 = vadd.f32 %v3372, 1.0
    %v3377 = vadd.f32 %v3373, 1.0
    %v3378 = vmul.f32 %v3346, %v3374
    %v3379 = vmul.f32 %v3347, %v3375
    %v3380 = vmul.f32 %v3348, %v3376
    %v3381 = vmul.f32 %v3349, %v3377
    %v3382 = vld [vmem:[#allocation2 + $0x130] sm:$0xff]
    %v3383 = vld [vmem:[#allocation2 + $0x138] sm:$0xff]
    %v3384 = vld [vmem:[#allocation2 + $0x140] sm:$0xff]
    %v3385 = vld [vmem:[#allocation2 + $0x148] sm:$0xff]
    %v3386 = vld [vmem:[#allocation2 + $0x150] sm:$0xff]
    %v3387 = vld [vmem:[#allocation2 + $0x158] sm:$0xff]
    %v3388 = vld [vmem:[#allocation2 + $0x160] sm:$0xff]
    %v3389 = vld [vmem:[#allocation2 + $0x168] sm:$0xff]
    %v3390 = vld [vmem:[#allocation2 + $0x217] sm:$0x1]
    %v3391 = vlaneseq
    %v3392 = vshrl.u32 %v3391, 7
    %v3393 = vsub.s32 0, %v3392
    %v3394 = vrot.slane %v3390, %v3393
    %vm3395 = vcmask 523264
    %v3397 = vsel %vm3395, %v3378, 0
    %v3400 = vsel %vm3395, %v3379, 0
    %v3403 = vsel %vm3395, %v3380, 0
    %v3406 = vsel %vm3395, %v3381, 0
    %3408 = vmatprep.subr.mxu0 0.0
    %3409 = vmatpush1.msra.mxu0 %v3382
    %3410 = vmatprep.subr.mxu0 0.0
    %3411 = vmatpush1.msra.mxu0 %v3383
    %3412 = vmatprep.subr.mxu0 0.0
    %3413 = vmatpush1.msra.mxu0 %v3384
    %3414 = vmatprep.subr.mxu0 0.0
    %3415 = vmatpush1.msra.mxu0 %v3385
    %3416 = vmatprep.subr.mxu0 0.0
    %3417 = vmatpush1.msra.mxu0 %v3386
    %3418 = vmatprep.subr.mxu0 0.0
    %3419 = vmatpush1.msra.mxu0 %v3387
    %3420 = vmatprep.subr.mxu0 0.0
    %3421 = vmatpush1.msra.mxu0 %v3388
    %3422 = vmatprep.subr.mxu0 0.0
    %3423 = vmatpush1.msra.mxu0 %v3389
    %3424 = vmatprep.subr.mxu0 0.0
    %3425 = vmatpush1.msra.mxu0 0.0
    %3426 = vmatprep.subr.mxu0 0.0
    %3427 = vmatpush1.msra.mxu0 0.0
    %3428 = vmatprep.subr.mxu0 0.0
    %3429 = vmatpush1.msra.mxu0 0.0
    %3430 = vmatprep.subr.mxu0 0.0
    %3431 = vmatpush1.msra.mxu0 0.0
    %3432 = vmatprep.subr.mxu0 0.0
    %3433 = vmatpush1.msra.mxu0 0.0
    %3434 = vmatprep.subr.mxu0 0.0
    %3435 = vmatpush1.msra.mxu0 0.0
    %3436 = vmatprep.subr.mxu0 0.0
    %3437 = vmatpush1.msra.mxu0 0.0
    %3438 = vmatprep.subr.mxu0 0.0
    %3439 = vmatpush1.msra.mxu0 0.0
    %3440 = vmatprep.subr.mxu0 0.0
    %3441 = vmatpush1.msra.mxu0 0.0
    %3442 = vmatprep.subr.mxu0 0.0
    %3443 = vmatpush1.msra.mxu0 0.0
    %3444 = vmatprep.subr.mxu0 0.0
    %3445 = vmatpush1.msra.mxu0 0.0
    %3446 = vmatprep.subr.mxu0 0.0
    %3447 = vmatpush1.msra.mxu0 0.0
    %3448 = vmatprep.subr.mxu0 0.0
    %3449 = vmatpush1.msra.mxu0 0.0
    %3450 = vmatprep.subr.mxu0 0.0
    %3451 = vmatpush1.msra.mxu0 0.0
    %3452 = vmatprep.subr.mxu0 0.0
    %3453 = vmatpush1.msra.mxu0 0.0
    %3454 = vmatprep.subr.mxu0 0.0
    %3455 = vmatpush1.msra.mxu0 0.0
    %3456 = vmatprep.subr.mxu0 0.0
    %3457 = vmatpush1.msra.mxu0 0.0
    %3458 = vmatprep.subr.mxu0 0.0
    %3459 = vmatpush1.msra.mxu0 0.0
    %3460 = vmatprep.subr.mxu0 0.0
    %3461 = vmatpush1.msra.mxu0 0.0
    %3462 = vmatprep.subr.mxu0 0.0
    %3463 = vmatpush1.msra.mxu0 0.0
    %3464 = vmatprep.subr.mxu0 0.0
    %3465 = vmatpush1.msra.mxu0 0.0
    %3466 = vmatprep.subr.mxu0 0.0
    %3467 = vmatpush1.msra.mxu0 0.0
    %3468 = vmatprep.subr.mxu0 0.0
    %3469 = vmatpush1.msra.mxu0 0.0
    %3470 = vmatprep.subr.mxu0 0.0
    %3471 = vmatpush1.msra.mxu0 0.0
    %3472 = vmatprep.mubr.f32.mxu0 0.0
    %3473 = vmatmul.mubr.f32.gmra.mrb[0].mxu0 %v3397
    %v3474 = vpop.f32.mrb[0].mxu0
    %v3475 = vadd.f32 %v3394, %v3474
    %v3476 = vpop.f32.mrb[0].mxu0
    %3477 = vmatprep.mubr.f32.mxu0 0.0
    %3478 = vmatmul.mubr.f32.gmra.mrb[0].mxu0 %v3400
    %v3479 = vpop.f32.mrb[0].mxu0
    %v3480 = vadd.f32 %v3394, %v3479
    %v3481 = vpop.f32.mrb[0].mxu0
    %3482 = vmatprep.mubr.f32.mxu0 0.0
    %3483 = vmatmul.mubr.f32.gmra.mrb[0].mxu0 %v3403
    %v3484 = vpop.f32.mrb[0].mxu0
    %v3485 = vadd.f32 %v3394, %v3484
    %v3486 = vpop.f32.mrb[0].mxu0
    %3487 = vmatprep.mubr.f32.mxu0 0.0
    %3488 = vmatmul.mubr.f32.gmra.mrb[0].mxu0 %v3406
    %v3489 = vpop.f32.mrb[0].mxu0
    %v3490 = vadd.f32 %v3394, %v3489
    %v3491 = vpop.f32.mrb[0].mxu0
    %3492 = vdwg.mxu0
    %v3493 = vadd.f32 %v3236, %v3475
    %v3494 = vadd.f32 %v3237, %v3480
    %v3495 = vadd.f32 %v3238, %v3485
    %v3496 = vadd.f32 %v3239, %v3490
    %v3497 = vld [vmem:[#allocation2 + $0x218] sm:$0x1]
    %v3498 = vld [vmem:[#allocation2 + $0x219] sm:$0x1]
    %v3499 = vsel %vm143, %v3493, 0.0
    %3500 = vadd.xlane.f32.xlu0 %v3499
    %v3501 = vpop.xlane.xlu0 %3500
    %v3502 = vsel %vm143, %v3494, 0.0
    %3503 = vadd.xlane.f32.xlu0 %v3502
    %v3504 = vpop.xlane.xlu0 %3503
    %v3505 = vsel %vm143, %v3495, 0.0
    %3506 = vadd.xlane.f32.xlu0 %v3505
    %v3507 = vpop.xlane.xlu0 %3506
    %v3508 = vsel %vm143, %v3496, 0.0
    %3509 = vadd.xlane.f32.xlu0 %v3508
    %v3510 = vpop.xlane.xlu0 %3509
    %v3511 = vmul.f32 %v3501, %v150
    %v3512 = vmul.f32 %v3504, %v150
    %v3513 = vmul.f32 %v3507, %v150
    %v3514 = vmul.f32 %v3510, %v150
    %v3515 = vsub.f32 %v3493, %v3511
    %v3516 = vsub.f32 %v3494, %v3512
    %v3517 = vsub.f32 %v3495, %v3513
    %v3518 = vsub.f32 %v3496, %v3514
    %v3519 = vmul.f32 %v3515, %v3515
    %v3520 = vmul.f32 %v3516, %v3516
    %v3521 = vmul.f32 %v3517, %v3517
    %v3522 = vmul.f32 %v3518, %v3518
    %v3523 = vsel %vm143, %v3519, 0.0
    %3524 = vadd.xlane.f32.xlu0 %v3523
    %v3525 = vpop.xlane.xlu0 %3524
    %v3526 = vsel %vm143, %v3520, 0.0
    %3527 = vadd.xlane.f32.xlu0 %v3526
    %v3528 = vpop.xlane.xlu0 %3527
    %v3529 = vsel %vm143, %v3521, 0.0
    %3530 = vadd.xlane.f32.xlu0 %v3529
    %v3531 = vpop.xlane.xlu0 %3530
    %v3532 = vsel %vm143, %v3522, 0.0
    %3533 = vadd.xlane.f32.xlu0 %v3532
    %v3534 = vpop.xlane.xlu0 %3533
    %v3535 = vmul.f32 %v3525, %v150
    %v3536 = vmul.f32 %v3528, %v150
    %v3537 = vmul.f32 %v3531, %v150
    %v3538 = vmul.f32 %v3534, %v150
    %v3539 = vadd.f32 %v3535, 1e-12
    %v3540 = vadd.f32 %v3536, 1e-12
    %v3541 = vadd.f32 %v3537, 1e-12
    %v3542 = vadd.f32 %v3538, 1e-12
    %v3543 = vrsqrt.pop %v3539
    %v3544 = vrsqrt.pop %v3540
    %v3545 = vrsqrt.pop %v3541
    %v3546 = vrsqrt.pop %v3542
    %v3547 = vmul.f32 %v3515, %v3543
    %v3548 = vmul.f32 %v3516, %v3544
    %v3549 = vmul.f32 %v3517, %v3545
    %v3550 = vmul.f32 %v3518, %v3546
    %v3551 = vlaneseq
    %v3552 = vshrl.u32 %v3551, 7
    %v3553 = vsub.s32 0, %v3552
    %v3554 = vrot.slane %v3497, %v3553
    %v3555 = vmul.f32 %v3547, %v3554
    %v3556 = vmul.f32 %v3548, %v3554
    %v3557 = vmul.f32 %v3549, %v3554
    %v3558 = vmul.f32 %v3550, %v3554
    %v3559 = vlaneseq
    %v3560 = vshrl.u32 %v3559, 7
    %v3561 = vsub.s32 0, %v3560
    %v3562 = vrot.slane %v3498, %v3561
    %v3563 = vadd.f32 %v3555, %v3562
    %v3564 = vadd.f32 %v3556, %v3562
    %v3565 = vadd.f32 %v3557, %v3562
    %v3566 = vadd.f32 %v3558, %v3562
    %v3567 = vld [vmem:[#allocation2 + $0x170] sm:$0xff]
    %v3568 = vld [vmem:[#allocation2 + $0x178] sm:$0xff]
    %v3569 = vld [vmem:[#allocation2 + $0x180] sm:$0xff]
    %v3570 = vld [vmem:[#allocation2 + $0x188] sm:$0xff]
    %v3571 = vld [vmem:[#allocation2 + $0x21a] sm:$0x1]
    %v3572 = vlaneseq
    %v3573 = vshrl.u32 %v3572, 7
    %v3574 = vsub.s32 0, %v3573
    %v3575 = vrot.slane %v3571, %v3574
    %v3577 = vsel %vm143, %v3563, 0
    %v3580 = vsel %vm143, %v3564, 0
    %v3583 = vsel %vm143, %v3565, 0
    %v3586 = vsel %vm143, %v3566, 0
    %3588 = vmatprep.subr.mxu0 0.0
    %3589 = vmatpush1.msra.mxu0 %v3567
    %3590 = vmatprep.subr.mxu0 0.0
    %3591 = vmatpush1.msra.mxu0 %v3568
    %3592 = vmatprep.subr.mxu0 0.0
    %3593 = vmatpush1.msra.mxu0 %v3569
    %3594 = vmatprep.subr.mxu0 0.0
    %3595 = vmatpush1.msra.mxu0 %v3570
    %3596 = vmatprep.subr.mxu0 0.0
    %3597 = vmatpush1.msra.mxu0 0.0
    %3598 = vmatprep.subr.mxu0 0.0
    %3599 = vmatpush1.msra.mxu0 0.0
    %3600 = vmatprep.subr.mxu0 0.0
    %3601 = vmatpush1.msra.mxu0 0.0
    %3602 = vmatprep.subr.mxu0 0.0
    %3603 = vmatpush1.msra.mxu0 0.0
    %3604 = vmatprep.subr.mxu0 0.0
    %3605 = vmatpush1.msra.mxu0 0.0
    %3606 = vmatprep.subr.mxu0 0.0
    %3607 = vmatpush1.msra.mxu0 0.0
    %3608 = vmatprep.subr.mxu0 0.0
    %3609 = vmatpush1.msra.mxu0 0.0
    %3610 = vmatprep.subr.mxu0 0.0
    %3611 = vmatpush1.msra.mxu0 0.0
    %3612 = vmatprep.subr.mxu0 0.0
    %3613 = vmatpush1.msra.mxu0 0.0
    %3614 = vmatprep.subr.mxu0 0.0
    %3615 = vmatpush1.msra.mxu0 0.0
    %3616 = vmatprep.subr.mxu0 0.0
    %3617 = vmatpush1.msra.mxu0 0.0
    %3618 = vmatprep.subr.mxu0 0.0
    %3619 = vmatpush1.msra.mxu0 0.0
    %3620 = vmatprep.subr.mxu0 0.0
    %3621 = vmatpush1.msra.mxu0 0.0
    %3622 = vmatprep.subr.mxu0 0.0
    %3623 = vmatpush1.msra.mxu0 0.0
    %3624 = vmatprep.subr.mxu0 0.0
    %3625 = vmatpush1.msra.mxu0 0.0
    %3626 = vmatprep.subr.mxu0 0.0
    %3627 = vmatpush1.msra.mxu0 0.0
    %3628 = vmatprep.subr.mxu0 0.0
    %3629 = vmatpush1.msra.mxu0 0.0
    %3630 = vmatprep.subr.mxu0 0.0
    %3631 = vmatpush1.msra.mxu0 0.0
    %3632 = vmatprep.subr.mxu0 0.0
    %3633 = vmatpush1.msra.mxu0 0.0
    %3634 = vmatprep.subr.mxu0 0.0
    %3635 = vmatpush1.msra.mxu0 0.0
    %3636 = vmatprep.subr.mxu0 0.0
    %3637 = vmatpush1.msra.mxu0 0.0
    %3638 = vmatprep.subr.mxu0 0.0
    %3639 = vmatpush1.msra.mxu0 0.0
    %3640 = vmatprep.subr.mxu0 0.0
    %3641 = vmatpush1.msra.mxu0 0.0
    %3642 = vmatprep.subr.mxu0 0.0
    %3643 = vmatpush1.msra.mxu0 0.0
    %3644 = vmatprep.subr.mxu0 0.0
    %3645 = vmatpush1.msra.mxu0 0.0
    %3646 = vmatprep.subr.mxu0 0.0
    %3647 = vmatpush1.msra.mxu0 0.0
    %3648 = vmatprep.subr.mxu0 0.0
    %3649 = vmatpush1.msra.mxu0 0.0
    %3650 = vmatprep.subr.mxu0 0.0
    %3651 = vmatpush1.msra.mxu0 0.0
    %3652 = vmatprep.mubr.f32.mxu0 0.0
    %3653 = vmatmul.mubr.f32.gmra.mrb[0].mxu0 %v3577
    %v3654 = vpop.f32.mrb[0].mxu0
    %v3655 = vadd.f32 %v3575, %v3654
    %v3656 = vpop.f32.mrb[0].mxu0
    %3657 = vmatprep.mubr.f32.mxu0 0.0
    %3658 = vmatmul.mubr.f32.gmra.mrb[0].mxu0 %v3580
    %v3659 = vpop.f32.mrb[0].mxu0
    %v3660 = vadd.f32 %v3575, %v3659
    %v3661 = vpop.f32.mrb[0].mxu0
    %3662 = vmatprep.mubr.f32.mxu0 0.0
    %3663 = vmatmul.mubr.f32.gmra.mrb[0].mxu0 %v3583
    %v3664 = vpop.f32.mrb[0].mxu0
    %v3665 = vadd.f32 %v3575, %v3664
    %v3666 = vpop.f32.mrb[0].mxu0
    %3667 = vmatprep.mubr.f32.mxu0 0.0
    %3668 = vmatmul.mubr.f32.gmra.mrb[0].mxu0 %v3586
    %v3669 = vpop.f32.mrb[0].mxu0
    %v3670 = vadd.f32 %v3575, %v3669
    %v3671 = vpop.f32.mrb[0].mxu0
    %3672 = vdwg.mxu0
    %3674 = vrot.lane.b32.xlu0 %v3655, 96
    %v3675 = vpop.permute.xlu0 %3674
    %v3676 = vsel %vm332, %v3655, 0
    %v3678 = vsel %vm332, %v3675, 0
    %3680 = vmatprep.subr.mxu0 0.0
    %3681 = vmatpush1.xpose.msra.mxu0 %v3678
    %3682 = vmatprep.subr.mxu0 0.0
    %3683 = vmatpush1.xpose.msra.mxu0 0.0
    %3684 = vmatprep.subr.mxu0 0.0
    %3685 = vmatpush1.xpose.msra.mxu0 0.0
    %3686 = vmatprep.subr.mxu0 0.0
    %3687 = vmatpush1.xpose.msra.mxu0 0.0
    %3688 = vmatprep.subr.mxu0 0.0
    %3689 = vmatpush1.xpose.msra.mxu0 0.0
    %3690 = vmatprep.subr.mxu0 0.0
    %3691 = vmatpush1.xpose.msra.mxu0 0.0
    %3692 = vmatprep.subr.mxu0 0.0
    %3693 = vmatpush1.xpose.msra.mxu0 0.0
    %3694 = vmatprep.subr.mxu0 0.0
    %3695 = vmatpush1.xpose.msra.mxu0 0.0
    %3696 = vmatprep.subr.mxu0 0.0
    %3697 = vmatpush1.xpose.msra.mxu0 0.0
    %3698 = vmatprep.subr.mxu0 0.0
    %3699 = vmatpush1.xpose.msra.mxu0 0.0
    %3700 = vmatprep.subr.mxu0 0.0
    %3701 = vmatpush1.xpose.msra.mxu0 0.0
    %3702 = vmatprep.subr.mxu0 0.0
    %3703 = vmatpush1.xpose.msra.mxu0 0.0
    %3704 = vmatprep.subr.mxu0 0.0
    %3705 = vmatpush1.xpose.msra.mxu0 0.0
    %3706 = vmatprep.subr.mxu0 0.0
    %3707 = vmatpush1.xpose.msra.mxu0 0.0
    %3708 = vmatprep.subr.mxu0 0.0
    %3709 = vmatpush1.xpose.msra.mxu0 0.0
    %3710 = vmatprep.subr.mxu0 0.0
    %3711 = vmatpush1.xpose.msra.mxu0 0.0
    %3712 = vmatprep.subr.mxu0 0.0
    %3713 = vmatpush1.xpose.msra.mxu0 0.0
    %3714 = vmatprep.subr.mxu0 0.0
    %3715 = vmatpush1.xpose.msra.mxu0 0.0
    %3716 = vmatprep.subr.mxu0 0.0
    %3717 = vmatpush1.xpose.msra.mxu0 0.0
    %3718 = vmatprep.subr.mxu0 0.0
    %3719 = vmatpush1.xpose.msra.mxu0 0.0
    %3720 = vmatprep.subr.mxu0 0.0
    %3721 = vmatpush1.xpose.msra.mxu0 0.0
    %3722 = vmatprep.subr.mxu0 0.0
    %3723 = vmatpush1.xpose.msra.mxu0 0.0
    %3724 = vmatprep.subr.mxu0 0.0
    %3725 = vmatpush1.xpose.msra.mxu0 0.0
    %3726 = vmatprep.subr.mxu0 0.0
    %3727 = vmatpush1.xpose.msra.mxu0 0.0
    %3728 = vmatprep.subr.mxu0 0.0
    %3729 = vmatpush1.xpose.msra.mxu0 0.0
    %3730 = vmatprep.subr.mxu0 0.0
    %3731 = vmatpush1.xpose.msra.mxu0 0.0
    %3732 = vmatprep.subr.mxu0 0.0
    %3733 = vmatpush1.xpose.msra.mxu0 0.0
    %3734 = vmatprep.subr.mxu0 0.0
    %3735 = vmatpush1.xpose.msra.mxu0 0.0
    %3736 = vmatprep.subr.mxu0 0.0
    %3737 = vmatpush1.xpose.msra.mxu0 0.0
    %3738 = vmatprep.subr.mxu0 0.0
    %3739 = vmatpush1.xpose.msra.mxu0 0.0
    %3740 = vmatprep.subr.mxu0 0.0
    %3741 = vmatpush1.xpose.msra.mxu0 0.0
    %3742 = vmatprep.subr.mxu0 0.0
    %3743 = vmatpush1.xpose.msra.mxu0 0.0
    %3744 = vmatprep.mubr.f32.mxu0 0.0
    %3745 = vmatmul.mubr.f32.gmra.mrb[0].mxu0 %v3676
    %v3746 = vpop.f32.mrb[0].mxu0
    %v3747 = vadd.f32 0.0, %v3746
    %v3748 = vpop.f32.mrb[0].mxu0
    %3749 = vdwg.mxu0
    %3751 = vrot.lane.b32.xlu0 %v3660, 96
    %v3752 = vpop.permute.xlu0 %3751
    %v3753 = vsel %vm332, %v3660, 0
    %v3755 = vsel %vm332, %v3752, 0
    %3757 = vmatprep.subr.mxu0 0.0
    %3758 = vmatpush1.xpose.msra.mxu0 %v3755
    %3759 = vmatprep.subr.mxu0 0.0
    %3760 = vmatpush1.xpose.msra.mxu0 0.0
    %3761 = vmatprep.subr.mxu0 0.0
    %3762 = vmatpush1.xpose.msra.mxu0 0.0
    %3763 = vmatprep.subr.mxu0 0.0
    %3764 = vmatpush1.xpose.msra.mxu0 0.0
    %3765 = vmatprep.subr.mxu0 0.0
    %3766 = vmatpush1.xpose.msra.mxu0 0.0
    %3767 = vmatprep.subr.mxu0 0.0
    %3768 = vmatpush1.xpose.msra.mxu0 0.0
    %3769 = vmatprep.subr.mxu0 0.0
    %3770 = vmatpush1.xpose.msra.mxu0 0.0
    %3771 = vmatprep.subr.mxu0 0.0
    %3772 = vmatpush1.xpose.msra.mxu0 0.0
    %3773 = vmatprep.subr.mxu0 0.0
    %3774 = vmatpush1.xpose.msra.mxu0 0.0
    %3775 = vmatprep.subr.mxu0 0.0
    %3776 = vmatpush1.xpose.msra.mxu0 0.0
    %3777 = vmatprep.subr.mxu0 0.0
    %3778 = vmatpush1.xpose.msra.mxu0 0.0
    %3779 = vmatprep.subr.mxu0 0.0
    %3780 = vmatpush1.xpose.msra.mxu0 0.0
    %3781 = vmatprep.subr.mxu0 0.0
    %3782 = vmatpush1.xpose.msra.mxu0 0.0
    %3783 = vmatprep.subr.mxu0 0.0
    %3784 = vmatpush1.xpose.msra.mxu0 0.0
    %3785 = vmatprep.subr.mxu0 0.0
    %3786 = vmatpush1.xpose.msra.mxu0 0.0
    %3787 = vmatprep.subr.mxu0 0.0
    %3788 = vmatpush1.xpose.msra.mxu0 0.0
    %3789 = vmatprep.subr.mxu0 0.0
    %3790 = vmatpush1.xpose.msra.mxu0 0.0
    %3791 = vmatprep.subr.mxu0 0.0
    %3792 = vmatpush1.xpose.msra.mxu0 0.0
    %3793 = vmatprep.subr.mxu0 0.0
    %3794 = vmatpush1.xpose.msra.mxu0 0.0
    %3795 = vmatprep.subr.mxu0 0.0
    %3796 = vmatpush1.xpose.msra.mxu0 0.0
    %3797 = vmatprep.subr.mxu0 0.0
    %3798 = vmatpush1.xpose.msra.mxu0 0.0
    %3799 = vmatprep.subr.mxu0 0.0
    %3800 = vmatpush1.xpose.msra.mxu0 0.0
    %3801 = vmatprep.subr.mxu0 0.0
    %3802 = vmatpush1.xpose.msra.mxu0 0.0
    %3803 = vmatprep.subr.mxu0 0.0
    %3804 = vmatpush1.xpose.msra.mxu0 0.0
    %3805 = vmatprep.subr.mxu0 0.0
    %3806 = vmatpush1.xpose.msra.mxu0 0.0
    %3807 = vmatprep.subr.mxu0 0.0
    %3808 = vmatpush1.xpose.msra.mxu0 0.0
    %3809 = vmatprep.subr.mxu0 0.0
    %3810 = vmatpush1.xpose.msra.mxu0 0.0
    %3811 = vmatprep.subr.mxu0 0.0
    %3812 = vmatpush1.xpose.msra.mxu0 0.0
    %3813 = vmatprep.subr.mxu0 0.0
    %3814 = vmatpush1.xpose.msra.mxu0 0.0
    %3815 = vmatprep.subr.mxu0 0.0
    %3816 = vmatpush1.xpose.msra.mxu0 0.0
    %3817 = vmatprep.subr.mxu0 0.0
    %3818 = vmatpush1.xpose.msra.mxu0 0.0
    %3819 = vmatprep.subr.mxu0 0.0
    %3820 = vmatpush1.xpose.msra.mxu0 0.0
    %3821 = vmatprep.mubr.f32.mxu0 0.0
    %3822 = vmatmul.mubr.f32.gmra.mrb[0].mxu0 %v3753
    %v3823 = vpop.f32.mrb[0].mxu0
    %v3824 = vadd.f32 0.0, %v3823
    %v3825 = vpop.f32.mrb[0].mxu0
    %3826 = vdwg.mxu0
    %3828 = vrot.lane.b32.xlu0 %v3665, 96
    %v3829 = vpop.permute.xlu0 %3828
    %v3830 = vsel %vm332, %v3665, 0
    %v3832 = vsel %vm332, %v3829, 0
    %3834 = vmatprep.subr.mxu0 0.0
    %3835 = vmatpush1.xpose.msra.mxu0 %v3832
    %3836 = vmatprep.subr.mxu0 0.0
    %3837 = vmatpush1.xpose.msra.mxu0 0.0
    %3838 = vmatprep.subr.mxu0 0.0
    %3839 = vmatpush1.xpose.msra.mxu0 0.0
    %3840 = vmatprep.subr.mxu0 0.0
    %3841 = vmatpush1.xpose.msra.mxu0 0.0
    %3842 = vmatprep.subr.mxu0 0.0
    %3843 = vmatpush1.xpose.msra.mxu0 0.0
    %3844 = vmatprep.subr.mxu0 0.0
    %3845 = vmatpush1.xpose.msra.mxu0 0.0
    %3846 = vmatprep.subr.mxu0 0.0
    %3847 = vmatpush1.xpose.msra.mxu0 0.0
    %3848 = vmatprep.subr.mxu0 0.0
    %3849 = vmatpush1.xpose.msra.mxu0 0.0
    %3850 = vmatprep.subr.mxu0 0.0
    %3851 = vmatpush1.xpose.msra.mxu0 0.0
    %3852 = vmatprep.subr.mxu0 0.0
    %3853 = vmatpush1.xpose.msra.mxu0 0.0
    %3854 = vmatprep.subr.mxu0 0.0
    %3855 = vmatpush1.xpose.msra.mxu0 0.0
    %3856 = vmatprep.subr.mxu0 0.0
    %3857 = vmatpush1.xpose.msra.mxu0 0.0
    %3858 = vmatprep.subr.mxu0 0.0
    %3859 = vmatpush1.xpose.msra.mxu0 0.0
    %3860 = vmatprep.subr.mxu0 0.0
    %3861 = vmatpush1.xpose.msra.mxu0 0.0
    %3862 = vmatprep.subr.mxu0 0.0
    %3863 = vmatpush1.xpose.msra.mxu0 0.0
    %3864 = vmatprep.subr.mxu0 0.0
    %3865 = vmatpush1.xpose.msra.mxu0 0.0
    %3866 = vmatprep.subr.mxu0 0.0
    %3867 = vmatpush1.xpose.msra.mxu0 0.0
    %3868 = vmatprep.subr.mxu0 0.0
    %3869 = vmatpush1.xpose.msra.mxu0 0.0
    %3870 = vmatprep.subr.mxu0 0.0
    %3871 = vmatpush1.xpose.msra.mxu0 0.0
    %3872 = vmatprep.subr.mxu0 0.0
    %3873 = vmatpush1.xpose.msra.mxu0 0.0
    %3874 = vmatprep.subr.mxu0 0.0
    %3875 = vmatpush1.xpose.msra.mxu0 0.0
    %3876 = vmatprep.subr.mxu0 0.0
    %3877 = vmatpush1.xpose.msra.mxu0 0.0
    %3878 = vmatprep.subr.mxu0 0.0
    %3879 = vmatpush1.xpose.msra.mxu0 0.0
    %3880 = vmatprep.subr.mxu0 0.0
    %3881 = vmatpush1.xpose.msra.mxu0 0.0
    %3882 = vmatprep.subr.mxu0 0.0
    %3883 = vmatpush1.xpose.msra.mxu0 0.0
    %3884 = vmatprep.subr.mxu0 0.0
    %3885 = vmatpush1.xpose.msra.mxu0 0.0
    %3886 = vmatprep.subr.mxu0 0.0
    %3887 = vmatpush1.xpose.msra.mxu0 0.0
    %3888 = vmatprep.subr.mxu0 0.0
    %3889 = vmatpush1.xpose.msra.mxu0 0.0
    %3890 = vmatprep.subr.mxu0 0.0
    %3891 = vmatpush1.xpose.msra.mxu0 0.0
    %3892 = vmatprep.subr.mxu0 0.0
    %3893 = vmatpush1.xpose.msra.mxu0 0.0
    %3894 = vmatprep.subr.mxu0 0.0
    %3895 = vmatpush1.xpose.msra.mxu0 0.0
    %3896 = vmatprep.subr.mxu0 0.0
    %3897 = vmatpush1.xpose.msra.mxu0 0.0
    %3898 = vmatprep.mubr.f32.mxu0 0.0
    %3899 = vmatmul.mubr.f32.gmra.mrb[0].mxu0 %v3830
    %v3900 = vpop.f32.mrb[0].mxu0
    %v3901 = vadd.f32 0.0, %v3900
    %v3902 = vpop.f32.mrb[0].mxu0
    %3903 = vdwg.mxu0
    %3905 = vrot.lane.b32.xlu0 %v3670, 96
    %v3906 = vpop.permute.xlu0 %3905
    %v3907 = vsel %vm332, %v3670, 0
    %v3909 = vsel %vm332, %v3906, 0
    %3911 = vmatprep.subr.mxu0 0.0
    %3912 = vmatpush1.xpose.msra.mxu0 %v3909
    %3913 = vmatprep.subr.mxu0 0.0
    %3914 = vmatpush1.xpose.msra.mxu0 0.0
    %3915 = vmatprep.subr.mxu0 0.0
    %3916 = vmatpush1.xpose.msra.mxu0 0.0
    %3917 = vmatprep.subr.mxu0 0.0
    %3918 = vmatpush1.xpose.msra.mxu0 0.0
    %3919 = vmatprep.subr.mxu0 0.0
    %3920 = vmatpush1.xpose.msra.mxu0 0.0
    %3921 = vmatprep.subr.mxu0 0.0
    %3922 = vmatpush1.xpose.msra.mxu0 0.0
    %3923 = vmatprep.subr.mxu0 0.0
    %3924 = vmatpush1.xpose.msra.mxu0 0.0
    %3925 = vmatprep.subr.mxu0 0.0
    %3926 = vmatpush1.xpose.msra.mxu0 0.0
    %3927 = vmatprep.subr.mxu0 0.0
    %3928 = vmatpush1.xpose.msra.mxu0 0.0
    %3929 = vmatprep.subr.mxu0 0.0
    %3930 = vmatpush1.xpose.msra.mxu0 0.0
    %3931 = vmatprep.subr.mxu0 0.0
    %3932 = vmatpush1.xpose.msra.mxu0 0.0
    %3933 = vmatprep.subr.mxu0 0.0
    %3934 = vmatpush1.xpose.msra.mxu0 0.0
    %3935 = vmatprep.subr.mxu0 0.0
    %3936 = vmatpush1.xpose.msra.mxu0 0.0
    %3937 = vmatprep.subr.mxu0 0.0
    %3938 = vmatpush1.xpose.msra.mxu0 0.0
    %3939 = vmatprep.subr.mxu0 0.0
    %3940 = vmatpush1.xpose.msra.mxu0 0.0
    %3941 = vmatprep.subr.mxu0 0.0
    %3942 = vmatpush1.xpose.msra.mxu0 0.0
    %3943 = vmatprep.subr.mxu0 0.0
    %3944 = vmatpush1.xpose.msra.mxu0 0.0
    %3945 = vmatprep.subr.mxu0 0.0
    %3946 = vmatpush1.xpose.msra.mxu0 0.0
    %3947 = vmatprep.subr.mxu0 0.0
    %3948 = vmatpush1.xpose.msra.mxu0 0.0
    %3949 = vmatprep.subr.mxu0 0.0
    %3950 = vmatpush1.xpose.msra.mxu0 0.0
    %3951 = vmatprep.subr.mxu0 0.0
    %3952 = vmatpush1.xpose.msra.mxu0 0.0
    %3953 = vmatprep.subr.mxu0 0.0
    %3954 = vmatpush1.xpose.msra.mxu0 0.0
    %3955 = vmatprep.subr.mxu0 0.0
    %3956 = vmatpush1.xpose.msra.mxu0 0.0
    %3957 = vmatprep.subr.mxu0 0.0
    %3958 = vmatpush1.xpose.msra.mxu0 0.0
    %3959 = vmatprep.subr.mxu0 0.0
    %3960 = vmatpush1.xpose.msra.mxu0 0.0
    %3961 = vmatprep.subr.mxu0 0.0
    %3962 = vmatpush1.xpose.msra.mxu0 0.0
    %3963 = vmatprep.subr.mxu0 0.0
    %3964 = vmatpush1.xpose.msra.mxu0 0.0
    %3965 = vmatprep.subr.mxu0 0.0
    %3966 = vmatpush1.xpose.msra.mxu0 0.0
    %3967 = vmatprep.subr.mxu0 0.0
    %3968 = vmatpush1.xpose.msra.mxu0 0.0
    %3969 = vmatprep.subr.mxu0 0.0
    %3970 = vmatpush1.xpose.msra.mxu0 0.0
    %3971 = vmatprep.subr.mxu0 0.0
    %3972 = vmatpush1.xpose.msra.mxu0 0.0
    %3973 = vmatprep.subr.mxu0 0.0
    %3974 = vmatpush1.xpose.msra.mxu0 0.0
    %3975 = vmatprep.mubr.f32.mxu0 0.0
    %3976 = vmatmul.mubr.f32.gmra.mrb[0].mxu0 %v3907
    %v3977 = vpop.f32.mrb[0].mxu0
    %v3978 = vadd.f32 0.0, %v3977
    %v3979 = vpop.f32.mrb[0].mxu0
    %3980 = vdwg.mxu0
    %v3981 = vmul.f32 %v3747, 0.35355338
    %v3982 = vmul.f32 %v3824, 0.35355338
    %v3983 = vmul.f32 %v3901, 0.35355338
    %v3984 = vmul.f32 %v3978, 0.35355338
    %v3985 = vadd.f32 %v3981, %v212
    %v3986 = vadd.f32 %v3982, %v216
    %v3987 = vadd.f32 %v3983, %v220
    %v3988 = vadd.f32 %v3984, %v224
    %v3989 = vsel %vm332, %v3985, -inf
    %3990 = vmax.xlane.f32.xlu0 %v3989
    %v3991 = vpop.xlane.xlu0 %3990
    %v3992 = vsel %vm332, %v3986, -inf
    %3993 = vmax.xlane.f32.xlu0 %v3992
    %v3994 = vpop.xlane.xlu0 %3993
    %v3995 = vsel %vm332, %v3987, -inf
    %3996 = vmax.xlane.f32.xlu0 %v3995
    %v3997 = vpop.xlane.xlu0 %3996
    %v3998 = vsel %vm332, %v3988, -inf
    %3999 = vmax.xlane.f32.xlu0 %v3998
    %v4000 = vpop.xlane.xlu0 %3999
    %v4001 = vsub.f32 %v3985, %v3991
    %v4002 = vsub.f32 %v3986, %v3994
    %v4003 = vsub.f32 %v3987, %v3997
    %v4004 = vsub.f32 %v3988, %v4000
    %v4005 = vmul.f32 %v4001, 1.442695
    %v4006 = vpow.pop %v4005
    %v4007 = vmul.f32 %v4002, 1.442695
    %v4008 = vpow.pop %v4007
    %v4009 = vmul.f32 %v4003, 1.442695
    %v4010 = vpow.pop %v4009
    %v4011 = vmul.f32 %v4004, 1.442695
    %v4012 = vpow.pop %v4011
    %v4013 = vsel %vm332, %v4006, 0.0
    %4014 = vadd.xlane.f32.xlu0 %v4013
    %v4015 = vpop.xlane.xlu0 %4014
    %v4016 = vsel %vm332, %v4008, 0.0
    %4017 = vadd.xlane.f32.xlu0 %v4016
    %v4018 = vpop.xlane.xlu0 %4017
    %v4019 = vsel %vm332, %v4010, 0.0
    %4020 = vadd.xlane.f32.xlu0 %v4019
    %v4021 = vpop.xlane.xlu0 %4020
    %v4022 = vsel %vm332, %v4012, 0.0
    %4023 = vadd.xlane.f32.xlu0 %v4022
    %v4024 = vpop.xlane.xlu0 %4023
    %v4025 = vrcp.pop %v4015
    %v4026 = vrcp.pop %v4018
    %v4027 = vrcp.pop %v4021
    %v4028 = vrcp.pop %v4024
    %v4029 = vmul.f32 %v4006, %v4025
    %v4030 = vmul.f32 %v4008, %v4026
    %v4031 = vmul.f32 %v4010, %v4027
    %v4032 = vmul.f32 %v4012, %v4028
    %4033 = vrot.lane.b32.xlu0 %v3655, 64
    %v4034 = vpop.permute.xlu0 %4033
    %v4037 = vsel %vm332, %v4029, 0
    %4039 = vmatprep.subr.mxu0 0.0
    %4040 = vmatpush1.msra.mxu0 %v4034
    %4041 = vmatprep.subr.mxu0 0.0
    %4042 = vmatpush1.msra.mxu0 0.0
    %4043 = vmatprep.subr.mxu0 0.0
    %4044 = vmatpush1.msra.mxu0 0.0
    %4045 = vmatprep.subr.mxu0 0.0
    %4046 = vmatpush1.msra.mxu0 0.0
    %4047 = vmatprep.subr.mxu0 0.0
    %4048 = vmatpush1.msra.mxu0 0.0
    %4049 = vmatprep.subr.mxu0 0.0
    %4050 = vmatpush1.msra.mxu0 0.0
    %4051 = vmatprep.subr.mxu0 0.0
    %4052 = vmatpush1.msra.mxu0 0.0
    %4053 = vmatprep.subr.mxu0 0.0
    %4054 = vmatpush1.msra.mxu0 0.0
    %4055 = vmatprep.subr.mxu0 0.0
    %4056 = vmatpush1.msra.mxu0 0.0
    %4057 = vmatprep.subr.mxu0 0.0
    %4058 = vmatpush1.msra.mxu0 0.0
    %4059 = vmatprep.subr.mxu0 0.0
    %4060 = vmatpush1.msra.mxu0 0.0
    %4061 = vmatprep.subr.mxu0 0.0
    %4062 = vmatpush1.msra.mxu0 0.0
    %4063 = vmatprep.subr.mxu0 0.0
    %4064 = vmatpush1.msra.mxu0 0.0
    %4065 = vmatprep.subr.mxu0 0.0
    %4066 = vmatpush1.msra.mxu0 0.0
    %4067 = vmatprep.subr.mxu0 0.0
    %4068 = vmatpush1.msra.mxu0 0.0
    %4069 = vmatprep.subr.mxu0 0.0
    %4070 = vmatpush1.msra.mxu0 0.0
    %4071 = vmatprep.subr.mxu0 0.0
    %4072 = vmatpush1.msra.mxu0 0.0
    %4073 = vmatprep.subr.mxu0 0.0
    %4074 = vmatpush1.msra.mxu0 0.0
    %4075 = vmatprep.subr.mxu0 0.0
    %4076 = vmatpush1.msra.mxu0 0.0
    %4077 = vmatprep.subr.mxu0 0.0
    %4078 = vmatpush1.msra.mxu0 0.0
    %4079 = vmatprep.subr.mxu0 0.0
    %4080 = vmatpush1.msra.mxu0 0.0
    %4081 = vmatprep.subr.mxu0 0.0
    %4082 = vmatpush1.msra.mxu0 0.0
    %4083 = vmatprep.subr.mxu0 0.0
    %4084 = vmatpush1.msra.mxu0 0.0
    %4085 = vmatprep.subr.mxu0 0.0
    %4086 = vmatpush1.msra.mxu0 0.0
    %4087 = vmatprep.subr.mxu0 0.0
    %4088 = vmatpush1.msra.mxu0 0.0
    %4089 = vmatprep.subr.mxu0 0.0
    %4090 = vmatpush1.msra.mxu0 0.0
    %4091 = vmatprep.subr.mxu0 0.0
    %4092 = vmatpush1.msra.mxu0 0.0
    %4093 = vmatprep.subr.mxu0 0.0
    %4094 = vmatpush1.msra.mxu0 0.0
    %4095 = vmatprep.subr.mxu0 0.0
    %4096 = vmatpush1.msra.mxu0 0.0
    %4097 = vmatprep.subr.mxu0 0.0
    %4098 = vmatpush1.msra.mxu0 0.0
    %4099 = vmatprep.subr.mxu0 0.0
    %4100 = vmatpush1.msra.mxu0 0.0
    %4101 = vmatprep.subr.mxu0 0.0
    %4102 = vmatpush1.msra.mxu0 0.0
    %4103 = vmatprep.mubr.f32.mxu0 0.0
    %4104 = vmatmul.mubr.f32.gmra.mrb[0].mxu0 %v4037
    %v4105 = vpop.f32.mrb[0].mxu0
    %v4106 = vadd.f32 0.0, %v4105
    %v4107 = vpop.f32.mrb[0].mxu0
    %4108 = vdwg.mxu0
    %4109 = vrot.lane.b32.xlu0 %v3660, 64
    %v4110 = vpop.permute.xlu0 %4109
    %v4113 = vsel %vm332, %v4030, 0
    %4115 = vmatprep.subr.mxu0 0.0
    %4116 = vmatpush1.msra.mxu0 %v4110
    %4117 = vmatprep.subr.mxu0 0.0
    %4118 = vmatpush1.msra.mxu0 0.0
    %4119 = vmatprep.subr.mxu0 0.0
    %4120 = vmatpush1.msra.mxu0 0.0
    %4121 = vmatprep.subr.mxu0 0.0
    %4122 = vmatpush1.msra.mxu0 0.0
    %4123 = vmatprep.subr.mxu0 0.0
    %4124 = vmatpush1.msra.mxu0 0.0
    %4125 = vmatprep.subr.mxu0 0.0
    %4126 = vmatpush1.msra.mxu0 0.0
    %4127 = vmatprep.subr.mxu0 0.0
    %4128 = vmatpush1.msra.mxu0 0.0
    %4129 = vmatprep.subr.mxu0 0.0
    %4130 = vmatpush1.msra.mxu0 0.0
    %4131 = vmatprep.subr.mxu0 0.0
    %4132 = vmatpush1.msra.mxu0 0.0
    %4133 = vmatprep.subr.mxu0 0.0
    %4134 = vmatpush1.msra.mxu0 0.0
    %4135 = vmatprep.subr.mxu0 0.0
    %4136 = vmatpush1.msra.mxu0 0.0
    %4137 = vmatprep.subr.mxu0 0.0
    %4138 = vmatpush1.msra.mxu0 0.0
    %4139 = vmatprep.subr.mxu0 0.0
    %4140 = vmatpush1.msra.mxu0 0.0
    %4141 = vmatprep.subr.mxu0 0.0
    %4142 = vmatpush1.msra.mxu0 0.0
    %4143 = vmatprep.subr.mxu0 0.0
    %4144 = vmatpush1.msra.mxu0 0.0
    %4145 = vmatprep.subr.mxu0 0.0
    %4146 = vmatpush1.msra.mxu0 0.0
    %4147 = vmatprep.subr.mxu0 0.0
    %4148 = vmatpush1.msra.mxu0 0.0
    %4149 = vmatprep.subr.mxu0 0.0
    %4150 = vmatpush1.msra.mxu0 0.0
    %4151 = vmatprep.subr.mxu0 0.0
    %4152 = vmatpush1.msra.mxu0 0.0
    %4153 = vmatprep.subr.mxu0 0.0
    %4154 = vmatpush1.msra.mxu0 0.0
    %4155 = vmatprep.subr.mxu0 0.0
    %4156 = vmatpush1.msra.mxu0 0.0
    %4157 = vmatprep.subr.mxu0 0.0
    %4158 = vmatpush1.msra.mxu0 0.0
    %4159 = vmatprep.subr.mxu0 0.0
    %4160 = vmatpush1.msra.mxu0 0.0
    %4161 = vmatprep.subr.mxu0 0.0
    %4162 = vmatpush1.msra.mxu0 0.0
    %4163 = vmatprep.subr.mxu0 0.0
    %4164 = vmatpush1.msra.mxu0 0.0
    %4165 = vmatprep.subr.mxu0 0.0
    %4166 = vmatpush1.msra.mxu0 0.0
    %4167 = vmatprep.subr.mxu0 0.0
    %4168 = vmatpush1.msra.mxu0 0.0
    %4169 = vmatprep.subr.mxu0 0.0
    %4170 = vmatpush1.msra.mxu0 0.0
    %4171 = vmatprep.subr.mxu0 0.0
    %4172 = vmatpush1.msra.mxu0 0.0
    %4173 = vmatprep.subr.mxu0 0.0
    %4174 = vmatpush1.msra.mxu0 0.0
    %4175 = vmatprep.subr.mxu0 0.0
    %4176 = vmatpush1.msra.mxu0 0.0
    %4177 = vmatprep.subr.mxu0 0.0
    %4178 = vmatpush1.msra.mxu0 0.0
    %4179 = vmatprep.mubr.f32.mxu0 0.0
    %4180 = vmatmul.mubr.f32.gmra.mrb[0].mxu0 %v4113
    %v4181 = vpop.f32.mrb[0].mxu0
    %v4182 = vadd.f32 0.0, %v4181
    %v4183 = vpop.f32.mrb[0].mxu0
    %4184 = vdwg.mxu0
    %4185 = vrot.lane.b32.xlu0 %v3665, 64
    %v4186 = vpop.permute.xlu0 %4185
    %v4189 = vsel %vm332, %v4031, 0
    %4191 = vmatprep.subr.mxu0 0.0
    %4192 = vmatpush1.msra.mxu0 %v4186
    %4193 = vmatprep.subr.mxu0 0.0
    %4194 = vmatpush1.msra.mxu0 0.0
    %4195 = vmatprep.subr.mxu0 0.0
    %4196 = vmatpush1.msra.mxu0 0.0
    %4197 = vmatprep.subr.mxu0 0.0
    %4198 = vmatpush1.msra.mxu0 0.0
    %4199 = vmatprep.subr.mxu0 0.0
    %4200 = vmatpush1.msra.mxu0 0.0
    %4201 = vmatprep.subr.mxu0 0.0
    %4202 = vmatpush1.msra.mxu0 0.0
    %4203 = vmatprep.subr.mxu0 0.0
    %4204 = vmatpush1.msra.mxu0 0.0
    %4205 = vmatprep.subr.mxu0 0.0
    %4206 = vmatpush1.msra.mxu0 0.0
    %4207 = vmatprep.subr.mxu0 0.0
    %4208 = vmatpush1.msra.mxu0 0.0
    %4209 = vmatprep.subr.mxu0 0.0
    %4210 = vmatpush1.msra.mxu0 0.0
    %4211 = vmatprep.subr.mxu0 0.0
    %4212 = vmatpush1.msra.mxu0 0.0
    %4213 = vmatprep.subr.mxu0 0.0
    %4214 = vmatpush1.msra.mxu0 0.0
    %4215 = vmatprep.subr.mxu0 0.0
    %4216 = vmatpush1.msra.mxu0 0.0
    %4217 = vmatprep.subr.mxu0 0.0
    %4218 = vmatpush1.msra.mxu0 0.0
    %4219 = vmatprep.subr.mxu0 0.0
    %4220 = vmatpush1.msra.mxu0 0.0
    %4221 = vmatprep.subr.mxu0 0.0
    %4222 = vmatpush1.msra.mxu0 0.0
    %4223 = vmatprep.subr.mxu0 0.0
    %4224 = vmatpush1.msra.mxu0 0.0
    %4225 = vmatprep.subr.mxu0 0.0
    %4226 = vmatpush1.msra.mxu0 0.0
    %4227 = vmatprep.subr.mxu0 0.0
    %4228 = vmatpush1.msra.mxu0 0.0
    %4229 = vmatprep.subr.mxu0 0.0
    %4230 = vmatpush1.msra.mxu0 0.0
    %4231 = vmatprep.subr.mxu0 0.0
    %4232 = vmatpush1.msra.mxu0 0.0
    %4233 = vmatprep.subr.mxu0 0.0
    %4234 = vmatpush1.msra.mxu0 0.0
    %4235 = vmatprep.subr.mxu0 0.0
    %4236 = vmatpush1.msra.mxu0 0.0
    %4237 = vmatprep.subr.mxu0 0.0
    %4238 = vmatpush1.msra.mxu0 0.0
    %4239 = vmatprep.subr.mxu0 0.0
    %4240 = vmatpush1.msra.mxu0 0.0
    %4241 = vmatprep.subr.mxu0 0.0
    %4242 = vmatpush1.msra.mxu0 0.0
    %4243 = vmatprep.subr.mxu0 0.0
    %4244 = vmatpush1.msra.mxu0 0.0
    %4245 = vmatprep.subr.mxu0 0.0
    %4246 = vmatpush1.msra.mxu0 0.0
    %4247 = vmatprep.subr.mxu0 0.0
    %4248 = vmatpush1.msra.mxu0 0.0
    %4249 = vmatprep.subr.mxu0 0.0
    %4250 = vmatpush1.msra.mxu0 0.0
    %4251 = vmatprep.subr.mxu0 0.0
    %4252 = vmatpush1.msra.mxu0 0.0
    %4253 = vmatprep.subr.mxu0 0.0
    %4254 = vmatpush1.msra.mxu0 0.0
    %4255 = vmatprep.mubr.f32.mxu0 0.0
    %4256 = vmatmul.mubr.f32.gmra.mrb[0].mxu0 %v4189
    %v4257 = vpop.f32.mrb[0].mxu0
    %v4258 = vadd.f32 0.0, %v4257
    %v4259 = vpop.f32.mrb[0].mxu0
    %4260 = vdwg.mxu0
    %4261 = vrot.lane.b32.xlu0 %v3670, 64
    %v4262 = vpop.permute.xlu0 %4261
    %v4265 = vsel %vm332, %v4032, 0
    %4267 = vmatprep.subr.mxu0 0.0
    %4268 = vmatpush1.msra.mxu0 %v4262
    %4269 = vmatprep.subr.mxu0 0.0
    %4270 = vmatpush1.msra.mxu0 0.0
    %4271 = vmatprep.subr.mxu0 0.0
    %4272 = vmatpush1.msra.mxu0 0.0
    %4273 = vmatprep.subr.mxu0 0.0
    %4274 = vmatpush1.msra.mxu0 0.0
    %4275 = vmatprep.subr.mxu0 0.0
    %4276 = vmatpush1.msra.mxu0 0.0
    %4277 = vmatprep.subr.mxu0 0.0
    %4278 = vmatpush1.msra.mxu0 0.0
    %4279 = vmatprep.subr.mxu0 0.0
    %4280 = vmatpush1.msra.mxu0 0.0
    %4281 = vmatprep.subr.mxu0 0.0
    %4282 = vmatpush1.msra.mxu0 0.0
    %4283 = vmatprep.subr.mxu0 0.0
    %4284 = vmatpush1.msra.mxu0 0.0
    %4285 = vmatprep.subr.mxu0 0.0
    %4286 = vmatpush1.msra.mxu0 0.0
    %4287 = vmatprep.subr.mxu0 0.0
    %4288 = vmatpush1.msra.mxu0 0.0
    %4289 = vmatprep.subr.mxu0 0.0
    %4290 = vmatpush1.msra.mxu0 0.0
    %4291 = vmatprep.subr.mxu0 0.0
    %4292 = vmatpush1.msra.mxu0 0.0
    %4293 = vmatprep.subr.mxu0 0.0
    %4294 = vmatpush1.msra.mxu0 0.0
    %4295 = vmatprep.subr.mxu0 0.0
    %4296 = vmatpush1.msra.mxu0 0.0
    %4297 = vmatprep.subr.mxu0 0.0
    %4298 = vmatpush1.msra.mxu0 0.0
    %4299 = vmatprep.subr.mxu0 0.0
    %4300 = vmatpush1.msra.mxu0 0.0
    %4301 = vmatprep.subr.mxu0 0.0
    %4302 = vmatpush1.msra.mxu0 0.0
    %4303 = vmatprep.subr.mxu0 0.0
    %4304 = vmatpush1.msra.mxu0 0.0
    %4305 = vmatprep.subr.mxu0 0.0
    %4306 = vmatpush1.msra.mxu0 0.0
    %4307 = vmatprep.subr.mxu0 0.0
    %4308 = vmatpush1.msra.mxu0 0.0
    %4309 = vmatprep.subr.mxu0 0.0
    %4310 = vmatpush1.msra.mxu0 0.0
    %4311 = vmatprep.subr.mxu0 0.0
    %4312 = vmatpush1.msra.mxu0 0.0
    %4313 = vmatprep.subr.mxu0 0.0
    %4314 = vmatpush1.msra.mxu0 0.0
    %4315 = vmatprep.subr.mxu0 0.0
    %4316 = vmatpush1.msra.mxu0 0.0
    %4317 = vmatprep.subr.mxu0 0.0
    %4318 = vmatpush1.msra.mxu0 0.0
    %4319 = vmatprep.subr.mxu0 0.0
    %4320 = vmatpush1.msra.mxu0 0.0
    %4321 = vmatprep.subr.mxu0 0.0
    %4322 = vmatpush1.msra.mxu0 0.0
    %4323 = vmatprep.subr.mxu0 0.0
    %4324 = vmatpush1.msra.mxu0 0.0
    %4325 = vmatprep.subr.mxu0 0.0
    %4326 = vmatpush1.msra.mxu0 0.0
    %4327 = vmatprep.subr.mxu0 0.0
    %4328 = vmatpush1.msra.mxu0 0.0
    %4329 = vmatprep.subr.mxu0 0.0
    %4330 = vmatpush1.msra.mxu0 0.0
    %4331 = vmatprep.mubr.f32.mxu0 0.0
    %4332 = vmatmul.mubr.f32.gmra.mrb[0].mxu0 %v4265
    %v4333 = vpop.f32.mrb[0].mxu0
    %v4334 = vadd.f32 0.0, %v4333
    %v4335 = vpop.f32.mrb[0].mxu0
    %4336 = vdwg.mxu0
    %4337 = vrot.lane.b32.xlu0 %v3655, 120
    %v4338 = vpop.permute.xlu0 %4337
    %4339 = vrot.lane.b32.xlu0 %v3655, 88
    %v4340 = vpop.permute.xlu0 %4339
    %v4341 = vsel %vm332, %v4338, 0
    %v4343 = vsel %vm332, %v4340, 0
    %4345 = vmatprep.subr.mxu0 0.0
    %4346 = vmatpush1.xpose.msra.mxu0 %v4343
    %4347 = vmatprep.subr.mxu0 0.0
    %4348 = vmatpush1.xpose.msra.mxu0 0.0
    %4349 = vmatprep.subr.mxu0 0.0
    %4350 = vmatpush1.xpose.msra.mxu0 0.0
    %4351 = vmatprep.subr.mxu0 0.0
    %4352 = vmatpush1.xpose.msra.mxu0 0.0
    %4353 = vmatprep.subr.mxu0 0.0
    %4354 = vmatpush1.xpose.msra.mxu0 0.0
    %4355 = vmatprep.subr.mxu0 0.0
    %4356 = vmatpush1.xpose.msra.mxu0 0.0
    %4357 = vmatprep.subr.mxu0 0.0
    %4358 = vmatpush1.xpose.msra.mxu0 0.0
    %4359 = vmatprep.subr.mxu0 0.0
    %4360 = vmatpush1.xpose.msra.mxu0 0.0
    %4361 = vmatprep.subr.mxu0 0.0
    %4362 = vmatpush1.xpose.msra.mxu0 0.0
    %4363 = vmatprep.subr.mxu0 0.0
    %4364 = vmatpush1.xpose.msra.mxu0 0.0
    %4365 = vmatprep.subr.mxu0 0.0
    %4366 = vmatpush1.xpose.msra.mxu0 0.0
    %4367 = vmatprep.subr.mxu0 0.0
    %4368 = vmatpush1.xpose.msra.mxu0 0.0
    %4369 = vmatprep.subr.mxu0 0.0
    %4370 = vmatpush1.xpose.msra.mxu0 0.0
    %4371 = vmatprep.subr.mxu0 0.0
    %4372 = vmatpush1.xpose.msra.mxu0 0.0
    %4373 = vmatprep.subr.mxu0 0.0
    %4374 = vmatpush1.xpose.msra.mxu0 0.0
    %4375 = vmatprep.subr.mxu0 0.0
    %4376 = vmatpush1.xpose.msra.mxu0 0.0
    %4377 = vmatprep.subr.mxu0 0.0
    %4378 = vmatpush1.xpose.msra.mxu0 0.0
    %4379 = vmatprep.subr.mxu0 0.0
    %4380 = vmatpush1.xpose.msra.mxu0 0.0
    %4381 = vmatprep.subr.mxu0 0.0
    %4382 = vmatpush1.xpose.msra.mxu0 0.0
    %4383 = vmatprep.subr.mxu0 0.0
    %4384 = vmatpush1.xpose.msra.mxu0 0.0
    %4385 = vmatprep.subr.mxu0 0.0
    %4386 = vmatpush1.xpose.msra.mxu0 0.0
    %4387 = vmatprep.subr.mxu0 0.0
    %4388 = vmatpush1.xpose.msra.mxu0 0.0
    %4389 = vmatprep.subr.mxu0 0.0
    %4390 = vmatpush1.xpose.msra.mxu0 0.0
    %4391 = vmatprep.subr.mxu0 0.0
    %4392 = vmatpush1.xpose.msra.mxu0 0.0
    %4393 = vmatprep.subr.mxu0 0.0
    %4394 = vmatpush1.xpose.msra.mxu0 0.0
    %4395 = vmatprep.subr.mxu0 0.0
    %4396 = vmatpush1.xpose.msra.mxu0 0.0
    %4397 = vmatprep.subr.mxu0 0.0
    %4398 = vmatpush1.xpose.msra.mxu0 0.0
    %4399 = vmatprep.subr.mxu0 0.0
    %4400 = vmatpush1.xpose.msra.mxu0 0.0
    %4401 = vmatprep.subr.mxu0 0.0
    %4402 = vmatpush1.xpose.msra.mxu0 0.0
    %4403 = vmatprep.subr.mxu0 0.0
    %4404 = vmatpush1.xpose.msra.mxu0 0.0
    %4405 = vmatprep.subr.mxu0 0.0
    %4406 = vmatpush1.xpose.msra.mxu0 0.0
    %4407 = vmatprep.subr.mxu0 0.0
    %4408 = vmatpush1.xpose.msra.mxu0 0.0
    %4409 = vmatprep.mubr.f32.mxu0 0.0
    %4410 = vmatmul.mubr.f32.gmra.mrb[0].mxu0 %v4341
    %v4411 = vpop.f32.mrb[0].mxu0
    %v4412 = vadd.f32 0.0, %v4411
    %v4413 = vpop.f32.mrb[0].mxu0
    %4414 = vdwg.mxu0
    %4415 = vrot.lane.b32.xlu0 %v3660, 120
    %v4416 = vpop.permute.xlu0 %4415
    %4417 = vrot.lane.b32.xlu0 %v3660, 88
    %v4418 = vpop.permute.xlu0 %4417
    %v4419 = vsel %vm332, %v4416, 0
    %v4421 = vsel %vm332, %v4418, 0
    %4423 = vmatprep.subr.mxu0 0.0
    %4424 = vmatpush1.xpose.msra.mxu0 %v4421
    %4425 = vmatprep.subr.mxu0 0.0
    %4426 = vmatpush1.xpose.msra.mxu0 0.0
    %4427 = vmatprep.subr.mxu0 0.0
    %4428 = vmatpush1.xpose.msra.mxu0 0.0
    %4429 = vmatprep.subr.mxu0 0.0
    %4430 = vmatpush1.xpose.msra.mxu0 0.0
    %4431 = vmatprep.subr.mxu0 0.0
    %4432 = vmatpush1.xpose.msra.mxu0 0.0
    %4433 = vmatprep.subr.mxu0 0.0
    %4434 = vmatpush1.xpose.msra.mxu0 0.0
    %4435 = vmatprep.subr.mxu0 0.0
    %4436 = vmatpush1.xpose.msra.mxu0 0.0
    %4437 = vmatprep.subr.mxu0 0.0
    %4438 = vmatpush1.xpose.msra.mxu0 0.0
    %4439 = vmatprep.subr.mxu0 0.0
    %4440 = vmatpush1.xpose.msra.mxu0 0.0
    %4441 = vmatprep.subr.mxu0 0.0
    %4442 = vmatpush1.xpose.msra.mxu0 0.0
    %4443 = vmatprep.subr.mxu0 0.0
    %4444 = vmatpush1.xpose.msra.mxu0 0.0
    %4445 = vmatprep.subr.mxu0 0.0
    %4446 = vmatpush1.xpose.msra.mxu0 0.0
    %4447 = vmatprep.subr.mxu0 0.0
    %4448 = vmatpush1.xpose.msra.mxu0 0.0
    %4449 = vmatprep.subr.mxu0 0.0
    %4450 = vmatpush1.xpose.msra.mxu0 0.0
    %4451 = vmatprep.subr.mxu0 0.0
    %4452 = vmatpush1.xpose.msra.mxu0 0.0
    %4453 = vmatprep.subr.mxu0 0.0
    %4454 = vmatpush1.xpose.msra.mxu0 0.0
    %4455 = vmatprep.subr.mxu0 0.0
    %4456 = vmatpush1.xpose.msra.mxu0 0.0
    %4457 = vmatprep.subr.mxu0 0.0
    %4458 = vmatpush1.xpose.msra.mxu0 0.0
    %4459 = vmatprep.subr.mxu0 0.0
    %4460 = vmatpush1.xpose.msra.mxu0 0.0
    %4461 = vmatprep.subr.mxu0 0.0
    %4462 = vmatpush1.xpose.msra.mxu0 0.0
    %4463 = vmatprep.subr.mxu0 0.0
    %4464 = vmatpush1.xpose.msra.mxu0 0.0
    %4465 = vmatprep.subr.mxu0 0.0
    %4466 = vmatpush1.xpose.msra.mxu0 0.0
    %4467 = vmatprep.subr.mxu0 0.0
    %4468 = vmatpush1.xpose.msra.mxu0 0.0
    %4469 = vmatprep.subr.mxu0 0.0
    %4470 = vmatpush1.xpose.msra.mxu0 0.0
    %4471 = vmatprep.subr.mxu0 0.0
    %4472 = vmatpush1.xpose.msra.mxu0 0.0
    %4473 = vmatprep.subr.mxu0 0.0
    %4474 = vmatpush1.xpose.msra.mxu0 0.0
    %4475 = vmatprep.subr.mxu0 0.0
    %4476 = vmatpush1.xpose.msra.mxu0 0.0
    %4477 = vmatprep.subr.mxu0 0.0
    %4478 = vmatpush1.xpose.msra.mxu0 0.0
    %4479 = vmatprep.subr.mxu0 0.0
    %4480 = vmatpush1.xpose.msra.mxu0 0.0
    %4481 = vmatprep.subr.mxu0 0.0
    %4482 = vmatpush1.xpose.msra.mxu0 0.0
    %4483 = vmatprep.subr.mxu0 0.0
    %4484 = vmatpush1.xpose.msra.mxu0 0.0
    %4485 = vmatprep.subr.mxu0 0.0
    %4486 = vmatpush1.xpose.msra.mxu0 0.0
    %4487 = vmatprep.mubr.f32.mxu0 0.0
    %4488 = vmatmul.mubr.f32.gmra.mrb[0].mxu0 %v4419
    %v4489 = vpop.f32.mrb[0].mxu0
    %v4490 = vadd.f32 0.0, %v4489
    %v4491 = vpop.f32.mrb[0].mxu0
    %4492 = vdwg.mxu0
    %4493 = vrot.lane.b32.xlu0 %v3665, 120
    %v4494 = vpop.permute.xlu0 %4493
    %4495 = vrot.lane.b32.xlu0 %v3665, 88
    %v4496 = vpop.permute.xlu0 %4495
    %v4497 = vsel %vm332, %v4494, 0
    %v4499 = vsel %vm332, %v4496, 0
    %4501 = vmatprep.subr.mxu0 0.0
    %4502 = vmatpush1.xpose.msra.mxu0 %v4499
    %4503 = vmatprep.subr.mxu0 0.0
    %4504 = vmatpush1.xpose.msra.mxu0 0.0
    %4505 = vmatprep.subr.mxu0 0.0
    %4506 = vmatpush1.xpose.msra.mxu0 0.0
    %4507 = vmatprep.subr.mxu0 0.0
    %4508 = vmatpush1.xpose.msra.mxu0 0.0
    %4509 = vmatprep.subr.mxu0 0.0
    %4510 = vmatpush1.xpose.msra.mxu0 0.0
    %4511 = vmatprep.subr.mxu0 0.0
    %4512 = vmatpush1.xpose.msra.mxu0 0.0
    %4513 = vmatprep.subr.mxu0 0.0
    %4514 = vmatpush1.xpose.msra.mxu0 0.0
    %4515 = vmatprep.subr.mxu0 0.0
    %4516 = vmatpush1.xpose.msra.mxu0 0.0
    %4517 = vmatprep.subr.mxu0 0.0
    %4518 = vmatpush1.xpose.msra.mxu0 0.0
    %4519 = vmatprep.subr.mxu0 0.0
    %4520 = vmatpush1.xpose.msra.mxu0 0.0
    %4521 = vmatprep.subr.mxu0 0.0
    %4522 = vmatpush1.xpose.msra.mxu0 0.0
    %4523 = vmatprep.subr.mxu0 0.0
    %4524 = vmatpush1.xpose.msra.mxu0 0.0
    %4525 = vmatprep.subr.mxu0 0.0
    %4526 = vmatpush1.xpose.msra.mxu0 0.0
    %4527 = vmatprep.subr.mxu0 0.0
    %4528 = vmatpush1.xpose.msra.mxu0 0.0
    %4529 = vmatprep.subr.mxu0 0.0
    %4530 = vmatpush1.xpose.msra.mxu0 0.0
    %4531 = vmatprep.subr.mxu0 0.0
    %4532 = vmatpush1.xpose.msra.mxu0 0.0
    %4533 = vmatprep.subr.mxu0 0.0
    %4534 = vmatpush1.xpose.msra.mxu0 0.0
    %4535 = vmatprep.subr.mxu0 0.0
    %4536 = vmatpush1.xpose.msra.mxu0 0.0
    %4537 = vmatprep.subr.mxu0 0.0
    %4538 = vmatpush1.xpose.msra.mxu0 0.0
    %4539 = vmatprep.subr.mxu0 0.0
    %4540 = vmatpush1.xpose.msra.mxu0 0.0
    %4541 = vmatprep.subr.mxu0 0.0
    %4542 = vmatpush1.xpose.msra.mxu0 0.0
    %4543 = vmatprep.subr.mxu0 0.0
    %4544 = vmatpush1.xpose.msra.mxu0 0.0
    %4545 = vmatprep.subr.mxu0 0.0
    %4546 = vmatpush1.xpose.msra.mxu0 0.0
    %4547 = vmatprep.subr.mxu0 0.0
    %4548 = vmatpush1.xpose.msra.mxu0 0.0
    %4549 = vmatprep.subr.mxu0 0.0
    %4550 = vmatpush1.xpose.msra.mxu0 0.0
    %4551 = vmatprep.subr.mxu0 0.0
    %4552 = vmatpush1.xpose.msra.mxu0 0.0
    %4553 = vmatprep.subr.mxu0 0.0
    %4554 = vmatpush1.xpose.msra.mxu0 0.0
    %4555 = vmatprep.subr.mxu0 0.0
    %4556 = vmatpush1.xpose.msra.mxu0 0.0
    %4557 = vmatprep.subr.mxu0 0.0
    %4558 = vmatpush1.xpose.msra.mxu0 0.0
    %4559 = vmatprep.subr.mxu0 0.0
    %4560 = vmatpush1.xpose.msra.mxu0 0.0
    %4561 = vmatprep.subr.mxu0 0.0
    %4562 = vmatpush1.xpose.msra.mxu0 0.0
    %4563 = vmatprep.subr.mxu0 0.0
    %4564 = vmatpush1.xpose.msra.mxu0 0.0
    %4565 = vmatprep.mubr.f32.mxu0 0.0
    %4566 = vmatmul.mubr.f32.gmra.mrb[0].mxu0 %v4497
    %v4567 = vpop.f32.mrb[0].mxu0
    %v4568 = vadd.f32 0.0, %v4567
    %v4569 = vpop.f32.mrb[0].mxu0
    %4570 = vdwg.mxu0
    %4571 = vrot.lane.b32.xlu0 %v3670, 120
    %v4572 = vpop.permute.xlu0 %4571
    %4573 = vrot.lane.b32.xlu0 %v3670, 88
    %v4574 = vpop.permute.xlu0 %4573
    %v4575 = vsel %vm332, %v4572, 0
    %v4577 = vsel %vm332, %v4574, 0
    %4579 = vmatprep.subr.mxu0 0.0
    %4580 = vmatpush1.xpose.msra.mxu0 %v4577
    %4581 = vmatprep.subr.mxu0 0.0
    %4582 = vmatpush1.xpose.msra.mxu0 0.0
    %4583 = vmatprep.subr.mxu0 0.0
    %4584 = vmatpush1.xpose.msra.mxu0 0.0
    %4585 = vmatprep.subr.mxu0 0.0
    %4586 = vmatpush1.xpose.msra.mxu0 0.0
    %4587 = vmatprep.subr.mxu0 0.0
    %4588 = vmatpush1.xpose.msra.mxu0 0.0
    %4589 = vmatprep.subr.mxu0 0.0
    %4590 = vmatpush1.xpose.msra.mxu0 0.0
    %4591 = vmatprep.subr.mxu0 0.0
    %4592 = vmatpush1.xpose.msra.mxu0 0.0
    %4593 = vmatprep.subr.mxu0 0.0
    %4594 = vmatpush1.xpose.msra.mxu0 0.0
    %4595 = vmatprep.subr.mxu0 0.0
    %4596 = vmatpush1.xpose.msra.mxu0 0.0
    %4597 = vmatprep.subr.mxu0 0.0
    %4598 = vmatpush1.xpose.msra.mxu0 0.0
    %4599 = vmatprep.subr.mxu0 0.0
    %4600 = vmatpush1.xpose.msra.mxu0 0.0
    %4601 = vmatprep.subr.mxu0 0.0
    %4602 = vmatpush1.xpose.msra.mxu0 0.0
    %4603 = vmatprep.subr.mxu0 0.0
    %4604 = vmatpush1.xpose.msra.mxu0 0.0
    %4605 = vmatprep.subr.mxu0 0.0
    %4606 = vmatpush1.xpose.msra.mxu0 0.0
    %4607 = vmatprep.subr.mxu0 0.0
    %4608 = vmatpush1.xpose.msra.mxu0 0.0
    %4609 = vmatprep.subr.mxu0 0.0
    %4610 = vmatpush1.xpose.msra.mxu0 0.0
    %4611 = vmatprep.subr.mxu0 0.0
    %4612 = vmatpush1.xpose.msra.mxu0 0.0
    %4613 = vmatprep.subr.mxu0 0.0
    %4614 = vmatpush1.xpose.msra.mxu0 0.0
    %4615 = vmatprep.subr.mxu0 0.0
    %4616 = vmatpush1.xpose.msra.mxu0 0.0
    %4617 = vmatprep.subr.mxu0 0.0
    %4618 = vmatpush1.xpose.msra.mxu0 0.0
    %4619 = vmatprep.subr.mxu0 0.0
    %4620 = vmatpush1.xpose.msra.mxu0 0.0
    %4621 = vmatprep.subr.mxu0 0.0
    %4622 = vmatpush1.xpose.msra.mxu0 0.0
    %4623 = vmatprep.subr.mxu0 0.0
    %4624 = vmatpush1.xpose.msra.mxu0 0.0
    %4625 = vmatprep.subr.mxu0 0.0
    %4626 = vmatpush1.xpose.msra.mxu0 0.0
    %4627 = vmatprep.subr.mxu0 0.0
    %4628 = vmatpush1.xpose.msra.mxu0 0.0
    %4629 = vmatprep.subr.mxu0 0.0
    %4630 = vmatpush1.xpose.msra.mxu0 0.0
    %4631 = vmatprep.subr.mxu0 0.0
    %4632 = vmatpush1.xpose.msra.mxu0 0.0
    %4633 = vmatprep.subr.mxu0 0.0
    %4634 = vmatpush1.xpose.msra.mxu0 0.0
    %4635 = vmatprep.subr.mxu0 0.0
    %4636 = vmatpush1.xpose.msra.mxu0 0.0
    %4637 = vmatprep.subr.mxu0 0.0
    %4638 = vmatpush1.xpose.msra.mxu0 0.0
    %4639 = vmatprep.subr.mxu0 0.0
    %4640 = vmatpush1.xpose.msra.mxu0 0.0
    %4641 = vmatprep.subr.mxu0 0.0
    %4642 = vmatpush1.xpose.msra.mxu0 0.0
    %4643 = vmatprep.mubr.f32.mxu0 0.0
    %4644 = vmatmul.mubr.f32.gmra.mrb[0].mxu0 %v4575
    %v4645 = vpop.f32.mrb[0].mxu0
    %v4646 = vadd.f32 0.0, %v4645
    %v4647 = vpop.f32.mrb[0].mxu0
    %4648 = vdwg.mxu0
    %v4649 = vmul.f32 %v4412, 0.35355338
    %v4650 = vmul.f32 %v4490, 0.35355338
    %v4651 = vmul.f32 %v4568, 0.35355338
    %v4652 = vmul.f32 %v4646, 0.35355338
    %v4653 = vadd.f32 %v4649, %v212
    %v4654 = vadd.f32 %v4650, %v216
    %v4655 = vadd.f32 %v4651, %v220
    %v4656 = vadd.f32 %v4652, %v224
    %v4657 = vsel %vm332, %v4653, -inf
    %4658 = vmax.xlane.f32.xlu0 %v4657
    %v4659 = vpop.xlane.xlu0 %4658
    %v4660 = vsel %vm332, %v4654, -inf
    %4661 = vmax.xlane.f32.xlu0 %v4660
    %v4662 = vpop.xlane.xlu0 %4661
    %v4663 = vsel %vm332, %v4655, -inf
    %4664 = vmax.xlane.f32.xlu0 %v4663
    %v4665 = vpop.xlane.xlu0 %4664
    %v4666 = vsel %vm332, %v4656, -inf
    %4667 = vmax.xlane.f32.xlu0 %v4666
    %v4668 = vpop.xlane.xlu0 %4667
    %v4669 = vsub.f32 %v4653, %v4659
    %v4670 = vsub.f32 %v4654, %v4662
    %v4671 = vsub.f32 %v4655, %v4665
    %v4672 = vsub.f32 %v4656, %v4668
    %v4673 = vmul.f32 %v4669, 1.442695
    %v4674 = vpow.pop %v4673
    %v4675 = vmul.f32 %v4670, 1.442695
    %v4676 = vpow.pop %v4675
    %v4677 = vmul.f32 %v4671, 1.442695
    %v4678 = vpow.pop %v4677
    %v4679 = vmul.f32 %v4672, 1.442695
    %v4680 = vpow.pop %v4679
    %v4681 = vsel %vm332, %v4674, 0.0
    %4682 = vadd.xlane.f32.xlu0 %v4681
    %v4683 = vpop.xlane.xlu0 %4682
    %v4684 = vsel %vm332, %v4676, 0.0
    %4685 = vadd.xlane.f32.xlu0 %v4684
    %v4686 = vpop.xlane.xlu0 %4685
    %v4687 = vsel %vm332, %v4678, 0.0
    %4688 = vadd.xlane.f32.xlu0 %v4687
    %v4689 = vpop.xlane.xlu0 %4688
    %v4690 = vsel %vm332, %v4680, 0.0
    %4691 = vadd.xlane.f32.xlu0 %v4690
    %v4692 = vpop.xlane.xlu0 %4691
    %v4693 = vrcp.pop %v4683
    %v4694 = vrcp.pop %v4686
    %v4695 = vrcp.pop %v4689
    %v4696 = vrcp.pop %v4692
    %v4697 = vmul.f32 %v4674, %v4693
    %v4698 = vmul.f32 %v4676, %v4694
    %v4699 = vmul.f32 %v4678, %v4695
    %v4700 = vmul.f32 %v4680, %v4696
    %4701 = vrot.lane.b32.xlu0 %v3655, 56
    %v4702 = vpop.permute.xlu0 %4701
    %v4705 = vsel %vm332, %v4697, 0
    %4707 = vmatprep.subr.mxu0 0.0
    %4708 = vmatpush1.msra.mxu0 %v4702
    %4709 = vmatprep.subr.mxu0 0.0
    %4710 = vmatpush1.msra.mxu0 0.0
    %4711 = vmatprep.subr.mxu0 0.0
    %4712 = vmatpush1.msra.mxu0 0.0
    %4713 = vmatprep.subr.mxu0 0.0
    %4714 = vmatpush1.msra.mxu0 0.0
    %4715 = vmatprep.subr.mxu0 0.0
    %4716 = vmatpush1.msra.mxu0 0.0
    %4717 = vmatprep.subr.mxu0 0.0
    %4718 = vmatpush1.msra.mxu0 0.0
    %4719 = vmatprep.subr.mxu0 0.0
    %4720 = vmatpush1.msra.mxu0 0.0
    %4721 = vmatprep.subr.mxu0 0.0
    %4722 = vmatpush1.msra.mxu0 0.0
    %4723 = vmatprep.subr.mxu0 0.0
    %4724 = vmatpush1.msra.mxu0 0.0
    %4725 = vmatprep.subr.mxu0 0.0
    %4726 = vmatpush1.msra.mxu0 0.0
    %4727 = vmatprep.subr.mxu0 0.0
    %4728 = vmatpush1.msra.mxu0 0.0
    %4729 = vmatprep.subr.mxu0 0.0
    %4730 = vmatpush1.msra.mxu0 0.0
    %4731 = vmatprep.subr.mxu0 0.0
    %4732 = vmatpush1.msra.mxu0 0.0
    %4733 = vmatprep.subr.mxu0 0.0
    %4734 = vmatpush1.msra.mxu0 0.0
    %4735 = vmatprep.subr.mxu0 0.0
    %4736 = vmatpush1.msra.mxu0 0.0
    %4737 = vmatprep.subr.mxu0 0.0
    %4738 = vmatpush1.msra.mxu0 0.0
    %4739 = vmatprep.subr.mxu0 0.0
    %4740 = vmatpush1.msra.mxu0 0.0
    %4741 = vmatprep.subr.mxu0 0.0
    %4742 = vmatpush1.msra.mxu0 0.0
    %4743 = vmatprep.subr.mxu0 0.0
    %4744 = vmatpush1.msra.mxu0 0.0
    %4745 = vmatprep.subr.mxu0 0.0
    %4746 = vmatpush1.msra.mxu0 0.0
    %4747 = vmatprep.subr.mxu0 0.0
    %4748 = vmatpush1.msra.mxu0 0.0
    %4749 = vmatprep.subr.mxu0 0.0
    %4750 = vmatpush1.msra.mxu0 0.0
    %4751 = vmatprep.subr.mxu0 0.0
    %4752 = vmatpush1.msra.mxu0 0.0
    %4753 = vmatprep.subr.mxu0 0.0
    %4754 = vmatpush1.msra.mxu0 0.0
    %4755 = vmatprep.subr.mxu0 0.0
    %4756 = vmatpush1.msra.mxu0 0.0
    %4757 = vmatprep.subr.mxu0 0.0
    %4758 = vmatpush1.msra.mxu0 0.0
    %4759 = vmatprep.subr.mxu0 0.0
    %4760 = vmatpush1.msra.mxu0 0.0
    %4761 = vmatprep.subr.mxu0 0.0
    %4762 = vmatpush1.msra.mxu0 0.0
    %4763 = vmatprep.subr.mxu0 0.0
    %4764 = vmatpush1.msra.mxu0 0.0
    %4765 = vmatprep.subr.mxu0 0.0
    %4766 = vmatpush1.msra.mxu0 0.0
    %4767 = vmatprep.subr.mxu0 0.0
    %4768 = vmatpush1.msra.mxu0 0.0
    %4769 = vmatprep.subr.mxu0 0.0
    %4770 = vmatpush1.msra.mxu0 0.0
    %4771 = vmatprep.mubr.f32.mxu0 0.0
    %4772 = vmatmul.mubr.f32.gmra.mrb[0].mxu0 %v4705
    %v4773 = vpop.f32.mrb[0].mxu0
    %v4774 = vadd.f32 0.0, %v4773
    %v4775 = vpop.f32.mrb[0].mxu0
    %4776 = vdwg.mxu0
    %4777 = vrot.lane.b32.xlu0 %v3660, 56
    %v4778 = vpop.permute.xlu0 %4777
    %v4781 = vsel %vm332, %v4698, 0
    %4783 = vmatprep.subr.mxu0 0.0
    %4784 = vmatpush1.msra.mxu0 %v4778
    %4785 = vmatprep.subr.mxu0 0.0
    %4786 = vmatpush1.msra.mxu0 0.0
    %4787 = vmatprep.subr.mxu0 0.0
    %4788 = vmatpush1.msra.mxu0 0.0
    %4789 = vmatprep.subr.mxu0 0.0
    %4790 = vmatpush1.msra.mxu0 0.0
    %4791 = vmatprep.subr.mxu0 0.0
    %4792 = vmatpush1.msra.mxu0 0.0
    %4793 = vmatprep.subr.mxu0 0.0
    %4794 = vmatpush1.msra.mxu0 0.0
    %4795 = vmatprep.subr.mxu0 0.0
    %4796 = vmatpush1.msra.mxu0 0.0
    %4797 = vmatprep.subr.mxu0 0.0
    %4798 = vmatpush1.msra.mxu0 0.0
    %4799 = vmatprep.subr.mxu0 0.0
    %4800 = vmatpush1.msra.mxu0 0.0
    %4801 = vmatprep.subr.mxu0 0.0
    %4802 = vmatpush1.msra.mxu0 0.0
    %4803 = vmatprep.subr.mxu0 0.0
    %4804 = vmatpush1.msra.mxu0 0.0
    %4805 = vmatprep.subr.mxu0 0.0
    %4806 = vmatpush1.msra.mxu0 0.0
    %4807 = vmatprep.subr.mxu0 0.0
    %4808 = vmatpush1.msra.mxu0 0.0
    %4809 = vmatprep.subr.mxu0 0.0
    %4810 = vmatpush1.msra.mxu0 0.0
    %4811 = vmatprep.subr.mxu0 0.0
    %4812 = vmatpush1.msra.mxu0 0.0
    %4813 = vmatprep.subr.mxu0 0.0
    %4814 = vmatpush1.msra.mxu0 0.0
    %4815 = vmatprep.subr.mxu0 0.0
    %4816 = vmatpush1.msra.mxu0 0.0
    %4817 = vmatprep.subr.mxu0 0.0
    %4818 = vmatpush1.msra.mxu0 0.0
    %4819 = vmatprep.subr.mxu0 0.0
    %4820 = vmatpush1.msra.mxu0 0.0
    %4821 = vmatprep.subr.mxu0 0.0
    %4822 = vmatpush1.msra.mxu0 0.0
    %4823 = vmatprep.subr.mxu0 0.0
    %4824 = vmatpush1.msra.mxu0 0.0
    %4825 = vmatprep.subr.mxu0 0.0
    %4826 = vmatpush1.msra.mxu0 0.0
    %4827 = vmatprep.subr.mxu0 0.0
    %4828 = vmatpush1.msra.mxu0 0.0
    %4829 = vmatprep.subr.mxu0 0.0
    %4830 = vmatpush1.msra.mxu0 0.0
    %4831 = vmatprep.subr.mxu0 0.0
    %4832 = vmatpush1.msra.mxu0 0.0
    %4833 = vmatprep.subr.mxu0 0.0
    %4834 = vmatpush1.msra.mxu0 0.0
    %4835 = vmatprep.subr.mxu0 0.0
    %4836 = vmatpush1.msra.mxu0 0.0
    %4837 = vmatprep.subr.mxu0 0.0
    %4838 = vmatpush1.msra.mxu0 0.0
    %4839 = vmatprep.subr.mxu0 0.0
    %4840 = vmatpush1.msra.mxu0 0.0
    %4841 = vmatprep.subr.mxu0 0.0
    %4842 = vmatpush1.msra.mxu0 0.0
    %4843 = vmatprep.subr.mxu0 0.0
    %4844 = vmatpush1.msra.mxu0 0.0
    %4845 = vmatprep.subr.mxu0 0.0
    %4846 = vmatpush1.msra.mxu0 0.0
    %4847 = vmatprep.mubr.f32.mxu0 0.0
    %4848 = vmatmul.mubr.f32.gmra.mrb[0].mxu0 %v4781
    %v4849 = vpop.f32.mrb[0].mxu0
    %v4850 = vadd.f32 0.0, %v4849
    %v4851 = vpop.f32.mrb[0].mxu0
    %4852 = vdwg.mxu0
    %4853 = vrot.lane.b32.xlu0 %v3665, 56
    %v4854 = vpop.permute.xlu0 %4853
    %v4857 = vsel %vm332, %v4699, 0
    %4859 = vmatprep.subr.mxu0 0.0
    %4860 = vmatpush1.msra.mxu0 %v4854
    %4861 = vmatprep.subr.mxu0 0.0
    %4862 = vmatpush1.msra.mxu0 0.0
    %4863 = vmatprep.subr.mxu0 0.0
    %4864 = vmatpush1.msra.mxu0 0.0
    %4865 = vmatprep.subr.mxu0 0.0
    %4866 = vmatpush1.msra.mxu0 0.0
    %4867 = vmatprep.subr.mxu0 0.0
    %4868 = vmatpush1.msra.mxu0 0.0
    %4869 = vmatprep.subr.mxu0 0.0
    %4870 = vmatpush1.msra.mxu0 0.0
    %4871 = vmatprep.subr.mxu0 0.0
    %4872 = vmatpush1.msra.mxu0 0.0
    %4873 = vmatprep.subr.mxu0 0.0
    %4874 = vmatpush1.msra.mxu0 0.0
    %4875 = vmatprep.subr.mxu0 0.0
    %4876 = vmatpush1.msra.mxu0 0.0
    %4877 = vmatprep.subr.mxu0 0.0
    %4878 = vmatpush1.msra.mxu0 0.0
    %4879 = vmatprep.subr.mxu0 0.0
    %4880 = vmatpush1.msra.mxu0 0.0
    %4881 = vmatprep.subr.mxu0 0.0
    %4882 = vmatpush1.msra.mxu0 0.0
    %4883 = vmatprep.subr.mxu0 0.0
    %4884 = vmatpush1.msra.mxu0 0.0
    %4885 = vmatprep.subr.mxu0 0.0
    %4886 = vmatpush1.msra.mxu0 0.0
    %4887 = vmatprep.subr.mxu0 0.0
    %4888 = vmatpush1.msra.mxu0 0.0
    %4889 = vmatprep.subr.mxu0 0.0
    %4890 = vmatpush1.msra.mxu0 0.0
    %4891 = vmatprep.subr.mxu0 0.0
    %4892 = vmatpush1.msra.mxu0 0.0
    %4893 = vmatprep.subr.mxu0 0.0
    %4894 = vmatpush1.msra.mxu0 0.0
    %4895 = vmatprep.subr.mxu0 0.0
    %4896 = vmatpush1.msra.mxu0 0.0
    %4897 = vmatprep.subr.mxu0 0.0
    %4898 = vmatpush1.msra.mxu0 0.0
    %4899 = vmatprep.subr.mxu0 0.0
    %4900 = vmatpush1.msra.mxu0 0.0
    %4901 = vmatprep.subr.mxu0 0.0
    %4902 = vmatpush1.msra.mxu0 0.0
    %4903 = vmatprep.subr.mxu0 0.0
    %4904 = vmatpush1.msra.mxu0 0.0
    %4905 = vmatprep.subr.mxu0 0.0
    %4906 = vmatpush1.msra.mxu0 0.0
    %4907 = vmatprep.subr.mxu0 0.0
    %4908 = vmatpush1.msra.mxu0 0.0
    %4909 = vmatprep.subr.mxu0 0.0
    %4910 = vmatpush1.msra.mxu0 0.0
    %4911 = vmatprep.subr.mxu0 0.0
    %4912 = vmatpush1.msra.mxu0 0.0
    %4913 = vmatprep.subr.mxu0 0.0
    %4914 = vmatpush1.msra.mxu0 0.0
    %4915 = vmatprep.subr.mxu0 0.0
    %4916 = vmatpush1.msra.mxu0 0.0
    %4917 = vmatprep.subr.mxu0 0.0
    %4918 = vmatpush1.msra.mxu0 0.0
    %4919 = vmatprep.subr.mxu0 0.0
    %4920 = vmatpush1.msra.mxu0 0.0
    %4921 = vmatprep.subr.mxu0 0.0
    %4922 = vmatpush1.msra.mxu0 0.0
    %4923 = vmatprep.mubr.f32.mxu0 0.0
    %4924 = vmatmul.mubr.f32.gmra.mrb[0].mxu0 %v4857
    %v4925 = vpop.f32.mrb[0].mxu0
    %v4926 = vadd.f32 0.0, %v4925
    %v4927 = vpop.f32.mrb[0].mxu0
    %4928 = vdwg.mxu0
    %4929 = vrot.lane.b32.xlu0 %v3670, 56
    %v4930 = vpop.permute.xlu0 %4929
    %v4933 = vsel %vm332, %v4700, 0
    %4935 = vmatprep.subr.mxu0 0.0
    %4936 = vmatpush1.msra.mxu0 %v4930
    %4937 = vmatprep.subr.mxu0 0.0
    %4938 = vmatpush1.msra.mxu0 0.0
    %4939 = vmatprep.subr.mxu0 0.0
    %4940 = vmatpush1.msra.mxu0 0.0
    %4941 = vmatprep.subr.mxu0 0.0
    %4942 = vmatpush1.msra.mxu0 0.0
    %4943 = vmatprep.subr.mxu0 0.0
    %4944 = vmatpush1.msra.mxu0 0.0
    %4945 = vmatprep.subr.mxu0 0.0
    %4946 = vmatpush1.msra.mxu0 0.0
    %4947 = vmatprep.subr.mxu0 0.0
    %4948 = vmatpush1.msra.mxu0 0.0
    %4949 = vmatprep.subr.mxu0 0.0
    %4950 = vmatpush1.msra.mxu0 0.0
    %4951 = vmatprep.subr.mxu0 0.0
    %4952 = vmatpush1.msra.mxu0 0.0
    %4953 = vmatprep.subr.mxu0 0.0
    %4954 = vmatpush1.msra.mxu0 0.0
    %4955 = vmatprep.subr.mxu0 0.0
    %4956 = vmatpush1.msra.mxu0 0.0
    %4957 = vmatprep.subr.mxu0 0.0
    %4958 = vmatpush1.msra.mxu0 0.0
    %4959 = vmatprep.subr.mxu0 0.0
    %4960 = vmatpush1.msra.mxu0 0.0
    %4961 = vmatprep.subr.mxu0 0.0
    %4962 = vmatpush1.msra.mxu0 0.0
    %4963 = vmatprep.subr.mxu0 0.0
    %4964 = vmatpush1.msra.mxu0 0.0
    %4965 = vmatprep.subr.mxu0 0.0
    %4966 = vmatpush1.msra.mxu0 0.0
    %4967 = vmatprep.subr.mxu0 0.0
    %4968 = vmatpush1.msra.mxu0 0.0
    %4969 = vmatprep.subr.mxu0 0.0
    %4970 = vmatpush1.msra.mxu0 0.0
    %4971 = vmatprep.subr.mxu0 0.0
    %4972 = vmatpush1.msra.mxu0 0.0
    %4973 = vmatprep.subr.mxu0 0.0
    %4974 = vmatpush1.msra.mxu0 0.0
    %4975 = vmatprep.subr.mxu0 0.0
    %4976 = vmatpush1.msra.mxu0 0.0
    %4977 = vmatprep.subr.mxu0 0.0
    %4978 = vmatpush1.msra.mxu0 0.0
    %4979 = vmatprep.subr.mxu0 0.0
    %4980 = vmatpush1.msra.mxu0 0.0
    %4981 = vmatprep.subr.mxu0 0.0
    %4982 = vmatpush1.msra.mxu0 0.0
    %4983 = vmatprep.subr.mxu0 0.0
    %4984 = vmatpush1.msra.mxu0 0.0
    %4985 = vmatprep.subr.mxu0 0.0
    %4986 = vmatpush1.msra.mxu0 0.0
    %4987 = vmatprep.subr.mxu0 0.0
    %4988 = vmatpush1.msra.mxu0 0.0
    %4989 = vmatprep.subr.mxu0 0.0
    %4990 = vmatpush1.msra.mxu0 0.0
    %4991 = vmatprep.subr.mxu0 0.0
    %4992 = vmatpush1.msra.mxu0 0.0
    %4993 = vmatprep.subr.mxu0 0.0
    %4994 = vmatpush1.msra.mxu0 0.0
    %4995 = vmatprep.subr.mxu0 0.0
    %4996 = vmatpush1.msra.mxu0 0.0
    %4997 = vmatprep.subr.mxu0 0.0
    %4998 = vmatpush1.msra.mxu0 0.0
    %4999 = vmatprep.mubr.f32.mxu0 0.0
    %5000 = vmatmul.mubr.f32.gmra.mrb[0].mxu0 %v4933
    %v5001 = vpop.f32.mrb[0].mxu0
    %v5002 = vadd.f32 0.0, %v5001
    %v5003 = vpop.f32.mrb[0].mxu0
    %5004 = vdwg.mxu0
    %5005 = vrot.lane.b32.xlu0 %v3655, 112
    %v5006 = vpop.permute.xlu0 %5005
    %5007 = vrot.lane.b32.xlu0 %v3655, 80
    %v5008 = vpop.permute.xlu0 %5007
    %v5009 = vsel %vm332, %v5006, 0
    %v5011 = vsel %vm332, %v5008, 0
    %5013 = vmatprep.subr.mxu0 0.0
    %5014 = vmatpush1.xpose.msra.mxu0 %v5011
    %5015 = vmatprep.subr.mxu0 0.0
    %5016 = vmatpush1.xpose.msra.mxu0 0.0
    %5017 = vmatprep.subr.mxu0 0.0
    %5018 = vmatpush1.xpose.msra.mxu0 0.0
    %5019 = vmatprep.subr.mxu0 0.0
    %5020 = vmatpush1.xpose.msra.mxu0 0.0
    %5021 = vmatprep.subr.mxu0 0.0
    %5022 = vmatpush1.xpose.msra.mxu0 0.0
    %5023 = vmatprep.subr.mxu0 0.0
    %5024 = vmatpush1.xpose.msra.mxu0 0.0
    %5025 = vmatprep.subr.mxu0 0.0
    %5026 = vmatpush1.xpose.msra.mxu0 0.0
    %5027 = vmatprep.subr.mxu0 0.0
    %5028 = vmatpush1.xpose.msra.mxu0 0.0
    %5029 = vmatprep.subr.mxu0 0.0
    %5030 = vmatpush1.xpose.msra.mxu0 0.0
    %5031 = vmatprep.subr.mxu0 0.0
    %5032 = vmatpush1.xpose.msra.mxu0 0.0
    %5033 = vmatprep.subr.mxu0 0.0
    %5034 = vmatpush1.xpose.msra.mxu0 0.0
    %5035 = vmatprep.subr.mxu0 0.0
    %5036 = vmatpush1.xpose.msra.mxu0 0.0
    %5037 = vmatprep.subr.mxu0 0.0
    %5038 = vmatpush1.xpose.msra.mxu0 0.0
    %5039 = vmatprep.subr.mxu0 0.0
    %5040 = vmatpush1.xpose.msra.mxu0 0.0
    %5041 = vmatprep.subr.mxu0 0.0
    %5042 = vmatpush1.xpose.msra.mxu0 0.0
    %5043 = vmatprep.subr.mxu0 0.0
    %5044 = vmatpush1.xpose.msra.mxu0 0.0
    %5045 = vmatprep.subr.mxu0 0.0
    %5046 = vmatpush1.xpose.msra.mxu0 0.0
    %5047 = vmatprep.subr.mxu0 0.0
    %5048 = vmatpush1.xpose.msra.mxu0 0.0
    %5049 = vmatprep.subr.mxu0 0.0
    %5050 = vmatpush1.xpose.msra.mxu0 0.0
    %5051 = vmatprep.subr.mxu0 0.0
    %5052 = vmatpush1.xpose.msra.mxu0 0.0
    %5053 = vmatprep.subr.mxu0 0.0
    %5054 = vmatpush1.xpose.msra.mxu0 0.0
    %5055 = vmatprep.subr.mxu0 0.0
    %5056 = vmatpush1.xpose.msra.mxu0 0.0
    %5057 = vmatprep.subr.mxu0 0.0
    %5058 = vmatpush1.xpose.msra.mxu0 0.0
    %5059 = vmatprep.subr.mxu0 0.0
    %5060 = vmatpush1.xpose.msra.mxu0 0.0
    %5061 = vmatprep.subr.mxu0 0.0
    %5062 = vmatpush1.xpose.msra.mxu0 0.0
    %5063 = vmatprep.subr.mxu0 0.0
    %5064 = vmatpush1.xpose.msra.mxu0 0.0
    %5065 = vmatprep.subr.mxu0 0.0
    %5066 = vmatpush1.xpose.msra.mxu0 0.0
    %5067 = vmatprep.subr.mxu0 0.0
    %5068 = vmatpush1.xpose.msra.mxu0 0.0
    %5069 = vmatprep.subr.mxu0 0.0
    %5070 = vmatpush1.xpose.msra.mxu0 0.0
    %5071 = vmatprep.subr.mxu0 0.0
    %5072 = vmatpush1.xpose.msra.mxu0 0.0
    %5073 = vmatprep.subr.mxu0 0.0
    %5074 = vmatpush1.xpose.msra.mxu0 0.0
    %5075 = vmatprep.subr.mxu0 0.0
    %5076 = vmatpush1.xpose.msra.mxu0 0.0
    %5077 = vmatprep.mubr.f32.mxu0 0.0
    %5078 = vmatmul.mubr.f32.gmra.mrb[0].mxu0 %v5009
    %v5079 = vpop.f32.mrb[0].mxu0
    %v5080 = vadd.f32 0.0, %v5079
    %v5081 = vpop.f32.mrb[0].mxu0
    %5082 = vdwg.mxu0
    %5083 = vrot.lane.b32.xlu0 %v3660, 112
    %v5084 = vpop.permute.xlu0 %5083
    %5085 = vrot.lane.b32.xlu0 %v3660, 80
    %v5086 = vpop.permute.xlu0 %5085
    %v5087 = vsel %vm332, %v5084, 0
    %v5089 = vsel %vm332, %v5086, 0
    %5091 = vmatprep.subr.mxu0 0.0
    %5092 = vmatpush1.xpose.msra.mxu0 %v5089
    %5093 = vmatprep.subr.mxu0 0.0
    %5094 = vmatpush1.xpose.msra.mxu0 0.0
    %5095 = vmatprep.subr.mxu0 0.0
    %5096 = vmatpush1.xpose.msra.mxu0 0.0
    %5097 = vmatprep.subr.mxu0 0.0
    %5098 = vmatpush1.xpose.msra.mxu0 0.0
    %5099 = vmatprep.subr.mxu0 0.0
    %5100 = vmatpush1.xpose.msra.mxu0 0.0
    %5101 = vmatprep.subr.mxu0 0.0
    %5102 = vmatpush1.xpose.msra.mxu0 0.0
    %5103 = vmatprep.subr.mxu0 0.0
    %5104 = vmatpush1.xpose.msra.mxu0 0.0
    %5105 = vmatprep.subr.mxu0 0.0
    %5106 = vmatpush1.xpose.msra.mxu0 0.0
    %5107 = vmatprep.subr.mxu0 0.0
    %5108 = vmatpush1.xpose.msra.mxu0 0.0
    %5109 = vmatprep.subr.mxu0 0.0
    %5110 = vmatpush1.xpose.msra.mxu0 0.0
    %5111 = vmatprep.subr.mxu0 0.0
    %5112 = vmatpush1.xpose.msra.mxu0 0.0
    %5113 = vmatprep.subr.mxu0 0.0
    %5114 = vmatpush1.xpose.msra.mxu0 0.0
    %5115 = vmatprep.subr.mxu0 0.0
    %5116 = vmatpush1.xpose.msra.mxu0 0.0
    %5117 = vmatprep.subr.mxu0 0.0
    %5118 = vmatpush1.xpose.msra.mxu0 0.0
    %5119 = vmatprep.subr.mxu0 0.0
    %5120 = vmatpush1.xpose.msra.mxu0 0.0
    %5121 = vmatprep.subr.mxu0 0.0
    %5122 = vmatpush1.xpose.msra.mxu0 0.0
    %5123 = vmatprep.subr.mxu0 0.0
    %5124 = vmatpush1.xpose.msra.mxu0 0.0
    %5125 = vmatprep.subr.mxu0 0.0
    %5126 = vmatpush1.xpose.msra.mxu0 0.0
    %5127 = vmatprep.subr.mxu0 0.0
    %5128 = vmatpush1.xpose.msra.mxu0 0.0
    %5129 = vmatprep.subr.mxu0 0.0
    %5130 = vmatpush1.xpose.msra.mxu0 0.0
    %5131 = vmatprep.subr.mxu0 0.0
    %5132 = vmatpush1.xpose.msra.mxu0 0.0
    %5133 = vmatprep.subr.mxu0 0.0
    %5134 = vmatpush1.xpose.msra.mxu0 0.0
    %5135 = vmatprep.subr.mxu0 0.0
    %5136 = vmatpush1.xpose.msra.mxu0 0.0
    %5137 = vmatprep.subr.mxu0 0.0
    %5138 = vmatpush1.xpose.msra.mxu0 0.0
    %5139 = vmatprep.subr.mxu0 0.0
    %5140 = vmatpush1.xpose.msra.mxu0 0.0
    %5141 = vmatprep.subr.mxu0 0.0
    %5142 = vmatpush1.xpose.msra.mxu0 0.0
    %5143 = vmatprep.subr.mxu0 0.0
    %5144 = vmatpush1.xpose.msra.mxu0 0.0
    %5145 = vmatprep.subr.mxu0 0.0
    %5146 = vmatpush1.xpose.msra.mxu0 0.0
    %5147 = vmatprep.subr.mxu0 0.0
    %5148 = vmatpush1.xpose.msra.mxu0 0.0
    %5149 = vmatprep.subr.mxu0 0.0
    %5150 = vmatpush1.xpose.msra.mxu0 0.0
    %5151 = vmatprep.subr.mxu0 0.0
    %5152 = vmatpush1.xpose.msra.mxu0 0.0
    %5153 = vmatprep.subr.mxu0 0.0
    %5154 = vmatpush1.xpose.msra.mxu0 0.0
    %5155 = vmatprep.mubr.f32.mxu0 0.0
    %5156 = vmatmul.mubr.f32.gmra.mrb[0].mxu0 %v5087
    %v5157 = vpop.f32.mrb[0].mxu0
    %v5158 = vadd.f32 0.0, %v5157
    %v5159 = vpop.f32.mrb[0].mxu0
    %5160 = vdwg.mxu0
    %5161 = vrot.lane.b32.xlu0 %v3665, 112
    %v5162 = vpop.permute.xlu0 %5161
    %5163 = vrot.lane.b32.xlu0 %v3665, 80
    %v5164 = vpop.permute.xlu0 %5163
    %v5165 = vsel %vm332, %v5162, 0
    %v5167 = vsel %vm332, %v5164, 0
    %5169 = vmatprep.subr.mxu0 0.0
    %5170 = vmatpush1.xpose.msra.mxu0 %v5167
    %5171 = vmatprep.subr.mxu0 0.0
    %5172 = vmatpush1.xpose.msra.mxu0 0.0
    %5173 = vmatprep.subr.mxu0 0.0
    %5174 = vmatpush1.xpose.msra.mxu0 0.0
    %5175 = vmatprep.subr.mxu0 0.0
    %5176 = vmatpush1.xpose.msra.mxu0 0.0
    %5177 = vmatprep.subr.mxu0 0.0
    %5178 = vmatpush1.xpose.msra.mxu0 0.0
    %5179 = vmatprep.subr.mxu0 0.0
    %5180 = vmatpush1.xpose.msra.mxu0 0.0
    %5181 = vmatprep.subr.mxu0 0.0
    %5182 = vmatpush1.xpose.msra.mxu0 0.0
    %5183 = vmatprep.subr.mxu0 0.0
    %5184 = vmatpush1.xpose.msra.mxu0 0.0
    %5185 = vmatprep.subr.mxu0 0.0
    %5186 = vmatpush1.xpose.msra.mxu0 0.0
    %5187 = vmatprep.subr.mxu0 0.0
    %5188 = vmatpush1.xpose.msra.mxu0 0.0
    %5189 = vmatprep.subr.mxu0 0.0
    %5190 = vmatpush1.xpose.msra.mxu0 0.0
    %5191 = vmatprep.subr.mxu0 0.0
    %5192 = vmatpush1.xpose.msra.mxu0 0.0
    %5193 = vmatprep.subr.mxu0 0.0
    %5194 = vmatpush1.xpose.msra.mxu0 0.0
    %5195 = vmatprep.subr.mxu0 0.0
    %5196 = vmatpush1.xpose.msra.mxu0 0.0
    %5197 = vmatprep.subr.mxu0 0.0
    %5198 = vmatpush1.xpose.msra.mxu0 0.0
    %5199 = vmatprep.subr.mxu0 0.0
    %5200 = vmatpush1.xpose.msra.mxu0 0.0
    %5201 = vmatprep.subr.mxu0 0.0
    %5202 = vmatpush1.xpose.msra.mxu0 0.0
    %5203 = vmatprep.subr.mxu0 0.0
    %5204 = vmatpush1.xpose.msra.mxu0 0.0
    %5205 = vmatprep.subr.mxu0 0.0
    %5206 = vmatpush1.xpose.msra.mxu0 0.0
    %5207 = vmatprep.subr.mxu0 0.0
    %5208 = vmatpush1.xpose.msra.mxu0 0.0
    %5209 = vmatprep.subr.mxu0 0.0
    %5210 = vmatpush1.xpose.msra.mxu0 0.0
    %5211 = vmatprep.subr.mxu0 0.0
    %5212 = vmatpush1.xpose.msra.mxu0 0.0
    %5213 = vmatprep.subr.mxu0 0.0
    %5214 = vmatpush1.xpose.msra.mxu0 0.0
    %5215 = vmatprep.subr.mxu0 0.0
    %5216 = vmatpush1.xpose.msra.mxu0 0.0
    %5217 = vmatprep.subr.mxu0 0.0
    %5218 = vmatpush1.xpose.msra.mxu0 0.0
    %5219 = vmatprep.subr.mxu0 0.0
    %5220 = vmatpush1.xpose.msra.mxu0 0.0
    %5221 = vmatprep.subr.mxu0 0.0
    %5222 = vmatpush1.xpose.msra.mxu0 0.0
    %5223 = vmatprep.subr.mxu0 0.0
    %5224 = vmatpush1.xpose.msra.mxu0 0.0
    %5225 = vmatprep.subr.mxu0 0.0
    %5226 = vmatpush1.xpose.msra.mxu0 0.0
    %5227 = vmatprep.subr.mxu0 0.0
    %5228 = vmatpush1.xpose.msra.mxu0 0.0
    %5229 = vmatprep.subr.mxu0 0.0
    %5230 = vmatpush1.xpose.msra.mxu0 0.0
    %5231 = vmatprep.subr.mxu0 0.0
    %5232 = vmatpush1.xpose.msra.mxu0 0.0
    %5233 = vmatprep.mubr.f32.mxu0 0.0
    %5234 = vmatmul.mubr.f32.gmra.mrb[0].mxu0 %v5165
    %v5235 = vpop.f32.mrb[0].mxu0
    %v5236 = vadd.f32 0.0, %v5235
    %v5237 = vpop.f32.mrb[0].mxu0
    %5238 = vdwg.mxu0
    %5239 = vrot.lane.b32.xlu0 %v3670, 112
    %v5240 = vpop.permute.xlu0 %5239
    %5241 = vrot.lane.b32.xlu0 %v3670, 80
    %v5242 = vpop.permute.xlu0 %5241
    %v5243 = vsel %vm332, %v5240, 0
    %v5245 = vsel %vm332, %v5242, 0
    %5247 = vmatprep.subr.mxu0 0.0
    %5248 = vmatpush1.xpose.msra.mxu0 %v5245
    %5249 = vmatprep.subr.mxu0 0.0
    %5250 = vmatpush1.xpose.msra.mxu0 0.0
    %5251 = vmatprep.subr.mxu0 0.0
    %5252 = vmatpush1.xpose.msra.mxu0 0.0
    %5253 = vmatprep.subr.mxu0 0.0
    %5254 = vmatpush1.xpose.msra.mxu0 0.0
    %5255 = vmatprep.subr.mxu0 0.0
    %5256 = vmatpush1.xpose.msra.mxu0 0.0
    %5257 = vmatprep.subr.mxu0 0.0
    %5258 = vmatpush1.xpose.msra.mxu0 0.0
    %5259 = vmatprep.subr.mxu0 0.0
    %5260 = vmatpush1.xpose.msra.mxu0 0.0
    %5261 = vmatprep.subr.mxu0 0.0
    %5262 = vmatpush1.xpose.msra.mxu0 0.0
    %5263 = vmatprep.subr.mxu0 0.0
    %5264 = vmatpush1.xpose.msra.mxu0 0.0
    %5265 = vmatprep.subr.mxu0 0.0
    %5266 = vmatpush1.xpose.msra.mxu0 0.0
    %5267 = vmatprep.subr.mxu0 0.0
    %5268 = vmatpush1.xpose.msra.mxu0 0.0
    %5269 = vmatprep.subr.mxu0 0.0
    %5270 = vmatpush1.xpose.msra.mxu0 0.0
    %5271 = vmatprep.subr.mxu0 0.0
    %5272 = vmatpush1.xpose.msra.mxu0 0.0
    %5273 = vmatprep.subr.mxu0 0.0
    %5274 = vmatpush1.xpose.msra.mxu0 0.0
    %5275 = vmatprep.subr.mxu0 0.0
    %5276 = vmatpush1.xpose.msra.mxu0 0.0
    %5277 = vmatprep.subr.mxu0 0.0
    %5278 = vmatpush1.xpose.msra.mxu0 0.0
    %5279 = vmatprep.subr.mxu0 0.0
    %5280 = vmatpush1.xpose.msra.mxu0 0.0
    %5281 = vmatprep.subr.mxu0 0.0
    %5282 = vmatpush1.xpose.msra.mxu0 0.0
    %5283 = vmatprep.subr.mxu0 0.0
    %5284 = vmatpush1.xpose.msra.mxu0 0.0
    %5285 = vmatprep.subr.mxu0 0.0
    %5286 = vmatpush1.xpose.msra.mxu0 0.0
    %5287 = vmatprep.subr.mxu0 0.0
    %5288 = vmatpush1.xpose.msra.mxu0 0.0
    %5289 = vmatprep.subr.mxu0 0.0
    %5290 = vmatpush1.xpose.msra.mxu0 0.0
    %5291 = vmatprep.subr.mxu0 0.0
    %5292 = vmatpush1.xpose.msra.mxu0 0.0
    %5293 = vmatprep.subr.mxu0 0.0
    %5294 = vmatpush1.xpose.msra.mxu0 0.0
    %5295 = vmatprep.subr.mxu0 0.0
    %5296 = vmatpush1.xpose.msra.mxu0 0.0
    %5297 = vmatprep.subr.mxu0 0.0
    %5298 = vmatpush1.xpose.msra.mxu0 0.0
    %5299 = vmatprep.subr.mxu0 0.0
    %5300 = vmatpush1.xpose.msra.mxu0 0.0
    %5301 = vmatprep.subr.mxu0 0.0
    %5302 = vmatpush1.xpose.msra.mxu0 0.0
    %5303 = vmatprep.subr.mxu0 0.0
    %5304 = vmatpush1.xpose.msra.mxu0 0.0
    %5305 = vmatprep.subr.mxu0 0.0
    %5306 = vmatpush1.xpose.msra.mxu0 0.0
    %5307 = vmatprep.subr.mxu0 0.0
    %5308 = vmatpush1.xpose.msra.mxu0 0.0
    %5309 = vmatprep.subr.mxu0 0.0
    %5310 = vmatpush1.xpose.msra.mxu0 0.0
    %5311 = vmatprep.mubr.f32.mxu0 0.0
    %5312 = vmatmul.mubr.f32.gmra.mrb[0].mxu0 %v5243
    %v5313 = vpop.f32.mrb[0].mxu0
    %v5314 = vadd.f32 0.0, %v5313
    %v5315 = vpop.f32.mrb[0].mxu0
    %5316 = vdwg.mxu0
    %v5317 = vmul.f32 %v5080, 0.35355338
    %v5318 = vmul.f32 %v5158, 0.35355338
    %v5319 = vmul.f32 %v5236, 0.35355338
    %v5320 = vmul.f32 %v5314, 0.35355338
    %v5321 = vadd.f32 %v5317, %v212
    %v5322 = vadd.f32 %v5318, %v216
    %v5323 = vadd.f32 %v5319, %v220
    %v5324 = vadd.f32 %v5320, %v224
    %v5325 = vsel %vm332, %v5321, -inf
    %5326 = vmax.xlane.f32.xlu0 %v5325
    %v5327 = vpop.xlane.xlu0 %5326
    %v5328 = vsel %vm332, %v5322, -inf
    %5329 = vmax.xlane.f32.xlu0 %v5328
    %v5330 = vpop.xlane.xlu0 %5329
    %v5331 = vsel %vm332, %v5323, -inf
    %5332 = vmax.xlane.f32.xlu0 %v5331
    %v5333 = vpop.xlane.xlu0 %5332
    %v5334 = vsel %vm332, %v5324, -inf
    %5335 = vmax.xlane.f32.xlu0 %v5334
    %v5336 = vpop.xlane.xlu0 %5335
    %v5337 = vsub.f32 %v5321, %v5327
    %v5338 = vsub.f32 %v5322, %v5330
    %v5339 = vsub.f32 %v5323, %v5333
    %v5340 = vsub.f32 %v5324, %v5336
    %v5341 = vmul.f32 %v5337, 1.442695
    %v5342 = vpow.pop %v5341
    %v5343 = vmul.f32 %v5338, 1.442695
    %v5344 = vpow.pop %v5343
    %v5345 = vmul.f32 %v5339, 1.442695
    %v5346 = vpow.pop %v5345
    %v5347 = vmul.f32 %v5340, 1.442695
    %v5348 = vpow.pop %v5347
    %v5349 = vsel %vm332, %v5342, 0.0
    %5350 = vadd.xlane.f32.xlu0 %v5349
    %v5351 = vpop.xlane.xlu0 %5350
    %v5352 = vsel %vm332, %v5344, 0.0
    %5353 = vadd.xlane.f32.xlu0 %v5352
    %v5354 = vpop.xlane.xlu0 %5353
    %v5355 = vsel %vm332, %v5346, 0.0
    %5356 = vadd.xlane.f32.xlu0 %v5355
    %v5357 = vpop.xlane.xlu0 %5356
    %v5358 = vsel %vm332, %v5348, 0.0
    %5359 = vadd.xlane.f32.xlu0 %v5358
    %v5360 = vpop.xlane.xlu0 %5359
    %v5361 = vrcp.pop %v5351
    %v5362 = vrcp.pop %v5354
    %v5363 = vrcp.pop %v5357
    %v5364 = vrcp.pop %v5360
    %v5365 = vmul.f32 %v5342, %v5361
    %v5366 = vmul.f32 %v5344, %v5362
    %v5367 = vmul.f32 %v5346, %v5363
    %v5368 = vmul.f32 %v5348, %v5364
    %5369 = vrot.lane.b32.xlu0 %v3655, 48
    %v5370 = vpop.permute.xlu0 %5369
    %v5373 = vsel %vm332, %v5365, 0
    %5375 = vmatprep.subr.mxu0 0.0
    %5376 = vmatpush1.msra.mxu0 %v5370
    %5377 = vmatprep.subr.mxu0 0.0
    %5378 = vmatpush1.msra.mxu0 0.0
    %5379 = vmatprep.subr.mxu0 0.0
    %5380 = vmatpush1.msra.mxu0 0.0
    %5381 = vmatprep.subr.mxu0 0.0
    %5382 = vmatpush1.msra.mxu0 0.0
    %5383 = vmatprep.subr.mxu0 0.0
    %5384 = vmatpush1.msra.mxu0 0.0
    %5385 = vmatprep.subr.mxu0 0.0
    %5386 = vmatpush1.msra.mxu0 0.0
    %5387 = vmatprep.subr.mxu0 0.0
    %5388 = vmatpush1.msra.mxu0 0.0
    %5389 = vmatprep.subr.mxu0 0.0
    %5390 = vmatpush1.msra.mxu0 0.0
    %5391 = vmatprep.subr.mxu0 0.0
    %5392 = vmatpush1.msra.mxu0 0.0
    %5393 = vmatprep.subr.mxu0 0.0
    %5394 = vmatpush1.msra.mxu0 0.0
    %5395 = vmatprep.subr.mxu0 0.0
    %5396 = vmatpush1.msra.mxu0 0.0
    %5397 = vmatprep.subr.mxu0 0.0
    %5398 = vmatpush1.msra.mxu0 0.0
    %5399 = vmatprep.subr.mxu0 0.0
    %5400 = vmatpush1.msra.mxu0 0.0
    %5401 = vmatprep.subr.mxu0 0.0
    %5402 = vmatpush1.msra.mxu0 0.0
    %5403 = vmatprep.subr.mxu0 0.0
    %5404 = vmatpush1.msra.mxu0 0.0
    %5405 = vmatprep.subr.mxu0 0.0
    %5406 = vmatpush1.msra.mxu0 0.0
    %5407 = vmatprep.subr.mxu0 0.0
    %5408 = vmatpush1.msra.mxu0 0.0
    %5409 = vmatprep.subr.mxu0 0.0
    %5410 = vmatpush1.msra.mxu0 0.0
    %5411 = vmatprep.subr.mxu0 0.0
    %5412 = vmatpush1.msra.mxu0 0.0
    %5413 = vmatprep.subr.mxu0 0.0
    %5414 = vmatpush1.msra.mxu0 0.0
    %5415 = vmatprep.subr.mxu0 0.0
    %5416 = vmatpush1.msra.mxu0 0.0
    %5417 = vmatprep.subr.mxu0 0.0
    %5418 = vmatpush1.msra.mxu0 0.0
    %5419 = vmatprep.subr.mxu0 0.0
    %5420 = vmatpush1.msra.mxu0 0.0
    %5421 = vmatprep.subr.mxu0 0.0
    %5422 = vmatpush1.msra.mxu0 0.0
    %5423 = vmatprep.subr.mxu0 0.0
    %5424 = vmatpush1.msra.mxu0 0.0
    %5425 = vmatprep.subr.mxu0 0.0
    %5426 = vmatpush1.msra.mxu0 0.0
    %5427 = vmatprep.subr.mxu0 0.0
    %5428 = vmatpush1.msra.mxu0 0.0
    %5429 = vmatprep.subr.mxu0 0.0
    %5430 = vmatpush1.msra.mxu0 0.0
    %5431 = vmatprep.subr.mxu0 0.0
    %5432 = vmatpush1.msra.mxu0 0.0
    %5433 = vmatprep.subr.mxu0 0.0
    %5434 = vmatpush1.msra.mxu0 0.0
    %5435 = vmatprep.subr.mxu0 0.0
    %5436 = vmatpush1.msra.mxu0 0.0
    %5437 = vmatprep.subr.mxu0 0.0
    %5438 = vmatpush1.msra.mxu0 0.0
    %5439 = vmatprep.mubr.f32.mxu0 0.0
    %5440 = vmatmul.mubr.f32.gmra.mrb[0].mxu0 %v5373
    %v5441 = vpop.f32.mrb[0].mxu0
    %v5442 = vadd.f32 0.0, %v5441
    %v5443 = vpop.f32.mrb[0].mxu0
    %5444 = vdwg.mxu0
    %5445 = vrot.lane.b32.xlu0 %v3660, 48
    %v5446 = vpop.permute.xlu0 %5445
    %v5449 = vsel %vm332, %v5366, 0
    %5451 = vmatprep.subr.mxu0 0.0
    %5452 = vmatpush1.msra.mxu0 %v5446
    %5453 = vmatprep.subr.mxu0 0.0
    %5454 = vmatpush1.msra.mxu0 0.0
    %5455 = vmatprep.subr.mxu0 0.0
    %5456 = vmatpush1.msra.mxu0 0.0
    %5457 = vmatprep.subr.mxu0 0.0
    %5458 = vmatpush1.msra.mxu0 0.0
    %5459 = vmatprep.subr.mxu0 0.0
    %5460 = vmatpush1.msra.mxu0 0.0
    %5461 = vmatprep.subr.mxu0 0.0
    %5462 = vmatpush1.msra.mxu0 0.0
    %5463 = vmatprep.subr.mxu0 0.0
    %5464 = vmatpush1.msra.mxu0 0.0
    %5465 = vmatprep.subr.mxu0 0.0
    %5466 = vmatpush1.msra.mxu0 0.0
    %5467 = vmatprep.subr.mxu0 0.0
    %5468 = vmatpush1.msra.mxu0 0.0
    %5469 = vmatprep.subr.mxu0 0.0
    %5470 = vmatpush1.msra.mxu0 0.0
    %5471 = vmatprep.subr.mxu0 0.0
    %5472 = vmatpush1.msra.mxu0 0.0
    %5473 = vmatprep.subr.mxu0 0.0
    %5474 = vmatpush1.msra.mxu0 0.0
    %5475 = vmatprep.subr.mxu0 0.0
    %5476 = vmatpush1.msra.mxu0 0.0
    %5477 = vmatprep.subr.mxu0 0.0
    %5478 = vmatpush1.msra.mxu0 0.0
    %5479 = vmatprep.subr.mxu0 0.0
    %5480 = vmatpush1.msra.mxu0 0.0
    %5481 = vmatprep.subr.mxu0 0.0
    %5482 = vmatpush1.msra.mxu0 0.0
    %5483 = vmatprep.subr.mxu0 0.0
    %5484 = vmatpush1.msra.mxu0 0.0
    %5485 = vmatprep.subr.mxu0 0.0
    %5486 = vmatpush1.msra.mxu0 0.0
    %5487 = vmatprep.subr.mxu0 0.0
    %5488 = vmatpush1.msra.mxu0 0.0
    %5489 = vmatprep.subr.mxu0 0.0
    %5490 = vmatpush1.msra.mxu0 0.0
    %5491 = vmatprep.subr.mxu0 0.0
    %5492 = vmatpush1.msra.mxu0 0.0
    %5493 = vmatprep.subr.mxu0 0.0
    %5494 = vmatpush1.msra.mxu0 0.0
    %5495 = vmatprep.subr.mxu0 0.0
    %5496 = vmatpush1.msra.mxu0 0.0
    %5497 = vmatprep.subr.mxu0 0.0
    %5498 = vmatpush1.msra.mxu0 0.0
    %5499 = vmatprep.subr.mxu0 0.0
    %5500 = vmatpush1.msra.mxu0 0.0
    %5501 = vmatprep.subr.mxu0 0.0
    %5502 = vmatpush1.msra.mxu0 0.0
    %5503 = vmatprep.subr.mxu0 0.0
    %5504 = vmatpush1.msra.mxu0 0.0
    %5505 = vmatprep.subr.mxu0 0.0
    %5506 = vmatpush1.msra.mxu0 0.0
    %5507 = vmatprep.subr.mxu0 0.0
    %5508 = vmatpush1.msra.mxu0 0.0
    %5509 = vmatprep.subr.mxu0 0.0
    %5510 = vmatpush1.msra.mxu0 0.0
    %5511 = vmatprep.subr.mxu0 0.0
    %5512 = vmatpush1.msra.mxu0 0.0
    %5513 = vmatprep.subr.mxu0 0.0
    %5514 = vmatpush1.msra.mxu0 0.0
    %5515 = vmatprep.mubr.f32.mxu0 0.0
    %5516 = vmatmul.mubr.f32.gmra.mrb[0].mxu0 %v5449
    %v5517 = vpop.f32.mrb[0].mxu0
    %v5518 = vadd.f32 0.0, %v5517
    %v5519 = vpop.f32.mrb[0].mxu0
    %5520 = vdwg.mxu0
    %5521 = vrot.lane.b32.xlu0 %v3665, 48
    %v5522 = vpop.permute.xlu0 %5521
    %v5525 = vsel %vm332, %v5367, 0
    %5527 = vmatprep.subr.mxu0 0.0
    %5528 = vmatpush1.msra.mxu0 %v5522
    %5529 = vmatprep.subr.mxu0 0.0
    %5530 = vmatpush1.msra.mxu0 0.0
    %5531 = vmatprep.subr.mxu0 0.0
    %5532 = vmatpush1.msra.mxu0 0.0
    %5533 = vmatprep.subr.mxu0 0.0
    %5534 = vmatpush1.msra.mxu0 0.0
    %5535 = vmatprep.subr.mxu0 0.0
    %5536 = vmatpush1.msra.mxu0 0.0
    %5537 = vmatprep.subr.mxu0 0.0
    %5538 = vmatpush1.msra.mxu0 0.0
    %5539 = vmatprep.subr.mxu0 0.0
    %5540 = vmatpush1.msra.mxu0 0.0
    %5541 = vmatprep.subr.mxu0 0.0
    %5542 = vmatpush1.msra.mxu0 0.0
    %5543 = vmatprep.subr.mxu0 0.0
    %5544 = vmatpush1.msra.mxu0 0.0
    %5545 = vmatprep.subr.mxu0 0.0
    %5546 = vmatpush1.msra.mxu0 0.0
    %5547 = vmatprep.subr.mxu0 0.0
    %5548 = vmatpush1.msra.mxu0 0.0
    %5549 = vmatprep.subr.mxu0 0.0
    %5550 = vmatpush1.msra.mxu0 0.0
    %5551 = vmatprep.subr.mxu0 0.0
    %5552 = vmatpush1.msra.mxu0 0.0
    %5553 = vmatprep.subr.mxu0 0.0
    %5554 = vmatpush1.msra.mxu0 0.0
    %5555 = vmatprep.subr.mxu0 0.0
    %5556 = vmatpush1.msra.mxu0 0.0
    %5557 = vmatprep.subr.mxu0 0.0
    %5558 = vmatpush1.msra.mxu0 0.0
    %5559 = vmatprep.subr.mxu0 0.0
    %5560 = vmatpush1.msra.mxu0 0.0
    %5561 = vmatprep.subr.mxu0 0.0
    %5562 = vmatpush1.msra.mxu0 0.0
    %5563 = vmatprep.subr.mxu0 0.0
    %5564 = vmatpush1.msra.mxu0 0.0
    %5565 = vmatprep.subr.mxu0 0.0
    %5566 = vmatpush1.msra.mxu0 0.0
    %5567 = vmatprep.subr.mxu0 0.0
    %5568 = vmatpush1.msra.mxu0 0.0
    %5569 = vmatprep.subr.mxu0 0.0
    %5570 = vmatpush1.msra.mxu0 0.0
    %5571 = vmatprep.subr.mxu0 0.0
    %5572 = vmatpush1.msra.mxu0 0.0
    %5573 = vmatprep.subr.mxu0 0.0
    %5574 = vmatpush1.msra.mxu0 0.0
    %5575 = vmatprep.subr.mxu0 0.0
    %5576 = vmatpush1.msra.mxu0 0.0
    %5577 = vmatprep.subr.mxu0 0.0
    %5578 = vmatpush1.msra.mxu0 0.0
    %5579 = vmatprep.subr.mxu0 0.0
    %5580 = vmatpush1.msra.mxu0 0.0
    %5581 = vmatprep.subr.mxu0 0.0
    %5582 = vmatpush1.msra.mxu0 0.0
    %5583 = vmatprep.subr.mxu0 0.0
    %5584 = vmatpush1.msra.mxu0 0.0
    %5585 = vmatprep.subr.mxu0 0.0
    %5586 = vmatpush1.msra.mxu0 0.0
    %5587 = vmatprep.subr.mxu0 0.0
    %5588 = vmatpush1.msra.mxu0 0.0
    %5589 = vmatprep.subr.mxu0 0.0
    %5590 = vmatpush1.msra.mxu0 0.0
    %5591 = vmatprep.mubr.f32.mxu0 0.0
    %5592 = vmatmul.mubr.f32.gmra.mrb[0].mxu0 %v5525
    %v5593 = vpop.f32.mrb[0].mxu0
    %v5594 = vadd.f32 0.0, %v5593
    %v5595 = vpop.f32.mrb[0].mxu0
    %5596 = vdwg.mxu0
    %5597 = vrot.lane.b32.xlu0 %v3670, 48
    %v5598 = vpop.permute.xlu0 %5597
    %v5601 = vsel %vm332, %v5368, 0
    %5603 = vmatprep.subr.mxu0 0.0
    %5604 = vmatpush1.msra.mxu0 %v5598
    %5605 = vmatprep.subr.mxu0 0.0
    %5606 = vmatpush1.msra.mxu0 0.0
    %5607 = vmatprep.subr.mxu0 0.0
    %5608 = vmatpush1.msra.mxu0 0.0
    %5609 = vmatprep.subr.mxu0 0.0
    %5610 = vmatpush1.msra.mxu0 0.0
    %5611 = vmatprep.subr.mxu0 0.0
    %5612 = vmatpush1.msra.mxu0 0.0
    %5613 = vmatprep.subr.mxu0 0.0
    %5614 = vmatpush1.msra.mxu0 0.0
    %5615 = vmatprep.subr.mxu0 0.0
    %5616 = vmatpush1.msra.mxu0 0.0
    %5617 = vmatprep.subr.mxu0 0.0
    %5618 = vmatpush1.msra.mxu0 0.0
    %5619 = vmatprep.subr.mxu0 0.0
    %5620 = vmatpush1.msra.mxu0 0.0
    %5621 = vmatprep.subr.mxu0 0.0
    %5622 = vmatpush1.msra.mxu0 0.0
    %5623 = vmatprep.subr.mxu0 0.0
    %5624 = vmatpush1.msra.mxu0 0.0
    %5625 = vmatprep.subr.mxu0 0.0
    %5626 = vmatpush1.msra.mxu0 0.0
    %5627 = vmatprep.subr.mxu0 0.0
    %5628 = vmatpush1.msra.mxu0 0.0
    %5629 = vmatprep.subr.mxu0 0.0
    %5630 = vmatpush1.msra.mxu0 0.0
    %5631 = vmatprep.subr.mxu0 0.0
    %5632 = vmatpush1.msra.mxu0 0.0
    %5633 = vmatprep.subr.mxu0 0.0
    %5634 = vmatpush1.msra.mxu0 0.0
    %5635 = vmatprep.subr.mxu0 0.0
    %5636 = vmatpush1.msra.mxu0 0.0
    %5637 = vmatprep.subr.mxu0 0.0
    %5638 = vmatpush1.msra.mxu0 0.0
    %5639 = vmatprep.subr.mxu0 0.0
    %5640 = vmatpush1.msra.mxu0 0.0
    %5641 = vmatprep.subr.mxu0 0.0
    %5642 = vmatpush1.msra.mxu0 0.0
    %5643 = vmatprep.subr.mxu0 0.0
    %5644 = vmatpush1.msra.mxu0 0.0
    %5645 = vmatprep.subr.mxu0 0.0
    %5646 = vmatpush1.msra.mxu0 0.0
    %5647 = vmatprep.subr.mxu0 0.0
    %5648 = vmatpush1.msra.mxu0 0.0
    %5649 = vmatprep.subr.mxu0 0.0
    %5650 = vmatpush1.msra.mxu0 0.0
    %5651 = vmatprep.subr.mxu0 0.0
    %5652 = vmatpush1.msra.mxu0 0.0
    %5653 = vmatprep.subr.mxu0 0.0
    %5654 = vmatpush1.msra.mxu0 0.0
    %5655 = vmatprep.subr.mxu0 0.0
    %5656 = vmatpush1.msra.mxu0 0.0
    %5657 = vmatprep.subr.mxu0 0.0
    %5658 = vmatpush1.msra.mxu0 0.0
    %5659 = vmatprep.subr.mxu0 0.0
    %5660 = vmatpush1.msra.mxu0 0.0
    %5661 = vmatprep.subr.mxu0 0.0
    %5662 = vmatpush1.msra.mxu0 0.0
    %5663 = vmatprep.subr.mxu0 0.0
    %5664 = vmatpush1.msra.mxu0 0.0
    %5665 = vmatprep.subr.mxu0 0.0
    %5666 = vmatpush1.msra.mxu0 0.0
    %5667 = vmatprep.mubr.f32.mxu0 0.0
    %5668 = vmatmul.mubr.f32.gmra.mrb[0].mxu0 %v5601
    %v5669 = vpop.f32.mrb[0].mxu0
    %v5670 = vadd.f32 0.0, %v5669
    %v5671 = vpop.f32.mrb[0].mxu0
    %5672 = vdwg.mxu0
    %5673 = vrot.lane.b32.xlu0 %v3655, 104
    %v5674 = vpop.permute.xlu0 %5673
    %5675 = vrot.lane.b32.xlu0 %v3655, 72
    %v5676 = vpop.permute.xlu0 %5675
    %v5677 = vsel %vm332, %v5674, 0
    %v5679 = vsel %vm332, %v5676, 0
    %5681 = vmatprep.subr.mxu0 0.0
    %5682 = vmatpush1.xpose.msra.mxu0 %v5679
    %5683 = vmatprep.subr.mxu0 0.0
    %5684 = vmatpush1.xpose.msra.mxu0 0.0
    %5685 = vmatprep.subr.mxu0 0.0
    %5686 = vmatpush1.xpose.msra.mxu0 0.0
    %5687 = vmatprep.subr.mxu0 0.0
    %5688 = vmatpush1.xpose.msra.mxu0 0.0
    %5689 = vmatprep.subr.mxu0 0.0
    %5690 = vmatpush1.xpose.msra.mxu0 0.0
    %5691 = vmatprep.subr.mxu0 0.0
    %5692 = vmatpush1.xpose.msra.mxu0 0.0
    %5693 = vmatprep.subr.mxu0 0.0
    %5694 = vmatpush1.xpose.msra.mxu0 0.0
    %5695 = vmatprep.subr.mxu0 0.0
    %5696 = vmatpush1.xpose.msra.mxu0 0.0
    %5697 = vmatprep.subr.mxu0 0.0
    %5698 = vmatpush1.xpose.msra.mxu0 0.0
    %5699 = vmatprep.subr.mxu0 0.0
    %5700 = vmatpush1.xpose.msra.mxu0 0.0
    %5701 = vmatprep.subr.mxu0 0.0
    %5702 = vmatpush1.xpose.msra.mxu0 0.0
    %5703 = vmatprep.subr.mxu0 0.0
    %5704 = vmatpush1.xpose.msra.mxu0 0.0
    %5705 = vmatprep.subr.mxu0 0.0
    %5706 = vmatpush1.xpose.msra.mxu0 0.0
    %5707 = vmatprep.subr.mxu0 0.0
    %5708 = vmatpush1.xpose.msra.mxu0 0.0
    %5709 = vmatprep.subr.mxu0 0.0
    %5710 = vmatpush1.xpose.msra.mxu0 0.0
    %5711 = vmatprep.subr.mxu0 0.0
    %5712 = vmatpush1.xpose.msra.mxu0 0.0
    %5713 = vmatprep.subr.mxu0 0.0
    %5714 = vmatpush1.xpose.msra.mxu0 0.0
    %5715 = vmatprep.subr.mxu0 0.0
    %5716 = vmatpush1.xpose.msra.mxu0 0.0
    %5717 = vmatprep.subr.mxu0 0.0
    %5718 = vmatpush1.xpose.msra.mxu0 0.0
    %5719 = vmatprep.subr.mxu0 0.0
    %5720 = vmatpush1.xpose.msra.mxu0 0.0
    %5721 = vmatprep.subr.mxu0 0.0
    %5722 = vmatpush1.xpose.msra.mxu0 0.0
    %5723 = vmatprep.subr.mxu0 0.0
    %5724 = vmatpush1.xpose.msra.mxu0 0.0
    %5725 = vmatprep.subr.mxu0 0.0
    %5726 = vmatpush1.xpose.msra.mxu0 0.0
    %5727 = vmatprep.subr.mxu0 0.0
    %5728 = vmatpush1.xpose.msra.mxu0 0.0
    %5729 = vmatprep.subr.mxu0 0.0
    %5730 = vmatpush1.xpose.msra.mxu0 0.0
    %5731 = vmatprep.subr.mxu0 0.0
    %5732 = vmatpush1.xpose.msra.mxu0 0.0
    %5733 = vmatprep.subr.mxu0 0.0
    %5734 = vmatpush1.xpose.msra.mxu0 0.0
    %5735 = vmatprep.subr.mxu0 0.0
    %5736 = vmatpush1.xpose.msra.mxu0 0.0
    %5737 = vmatprep.subr.mxu0 0.0
    %5738 = vmatpush1.xpose.msra.mxu0 0.0
    %5739 = vmatprep.subr.mxu0 0.0
    %5740 = vmatpush1.xpose.msra.mxu0 0.0
    %5741 = vmatprep.subr.mxu0 0.0
    %5742 = vmatpush1.xpose.msra.mxu0 0.0
    %5743 = vmatprep.subr.mxu0 0.0
    %5744 = vmatpush1.xpose.msra.mxu0 0.0
    %5745 = vmatprep.mubr.f32.mxu0 0.0
    %5746 = vmatmul.mubr.f32.gmra.mrb[0].mxu0 %v5677
    %v5747 = vpop.f32.mrb[0].mxu0
    %v5748 = vadd.f32 0.0, %v5747
    %v5749 = vpop.f32.mrb[0].mxu0
    %5750 = vdwg.mxu0
    %5751 = vrot.lane.b32.xlu0 %v3660, 104
    %v5752 = vpop.permute.xlu0 %5751
    %5753 = vrot.lane.b32.xlu0 %v3660, 72
    %v5754 = vpop.permute.xlu0 %5753
    %v5755 = vsel %vm332, %v5752, 0
    %v5757 = vsel %vm332, %v5754, 0
    %5759 = vmatprep.subr.mxu0 0.0
    %5760 = vmatpush1.xpose.msra.mxu0 %v5757
    %5761 = vmatprep.subr.mxu0 0.0
    %5762 = vmatpush1.xpose.msra.mxu0 0.0
    %5763 = vmatprep.subr.mxu0 0.0
    %5764 = vmatpush1.xpose.msra.mxu0 0.0
    %5765 = vmatprep.subr.mxu0 0.0
    %5766 = vmatpush1.xpose.msra.mxu0 0.0
    %5767 = vmatprep.subr.mxu0 0.0
    %5768 = vmatpush1.xpose.msra.mxu0 0.0
    %5769 = vmatprep.subr.mxu0 0.0
    %5770 = vmatpush1.xpose.msra.mxu0 0.0
    %5771 = vmatprep.subr.mxu0 0.0
    %5772 = vmatpush1.xpose.msra.mxu0 0.0
    %5773 = vmatprep.subr.mxu0 0.0
    %5774 = vmatpush1.xpose.msra.mxu0 0.0
    %5775 = vmatprep.subr.mxu0 0.0
    %5776 = vmatpush1.xpose.msra.mxu0 0.0
    %5777 = vmatprep.subr.mxu0 0.0
    %5778 = vmatpush1.xpose.msra.mxu0 0.0
    %5779 = vmatprep.subr.mxu0 0.0
    %5780 = vmatpush1.xpose.msra.mxu0 0.0
    %5781 = vmatprep.subr.mxu0 0.0
    %5782 = vmatpush1.xpose.msra.mxu0 0.0
    %5783 = vmatprep.subr.mxu0 0.0
    %5784 = vmatpush1.xpose.msra.mxu0 0.0
    %5785 = vmatprep.subr.mxu0 0.0
    %5786 = vmatpush1.xpose.msra.mxu0 0.0
    %5787 = vmatprep.subr.mxu0 0.0
    %5788 = vmatpush1.xpose.msra.mxu0 0.0
    %5789 = vmatprep.subr.mxu0 0.0
    %5790 = vmatpush1.xpose.msra.mxu0 0.0
    %5791 = vmatprep.subr.mxu0 0.0
    %5792 = vmatpush1.xpose.msra.mxu0 0.0
    %5793 = vmatprep.subr.mxu0 0.0
    %5794 = vmatpush1.xpose.msra.mxu0 0.0
    %5795 = vmatprep.subr.mxu0 0.0
    %5796 = vmatpush1.xpose.msra.mxu0 0.0
    %5797 = vmatprep.subr.mxu0 0.0
    %5798 = vmatpush1.xpose.msra.mxu0 0.0
    %5799 = vmatprep.subr.mxu0 0.0
    %5800 = vmatpush1.xpose.msra.mxu0 0.0
    %5801 = vmatprep.subr.mxu0 0.0
    %5802 = vmatpush1.xpose.msra.mxu0 0.0
    %5803 = vmatprep.subr.mxu0 0.0
    %5804 = vmatpush1.xpose.msra.mxu0 0.0
    %5805 = vmatprep.subr.mxu0 0.0
    %5806 = vmatpush1.xpose.msra.mxu0 0.0
    %5807 = vmatprep.subr.mxu0 0.0
    %5808 = vmatpush1.xpose.msra.mxu0 0.0
    %5809 = vmatprep.subr.mxu0 0.0
    %5810 = vmatpush1.xpose.msra.mxu0 0.0
    %5811 = vmatprep.subr.mxu0 0.0
    %5812 = vmatpush1.xpose.msra.mxu0 0.0
    %5813 = vmatprep.subr.mxu0 0.0
    %5814 = vmatpush1.xpose.msra.mxu0 0.0
    %5815 = vmatprep.subr.mxu0 0.0
    %5816 = vmatpush1.xpose.msra.mxu0 0.0
    %5817 = vmatprep.subr.mxu0 0.0
    %5818 = vmatpush1.xpose.msra.mxu0 0.0
    %5819 = vmatprep.subr.mxu0 0.0
    %5820 = vmatpush1.xpose.msra.mxu0 0.0
    %5821 = vmatprep.subr.mxu0 0.0
    %5822 = vmatpush1.xpose.msra.mxu0 0.0
    %5823 = vmatprep.mubr.f32.mxu0 0.0
    %5824 = vmatmul.mubr.f32.gmra.mrb[0].mxu0 %v5755
    %v5825 = vpop.f32.mrb[0].mxu0
    %v5826 = vadd.f32 0.0, %v5825
    %v5827 = vpop.f32.mrb[0].mxu0
    %5828 = vdwg.mxu0
    %5829 = vrot.lane.b32.xlu0 %v3665, 104
    %v5830 = vpop.permute.xlu0 %5829
    %5831 = vrot.lane.b32.xlu0 %v3665, 72
    %v5832 = vpop.permute.xlu0 %5831
    %v5833 = vsel %vm332, %v5830, 0
    %v5835 = vsel %vm332, %v5832, 0
    %5837 = vmatprep.subr.mxu0 0.0
    %5838 = vmatpush1.xpose.msra.mxu0 %v5835
    %5839 = vmatprep.subr.mxu0 0.0
    %5840 = vmatpush1.xpose.msra.mxu0 0.0
    %5841 = vmatprep.subr.mxu0 0.0
    %5842 = vmatpush1.xpose.msra.mxu0 0.0
    %5843 = vmatprep.subr.mxu0 0.0
    %5844 = vmatpush1.xpose.msra.mxu0 0.0
    %5845 = vmatprep.subr.mxu0 0.0
    %5846 = vmatpush1.xpose.msra.mxu0 0.0
    %5847 = vmatprep.subr.mxu0 0.0
    %5848 = vmatpush1.xpose.msra.mxu0 0.0
    %5849 = vmatprep.subr.mxu0 0.0
    %5850 = vmatpush1.xpose.msra.mxu0 0.0
    %5851 = vmatprep.subr.mxu0 0.0
    %5852 = vmatpush1.xpose.msra.mxu0 0.0
    %5853 = vmatprep.subr.mxu0 0.0
    %5854 = vmatpush1.xpose.msra.mxu0 0.0
    %5855 = vmatprep.subr.mxu0 0.0
    %5856 = vmatpush1.xpose.msra.mxu0 0.0
    %5857 = vmatprep.subr.mxu0 0.0
    %5858 = vmatpush1.xpose.msra.mxu0 0.0
    %5859 = vmatprep.subr.mxu0 0.0
    %5860 = vmatpush1.xpose.msra.mxu0 0.0
    %5861 = vmatprep.subr.mxu0 0.0
    %5862 = vmatpush1.xpose.msra.mxu0 0.0
    %5863 = vmatprep.subr.mxu0 0.0
    %5864 = vmatpush1.xpose.msra.mxu0 0.0
    %5865 = vmatprep.subr.mxu0 0.0
    %5866 = vmatpush1.xpose.msra.mxu0 0.0
    %5867 = vmatprep.subr.mxu0 0.0
    %5868 = vmatpush1.xpose.msra.mxu0 0.0
    %5869 = vmatprep.subr.mxu0 0.0
    %5870 = vmatpush1.xpose.msra.mxu0 0.0
    %5871 = vmatprep.subr.mxu0 0.0
    %5872 = vmatpush1.xpose.msra.mxu0 0.0
    %5873 = vmatprep.subr.mxu0 0.0
    %5874 = vmatpush1.xpose.msra.mxu0 0.0
    %5875 = vmatprep.subr.mxu0 0.0
    %5876 = vmatpush1.xpose.msra.mxu0 0.0
    %5877 = vmatprep.subr.mxu0 0.0
    %5878 = vmatpush1.xpose.msra.mxu0 0.0
    %5879 = vmatprep.subr.mxu0 0.0
    %5880 = vmatpush1.xpose.msra.mxu0 0.0
    %5881 = vmatprep.subr.mxu0 0.0
    %5882 = vmatpush1.xpose.msra.mxu0 0.0
    %5883 = vmatprep.subr.mxu0 0.0
    %5884 = vmatpush1.xpose.msra.mxu0 0.0
    %5885 = vmatprep.subr.mxu0 0.0
    %5886 = vmatpush1.xpose.msra.mxu0 0.0
    %5887 = vmatprep.subr.mxu0 0.0
    %5888 = vmatpush1.xpose.msra.mxu0 0.0
    %5889 = vmatprep.subr.mxu0 0.0
    %5890 = vmatpush1.xpose.msra.mxu0 0.0
    %5891 = vmatprep.subr.mxu0 0.0
    %5892 = vmatpush1.xpose.msra.mxu0 0.0
    %5893 = vmatprep.subr.mxu0 0.0
    %5894 = vmatpush1.xpose.msra.mxu0 0.0
    %5895 = vmatprep.subr.mxu0 0.0
    %5896 = vmatpush1.xpose.msra.mxu0 0.0
    %5897 = vmatprep.subr.mxu0 0.0
    %5898 = vmatpush1.xpose.msra.mxu0 0.0
    %5899 = vmatprep.subr.mxu0 0.0
    %5900 = vmatpush1.xpose.msra.mxu0 0.0
    %5901 = vmatprep.mubr.f32.mxu0 0.0
    %5902 = vmatmul.mubr.f32.gmra.mrb[0].mxu0 %v5833
    %v5903 = vpop.f32.mrb[0].mxu0
    %v5904 = vadd.f32 0.0, %v5903
    %v5905 = vpop.f32.mrb[0].mxu0
    %5906 = vdwg.mxu0
    %5907 = vrot.lane.b32.xlu0 %v3670, 104
    %v5908 = vpop.permute.xlu0 %5907
    %5909 = vrot.lane.b32.xlu0 %v3670, 72
    %v5910 = vpop.permute.xlu0 %5909
    %v5911 = vsel %vm332, %v5908, 0
    %v5913 = vsel %vm332, %v5910, 0
    %5915 = vmatprep.subr.mxu0 0.0
    %5916 = vmatpush1.xpose.msra.mxu0 %v5913
    %5917 = vmatprep.subr.mxu0 0.0
    %5918 = vmatpush1.xpose.msra.mxu0 0.0
    %5919 = vmatprep.subr.mxu0 0.0
    %5920 = vmatpush1.xpose.msra.mxu0 0.0
    %5921 = vmatprep.subr.mxu0 0.0
    %5922 = vmatpush1.xpose.msra.mxu0 0.0
    %5923 = vmatprep.subr.mxu0 0.0
    %5924 = vmatpush1.xpose.msra.mxu0 0.0
    %5925 = vmatprep.subr.mxu0 0.0
    %5926 = vmatpush1.xpose.msra.mxu0 0.0
    %5927 = vmatprep.subr.mxu0 0.0
    %5928 = vmatpush1.xpose.msra.mxu0 0.0
    %5929 = vmatprep.subr.mxu0 0.0
    %5930 = vmatpush1.xpose.msra.mxu0 0.0
    %5931 = vmatprep.subr.mxu0 0.0
    %5932 = vmatpush1.xpose.msra.mxu0 0.0
    %5933 = vmatprep.subr.mxu0 0.0
    %5934 = vmatpush1.xpose.msra.mxu0 0.0
    %5935 = vmatprep.subr.mxu0 0.0
    %5936 = vmatpush1.xpose.msra.mxu0 0.0
    %5937 = vmatprep.subr.mxu0 0.0
    %5938 = vmatpush1.xpose.msra.mxu0 0.0
    %5939 = vmatprep.subr.mxu0 0.0
    %5940 = vmatpush1.xpose.msra.mxu0 0.0
    %5941 = vmatprep.subr.mxu0 0.0
    %5942 = vmatpush1.xpose.msra.mxu0 0.0
    %5943 = vmatprep.subr.mxu0 0.0
    %5944 = vmatpush1.xpose.msra.mxu0 0.0
    %5945 = vmatprep.subr.mxu0 0.0
    %5946 = vmatpush1.xpose.msra.mxu0 0.0
    %5947 = vmatprep.subr.mxu0 0.0
    %5948 = vmatpush1.xpose.msra.mxu0 0.0
    %5949 = vmatprep.subr.mxu0 0.0
    %5950 = vmatpush1.xpose.msra.mxu0 0.0
    %5951 = vmatprep.subr.mxu0 0.0
    %5952 = vmatpush1.xpose.msra.mxu0 0.0
    %5953 = vmatprep.subr.mxu0 0.0
    %5954 = vmatpush1.xpose.msra.mxu0 0.0
    %5955 = vmatprep.subr.mxu0 0.0
    %5956 = vmatpush1.xpose.msra.mxu0 0.0
    %5957 = vmatprep.subr.mxu0 0.0
    %5958 = vmatpush1.xpose.msra.mxu0 0.0
    %5959 = vmatprep.subr.mxu0 0.0
    %5960 = vmatpush1.xpose.msra.mxu0 0.0
    %5961 = vmatprep.subr.mxu0 0.0
    %5962 = vmatpush1.xpose.msra.mxu0 0.0
    %5963 = vmatprep.subr.mxu0 0.0
    %5964 = vmatpush1.xpose.msra.mxu0 0.0
    %5965 = vmatprep.subr.mxu0 0.0
    %5966 = vmatpush1.xpose.msra.mxu0 0.0
    %5967 = vmatprep.subr.mxu0 0.0
    %5968 = vmatpush1.xpose.msra.mxu0 0.0
    %5969 = vmatprep.subr.mxu0 0.0
    %5970 = vmatpush1.xpose.msra.mxu0 0.0
    %5971 = vmatprep.subr.mxu0 0.0
    %5972 = vmatpush1.xpose.msra.mxu0 0.0
    %5973 = vmatprep.subr.mxu0 0.0
    %5974 = vmatpush1.xpose.msra.mxu0 0.0
    %5975 = vmatprep.subr.mxu0 0.0
    %5976 = vmatpush1.xpose.msra.mxu0 0.0
    %5977 = vmatprep.subr.mxu0 0.0
    %5978 = vmatpush1.xpose.msra.mxu0 0.0
    %5979 = vmatprep.mubr.f32.mxu0 0.0
    %5980 = vmatmul.mubr.f32.gmra.mrb[0].mxu0 %v5911
    %v5981 = vpop.f32.mrb[0].mxu0
    %v5982 = vadd.f32 0.0, %v5981
    %v5983 = vpop.f32.mrb[0].mxu0
    %5984 = vdwg.mxu0
    %v5985 = vmul.f32 %v5748, 0.35355338
    %v5986 = vmul.f32 %v5826, 0.35355338
    %v5987 = vmul.f32 %v5904, 0.35355338
    %v5988 = vmul.f32 %v5982, 0.35355338
    %v5989 = vadd.f32 %v5985, %v212
    %v5990 = vadd.f32 %v5986, %v216
    %v5991 = vadd.f32 %v5987, %v220
    %v5992 = vadd.f32 %v5988, %v224
    %v5993 = vsel %vm332, %v5989, -inf
    %5994 = vmax.xlane.f32.xlu0 %v5993
    %v5995 = vpop.xlane.xlu0 %5994
    %v5996 = vsel %vm332, %v5990, -inf
    %5997 = vmax.xlane.f32.xlu0 %v5996
    %v5998 = vpop.xlane.xlu0 %5997
    %v5999 = vsel %vm332, %v5991, -inf
    %6000 = vmax.xlane.f32.xlu0 %v5999
    %v6001 = vpop.xlane.xlu0 %6000
    %v6002 = vsel %vm332, %v5992, -inf
    %6003 = vmax.xlane.f32.xlu0 %v6002
    %v6004 = vpop.xlane.xlu0 %6003
    %v6005 = vsub.f32 %v5989, %v5995
    %v6006 = vsub.f32 %v5990, %v5998
    %v6007 = vsub.f32 %v5991, %v6001
    %v6008 = vsub.f32 %v5992, %v6004
    %v6009 = vmul.f32 %v6005, 1.442695
    %v6010 = vpow.pop %v6009
    %v6011 = vmul.f32 %v6006, 1.442695
    %v6012 = vpow.pop %v6011
    %v6013 = vmul.f32 %v6007, 1.442695
    %v6014 = vpow.pop %v6013
    %v6015 = vmul.f32 %v6008, 1.442695
    %v6016 = vpow.pop %v6015
    %v6017 = vsel %vm332, %v6010, 0.0
    %6018 = vadd.xlane.f32.xlu0 %v6017
    %v6019 = vpop.xlane.xlu0 %6018
    %v6020 = vsel %vm332, %v6012, 0.0
    %6021 = vadd.xlane.f32.xlu0 %v6020
    %v6022 = vpop.xlane.xlu0 %6021
    %v6023 = vsel %vm332, %v6014, 0.0
    %6024 = vadd.xlane.f32.xlu0 %v6023
    %v6025 = vpop.xlane.xlu0 %6024
    %v6026 = vsel %vm332, %v6016, 0.0
    %6027 = vadd.xlane.f32.xlu0 %v6026
    %v6028 = vpop.xlane.xlu0 %6027
    %v6029 = vrcp.pop %v6019
    %v6030 = vrcp.pop %v6022
    %v6031 = vrcp.pop %v6025
    %v6032 = vrcp.pop %v6028
    %v6033 = vmul.f32 %v6010, %v6029
    %v6034 = vmul.f32 %v6012, %v6030
    %v6035 = vmul.f32 %v6014, %v6031
    %v6036 = vmul.f32 %v6016, %v6032
    %6037 = vrot.lane.b32.xlu0 %v3655, 40
    %v6038 = vpop.permute.xlu0 %6037
    %v6041 = vsel %vm332, %v6033, 0
    %6043 = vmatprep.subr.mxu0 0.0
    %6044 = vmatpush1.msra.mxu0 %v6038
    %6045 = vmatprep.subr.mxu0 0.0
    %6046 = vmatpush1.msra.mxu0 0.0
    %6047 = vmatprep.subr.mxu0 0.0
    %6048 = vmatpush1.msra.mxu0 0.0
    %6049 = vmatprep.subr.mxu0 0.0
    %6050 = vmatpush1.msra.mxu0 0.0
    %6051 = vmatprep.subr.mxu0 0.0
    %6052 = vmatpush1.msra.mxu0 0.0
    %6053 = vmatprep.subr.mxu0 0.0
    %6054 = vmatpush1.msra.mxu0 0.0
    %6055 = vmatprep.subr.mxu0 0.0
    %6056 = vmatpush1.msra.mxu0 0.0
    %6057 = vmatprep.subr.mxu0 0.0
    %6058 = vmatpush1.msra.mxu0 0.0
    %6059 = vmatprep.subr.mxu0 0.0
    %6060 = vmatpush1.msra.mxu0 0.0
    %6061 = vmatprep.subr.mxu0 0.0
    %6062 = vmatpush1.msra.mxu0 0.0
    %6063 = vmatprep.subr.mxu0 0.0
    %6064 = vmatpush1.msra.mxu0 0.0
    %6065 = vmatprep.subr.mxu0 0.0
    %6066 = vmatpush1.msra.mxu0 0.0
    %6067 = vmatprep.subr.mxu0 0.0
    %6068 = vmatpush1.msra.mxu0 0.0
    %6069 = vmatprep.subr.mxu0 0.0
    %6070 = vmatpush1.msra.mxu0 0.0
    %6071 = vmatprep.subr.mxu0 0.0
    %6072 = vmatpush1.msra.mxu0 0.0
    %6073 = vmatprep.subr.mxu0 0.0
    %6074 = vmatpush1.msra.mxu0 0.0
    %6075 = vmatprep.subr.mxu0 0.0
    %6076 = vmatpush1.msra.mxu0 0.0
    %6077 = vmatprep.subr.mxu0 0.0
    %6078 = vmatpush1.msra.mxu0 0.0
    %6079 = vmatprep.subr.mxu0 0.0
    %6080 = vmatpush1.msra.mxu0 0.0
    %6081 = vmatprep.subr.mxu0 0.0
    %6082 = vmatpush1.msra.mxu0 0.0
    %6083 = vmatprep.subr.mxu0 0.0
    %6084 = vmatpush1.msra.mxu0 0.0
    %6085 = vmatprep.subr.mxu0 0.0
    %6086 = vmatpush1.msra.mxu0 0.0
    %6087 = vmatprep.subr.mxu0 0.0
    %6088 = vmatpush1.msra.mxu0 0.0
    %6089 = vmatprep.subr.mxu0 0.0
    %6090 = vmatpush1.msra.mxu0 0.0
    %6091 = vmatprep.subr.mxu0 0.0
    %6092 = vmatpush1.msra.mxu0 0.0
    %6093 = vmatprep.subr.mxu0 0.0
    %6094 = vmatpush1.msra.mxu0 0.0
    %6095 = vmatprep.subr.mxu0 0.0
    %6096 = vmatpush1.msra.mxu0 0.0
    %6097 = vmatprep.subr.mxu0 0.0
    %6098 = vmatpush1.msra.mxu0 0.0
    %6099 = vmatprep.subr.mxu0 0.0
    %6100 = vmatpush1.msra.mxu0 0.0
    %6101 = vmatprep.subr.mxu0 0.0
    %6102 = vmatpush1.msra.mxu0 0.0
    %6103 = vmatprep.subr.mxu0 0.0
    %6104 = vmatpush1.msra.mxu0 0.0
    %6105 = vmatprep.subr.mxu0 0.0
    %6106 = vmatpush1.msra.mxu0 0.0
    %6107 = vmatprep.mubr.f32.mxu0 0.0
    %6108 = vmatmul.mubr.f32.gmra.mrb[0].mxu0 %v6041
    %v6109 = vpop.f32.mrb[0].mxu0
    %v6110 = vadd.f32 0.0, %v6109
    %v6111 = vpop.f32.mrb[0].mxu0
    %6112 = vdwg.mxu0
    %6113 = vrot.lane.b32.xlu0 %v3660, 40
    %v6114 = vpop.permute.xlu0 %6113
    %v6117 = vsel %vm332, %v6034, 0
    %6119 = vmatprep.subr.mxu0 0.0
    %6120 = vmatpush1.msra.mxu0 %v6114
    %6121 = vmatprep.subr.mxu0 0.0
    %6122 = vmatpush1.msra.mxu0 0.0
    %6123 = vmatprep.subr.mxu0 0.0
    %6124 = vmatpush1.msra.mxu0 0.0
    %6125 = vmatprep.subr.mxu0 0.0
    %6126 = vmatpush1.msra.mxu0 0.0
    %6127 = vmatprep.subr.mxu0 0.0
    %6128 = vmatpush1.msra.mxu0 0.0
    %6129 = vmatprep.subr.mxu0 0.0
    %6130 = vmatpush1.msra.mxu0 0.0
    %6131 = vmatprep.subr.mxu0 0.0
    %6132 = vmatpush1.msra.mxu0 0.0
    %6133 = vmatprep.subr.mxu0 0.0
    %6134 = vmatpush1.msra.mxu0 0.0
    %6135 = vmatprep.subr.mxu0 0.0
    %6136 = vmatpush1.msra.mxu0 0.0
    %6137 = vmatprep.subr.mxu0 0.0
    %6138 = vmatpush1.msra.mxu0 0.0
    %6139 = vmatprep.subr.mxu0 0.0
    %6140 = vmatpush1.msra.mxu0 0.0
    %6141 = vmatprep.subr.mxu0 0.0
    %6142 = vmatpush1.msra.mxu0 0.0
    %6143 = vmatprep.subr.mxu0 0.0
    %6144 = vmatpush1.msra.mxu0 0.0
    %6145 = vmatprep.subr.mxu0 0.0
    %6146 = vmatpush1.msra.mxu0 0.0
    %6147 = vmatprep.subr.mxu0 0.0
    %6148 = vmatpush1.msra.mxu0 0.0
    %6149 = vmatprep.subr.mxu0 0.0
    %6150 = vmatpush1.msra.mxu0 0.0
    %6151 = vmatprep.subr.mxu0 0.0
    %6152 = vmatpush1.msra.mxu0 0.0
    %6153 = vmatprep.subr.mxu0 0.0
    %6154 = vmatpush1.msra.mxu0 0.0
    %6155 = vmatprep.subr.mxu0 0.0
    %6156 = vmatpush1.msra.mxu0 0.0
    %6157 = vmatprep.subr.mxu0 0.0
    %6158 = vmatpush1.msra.mxu0 0.0
    %6159 = vmatprep.subr.mxu0 0.0
    %6160 = vmatpush1.msra.mxu0 0.0
    %6161 = vmatprep.subr.mxu0 0.0
    %6162 = vmatpush1.msra.mxu0 0.0
    %6163 = vmatprep.subr.mxu0 0.0
    %6164 = vmatpush1.msra.mxu0 0.0
    %6165 = vmatprep.subr.mxu0 0.0
    %6166 = vmatpush1.msra.mxu0 0.0
    %6167 = vmatprep.subr.mxu0 0.0
    %6168 = vmatpush1.msra.mxu0 0.0
    %6169 = vmatprep.subr.mxu0 0.0
    %6170 = vmatpush1.msra.mxu0 0.0
    %6171 = vmatprep.subr.mxu0 0.0
    %6172 = vmatpush1.msra.mxu0 0.0
    %6173 = vmatprep.subr.mxu0 0.0
    %6174 = vmatpush1.msra.mxu0 0.0
    %6175 = vmatprep.subr.mxu0 0.0
    %6176 = vmatpush1.msra.mxu0 0.0
    %6177 = vmatprep.subr.mxu0 0.0
    %6178 = vmatpush1.msra.mxu0 0.0
    %6179 = vmatprep.subr.mxu0 0.0
    %6180 = vmatpush1.msra.mxu0 0.0
    %6181 = vmatprep.subr.mxu0 0.0
    %6182 = vmatpush1.msra.mxu0 0.0
    %6183 = vmatprep.mubr.f32.mxu0 0.0
    %6184 = vmatmul.mubr.f32.gmra.mrb[0].mxu0 %v6117
    %v6185 = vpop.f32.mrb[0].mxu0
    %v6186 = vadd.f32 0.0, %v6185
    %v6187 = vpop.f32.mrb[0].mxu0
    %6188 = vdwg.mxu0
    %6189 = vrot.lane.b32.xlu0 %v3665, 40
    %v6190 = vpop.permute.xlu0 %6189
    %v6193 = vsel %vm332, %v6035, 0
    %6195 = vmatprep.subr.mxu0 0.0
    %6196 = vmatpush1.msra.mxu0 %v6190
    %6197 = vmatprep.subr.mxu0 0.0
    %6198 = vmatpush1.msra.mxu0 0.0
    %6199 = vmatprep.subr.mxu0 0.0
    %6200 = vmatpush1.msra.mxu0 0.0
    %6201 = vmatprep.subr.mxu0 0.0
    %6202 = vmatpush1.msra.mxu0 0.0
    %6203 = vmatprep.subr.mxu0 0.0
    %6204 = vmatpush1.msra.mxu0 0.0
    %6205 = vmatprep.subr.mxu0 0.0
    %6206 = vmatpush1.msra.mxu0 0.0
    %6207 = vmatprep.subr.mxu0 0.0
    %6208 = vmatpush1.msra.mxu0 0.0
    %6209 = vmatprep.subr.mxu0 0.0
    %6210 = vmatpush1.msra.mxu0 0.0
    %6211 = vmatprep.subr.mxu0 0.0
    %6212 = vmatpush1.msra.mxu0 0.0
    %6213 = vmatprep.subr.mxu0 0.0
    %6214 = vmatpush1.msra.mxu0 0.0
    %6215 = vmatprep.subr.mxu0 0.0
    %6216 = vmatpush1.msra.mxu0 0.0
    %6217 = vmatprep.subr.mxu0 0.0
    %6218 = vmatpush1.msra.mxu0 0.0
    %6219 = vmatprep.subr.mxu0 0.0
    %6220 = vmatpush1.msra.mxu0 0.0
    %6221 = vmatprep.subr.mxu0 0.0
    %6222 = vmatpush1.msra.mxu0 0.0
    %6223 = vmatprep.subr.mxu0 0.0
    %6224 = vmatpush1.msra.mxu0 0.0
    %6225 = vmatprep.subr.mxu0 0.0
    %6226 = vmatpush1.msra.mxu0 0.0
    %6227 = vmatprep.subr.mxu0 0.0
    %6228 = vmatpush1.msra.mxu0 0.0
    %6229 = vmatprep.subr.mxu0 0.0
    %6230 = vmatpush1.msra.mxu0 0.0
    %6231 = vmatprep.subr.mxu0 0.0
    %6232 = vmatpush1.msra.mxu0 0.0
    %6233 = vmatprep.subr.mxu0 0.0
    %6234 = vmatpush1.msra.mxu0 0.0
    %6235 = vmatprep.subr.mxu0 0.0
    %6236 = vmatpush1.msra.mxu0 0.0
    %6237 = vmatprep.subr.mxu0 0.0
    %6238 = vmatpush1.msra.mxu0 0.0
    %6239 = vmatprep.subr.mxu0 0.0
    %6240 = vmatpush1.msra.mxu0 0.0
    %6241 = vmatprep.subr.mxu0 0.0
    %6242 = vmatpush1.msra.mxu0 0.0
    %6243 = vmatprep.subr.mxu0 0.0
    %6244 = vmatpush1.msra.mxu0 0.0
    %6245 = vmatprep.subr.mxu0 0.0
    %6246 = vmatpush1.msra.mxu0 0.0
    %6247 = vmatprep.subr.mxu0 0.0
    %6248 = vmatpush1.msra.mxu0 0.0
    %6249 = vmatprep.subr.mxu0 0.0
    %6250 = vmatpush1.msra.mxu0 0.0
    %6251 = vmatprep.subr.mxu0 0.0
    %6252 = vmatpush1.msra.mxu0 0.0
    %6253 = vmatprep.subr.mxu0 0.0
    %6254 = vmatpush1.msra.mxu0 0.0
    %6255 = vmatprep.subr.mxu0 0.0
    %6256 = vmatpush1.msra.mxu0 0.0
    %6257 = vmatprep.subr.mxu0 0.0
    %6258 = vmatpush1.msra.mxu0 0.0
    %6259 = vmatprep.mubr.f32.mxu0 0.0
    %6260 = vmatmul.mubr.f32.gmra.mrb[0].mxu0 %v6193
    %v6261 = vpop.f32.mrb[0].mxu0
    %v6262 = vadd.f32 0.0, %v6261
    %v6263 = vpop.f32.mrb[0].mxu0
    %6264 = vdwg.mxu0
    %6265 = vrot.lane.b32.xlu0 %v3670, 40
    %v6266 = vpop.permute.xlu0 %6265
    %v6269 = vsel %vm332, %v6036, 0
    %6271 = vmatprep.subr.mxu0 0.0
    %6272 = vmatpush1.msra.mxu0 %v6266
    %6273 = vmatprep.subr.mxu0 0.0
    %6274 = vmatpush1.msra.mxu0 0.0
    %6275 = vmatprep.subr.mxu0 0.0
    %6276 = vmatpush1.msra.mxu0 0.0
    %6277 = vmatprep.subr.mxu0 0.0
    %6278 = vmatpush1.msra.mxu0 0.0
    %6279 = vmatprep.subr.mxu0 0.0
    %6280 = vmatpush1.msra.mxu0 0.0
    %6281 = vmatprep.subr.mxu0 0.0
    %6282 = vmatpush1.msra.mxu0 0.0
    %6283 = vmatprep.subr.mxu0 0.0
    %6284 = vmatpush1.msra.mxu0 0.0
    %6285 = vmatprep.subr.mxu0 0.0
    %6286 = vmatpush1.msra.mxu0 0.0
    %6287 = vmatprep.subr.mxu0 0.0
    %6288 = vmatpush1.msra.mxu0 0.0
    %6289 = vmatprep.subr.mxu0 0.0
    %6290 = vmatpush1.msra.mxu0 0.0
    %6291 = vmatprep.subr.mxu0 0.0
    %6292 = vmatpush1.msra.mxu0 0.0
    %6293 = vmatprep.subr.mxu0 0.0
    %6294 = vmatpush1.msra.mxu0 0.0
    %6295 = vmatprep.subr.mxu0 0.0
    %6296 = vmatpush1.msra.mxu0 0.0
    %6297 = vmatprep.subr.mxu0 0.0
    %6298 = vmatpush1.msra.mxu0 0.0
    %6299 = vmatprep.subr.mxu0 0.0
    %6300 = vmatpush1.msra.mxu0 0.0
    %6301 = vmatprep.subr.mxu0 0.0
    %6302 = vmatpush1.msra.mxu0 0.0
    %6303 = vmatprep.subr.mxu0 0.0
    %6304 = vmatpush1.msra.mxu0 0.0
    %6305 = vmatprep.subr.mxu0 0.0
    %6306 = vmatpush1.msra.mxu0 0.0
    %6307 = vmatprep.subr.mxu0 0.0
    %6308 = vmatpush1.msra.mxu0 0.0
    %6309 = vmatprep.subr.mxu0 0.0
    %6310 = vmatpush1.msra.mxu0 0.0
    %6311 = vmatprep.subr.mxu0 0.0
    %6312 = vmatpush1.msra.mxu0 0.0
    %6313 = vmatprep.subr.mxu0 0.0
    %6314 = vmatpush1.msra.mxu0 0.0
    %6315 = vmatprep.subr.mxu0 0.0
    %6316 = vmatpush1.msra.mxu0 0.0
    %6317 = vmatprep.subr.mxu0 0.0
    %6318 = vmatpush1.msra.mxu0 0.0
    %6319 = vmatprep.subr.mxu0 0.0
    %6320 = vmatpush1.msra.mxu0 0.0
    %6321 = vmatprep.subr.mxu0 0.0
    %6322 = vmatpush1.msra.mxu0 0.0
    %6323 = vmatprep.subr.mxu0 0.0
    %6324 = vmatpush1.msra.mxu0 0.0
    %6325 = vmatprep.subr.mxu0 0.0
    %6326 = vmatpush1.msra.mxu0 0.0
    %6327 = vmatprep.subr.mxu0 0.0
    %6328 = vmatpush1.msra.mxu0 0.0
    %6329 = vmatprep.subr.mxu0 0.0
    %6330 = vmatpush1.msra.mxu0 0.0
    %6331 = vmatprep.subr.mxu0 0.0
    %6332 = vmatpush1.msra.mxu0 0.0
    %6333 = vmatprep.subr.mxu0 0.0
    %6334 = vmatpush1.msra.mxu0 0.0
    %6335 = vmatprep.mubr.f32.mxu0 0.0
    %6336 = vmatmul.mubr.f32.gmra.mrb[0].mxu0 %v6269
    %v6337 = vpop.f32.mrb[0].mxu0
    %v6338 = vadd.f32 0.0, %v6337
    %v6339 = vpop.f32.mrb[0].mxu0
    %6340 = vdwg.mxu0
    %6345 = vrot.lane.b32.xlu0 %v4774, 8
    %v6346 = vpop.permute.xlu0 %6345
    %6347 = vrot.lane.b32.xlu0 %v4850, 8
    %v6348 = vpop.permute.xlu0 %6347
    %6349 = vrot.lane.b32.xlu0 %v4926, 8
    %v6350 = vpop.permute.xlu0 %6349
    %6351 = vrot.lane.b32.xlu0 %v5002, 8
    %v6352 = vpop.permute.xlu0 %6351
    %6361 = vrot.lane.b32.xlu0 %v5442, 16
    %v6362 = vpop.permute.xlu0 %6361
    %6363 = vrot.lane.b32.xlu0 %v5518, 16
    %v6364 = vpop.permute.xlu0 %6363
    %6365 = vrot.lane.b32.xlu0 %v5594, 16
    %v6366 = vpop.permute.xlu0 %6365
    %6367 = vrot.lane.b32.xlu0 %v5670, 16
    %v6368 = vpop.permute.xlu0 %6367
    %6377 = vrot.lane.b32.xlu0 %v6110, 24
    %v6378 = vpop.permute.xlu0 %6377
    %6379 = vrot.lane.b32.xlu0 %v6186, 24
    %v6380 = vpop.permute.xlu0 %6379
    %6381 = vrot.lane.b32.xlu0 %v6262, 24
    %v6382 = vpop.permute.xlu0 %6381
    %6383 = vrot.lane.b32.xlu0 %v6338, 24
    %v6384 = vpop.permute.xlu0 %6383
    %v6389 = vsel %vm332, %v4106, %v6346
    %v6390 = vsel %vm332, %v4182, %v6348
    %v6391 = vsel %vm332, %v4258, %v6350
    %v6392 = vsel %vm332, %v4334, %v6352
    %v6393 = vsel %vm3050, %v6389, %v6362
    %v6394 = vsel %vm3050, %v6390, %v6364
    %v6395 = vsel %vm3050, %v6391, %v6366
    %v6396 = vsel %vm3050, %v6392, %v6368
    %v6397 = vsel %vm3055, %v6393, %v6378
    %v6398 = vsel %vm3055, %v6394, %v6380
    %v6399 = vsel %vm3055, %v6395, %v6382
    %v6400 = vsel %vm3055, %v6396, %v6384
    %v6401 = vld [vmem:[#allocation2 + $0x190] sm:$0xff]
    %v6402 = vld [vmem:[#allocation2 + $0x198] sm:$0xff]
    %v6403 = vld [vmem:[#allocation2 + $0x1a0] sm:$0xff]
    %v6404 = vld [vmem:[#allocation2 + $0x1a8] sm:$0xff]
    %v6405 = vld [vmem:[#allocation2 + $0x21b] sm:$0x1]
    %v6406 = vlaneseq
    %v6407 = vshrl.u32 %v6406, 7
    %v6408 = vsub.s32 0, %v6407
    %v6409 = vrot.slane %v6405, %v6408
    %v6411 = vsel %vm143, %v6397, 0
    %v6414 = vsel %vm143, %v6398, 0
    %v6417 = vsel %vm143, %v6399, 0
    %v6420 = vsel %vm143, %v6400, 0
    %6422 = vmatprep.subr.mxu0 0.0
    %6423 = vmatpush1.msra.mxu0 %v6401
    %6424 = vmatprep.subr.mxu0 0.0
    %6425 = vmatpush1.msra.mxu0 %v6402
    %6426 = vmatprep.subr.mxu0 0.0
    %6427 = vmatpush1.msra.mxu0 %v6403
    %6428 = vmatprep.subr.mxu0 0.0
    %6429 = vmatpush1.msra.mxu0 %v6404
    %6430 = vmatprep.subr.mxu0 0.0
    %6431 = vmatpush1.msra.mxu0 0.0
    %6432 = vmatprep.subr.mxu0 0.0
    %6433 = vmatpush1.msra.mxu0 0.0
    %6434 = vmatprep.subr.mxu0 0.0
    %6435 = vmatpush1.msra.mxu0 0.0
    %6436 = vmatprep.subr.mxu0 0.0
    %6437 = vmatpush1.msra.mxu0 0.0
    %6438 = vmatprep.subr.mxu0 0.0
    %6439 = vmatpush1.msra.mxu0 0.0
    %6440 = vmatprep.subr.mxu0 0.0
    %6441 = vmatpush1.msra.mxu0 0.0
    %6442 = vmatprep.subr.mxu0 0.0
    %6443 = vmatpush1.msra.mxu0 0.0
    %6444 = vmatprep.subr.mxu0 0.0
    %6445 = vmatpush1.msra.mxu0 0.0
    %6446 = vmatprep.subr.mxu0 0.0
    %6447 = vmatpush1.msra.mxu0 0.0
    %6448 = vmatprep.subr.mxu0 0.0
    %6449 = vmatpush1.msra.mxu0 0.0
    %6450 = vmatprep.subr.mxu0 0.0
    %6451 = vmatpush1.msra.mxu0 0.0
    %6452 = vmatprep.subr.mxu0 0.0
    %6453 = vmatpush1.msra.mxu0 0.0
    %6454 = vmatprep.subr.mxu0 0.0
    %6455 = vmatpush1.msra.mxu0 0.0
    %6456 = vmatprep.subr.mxu0 0.0
    %6457 = vmatpush1.msra.mxu0 0.0
    %6458 = vmatprep.subr.mxu0 0.0
    %6459 = vmatpush1.msra.mxu0 0.0
    %6460 = vmatprep.subr.mxu0 0.0
    %6461 = vmatpush1.msra.mxu0 0.0
    %6462 = vmatprep.subr.mxu0 0.0
    %6463 = vmatpush1.msra.mxu0 0.0
    %6464 = vmatprep.subr.mxu0 0.0
    %6465 = vmatpush1.msra.mxu0 0.0
    %6466 = vmatprep.subr.mxu0 0.0
    %6467 = vmatpush1.msra.mxu0 0.0
    %6468 = vmatprep.subr.mxu0 0.0
    %6469 = vmatpush1.msra.mxu0 0.0
    %6470 = vmatprep.subr.mxu0 0.0
    %6471 = vmatpush1.msra.mxu0 0.0
    %6472 = vmatprep.subr.mxu0 0.0
    %6473 = vmatpush1.msra.mxu0 0.0
    %6474 = vmatprep.subr.mxu0 0.0
    %6475 = vmatpush1.msra.mxu0 0.0
    %6476 = vmatprep.subr.mxu0 0.0
    %6477 = vmatpush1.msra.mxu0 0.0
    %6478 = vmatprep.subr.mxu0 0.0
    %6479 = vmatpush1.msra.mxu0 0.0
    %6480 = vmatprep.subr.mxu0 0.0
    %6481 = vmatpush1.msra.mxu0 0.0
    %6482 = vmatprep.subr.mxu0 0.0
    %6483 = vmatpush1.msra.mxu0 0.0
    %6484 = vmatprep.subr.mxu0 0.0
    %6485 = vmatpush1.msra.mxu0 0.0
    %6486 = vmatprep.mubr.f32.mxu0 0.0
    %6487 = vmatmul.mubr.f32.gmra.mrb[0].mxu0 %v6411
    %v6488 = vpop.f32.mrb[0].mxu0
    %v6489 = vadd.f32 %v6409, %v6488
    %v6490 = vpop.f32.mrb[0].mxu0
    %6491 = vmatprep.mubr.f32.mxu0 0.0
    %6492 = vmatmul.mubr.f32.gmra.mrb[0].mxu0 %v6414
    %v6493 = vpop.f32.mrb[0].mxu0
    %v6494 = vadd.f32 %v6409, %v6493
    %v6495 = vpop.f32.mrb[0].mxu0
    %6496 = vmatprep.mubr.f32.mxu0 0.0
    %6497 = vmatmul.mubr.f32.gmra.mrb[0].mxu0 %v6417
    %v6498 = vpop.f32.mrb[0].mxu0
    %v6499 = vadd.f32 %v6409, %v6498
    %v6500 = vpop.f32.mrb[0].mxu0
    %6501 = vmatprep.mubr.f32.mxu0 0.0
    %6502 = vmatmul.mubr.f32.gmra.mrb[0].mxu0 %v6420
    %v6503 = vpop.f32.mrb[0].mxu0
    %v6504 = vadd.f32 %v6409, %v6503
    %v6505 = vpop.f32.mrb[0].mxu0
    %6506 = vdwg.mxu0
    %v6507 = vadd.f32 %v3563, %v6489
    %v6508 = vadd.f32 %v3564, %v6494
    %v6509 = vadd.f32 %v3565, %v6499
    %v6510 = vadd.f32 %v3566, %v6504
    %v6511 = vld [vmem:[#allocation2 + $0x21c] sm:$0x1]
    %v6512 = vld [vmem:[#allocation2 + $0x21d] sm:$0x1]
    %v6513 = vsel %vm143, %v6507, 0.0
    %6514 = vadd.xlane.f32.xlu0 %v6513
    %v6515 = vpop.xlane.xlu0 %6514
    %v6516 = vsel %vm143, %v6508, 0.0
    %6517 = vadd.xlane.f32.xlu0 %v6516
    %v6518 = vpop.xlane.xlu0 %6517
    %v6519 = vsel %vm143, %v6509, 0.0
    %6520 = vadd.xlane.f32.xlu0 %v6519
    %v6521 = vpop.xlane.xlu0 %6520
    %v6522 = vsel %vm143, %v6510, 0.0
    %6523 = vadd.xlane.f32.xlu0 %v6522
    %v6524 = vpop.xlane.xlu0 %6523
    %v6525 = vmul.f32 %v6515, %v150
    %v6526 = vmul.f32 %v6518, %v150
    %v6527 = vmul.f32 %v6521, %v150
    %v6528 = vmul.f32 %v6524, %v150
    %v6529 = vsub.f32 %v6507, %v6525
    %v6530 = vsub.f32 %v6508, %v6526
    %v6531 = vsub.f32 %v6509, %v6527
    %v6532 = vsub.f32 %v6510, %v6528
    %v6533 = vmul.f32 %v6529, %v6529
    %v6534 = vmul.f32 %v6530, %v6530
    %v6535 = vmul.f32 %v6531, %v6531
    %v6536 = vmul.f32 %v6532, %v6532
    %v6537 = vsel %vm143, %v6533, 0.0
    %6538 = vadd.xlane.f32.xlu0 %v6537
    %v6539 = vpop.xlane.xlu0 %6538
    %v6540 = vsel %vm143, %v6534, 0.0
    %6541 = vadd.xlane.f32.xlu0 %v6540
    %v6542 = vpop.xlane.xlu0 %6541
    %v6543 = vsel %vm143, %v6535, 0.0
    %6544 = vadd.xlane.f32.xlu0 %v6543
    %v6545 = vpop.xlane.xlu0 %6544
    %v6546 = vsel %vm143, %v6536, 0.0
    %6547 = vadd.xlane.f32.xlu0 %v6546
    %v6548 = vpop.xlane.xlu0 %6547
    %v6549 = vmul.f32 %v6539, %v150
    %v6550 = vmul.f32 %v6542, %v150
    %v6551 = vmul.f32 %v6545, %v150
    %v6552 = vmul.f32 %v6548, %v150
    %v6553 = vadd.f32 %v6549, 1e-12
    %v6554 = vadd.f32 %v6550, 1e-12
    %v6555 = vadd.f32 %v6551, 1e-12
    %v6556 = vadd.f32 %v6552, 1e-12
    %v6557 = vrsqrt.pop %v6553
    %v6558 = vrsqrt.pop %v6554
    %v6559 = vrsqrt.pop %v6555
    %v6560 = vrsqrt.pop %v6556
    %v6561 = vmul.f32 %v6529, %v6557
    %v6562 = vmul.f32 %v6530, %v6558
    %v6563 = vmul.f32 %v6531, %v6559
    %v6564 = vmul.f32 %v6532, %v6560
    %v6565 = vlaneseq
    %v6566 = vshrl.u32 %v6565, 7
    %v6567 = vsub.s32 0, %v6566
    %v6568 = vrot.slane %v6511, %v6567
    %v6569 = vmul.f32 %v6561, %v6568
    %v6570 = vmul.f32 %v6562, %v6568
    %v6571 = vmul.f32 %v6563, %v6568
    %v6572 = vmul.f32 %v6564, %v6568
    %v6573 = vlaneseq
    %v6574 = vshrl.u32 %v6573, 7
    %v6575 = vsub.s32 0, %v6574
    %v6576 = vrot.slane %v6512, %v6575
    %v6577 = vadd.f32 %v6569, %v6576
    %v6578 = vadd.f32 %v6570, %v6576
    %v6579 = vadd.f32 %v6571, %v6576
    %v6580 = vadd.f32 %v6572, %v6576
    %v6581 = vld [vmem:[#allocation2 + $0x1b0] sm:$0xff]
    %v6582 = vld [vmem:[#allocation2 + $0x1b8] sm:$0xff]
    %v6583 = vld [vmem:[#allocation2 + $0x1c0] sm:$0xff]
    %v6584 = vld [vmem:[#allocation2 + $0x1c8] sm:$0xff]
    %v6585 = vld [vmem:[#allocation2 + $0x21e] sm:$0x1]
    %v6586 = vlaneseq
    %v6587 = vshrl.u32 %v6586, 7
    %v6588 = vsub.s32 0, %v6587
    %v6589 = vrot.slane %v6585, %v6588
    %v6591 = vsel %vm143, %v6577, 0
    %v6594 = vsel %vm143, %v6578, 0
    %v6597 = vsel %vm143, %v6579, 0
    %v6600 = vsel %vm143, %v6580, 0
    %6602 = vmatprep.subr.mxu0 0.0
    %6603 = vmatpush1.msra.mxu0 %v6581
    %6604 = vmatprep.subr.mxu0 0.0
    %6605 = vmatpush1.msra.mxu0 %v6582
    %6606 = vmatprep.subr.mxu0 0.0
    %6607 = vmatpush1.msra.mxu0 %v6583
    %6608 = vmatprep.subr.mxu0 0.0
    %6609 = vmatpush1.msra.mxu0 %v6584
    %6610 = vmatprep.subr.mxu0 0.0
    %6611 = vmatpush1.msra.mxu0 0.0
    %6612 = vmatprep.subr.mxu0 0.0
    %6613 = vmatpush1.msra.mxu0 0.0
    %6614 = vmatprep.subr.mxu0 0.0
    %6615 = vmatpush1.msra.mxu0 0.0
    %6616 = vmatprep.subr.mxu0 0.0
    %6617 = vmatpush1.msra.mxu0 0.0
    %6618 = vmatprep.subr.mxu0 0.0
    %6619 = vmatpush1.msra.mxu0 0.0
    %6620 = vmatprep.subr.mxu0 0.0
    %6621 = vmatpush1.msra.mxu0 0.0
    %6622 = vmatprep.subr.mxu0 0.0
    %6623 = vmatpush1.msra.mxu0 0.0
    %6624 = vmatprep.subr.mxu0 0.0
    %6625 = vmatpush1.msra.mxu0 0.0
    %6626 = vmatprep.subr.mxu0 0.0
    %6627 = vmatpush1.msra.mxu0 0.0
    %6628 = vmatprep.subr.mxu0 0.0
    %6629 = vmatpush1.msra.mxu0 0.0
    %6630 = vmatprep.subr.mxu0 0.0
    %6631 = vmatpush1.msra.mxu0 0.0
    %6632 = vmatprep.subr.mxu0 0.0
    %6633 = vmatpush1.msra.mxu0 0.0
    %6634 = vmatprep.subr.mxu0 0.0
    %6635 = vmatpush1.msra.mxu0 0.0
    %6636 = vmatprep.subr.mxu0 0.0
    %6637 = vmatpush1.msra.mxu0 0.0
    %6638 = vmatprep.subr.mxu0 0.0
    %6639 = vmatpush1.msra.mxu0 0.0
    %6640 = vmatprep.subr.mxu0 0.0
    %6641 = vmatpush1.msra.mxu0 0.0
    %6642 = vmatprep.subr.mxu0 0.0
    %6643 = vmatpush1.msra.mxu0 0.0
    %6644 = vmatprep.subr.mxu0 0.0
    %6645 = vmatpush1.msra.mxu0 0.0
    %6646 = vmatprep.subr.mxu0 0.0
    %6647 = vmatpush1.msra.mxu0 0.0
    %6648 = vmatprep.subr.mxu0 0.0
    %6649 = vmatpush1.msra.mxu0 0.0
    %6650 = vmatprep.subr.mxu0 0.0
    %6651 = vmatpush1.msra.mxu0 0.0
    %6652 = vmatprep.subr.mxu0 0.0
    %6653 = vmatpush1.msra.mxu0 0.0
    %6654 = vmatprep.subr.mxu0 0.0
    %6655 = vmatpush1.msra.mxu0 0.0
    %6656 = vmatprep.subr.mxu0 0.0
    %6657 = vmatpush1.msra.mxu0 0.0
    %6658 = vmatprep.subr.mxu0 0.0
    %6659 = vmatpush1.msra.mxu0 0.0
    %6660 = vmatprep.subr.mxu0 0.0
    %6661 = vmatpush1.msra.mxu0 0.0
    %6662 = vmatprep.subr.mxu0 0.0
    %6663 = vmatpush1.msra.mxu0 0.0
    %6664 = vmatprep.subr.mxu0 0.0
    %6665 = vmatpush1.msra.mxu0 0.0
    %6666 = vmatprep.mubr.f32.mxu0 0.0
    %6667 = vmatmul.mubr.f32.gmra.mrb[0].mxu0 %v6591
    %v6668 = vpop.f32.mrb[0].mxu0
    %v6669 = vadd.f32 %v6589, %v6668
    %v6670 = vpop.f32.mrb[0].mxu0
    %6671 = vmatprep.mubr.f32.mxu0 0.0
    %6672 = vmatmul.mubr.f32.gmra.mrb[0].mxu0 %v6594
    %v6673 = vpop.f32.mrb[0].mxu0
    %v6674 = vadd.f32 %v6589, %v6673
    %v6675 = vpop.f32.mrb[0].mxu0
    %6676 = vmatprep.mubr.f32.mxu0 0.0
    %6677 = vmatmul.mubr.f32.gmra.mrb[0].mxu0 %v6597
    %v6678 = vpop.f32.mrb[0].mxu0
    %v6679 = vadd.f32 %v6589, %v6678
    %v6680 = vpop.f32.mrb[0].mxu0
    %6681 = vmatprep.mubr.f32.mxu0 0.0
    %6682 = vmatmul.mubr.f32.gmra.mrb[0].mxu0 %v6600
    %v6683 = vpop.f32.mrb[0].mxu0
    %v6684 = vadd.f32 %v6589, %v6683
    %v6685 = vpop.f32.mrb[0].mxu0
    %6686 = vdwg.mxu0
    %v6687 = vmul.f32 %v6669, 0.5
    %v6688 = vmul.f32 %v6674, 0.5
    %v6689 = vmul.f32 %v6679, 0.5
    %v6690 = vmul.f32 %v6684, 0.5
    %v6691 = vmul.f32 %v6669, 0.044715
    %v6692 = vmul.f32 %v6674, 0.044715
    %v6693 = vmul.f32 %v6679, 0.044715
    %v6694 = vmul.f32 %v6684, 0.044715
    %v6695 = vmul.f32 %v6691, %v6669
    %v6696 = vmul.f32 %v6692, %v6674
    %v6697 = vmul.f32 %v6693, %v6679
    %v6698 = vmul.f32 %v6694, %v6684
    %v6699 = vmul.f32 %v6695, %v6669
    %v6700 = vmul.f32 %v6696, %v6674
    %v6701 = vmul.f32 %v6697, %v6679
    %v6702 = vmul.f32 %v6698, %v6684
    %v6703 = vadd.f32 %v6669, %v6699
    %v6704 = vadd.f32 %v6674, %v6700
    %v6705 = vadd.f32 %v6679, %v6701
    %v6706 = vadd.f32 %v6684, %v6702
    %v6707 = vmul.f32 %v6703, 0.7978846
    %v6708 = vmul.f32 %v6704, 0.7978846
    %v6709 = vmul.f32 %v6705, 0.7978846
    %v6710 = vmul.f32 %v6706, 0.7978846
    %v6711 = vtanh.pop %v6707
    %v6712 = vtanh.pop %v6708
    %v6713 = vtanh.pop %v6709
    %v6714 = vtanh.pop %v6710
    %v6715 = vadd.f32 %v6711, 1.0
    %v6716 = vadd.f32 %v6712, 1.0
    %v6717 = vadd.f32 %v6713, 1.0
    %v6718 = vadd.f32 %v6714, 1.0
    %v6719 = vmul.f32 %v6687, %v6715
    %v6720 = vmul.f32 %v6688, %v6716
    %v6721 = vmul.f32 %v6689, %v6717
    %v6722 = vmul.f32 %v6690, %v6718
    %v6723 = vld [vmem:[#allocation2 + $0x1d0] sm:$0xff]
    %v6724 = vld [vmem:[#allocation2 + $0x1d8] sm:$0xff]
    %v6725 = vld [vmem:[#allocation2 + $0x1e0] sm:$0xff]
    %v6726 = vld [vmem:[#allocation2 + $0x1e8] sm:$0xff]
    %v6727 = vld [vmem:[#allocation2 + $0x1f0] sm:$0xff]
    %v6728 = vld [vmem:[#allocation2 + $0x1f8] sm:$0xff]
    %v6729 = vld [vmem:[#allocation2 + $0x200] sm:$0xff]
    %v6730 = vld [vmem:[#allocation2 + $0x208] sm:$0xff]
    %v6731 = vld [vmem:[#allocation2 + $0x21f] sm:$0x1]
    %v6732 = vlaneseq
    %v6733 = vshrl.u32 %v6732, 7
    %v6734 = vsub.s32 0, %v6733
    %v6735 = vrot.slane %v6731, %v6734
    %v6737 = vsel %vm3395, %v6719, 0
    %v6740 = vsel %vm3395, %v6720, 0
    %v6743 = vsel %vm3395, %v6721, 0
    %v6746 = vsel %vm3395, %v6722, 0
    %6748 = vmatprep.subr.mxu0 0.0
    %6749 = vmatpush1.msra.mxu0 %v6723
    %6750 = vmatprep.subr.mxu0 0.0
    %6751 = vmatpush1.msra.mxu0 %v6724
    %6752 = vmatprep.subr.mxu0 0.0
    %6753 = vmatpush1.msra.mxu0 %v6725
    %6754 = vmatprep.subr.mxu0 0.0
    %6755 = vmatpush1.msra.mxu0 %v6726
    %6756 = vmatprep.subr.mxu0 0.0
    %6757 = vmatpush1.msra.mxu0 %v6727
    %6758 = vmatprep.subr.mxu0 0.0
    %6759 = vmatpush1.msra.mxu0 %v6728
    %6760 = vmatprep.subr.mxu0 0.0
    %6761 = vmatpush1.msra.mxu0 %v6729
    %6762 = vmatprep.subr.mxu0 0.0
    %6763 = vmatpush1.msra.mxu0 %v6730
    %6764 = vmatprep.subr.mxu0 0.0
    %6765 = vmatpush1.msra.mxu0 0.0
    %6766 = vmatprep.subr.mxu0 0.0
    %6767 = vmatpush1.msra.mxu0 0.0
    %6768 = vmatprep.subr.mxu0 0.0
    %6769 = vmatpush1.msra.mxu0 0.0
    %6770 = vmatprep.subr.mxu0 0.0
    %6771 = vmatpush1.msra.mxu0 0.0
    %6772 = vmatprep.subr.mxu0 0.0
    %6773 = vmatpush1.msra.mxu0 0.0
    %6774 = vmatprep.subr.mxu0 0.0
    %6775 = vmatpush1.msra.mxu0 0.0
    %6776 = vmatprep.subr.mxu0 0.0
    %6777 = vmatpush1.msra.mxu0 0.0
    %6778 = vmatprep.subr.mxu0 0.0
    %6779 = vmatpush1.msra.mxu0 0.0
    %6780 = vmatprep.subr.mxu0 0.0
    %6781 = vmatpush1.msra.mxu0 0.0
    %6782 = vmatprep.subr.mxu0 0.0
    %6783 = vmatpush1.msra.mxu0 0.0
    %6784 = vmatprep.subr.mxu0 0.0
    %6785 = vmatpush1.msra.mxu0 0.0
    %6786 = vmatprep.subr.mxu0 0.0
    %6787 = vmatpush1.msra.mxu0 0.0
    %6788 = vmatprep.subr.mxu0 0.0
    %6789 = vmatpush1.msra.mxu0 0.0
    %6790 = vmatprep.subr.mxu0 0.0
    %6791 = vmatpush1.msra.mxu0 0.0
    %6792 = vmatprep.subr.mxu0 0.0
    %6793 = vmatpush1.msra.mxu0 0.0
    %6794 = vmatprep.subr.mxu0 0.0
    %6795 = vmatpush1.msra.mxu0 0.0
    %6796 = vmatprep.subr.mxu0 0.0
    %6797 = vmatpush1.msra.mxu0 0.0
    %6798 = vmatprep.subr.mxu0 0.0
    %6799 = vmatpush1.msra.mxu0 0.0
    %6800 = vmatprep.subr.mxu0 0.0
    %6801 = vmatpush1.msra.mxu0 0.0
    %6802 = vmatprep.subr.mxu0 0.0
    %6803 = vmatpush1.msra.mxu0 0.0
    %6804 = vmatprep.subr.mxu0 0.0
    %6805 = vmatpush1.msra.mxu0 0.0
    %6806 = vmatprep.subr.mxu0 0.0
    %6807 = vmatpush1.msra.mxu0 0.0
    %6808 = vmatprep.subr.mxu0 0.0
    %6809 = vmatpush1.msra.mxu0 0.0
    %6810 = vmatprep.subr.mxu0 0.0
    %6811 = vmatpush1.msra.mxu0 0.0
    %6812 = vmatprep.mubr.f32.mxu0 0.0
    %6813 = vmatmul.mubr.f32.gmra.mrb[0].mxu0 %v6737
    %v6814 = vpop.f32.mrb[0].mxu0
    %v6815 = vadd.f32 %v6735, %v6814
    %v6816 = vpop.f32.mrb[0].mxu0
    %6817 = vmatprep.mubr.f32.mxu0 0.0
    %6818 = vmatmul.mubr.f32.gmra.mrb[0].mxu0 %v6740
    %v6819 = vpop.f32.mrb[0].mxu0
    %v6820 = vadd.f32 %v6735, %v6819
    %v6821 = vpop.f32.mrb[0].mxu0
    %6822 = vmatprep.mubr.f32.mxu0 0.0
    %6823 = vmatmul.mubr.f32.gmra.mrb[0].mxu0 %v6743
    %v6824 = vpop.f32.mrb[0].mxu0
    %v6825 = vadd.f32 %v6735, %v6824
    %v6826 = vpop.f32.mrb[0].mxu0
    %6827 = vmatprep.mubr.f32.mxu0 0.0
    %6828 = vmatmul.mubr.f32.gmra.mrb[0].mxu0 %v6746
    %v6829 = vpop.f32.mrb[0].mxu0
    %v6830 = vadd.f32 %v6735, %v6829
    %v6831 = vpop.f32.mrb[0].mxu0
    %6832 = vdwg.mxu0
    %v6833 = vadd.f32 %v6577, %v6815
    %v6834 = vadd.f32 %v6578, %v6820
    %v6835 = vadd.f32 %v6579, %v6825
    %v6836 = vadd.f32 %v6580, %v6830
    %v6837 = vld [vmem:[#allocation2 + $0x220] sm:$0x1]
    %v6838 = vld [vmem:[#allocation2 + $0x221] sm:$0x1]
    %v6839 = vsel %vm143, %v6833, 0.0
    %6840 = vadd.xlane.f32.xlu0 %v6839
    %v6841 = vpop.xlane.xlu0 %6840
    %v6842 = vsel %vm143, %v6834, 0.0
    %6843 = vadd.xlane.f32.xlu0 %v6842
    %v6844 = vpop.xlane.xlu0 %6843
    %v6845 = vsel %vm143, %v6835, 0.0
    %6846 = vadd.xlane.f32.xlu0 %v6845
    %v6847 = vpop.xlane.xlu0 %6846
    %v6848 = vsel %vm143, %v6836, 0.0
    %6849 = vadd.xlane.f32.xlu0 %v6848
    %v6850 = vpop.xlane.xlu0 %6849
    %v6851 = vmul.f32 %v6841, %v150
    %v6852 = vmul.f32 %v6844, %v150
    %v6853 = vmul.f32 %v6847, %v150
    %v6854 = vmul.f32 %v6850, %v150
    %v6855 = vsub.f32 %v6833, %v6851
    %v6856 = vsub.f32 %v6834, %v6852
    %v6857 = vsub.f32 %v6835, %v6853
    %v6858 = vsub.f32 %v6836, %v6854
    %v6859 = vmul.f32 %v6855, %v6855
    %v6860 = vmul.f32 %v6856, %v6856
    %v6861 = vmul.f32 %v6857, %v6857
    %v6862 = vmul.f32 %v6858, %v6858
    %v6863 = vsel %vm143, %v6859, 0.0
    %6864 = vadd.xlane.f32.xlu0 %v6863
    %v6865 = vpop.xlane.xlu0 %6864
    %v6866 = vsel %vm143, %v6860, 0.0
    %6867 = vadd.xlane.f32.xlu0 %v6866
    %v6868 = vpop.xlane.xlu0 %6867
    %v6869 = vsel %vm143, %v6861, 0.0
    %6870 = vadd.xlane.f32.xlu0 %v6869
    %v6871 = vpop.xlane.xlu0 %6870
    %v6872 = vsel %vm143, %v6862, 0.0
    %6873 = vadd.xlane.f32.xlu0 %v6872
    %v6874 = vpop.xlane.xlu0 %6873
    %v6875 = vmul.f32 %v6865, %v150
    %v6876 = vmul.f32 %v6868, %v150
    %v6877 = vmul.f32 %v6871, %v150
    %v6878 = vmul.f32 %v6874, %v150
    %v6879 = vadd.f32 %v6875, 1e-12
    %v6880 = vadd.f32 %v6876, 1e-12
    %v6881 = vadd.f32 %v6877, 1e-12
    %v6882 = vadd.f32 %v6878, 1e-12
    %v6883 = vrsqrt.pop %v6879
    %v6884 = vrsqrt.pop %v6880
    %v6885 = vrsqrt.pop %v6881
    %v6886 = vrsqrt.pop %v6882
    %v6887 = vmul.f32 %v6855, %v6883
    %v6888 = vmul.f32 %v6856, %v6884
    %v6889 = vmul.f32 %v6857, %v6885
    %v6890 = vmul.f32 %v6858, %v6886
    %v6891 = vlaneseq
    %v6892 = vshrl.u32 %v6891, 7
    %v6893 = vsub.s32 0, %v6892
    %v6894 = vrot.slane %v6837, %v6893
    %v6895 = vmul.f32 %v6887, %v6894
    %v6896 = vmul.f32 %v6888, %v6894
    %v6897 = vmul.f32 %v6889, %v6894
    %v6898 = vmul.f32 %v6890, %v6894
    %v6899 = vlaneseq
    %v6900 = vshrl.u32 %v6899, 7
    %v6901 = vsub.s32 0, %v6900
    %v6902 = vrot.slane %v6838, %v6901
    %v6903 = vadd.f32 %v6895, %v6902
    %v6904 = vadd.f32 %v6896, %v6902
    %v6905 = vadd.f32 %v6897, %v6902
    %v6906 = vadd.f32 %v6898, %v6902
    %v6907 = vld [vmem:[#allocation2 + $0xb0] sm:$0xff]
    %v6908 = vld [vmem:[#allocation2 + $0xb8] sm:$0xff]
    %v6909 = vld [vmem:[#allocation2 + $0xc0] sm:$0xff]
    %v6910 = vld [vmem:[#allocation2 + $0xc8] sm:$0xff]
    %v6911 = vld [vmem:[#allocation2 + $0x222] sm:$0x1]
    %v6912 = vlaneseq
    %v6913 = vshrl.u32 %v6912, 7
    %v6914 = vsub.s32 0, %v6913
    %v6915 = vrot.slane %v6911, %v6914
    %v6917 = vsel %vm143, %v6903, 0
    %v6920 = vsel %vm143, %v6904, 0
    %v6923 = vsel %vm143, %v6905, 0
    %v6926 = vsel %vm143, %v6906, 0
    %6928 = vmatprep.subr.mxu0 0.0
    %6929 = vmatpush1.msra.mxu0 %v6907
    %6930 = vmatprep.subr.mxu0 0.0
    %6931 = vmatpush1.msra.mxu0 %v6908
    %6932 = vmatprep.subr.mxu0 0.0
    %6933 = vmatpush1.msra.mxu0 %v6909
    %6934 = vmatprep.subr.mxu0 0.0
    %6935 = vmatpush1.msra.mxu0 %v6910
    %6936 = vmatprep.subr.mxu0 0.0
    %6937 = vmatpush1.msra.mxu0 0.0
    %6938 = vmatprep.subr.mxu0 0.0
    %6939 = vmatpush1.msra.mxu0 0.0
    %6940 = vmatprep.subr.mxu0 0.0
    %6941 = vmatpush1.msra.mxu0 0.0
    %6942 = vmatprep.subr.mxu0 0.0
    %6943 = vmatpush1.msra.mxu0 0.0
    %6944 = vmatprep.subr.mxu0 0.0
    %6945 = vmatpush1.msra.mxu0 0.0
    %6946 = vmatprep.subr.mxu0 0.0
    %6947 = vmatpush1.msra.mxu0 0.0
    %6948 = vmatprep.subr.mxu0 0.0
    %6949 = vmatpush1.msra.mxu0 0.0
    %6950 = vmatprep.subr.mxu0 0.0
    %6951 = vmatpush1.msra.mxu0 0.0
    %6952 = vmatprep.subr.mxu0 0.0
    %6953 = vmatpush1.msra.mxu0 0.0
    %6954 = vmatprep.subr.mxu0 0.0
    %6955 = vmatpush1.msra.mxu0 0.0
    %6956 = vmatprep.subr.mxu0 0.0
    %6957 = vmatpush1.msra.mxu0 0.0
    %6958 = vmatprep.subr.mxu0 0.0
    %6959 = vmatpush1.msra.mxu0 0.0
    %6960 = vmatprep.subr.mxu0 0.0
    %6961 = vmatpush1.msra.mxu0 0.0
    %6962 = vmatprep.subr.mxu0 0.0
    %6963 = vmatpush1.msra.mxu0 0.0
    %6964 = vmatprep.subr.mxu0 0.0
    %6965 = vmatpush1.msra.mxu0 0.0
    %6966 = vmatprep.subr.mxu0 0.0
    %6967 = vmatpush1.msra.mxu0 0.0
    %6968 = vmatprep.subr.mxu0 0.0
    %6969 = vmatpush1.msra.mxu0 0.0
    %6970 = vmatprep.subr.mxu0 0.0
    %6971 = vmatpush1.msra.mxu0 0.0
    %6972 = vmatprep.subr.mxu0 0.0
    %6973 = vmatpush1.msra.mxu0 0.0
    %6974 = vmatprep.subr.mxu0 0.0
    %6975 = vmatpush1.msra.mxu0 0.0
    %6976 = vmatprep.subr.mxu0 0.0
    %6977 = vmatpush1.msra.mxu0 0.0
    %6978 = vmatprep.subr.mxu0 0.0
    %6979 = vmatpush1.msra.mxu0 0.0
    %6980 = vmatprep.subr.mxu0 0.0
    %6981 = vmatpush1.msra.mxu0 0.0
    %6982 = vmatprep.subr.mxu0 0.0
    %6983 = vmatpush1.msra.mxu0 0.0
    %6984 = vmatprep.subr.mxu0 0.0
    %6985 = vmatpush1.msra.mxu0 0.0
    %6986 = vmatprep.subr.mxu0 0.0
    %6987 = vmatpush1.msra.mxu0 0.0
    %6988 = vmatprep.subr.mxu0 0.0
    %6989 = vmatpush1.msra.mxu0 0.0
    %6990 = vmatprep.subr.mxu0 0.0
    %6991 = vmatpush1.msra.mxu0 0.0
    %6992 = vmatprep.mubr.f32.mxu0 0.0
    %6993 = vmatmul.mubr.f32.gmra.mrb[0].mxu0 %v6917
    %v6994 = vpop.f32.mrb[0].mxu0
    %v6995 = vadd.f32 %v6915, %v6994
    %v6996 = vpop.f32.mrb[0].mxu0
    %6997 = vmatprep.mubr.f32.mxu0 0.0
    %6998 = vmatmul.mubr.f32.gmra.mrb[0].mxu0 %v6920
    %v6999 = vpop.f32.mrb[0].mxu0
    %v7000 = vadd.f32 %v6915, %v6999
    %v7001 = vpop.f32.mrb[0].mxu0
    %7002 = vmatprep.mubr.f32.mxu0 0.0
    %7003 = vmatmul.mubr.f32.gmra.mrb[0].mxu0 %v6923
    %v7004 = vpop.f32.mrb[0].mxu0
    %v7005 = vadd.f32 %v6915, %v7004
    %v7006 = vpop.f32.mrb[0].mxu0
    %7007 = vmatprep.mubr.f32.mxu0 0.0
    %7008 = vmatmul.mubr.f32.gmra.mrb[0].mxu0 %v6926
    %v7009 = vpop.f32.mrb[0].mxu0
    %v7010 = vadd.f32 %v6915, %v7009
    %v7011 = vpop.f32.mrb[0].mxu0
    %7012 = vdwg.mxu0
    %v7013 = vmul.f32 %v6995, 0.5
    %v7014 = vmul.f32 %v7000, 0.5
    %v7015 = vmul.f32 %v7005, 0.5
    %v7016 = vmul.f32 %v7010, 0.5
    %v7017 = vmul.f32 %v6995, 0.044715
    %v7018 = vmul.f32 %v7000, 0.044715
    %v7019 = vmul.f32 %v7005, 0.044715
    %v7020 = vmul.f32 %v7010, 0.044715
    %v7021 = vmul.f32 %v7017, %v6995
    %v7022 = vmul.f32 %v7018, %v7000
    %v7023 = vmul.f32 %v7019, %v7005
    %v7024 = vmul.f32 %v7020, %v7010
    %v7025 = vmul.f32 %v7021, %v6995
    %v7026 = vmul.f32 %v7022, %v7000
    %v7027 = vmul.f32 %v7023, %v7005
    %v7028 = vmul.f32 %v7024, %v7010
    %v7029 = vadd.f32 %v6995, %v7025
    %v7030 = vadd.f32 %v7000, %v7026
    %v7031 = vadd.f32 %v7005, %v7027
    %v7032 = vadd.f32 %v7010, %v7028
    %v7033 = vmul.f32 %v7029, 0.7978846
    %v7034 = vmul.f32 %v7030, 0.7978846
    %v7035 = vmul.f32 %v7031, 0.7978846
    %v7036 = vmul.f32 %v7032, 0.7978846
    %v7037 = vtanh.pop %v7033
    %v7038 = vtanh.pop %v7034
    %v7039 = vtanh.pop %v7035
    %v7040 = vtanh.pop %v7036
    %v7041 = vadd.f32 %v7037, 1.0
    %v7042 = vadd.f32 %v7038, 1.0
    %v7043 = vadd.f32 %v7039, 1.0
    %v7044 = vadd.f32 %v7040, 1.0
    %v7045 = vmul.f32 %v7013, %v7041
    %v7046 = vmul.f32 %v7014, %v7042
    %v7047 = vmul.f32 %v7015, %v7043
    %v7048 = vmul.f32 %v7016, %v7044
    %v7049 = vld [vmem:[#allocation2 + $0x223] sm:$0x1]
    %v7050 = vld [vmem:[#allocation2 + $0x224] sm:$0x1]
    %v7051 = vsel %vm143, %v7045, 0.0
    %7052 = vadd.xlane.f32.xlu0 %v7051
    %v7053 = vpop.xlane.xlu0 %7052
    %v7054 = vsel %vm143, %v7046, 0.0
    %7055 = vadd.xlane.f32.xlu0 %v7054
    %v7056 = vpop.xlane.xlu0 %7055
    %v7057 = vsel %vm143, %v7047, 0.0
    %7058 = vadd.xlane.f32.xlu0 %v7057
    %v7059 = vpop.xlane.xlu0 %7058
    %v7060 = vsel %vm143, %v7048, 0.0
    %7061 = vadd.xlane.f32.xlu0 %v7060
    %v7062 = vpop.xlane.xlu0 %7061
    %v7063 = vmul.f32 %v7053, %v150
    %v7064 = vmul.f32 %v7056, %v150
    %v7065 = vmul.f32 %v7059, %v150
    %v7066 = vmul.f32 %v7062, %v150
    %v7067 = vsub.f32 %v7045, %v7063
    %v7068 = vsub.f32 %v7046, %v7064
    %v7069 = vsub.f32 %v7047, %v7065
    %v7070 = vsub.f32 %v7048, %v7066
    %v7071 = vmul.f32 %v7067, %v7067
    %v7072 = vmul.f32 %v7068, %v7068
    %v7073 = vmul.f32 %v7069, %v7069
    %v7074 = vmul.f32 %v7070, %v7070
    %v7075 = vsel %vm143, %v7071, 0.0
    %7076 = vadd.xlane.f32.xlu0 %v7075
    %v7077 = vpop.xlane.xlu0 %7076
    %v7078 = vsel %vm143, %v7072, 0.0
    %7079 = vadd.xlane.f32.xlu0 %v7078
    %v7080 = vpop.xlane.xlu0 %7079
    %v7081 = vsel %vm143, %v7073, 0.0
    %7082 = vadd.xlane.f32.xlu0 %v7081
    %v7083 = vpop.xlane.xlu0 %7082
    %v7084 = vsel %vm143, %v7074, 0.0
    %7085 = vadd.xlane.f32.xlu0 %v7084
    %v7086 = vpop.xlane.xlu0 %7085
    %v7087 = vmul.f32 %v7077, %v150
    %v7088 = vmul.f32 %v7080, %v150
    %v7089 = vmul.f32 %v7083, %v150
    %v7090 = vmul.f32 %v7086, %v150
    %v7091 = vadd.f32 %v7087, 1e-12
    %v7092 = vadd.f32 %v7088, 1e-12
    %v7093 = vadd.f32 %v7089, 1e-12
    %v7094 = vadd.f32 %v7090, 1e-12
    %v7095 = vrsqrt.pop %v7091
    %v7096 = vrsqrt.pop %v7092
    %v7097 = vrsqrt.pop %v7093
    %v7098 = vrsqrt.pop %v7094
    %v7099 = vmul.f32 %v7067, %v7095
    %v7100 = vmul.f32 %v7068, %v7096
    %v7101 = vmul.f32 %v7069, %v7097
    %v7102 = vmul.f32 %v7070, %v7098
    %v7103 = vlaneseq
    %v7104 = vshrl.u32 %v7103, 7
    %v7105 = vsub.s32 0, %v7104
    %v7106 = vrot.slane %v7049, %v7105
    %v7107 = vmul.f32 %v7099, %v7106
    %v7108 = vmul.f32 %v7100, %v7106
    %v7109 = vmul.f32 %v7101, %v7106
    %v7110 = vmul.f32 %v7102, %v7106
    %v7111 = vlaneseq
    %v7112 = vshrl.u32 %v7111, 7
    %v7113 = vsub.s32 0, %v7112
    %v7114 = vrot.slane %v7050, %v7113
    %v7115 = vadd.f32 %v7107, %v7114
    %v7116 = vadd.f32 %v7108, %v7114
    %v7117 = vadd.f32 %v7109, %v7114
    %v7118 = vadd.f32 %v7110, %v7114
    %v7119 = vld [vmem:[#allocation2] sm:$0xff]
    %v7120 = vld [vmem:[#allocation2 + $0x8] sm:$0xff]
    %v7121 = vld [vmem:[#allocation2 + $0x10] sm:$0xff]
    %v7122 = vld [vmem:[#allocation2 + $0x18] sm:$0xff]
    %v7123 = vld [vmem:[#allocation2 + $0x225] sm:$0x1]
    %v7124 = vlaneseq
    %v7125 = vshrl.u32 %v7124, 7
    %v7126 = vsub.s32 0, %v7125
    %v7127 = vrot.slane %v7123, %v7126
    %v7129 = vsel %vm143, %v7115, 0
    %v7132 = vsel %vm143, %v7116, 0
    %v7135 = vsel %vm143, %v7117, 0
    %v7138 = vsel %vm143, %v7118, 0
    %7140 = vmatprep.subr.mxu0 0.0
    %7141 = vmatpush1.msra.mxu0 %v7119
    %7142 = vmatprep.subr.mxu0 0.0
    %7143 = vmatpush1.msra.mxu0 %v7120
    %7144 = vmatprep.subr.mxu0 0.0
    %7145 = vmatpush1.msra.mxu0 %v7121
    %7146 = vmatprep.subr.mxu0 0.0
    %7147 = vmatpush1.msra.mxu0 %v7122
    %7148 = vmatprep.subr.mxu0 0.0
    %7149 = vmatpush1.msra.mxu0 0.0
    %7150 = vmatprep.subr.mxu0 0.0
    %7151 = vmatpush1.msra.mxu0 0.0
    %7152 = vmatprep.subr.mxu0 0.0
    %7153 = vmatpush1.msra.mxu0 0.0
    %7154 = vmatprep.subr.mxu0 0.0
    %7155 = vmatpush1.msra.mxu0 0.0
    %7156 = vmatprep.subr.mxu0 0.0
    %7157 = vmatpush1.msra.mxu0 0.0
    %7158 = vmatprep.subr.mxu0 0.0
    %7159 = vmatpush1.msra.mxu0 0.0
    %7160 = vmatprep.subr.mxu0 0.0
    %7161 = vmatpush1.msra.mxu0 0.0
    %7162 = vmatprep.subr.mxu0 0.0
    %7163 = vmatpush1.msra.mxu0 0.0
    %7164 = vmatprep.subr.mxu0 0.0
    %7165 = vmatpush1.msra.mxu0 0.0
    %7166 = vmatprep.subr.mxu0 0.0
    %7167 = vmatpush1.msra.mxu0 0.0
    %7168 = vmatprep.subr.mxu0 0.0
    %7169 = vmatpush1.msra.mxu0 0.0
    %7170 = vmatprep.subr.mxu0 0.0
    %7171 = vmatpush1.msra.mxu0 0.0
    %7172 = vmatprep.subr.mxu0 0.0
    %7173 = vmatpush1.msra.mxu0 0.0
    %7174 = vmatprep.subr.mxu0 0.0
    %7175 = vmatpush1.msra.mxu0 0.0
    %7176 = vmatprep.subr.mxu0 0.0
    %7177 = vmatpush1.msra.mxu0 0.0
    %7178 = vmatprep.subr.mxu0 0.0
    %7179 = vmatpush1.msra.mxu0 0.0
    %7180 = vmatprep.subr.mxu0 0.0
    %7181 = vmatpush1.msra.mxu0 0.0
    %7182 = vmatprep.subr.mxu0 0.0
    %7183 = vmatpush1.msra.mxu0 0.0
    %7184 = vmatprep.subr.mxu0 0.0
    %7185 = vmatpush1.msra.mxu0 0.0
    %7186 = vmatprep.subr.mxu0 0.0
    %7187 = vmatpush1.msra.mxu0 0.0
    %7188 = vmatprep.subr.mxu0 0.0
    %7189 = vmatpush1.msra.mxu0 0.0
    %7190 = vmatprep.subr.mxu0 0.0
    %7191 = vmatpush1.msra.mxu0 0.0
    %7192 = vmatprep.subr.mxu0 0.0
    %7193 = vmatpush1.msra.mxu0 0.0
    %7194 = vmatprep.subr.mxu0 0.0
    %7195 = vmatpush1.msra.mxu0 0.0
    %7196 = vmatprep.subr.mxu0 0.0
    %7197 = vmatpush1.msra.mxu0 0.0
    %7198 = vmatprep.subr.mxu0 0.0
    %7199 = vmatpush1.msra.mxu0 0.0
    %7200 = vmatprep.subr.mxu0 0.0
    %7201 = vmatpush1.msra.mxu0 0.0
    %7202 = vmatprep.subr.mxu0 0.0
    %7203 = vmatpush1.msra.mxu0 0.0
    %7204 = vmatprep.mubr.f32.mxu0 0.0
    %7205 = vmatmul.mubr.f32.gmra.mrb[0].mxu0 %v7129
    %v7206 = vpop.f32.mrb[0].mxu0
    %v7207 = vadd.f32 %v7127, %v7206
    %v7208 = vpop.f32.mrb[0].mxu0
    %7209 = vmatprep.mubr.f32.mxu0 0.0
    %7210 = vmatmul.mubr.f32.gmra.mrb[0].mxu0 %v7132
    %v7211 = vpop.f32.mrb[0].mxu0
    %v7212 = vadd.f32 %v7127, %v7211
    %v7213 = vpop.f32.mrb[0].mxu0
    %7214 = vmatprep.mubr.f32.mxu0 0.0
    %7215 = vmatmul.mubr.f32.gmra.mrb[0].mxu0 %v7135
    %v7216 = vpop.f32.mrb[0].mxu0
    %v7217 = vadd.f32 %v7127, %v7216
    %v7218 = vpop.f32.mrb[0].mxu0
    %7219 = vmatprep.mubr.f32.mxu0 0.0
    %7220 = vmatmul.mubr.f32.gmra.mrb[0].mxu0 %v7138
    %v7221 = vpop.f32.mrb[0].mxu0
    %v7222 = vadd.f32 %v7127, %v7221
    %v7223 = vpop.f32.mrb[0].mxu0
    %7224 = vdwg.mxu0
    %7225 = vst [vmem:[#allocation6] sm:$0xff] %v7217
    %7226 = vst [vmem:[#allocation6 + $0x8] sm:$0xff] %v7222
    %7227 = vmax.xlane.f32.xlu0 %v7207
    %v7228 = vpop.xlane.xlu0 %7227
    %7229 = vmax.xlane.f32.xlu0 %v7212
    %v7230 = vpop.xlane.xlu0 %7229
    %v7231 = vsub.f32 %v7207, %v7228
    %v7232 = vsub.f32 %v7212, %v7230
    %v7233 = vmul.f32 %v7231, 1.442695
    %v7234 = vpow.pop %v7233
    %v7235 = vmul.f32 %v7232, 1.442695
    %v7236 = vpow.pop %v7235
    %7237 = vadd.xlane.f32.xlu0 %v7234
    %v7238 = vpop.xlane.xlu0 %7237
    %7239 = vadd.xlane.f32.xlu0 %v7236
    %v7240 = vpop.xlane.xlu0 %7239
    %v7241 = vlog2.pop %v7238
    %v7242 = vmul.f32 %v7241, 0.6931472
    %v7243 = vlog2.pop %v7240
    %v7244 = vmul.f32 %v7243, 0.6931472
    %v7245 = vadd.f32 %v7242, %v7228
    %v7246 = vadd.f32 %v7244, %v7230
    %v7247 = vmul.f32 %v7207, %v46
    %v7248 = vmul.f32 %v7212, %v47
    %7249 = vadd.xlane.f32.xlu0 %v7247
    %v7250 = vpop.xlane.xlu0 %7249
    %7251 = vadd.xlane.f32.xlu0 %v7248
    %v7252 = vpop.xlane.xlu0 %7251
    %v7253 = vsub.f32 %v7245, %v7250
    %v7254 = vsub.f32 %v7246, %v7252
    %v7255 = vadd.f32 %v7253, %v7254
    %v7256 = vrot.slane %v7255, 4
    %v7257 = vadd.f32 %v7255, %v7256
    %v7258 = vrot.slane %v7257, 2
    %v7259 = vadd.f32 %v7257, %v7258
    %v7260 = vrot.slane %v7259, 1
    %v7261 = vadd.f32 %v7259, %v7260
    %s7262 = vtos %v7261
    %s7263 = smul.f32 %s7262, 0.0625
    %s7264 = scalar_lea.smem [#allocation7], 0
    %7265 = sst [smem:[%s7264]] %s7263
    // Predicated region
    $region18: #{tpu_custom_call.1} parent=1 // pred_check
      _
    $region19: #{tpu_custom_call.1} parent=1 // pred_check_branch
      %7267 = sbr.rel (0) target = $region21
    $region20: #{tpu_custom_call.1} parent=1 // pred_region
      %s7269 = ssub.s32 256, 256
      %7270 = vsyncadd [#allocation4], %s7269
      %s7271 = sshll.u32 [#allocation6], 4
      %s7272 = int_to_ptr.vmem [resolvable:$true] %s7271
      %7277 = dma.vmem_to_hbm [thread:$0]  %s7272, 256, %s3, [#allocation4], 128, 128, 8
    $region21: #{tpu_custom_call.1} parent=1 // pred_fallthru
      _
    // Predicated region
    $region22: #{tpu_custom_call.1} parent=1 // pred_check
      _
    $region23: #{tpu_custom_call.1} parent=1 // pred_check_branch
      %7279 = sbr.rel (0) target = $region25
    $region24: #{tpu_custom_call.1} parent=1 // pred_region
      %s7281 = ssub.s32 16, 16
      %7282 = vsyncadd [#allocation5], %s7281
      %7285 = dma.smem_to_hbm [#allocation7], 16, %s4, [#allocation5]
    $region25: #{tpu_custom_call.1} parent=1 // pred_fallthru
      _
    // Predicated region
    $region26: #{tpu_custom_call.1} parent=1 // pred_check
      _
    $region27: #{tpu_custom_call.1} parent=1 // pred_check_branch
      %7287 = sbr.rel (0) target = $region29
    $region28: #{tpu_custom_call.1} parent=1 // pred_region
      %7288 = dma.done [#allocation4], 256
    $region29: #{tpu_custom_call.1} parent=1 // pred_fallthru
      _
    // Predicated region
    $region30: #{tpu_custom_call.1} parent=1 // pred_check
      _
    $region31: #{tpu_custom_call.1} parent=1 // pred_check_branch
      %7290 = sbr.rel (0) target = $region33
    $region32: #{tpu_custom_call.1} parent=1 // pred_region
      %7291 = dma.done [#allocation5], 16
    $region33: #{tpu_custom_call.1} parent=1 // pred_fallthru
      _
    %7292 = sfence
    %7293 = vsyncpa [#allocation3], 1
    %7294 = vsyncpa [#allocation4], 1
    %7295 = vsyncpa [#allocation5], 1

</llo_original>
